<compile_context>
chip_gen: v6e
topology: v6e:2x2x1
jax: 0.10.0
libtpu: 0.0.40
codegen_flags: <defaults>
</compile_context>

<pallas_src>
import functools

import jax
import jax.numpy as jnp
from jax.experimental import pallas as pl
from jax.experimental.pallas import tpu as pltpu

EMBED_SIZE = 384
HEAD_NUM = 6
HEAD_SIZE = EMBED_SIZE // HEAD_NUM      # 64
HEAD_PAIR = 2 * HEAD_SIZE               # 128 = one lane-aligned head pair
HIDDEN = 4 * EMBED_SIZE                 # 1536
LN_EPS = 1e-5


def _layernorm(v, w, b):
    mean = jnp.mean(v, axis=-1, keepdims=True)
    var = jnp.mean((v - mean) ** 2, axis=-1, keepdims=True)
    return (v - mean) * jax.lax.rsqrt(var + LN_EPS) * w + b


def transformer_block_kernel(
    x_ref,                      # (m, E) f32
    ln1_w_ref, ln1_b_ref,       # (1, E) f32
    wqkv_ref,                   # (E, 3E) bf16  fused [Wq*scale | Wk | Wv]
    wo_ref,                     # (E, E) bf16   output projection (unpadded)
    bo_ref,                     # (1, E) f32
    ln2_w_ref, ln2_b_ref,       # (1, E) f32
    w1_ref, b1_ref,             # (E, 4E) bf16, (1, 4E) f32
    w2_ref, b2_ref,             # (4E, E) bf16, (1, E) f32
    out_ref,                    # (m, E) f32
    qkv_scr,                    # (m, 3E) f32 VMEM scratch
    ao_scr,                     # (m, E)  f32 VMEM scratch (head-concat layout)
    *, bb, t,
):
    # ---- attention branch: LN1 -> ONE fused QKV GEMM over all tile rows ----
    h16 = _layernorm(x_ref[...], ln1_w_ref[...], ln1_b_ref[...]).astype(jnp.bfloat16)
    qkv_scr[...] = jnp.dot(h16, wqkv_ref[...], preferred_element_type=jnp.float32)

    row = jax.lax.broadcasted_iota(jnp.int32, (t, t), 0)
    col = jax.lax.broadcasted_iota(jnp.int32, (t, t), 1)
    causal = row >= col   # diagonal always unmasked -> row max stays finite

    def batch_body(b, carry):
        r0 = pl.multiple_of(b * t, t)
        rows = pl.ds(r0, t)
        for pr in range(HEAD_NUM // 2):          # head pairs: aligned 128-lane loads
            c0 = pr * HEAD_PAIR
            qp = qkv_scr[rows, pl.ds(c0, HEAD_PAIR)].astype(jnp.bfloat16)
            kp = qkv_scr[rows, pl.ds(EMBED_SIZE + c0, HEAD_PAIR)].astype(jnp.bfloat16)
            vp = qkv_scr[rows, pl.ds(2 * EMBED_SIZE + c0, HEAD_PAIR)].astype(jnp.bfloat16)
            outs = []
            for j in range(2):                   # intra-pair split: value slice (XLU)
                sl = slice(j * HEAD_SIZE, (j + 1) * HEAD_SIZE)
                qh, kh, vh = qp[:, sl], kp[:, sl], vp[:, sl]
                # scale already folded into Wq at pack time
                s = jax.lax.dot_general(
                    qh, kh, (((1,), (1,)), ((), ())),
                    preferred_element_type=jnp.float32)
                s = jnp.where(causal, s, -jnp.inf)
                s = s - jnp.max(s, axis=-1, keepdims=True)
                p = jnp.exp(s)
                p = p * pl.reciprocal(jnp.sum(p, axis=-1, keepdims=True),
                                      approx=True)
                # attention-weight dropout: identity (eval mode)
                outs.append(jnp.dot(p.astype(jnp.bfloat16), vh,
                                    preferred_element_type=jnp.float32))
            # store the head pair into the concat-layout scratch (128-lane aligned)
            ao_scr[rows, pl.ds(c0, HEAD_PAIR)] = jnp.concatenate(outs, axis=-1)
        return carry

    jax.lax.fori_loop(0, bb, batch_body, 0)

    # ---- ONE fused output projection over all rows, then residual ----
    attn = jnp.dot(ao_scr[...].astype(jnp.bfloat16), wo_ref[...],
                   preferred_element_type=jnp.float32)
    # projection dropout: identity (eval mode)
    x1 = x_ref[...] + attn + bo_ref[...]

    # ---- feed-forward branch over all rows in the tile ----
    h2 = _layernorm(x1, ln2_w_ref[...], ln2_b_ref[...]).astype(jnp.bfloat16)
    ff = jnp.dot(h2, w1_ref[...], preferred_element_type=jnp.float32) + b1_ref[...]
    ff = jnp.maximum(ff, 0.0)
    ff = jnp.dot(ff.astype(jnp.bfloat16), w2_ref[...],
                 preferred_element_type=jnp.float32) + b2_ref[...]
    # ffn dropout: identity (eval mode)
    out_ref[...] = x1 + ff


def _largest_divisor_leq(n, cap):
    for d in range(min(n, cap), 0, -1):
        if n % d == 0:
            return d
    return 1


def _tile_plan(B, T):
    """Generation-aware row tiling (perf only; correctness unaffected)."""
    try:
        kind = jax.devices()[0].device_kind.lower()
    except Exception:  # pragma: no cover
        kind = ""
    big_vmem = ("v5" in kind) or ("v6" in kind)   # 128 MiB VMEM, single TC
    row_target = 1024 if big_vmem else 256
    vmem_limit = (96 << 20) if big_vmem else (48 << 20)
    cap = max(1, row_target // T)
    if not big_vmem and B >= 2:
        # keep >= 2 independent grid steps so v7x's 2 TensorCores both work
        cap = min(cap, B // 2)
    bb = _largest_divisor_leq(B, max(1, cap))
    return bb, vmem_limit


def pack_params(params):
    """Pack / fuse / cast weights ONCE at init (hoisted out of the forward)."""
    scale = EMBED_SIZE ** -0.5
    # fused QKV (no head padding); score scale folded into Wq
    wqkv = jnp.concatenate(
        [params["wq"] * scale, params["wk"], params["wv"]], axis=1
    ).astype(jnp.bfloat16)                       # (E, 3E)
    return (
        params["ln1_w"], params["ln1_b"],
        wqkv,
        params["wo"].astype(jnp.bfloat16),       # (E, E) unpadded
        params["bo"],
        params["ln2_w"], params["ln2_b"],
        params["w1"].astype(jnp.bfloat16), params["b1"],
        params["w2"].astype(jnp.bfloat16), params["b2"],
    )


@jax.jit
def transformer_block(x, packed):
    B, T, E = x.shape
    assert E == EMBED_SIZE and T % 8 == 0

    bb, vmem_limit = _tile_plan(B, T)
    m = bb * T
    grid = (B // bb,)

    x2 = x.reshape(B * T, E)

    def const_spec(a):
        zeros = (0,) * a.ndim
        # constant index map -> weights stay resident; double-buffering wastes
        # a few MiB but pl.Buffered(1) is skipped to keep compilation robust.
        return pl.BlockSpec(a.shape, lambda i: zeros)

    in_specs = [pl.BlockSpec((m, E), lambda i: (i, 0))]
    in_specs += [const_spec(a) for a in packed]
    out_spec = pl.BlockSpec((m, E), lambda i: (i, 0))

    kernel = functools.partial(transformer_block_kernel, bb=bb, t=T)

    out = pl.pallas_call(
        kernel,
        out_shape=jax.ShapeDtypeStruct((B * T, E), jnp.float32),
        grid_spec=pltpu.PrefetchScalarGridSpec(
            num_scalar_prefetch=0,
            grid=grid,
            in_specs=in_specs,
            out_specs=out_spec,
            scratch_shapes=[
                pltpu.VMEM((m, 3 * E), jnp.float32),   # fused QKV activations
                pltpu.VMEM((m, E), jnp.float32),       # head-concat outputs
            ],
        ),
        compiler_params=pltpu.CompilerParams(
            # batch tiles are independent -> shard across v7x's 2 TensorCores
            dimension_semantics=("parallel",),
            vmem_limit_bytes=vmem_limit,
        ),
    )(x2, *packed)
    return out.reshape(B, T, E)


def init_params(key):
    E = EMBED_SIZE
    ks = jax.random.split(key, 8)
    scale = 0.02

    def rnd(k, shape):
        return (scale * jax.random.normal(k, shape)).astype(jnp.float32)

    return {
        # LayerNorm affine params (PyTorch default: ones / zeros)
        "ln1_w": jnp.ones((1, E), jnp.float32),
        "ln1_b": jnp.zeros((1, E), jnp.float32),
        "ln2_w": jnp.ones((1, E), jnp.float32),
        "ln2_b": jnp.zeros((1, E), jnp.float32),
        # per-head K/Q/V linears (bias=False), concatenated along output cols
        "wq": rnd(ks[0], (E, E)),
        "wk": rnd(ks[1], (E, E)),
        "wv": rnd(ks[2], (E, E)),
        # output projection
        "wo": rnd(ks[3], (E, E)),
        "bo": rnd(ks[4], (1, E)),
        # feed-forward
        "w1": rnd(ks[5], (E, 4 * E)),
        "b1": jnp.zeros((1, 4 * E), jnp.float32),
        "w2": rnd(ks[6], (4 * E, E)),
        "b2": jnp.zeros((1, E), jnp.float32),
    }


def reference_jax(x, p):
    """Plain-JAX f32 reference for correctness checking."""
    def ln(v, w, b):
        m = jnp.mean(v, -1, keepdims=True)
        var = jnp.mean((v - m) ** 2, -1, keepdims=True)
        return (v - m) * jax.lax.rsqrt(var + LN_EPS) * w + b

    h = ln(x, p["ln1_w"], p["ln1_b"])
    q = h @ p["wq"]
    k = h @ p["wk"]
    v = h @ p["wv"]
    B, T, E = x.shape
    qh = q.reshape(B, T, HEAD_NUM, HEAD_SIZE).transpose(0, 2, 1, 3)
    kh = k.reshape(B, T, HEAD_NUM, HEAD_SIZE).transpose(0, 2, 1, 3)
    vh = v.reshape(B, T, HEAD_NUM, HEAD_SIZE).transpose(0, 2, 1, 3)
    s = jnp.einsum("bhqd,bhkd->bhqk", qh, kh) * (EMBED_SIZE ** -0.5)
    mask = jnp.tril(jnp.ones((T, T), bool))
    s = jnp.where(mask, s, -jnp.inf)
    w = jax.nn.softmax(s, axis=-1)
    o = jnp.einsum("bhqk,bhkd->bhqd", w, vh).transpose(0, 2, 1, 3).reshape(B, T, E)
    x1 = x + (o @ p["wo"] + p["bo"])
    h2 = ln(x1, p["ln2_w"], p["ln2_b"])
    ff = jnp.maximum(h2 @ p["w1"] + p["b1"], 0.0) @ p["w2"] + p["b2"]
    return x1 + ff


if __name__ == "__main__":
    key = jax.random.PRNGKey(0)
    kx, kp = jax.random.split(key)

    B, T = 2, 8  # seq length 8 <= block_size (256)
    x = jax.random.normal(kx, (B, T, EMBED_SIZE), jnp.float32)
    params = init_params(kp)
    packed = pack_params(params)          # packed ONCE, outside the forward

    out = transformer_block(x, packed)
    out = jax.block_until_ready(out)

    ref = reference_jax(x, params)
    assert out.shape == (B, T, EMBED_SIZE)
    # bf16 matmul operands (f32 accumulate) -> relaxed tolerance vs f32 ref
    err = float(jnp.max(jnp.abs(out - ref)))
    assert jnp.allclose(out, ref, atol=2e-2, rtol=2e-2), err

    print("KERNEL_OK")
</pallas_src>

<mosaic_0001>
module attributes {stable_mosaic.version = 11 : i64} {
  func.func @transformer_block_kernel(%arg0: i32, %arg1: memref<8x384xf32, #tpu.memory_space<vmem>>, %arg2: memref<1x384xf32, #tpu.memory_space<vmem>>, %arg3: memref<1x384xf32, #tpu.memory_space<vmem>>, %arg4: memref<384x1152xbf16, #tpu.memory_space<vmem>>, %arg5: memref<384x384xbf16, #tpu.memory_space<vmem>>, %arg6: memref<1x384xf32, #tpu.memory_space<vmem>>, %arg7: memref<1x384xf32, #tpu.memory_space<vmem>>, %arg8: memref<1x384xf32, #tpu.memory_space<vmem>>, %arg9: memref<384x1536xbf16, #tpu.memory_space<vmem>>, %arg10: memref<1x1536xf32, #tpu.memory_space<vmem>>, %arg11: memref<1536x384xbf16, #tpu.memory_space<vmem>>, %arg12: memref<1x384xf32, #tpu.memory_space<vmem>>, %arg13: memref<8x384xf32, #tpu.memory_space<vmem>>, %arg14: memref<8x1152xf32, #tpu.memory_space<vmem>>, %arg15: memref<8x384xf32, #tpu.memory_space<vmem>>) attributes {dimension_semantics = [#tpu.dimension_semantics<parallel>], iteration_bounds = array<i64: 2>, scalar_prefetch = 0 : i64, scratch_operands = 2 : i64, tpu.core_type = #tpu.core_type<tc>, window_params = [{transform_indices = @transform_0, window_bounds = array<i64: 8, 384>}, {pipeline_mode = #tpu.pipeline_mode<synchronous>, transform_indices = @transform_1, window_bounds = array<i64: 1, 384>}, {pipeline_mode = #tpu.pipeline_mode<synchronous>, transform_indices = @transform_2, window_bounds = array<i64: 1, 384>}, {pipeline_mode = #tpu.pipeline_mode<synchronous>, transform_indices = @transform_3, window_bounds = array<i64: 384, 1152>}, {pipeline_mode = #tpu.pipeline_mode<synchronous>, transform_indices = @transform_4, window_bounds = array<i64: 384, 384>}, {pipeline_mode = #tpu.pipeline_mode<synchronous>, transform_indices = @transform_5, window_bounds = array<i64: 1, 384>}, {pipeline_mode = #tpu.pipeline_mode<synchronous>, transform_indices = @transform_6, window_bounds = array<i64: 1, 384>}, {pipeline_mode = #tpu.pipeline_mode<synchronous>, transform_indices = @transform_7, window_bounds = array<i64: 1, 384>}, {pipeline_mode = #tpu.pipeline_mode<synchronous>, transform_indices = @transform_8, window_bounds = array<i64: 384, 1536>}, {pipeline_mode = #tpu.pipeline_mode<synchronous>, transform_indices = @transform_9, window_bounds = array<i64: 1, 1536>}, {pipeline_mode = #tpu.pipeline_mode<synchronous>, transform_indices = @transform_10, window_bounds = array<i64: 1536, 384>}, {pipeline_mode = #tpu.pipeline_mode<synchronous>, transform_indices = @transform_11, window_bounds = array<i64: 1, 384>}, {transform_indices = @transform_12, window_bounds = array<i64: 8, 384>}]} {
    %c0 = arith.constant 0 : index
    %c0_0 = arith.constant 0 : index
    %0 = vector.load %arg1[%c0, %c0_0] : memref<8x384xf32, #tpu.memory_space<vmem>>, vector<8x384xf32>
    %c0_1 = arith.constant 0 : index
    %c0_2 = arith.constant 0 : index
    %1 = vector.load %arg2[%c0_1, %c0_2] : memref<1x384xf32, #tpu.memory_space<vmem>>, vector<1x384xf32>
    %c0_3 = arith.constant 0 : index
    %c0_4 = arith.constant 0 : index
    %2 = vector.load %arg3[%c0_3, %c0_4] : memref<1x384xf32, #tpu.memory_space<vmem>>, vector<1x384xf32>
    %cst = arith.constant dense<0.000000e+00> : vector<8xf32>
    %3 = vector.multi_reduction <add>, %0, %cst [1] : vector<8x384xf32> to vector<8xf32>
    %4 = vector.shape_cast %3 : vector<8xf32> to vector<8x1xf32>
    %cst_5 = arith.constant 3.840000e+02 : f32
    %5 = vector.broadcast %cst_5 : f32 to vector<8x1xf32>
    %6 = arith.divf %4, %5 : vector<8x1xf32>
    %7 = vector.broadcast %6 : vector<8x1xf32> to vector<8x384xf32>
    %8 = arith.subf %0, %7 : vector<8x384xf32>
    %9 = arith.mulf %8, %8 : vector<8x384xf32>
    %cst_6 = arith.constant dense<0.000000e+00> : vector<8xf32>
    %10 = vector.multi_reduction <add>, %9, %cst_6 [1] : vector<8x384xf32> to vector<8xf32>
    %11 = vector.shape_cast %10 : vector<8xf32> to vector<8x1xf32>
    %cst_7 = arith.constant 3.840000e+02 : f32
    %12 = vector.broadcast %cst_7 : f32 to vector<8x1xf32>
    %13 = arith.divf %11, %12 : vector<8x1xf32>
    %14 = vector.broadcast %6 : vector<8x1xf32> to vector<8x384xf32>
    %15 = arith.subf %0, %14 : vector<8x384xf32>
    %cst_8 = arith.constant 9.99999974E-6 : f32
    %16 = vector.broadcast %cst_8 : f32 to vector<8x1xf32>
    %17 = arith.addf %13, %16 : vector<8x1xf32>
    %18 = math.rsqrt %17 : vector<8x1xf32>
    %19 = vector.broadcast %18 : vector<8x1xf32> to vector<8x384xf32>
    %20 = arith.mulf %15, %19 : vector<8x384xf32>
    %21 = vector.broadcast %1 : vector<1x384xf32> to vector<8x384xf32>
    %22 = arith.mulf %20, %21 : vector<8x384xf32>
    %23 = vector.broadcast %2 : vector<1x384xf32> to vector<8x384xf32>
    %24 = arith.addf %22, %23 : vector<8x384xf32>
    %25 = arith.truncf %24 : vector<8x384xf32> to vector<8x384xbf16>
    %c0_9 = arith.constant 0 : index
    %c0_10 = arith.constant 0 : index
    %26 = vector.load %arg4[%c0_9, %c0_10] : memref<384x1152xbf16, #tpu.memory_space<vmem>>, vector<384x1152xbf16>
    %cst_11 = arith.constant dense<0.000000e+00> : vector<8x1152xf32>
    %27 = tpu.matmul %25, %26, %cst_11 {dimension_numbers = #tpu.dot_dimension_numbers<[1], [0], [0], [1], [0, 0, 1, 1], [], []>} : vector<8x384xbf16>, vector<384x1152xbf16>, vector<8x1152xf32> -> vector<8x1152xf32>
    %c0_12 = arith.constant 0 : index
    %c0_13 = arith.constant 0 : index
    %28 = vector.load %arg14[%c0_12, %c0_13] : memref<8x1152xf32, #tpu.memory_space<vmem>>, vector<8x1152xf32>
    tpu.vector_store %arg14[%c0_12, %c0_13], %27 {strides = array<i32>} : memref<8x1152xf32, #tpu.memory_space<vmem>>, vector<8x1152xf32>,
    %29 = tpu.iota {dimensions = array<i32: 0>} : vector<8x8xi32>
    %30 = tpu.iota {dimensions = array<i32: 1>} : vector<8x8xi32>
    %31 = arith.cmpi sge, %29, %30 : vector<8x8xi32>
    %c0_i32 = arith.constant 0 : i32
    %c8_i32 = arith.constant 8 : i32
    %32 = arith.muli %c0_i32, %c8_i32 : i32
    %33 = tpu.assume_multiple %32, 8 : i32
    %34 = arith.index_cast %33 : i32 to index
    %c0_14 = arith.constant 0 : index
    %35 = vector.load %arg14[%34, %c0_14] : memref<8x1152xf32, #tpu.memory_space<vmem>>, vector<8x128xf32>
    %36 = arith.truncf %35 : vector<8x128xf32> to vector<8x128xbf16>
    %37 = arith.index_cast %33 : i32 to index
    %c384 = arith.constant 384 : index
    %38 = vector.load %arg14[%37, %c384] : memref<8x1152xf32, #tpu.memory_space<vmem>>, vector<8x128xf32>
    %39 = arith.truncf %38 : vector<8x128xf32> to vector<8x128xbf16>
    %40 = arith.index_cast %33 : i32 to index
    %c768 = arith.constant 768 : index
    %41 = vector.load %arg14[%40, %c768] : memref<8x1152xf32, #tpu.memory_space<vmem>>, vector<8x128xf32>
    %42 = arith.truncf %41 : vector<8x128xf32> to vector<8x128xbf16>
    %43 = vector.extract_strided_slice %36 {offsets = [0, 0], sizes = [8, 64], strides = [1, 1]} : vector<8x128xbf16> to vector<8x64xbf16>
    %44 = vector.extract_strided_slice %39 {offsets = [0, 0], sizes = [8, 64], strides = [1, 1]} : vector<8x128xbf16> to vector<8x64xbf16>
    %45 = vector.extract_strided_slice %42 {offsets = [0, 0], sizes = [8, 64], strides = [1, 1]} : vector<8x128xbf16> to vector<8x64xbf16>
    %cst_15 = arith.constant dense<0.000000e+00> : vector<8x8xf32>
    %46 = tpu.matmul %43, %44, %cst_15 {dimension_numbers = #tpu.dot_dimension_numbers<[1], [1], [0], [0], [0, 0, 1, 0], [], []>} : vector<8x64xbf16>, vector<8x64xbf16>, vector<8x8xf32> -> vector<8x8xf32>
    %cst_16 = arith.constant 0xFF800000 : f32
    %47 = vector.broadcast %cst_16 : f32 to vector<8x8xf32>
    %48 = arith.select %31, %46, %47 : vector<8x8xi1>, vector<8x8xf32>
    %cst_17 = arith.constant dense<0xFF800000> : vector<8xf32>
    %49 = vector.multi_reduction <maximumf>, %48, %cst_17 [1] : vector<8x8xf32> to vector<8xf32>
    %50 = vector.shape_cast %49 : vector<8xf32> to vector<8x1xf32>
    %51 = vector.broadcast %50 : vector<8x1xf32> to vector<8x8xf32>
    %52 = arith.subf %48, %51 : vector<8x8xf32>
    %53 = math.exp %52 : vector<8x8xf32>
    %cst_18 = arith.constant dense<0.000000e+00> : vector<8xf32>
    %54 = vector.multi_reduction <add>, %53, %cst_18 [1] : vector<8x8xf32> to vector<8xf32>
    %55 = vector.shape_cast %54 : vector<8xf32> to vector<8x1xf32>
    %56 = tpu.reciprocal %55 {approx = true} : vector<8x1xf32> -> vector<8x1xf32>
    %57 = vector.broadcast %56 : vector<8x1xf32> to vector<8x8xf32>
    %58 = arith.mulf %53, %57 : vector<8x8xf32>
    %59 = arith.truncf %58 : vector<8x8xf32> to vector<8x8xbf16>
    %cst_19 = arith.constant dense<0.000000e+00> : vector<8x64xf32>
    %60 = tpu.matmul %59, %45, %cst_19 {dimension_numbers = #tpu.dot_dimension_numbers<[1], [0], [0], [1], [0, 0, 1, 1], [], []>} : vector<8x8xbf16>, vector<8x64xbf16>, vector<8x64xf32> -> vector<8x64xf32>
    %61 = vector.extract_strided_slice %36 {offsets = [0, 64], sizes = [8, 64], strides = [1, 1]} : vector<8x128xbf16> to vector<8x64xbf16>
    %62 = vector.extract_strided_slice %39 {offsets = [0, 64], sizes = [8, 64], strides = [1, 1]} : vector<8x128xbf16> to vector<8x64xbf16>
    %63 = vector.extract_strided_slice %42 {offsets = [0, 64], sizes = [8, 64], strides = [1, 1]} : vector<8x128xbf16> to vector<8x64xbf16>
    %cst_20 = arith.constant dense<0.000000e+00> : vector<8x8xf32>
    %64 = tpu.matmul %61, %62, %cst_20 {dimension_numbers = #tpu.dot_dimension_numbers<[1], [1], [0], [0], [0, 0, 1, 0], [], []>} : vector<8x64xbf16>, vector<8x64xbf16>, vector<8x8xf32> -> vector<8x8xf32>
    %cst_21 = arith.constant 0xFF800000 : f32
    %65 = vector.broadcast %cst_21 : f32 to vector<8x8xf32>
    %66 = arith.select %31, %64, %65 : vector<8x8xi1>, vector<8x8xf32>
    %cst_22 = arith.constant dense<0xFF800000> : vector<8xf32>
    %67 = vector.multi_reduction <maximumf>, %66, %cst_22 [1] : vector<8x8xf32> to vector<8xf32>
    %68 = vector.shape_cast %67 : vector<8xf32> to vector<8x1xf32>
    %69 = vector.broadcast %68 : vector<8x1xf32> to vector<8x8xf32>
    %70 = arith.subf %66, %69 : vector<8x8xf32>
    %71 = math.exp %70 : vector<8x8xf32>
    %cst_23 = arith.constant dense<0.000000e+00> : vector<8xf32>
    %72 = vector.multi_reduction <add>, %71, %cst_23 [1] : vector<8x8xf32> to vector<8xf32>
    %73 = vector.shape_cast %72 : vector<8xf32> to vector<8x1xf32>
    %74 = tpu.reciprocal %73 {approx = true} : vector<8x1xf32> -> vector<8x1xf32>
    %75 = vector.broadcast %74 : vector<8x1xf32> to vector<8x8xf32>
    %76 = arith.mulf %71, %75 : vector<8x8xf32>
    %77 = arith.truncf %76 : vector<8x8xf32> to vector<8x8xbf16>
    %cst_24 = arith.constant dense<0.000000e+00> : vector<8x64xf32>
    %78 = tpu.matmul %77, %63, %cst_24 {dimension_numbers = #tpu.dot_dimension_numbers<[1], [0], [0], [1], [0, 0, 1, 1], [], []>} : vector<8x8xbf16>, vector<8x64xbf16>, vector<8x64xf32> -> vector<8x64xf32>
    %79 = tpu.concatenate %60, %78 in 1 : vector<8x64xf32>, vector<8x64xf32> -> vector<8x128xf32>
    %80 = arith.index_cast %33 : i32 to index
    %c0_25 = arith.constant 0 : index
    %81 = vector.load %arg15[%80, %c0_25] : memref<8x384xf32, #tpu.memory_space<vmem>>, vector<8x128xf32>
    tpu.vector_store %arg15[%80, %c0_25], %79 {strides = array<i32>} : memref<8x384xf32, #tpu.memory_space<vmem>>, vector<8x128xf32>,
    %82 = arith.index_cast %33 : i32 to index
    %c128 = arith.constant 128 : index
    %83 = vector.load %arg14[%82, %c128] : memref<8x1152xf32, #tpu.memory_space<vmem>>, vector<8x128xf32>
    %84 = arith.truncf %83 : vector<8x128xf32> to vector<8x128xbf16>
    %85 = arith.index_cast %33 : i32 to index
    %c512 = arith.constant 512 : index
    %86 = vector.load %arg14[%85, %c512] : memref<8x1152xf32, #tpu.memory_space<vmem>>, vector<8x128xf32>
    %87 = arith.truncf %86 : vector<8x128xf32> to vector<8x128xbf16>
    %88 = arith.index_cast %33 : i32 to index
    %c896 = arith.constant 896 : index
    %89 = vector.load %arg14[%88, %c896] : memref<8x1152xf32, #tpu.memory_space<vmem>>, vector<8x128xf32>
    %90 = arith.truncf %89 : vector<8x128xf32> to vector<8x128xbf16>
    %91 = vector.extract_strided_slice %84 {offsets = [0, 0], sizes = [8, 64], strides = [1, 1]} : vector<8x128xbf16> to vector<8x64xbf16>
    %92 = vector.extract_strided_slice %87 {offsets = [0, 0], sizes = [8, 64], strides = [1, 1]} : vector<8x128xbf16> to vector<8x64xbf16>
    %93 = vector.extract_strided_slice %90 {offsets = [0, 0], sizes = [8, 64], strides = [1, 1]} : vector<8x128xbf16> to vector<8x64xbf16>
    %cst_26 = arith.constant dense<0.000000e+00> : vector<8x8xf32>
    %94 = tpu.matmul %91, %92, %cst_26 {dimension_numbers = #tpu.dot_dimension_numbers<[1], [1], [0], [0], [0, 0, 1, 0], [], []>} : vector<8x64xbf16>, vector<8x64xbf16>, vector<8x8xf32> -> vector<8x8xf32>
    %cst_27 = arith.constant 0xFF800000 : f32
    %95 = vector.broadcast %cst_27 : f32 to vector<8x8xf32>
    %96 = arith.select %31, %94, %95 : vector<8x8xi1>, vector<8x8xf32>
    %cst_28 = arith.constant dense<0xFF800000> : vector<8xf32>
    %97 = vector.multi_reduction <maximumf>, %96, %cst_28 [1] : vector<8x8xf32> to vector<8xf32>
    %98 = vector.shape_cast %97 : vector<8xf32> to vector<8x1xf32>
    %99 = vector.broadcast %98 : vector<8x1xf32> to vector<8x8xf32>
    %100 = arith.subf %96, %99 : vector<8x8xf32>
    %101 = math.exp %100 : vector<8x8xf32>
    %cst_29 = arith.constant dense<0.000000e+00> : vector<8xf32>
    %102 = vector.multi_reduction <add>, %101, %cst_29 [1] : vector<8x8xf32> to vector<8xf32>
    %103 = vector.shape_cast %102 : vector<8xf32> to vector<8x1xf32>
    %104 = tpu.reciprocal %103 {approx = true} : vector<8x1xf32> -> vector<8x1xf32>
    %105 = vector.broadcast %104 : vector<8x1xf32> to vector<8x8xf32>
    %106 = arith.mulf %101, %105 : vector<8x8xf32>
    %107 = arith.truncf %106 : vector<8x8xf32> to vector<8x8xbf16>
    %cst_30 = arith.constant dense<0.000000e+00> : vector<8x64xf32>
    %108 = tpu.matmul %107, %93, %cst_30 {dimension_numbers = #tpu.dot_dimension_numbers<[1], [0], [0], [1], [0, 0, 1, 1], [], []>} : vector<8x8xbf16>, vector<8x64xbf16>, vector<8x64xf32> -> vector<8x64xf32>
    %109 = vector.extract_strided_slice %84 {offsets = [0, 64], sizes = [8, 64], strides = [1, 1]} : vector<8x128xbf16> to vector<8x64xbf16>
    %110 = vector.extract_strided_slice %87 {offsets = [0, 64], sizes = [8, 64], strides = [1, 1]} : vector<8x128xbf16> to vector<8x64xbf16>
    %111 = vector.extract_strided_slice %90 {offsets = [0, 64], sizes = [8, 64], strides = [1, 1]} : vector<8x128xbf16> to vector<8x64xbf16>
    %cst_31 = arith.constant dense<0.000000e+00> : vector<8x8xf32>
    %112 = tpu.matmul %109, %110, %cst_31 {dimension_numbers = #tpu.dot_dimension_numbers<[1], [1], [0], [0], [0, 0, 1, 0], [], []>} : vector<8x64xbf16>, vector<8x64xbf16>, vector<8x8xf32> -> vector<8x8xf32>
    %cst_32 = arith.constant 0xFF800000 : f32
    %113 = vector.broadcast %cst_32 : f32 to vector<8x8xf32>
    %114 = arith.select %31, %112, %113 : vector<8x8xi1>, vector<8x8xf32>
    %cst_33 = arith.constant dense<0xFF800000> : vector<8xf32>
    %115 = vector.multi_reduction <maximumf>, %114, %cst_33 [1] : vector<8x8xf32> to vector<8xf32>
    %116 = vector.shape_cast %115 : vector<8xf32> to vector<8x1xf32>
    %117 = vector.broadcast %116 : vector<8x1xf32> to vector<8x8xf32>
    %118 = arith.subf %114, %117 : vector<8x8xf32>
    %119 = math.exp %118 : vector<8x8xf32>
    %cst_34 = arith.constant dense<0.000000e+00> : vector<8xf32>
    %120 = vector.multi_reduction <add>, %119, %cst_34 [1] : vector<8x8xf32> to vector<8xf32>
    %121 = vector.shape_cast %120 : vector<8xf32> to vector<8x1xf32>
    %122 = tpu.reciprocal %121 {approx = true} : vector<8x1xf32> -> vector<8x1xf32>
    %123 = vector.broadcast %122 : vector<8x1xf32> to vector<8x8xf32>
    %124 = arith.mulf %119, %123 : vector<8x8xf32>
    %125 = arith.truncf %124 : vector<8x8xf32> to vector<8x8xbf16>
    %cst_35 = arith.constant dense<0.000000e+00> : vector<8x64xf32>
    %126 = tpu.matmul %125, %111, %cst_35 {dimension_numbers = #tpu.dot_dimension_numbers<[1], [0], [0], [1], [0, 0, 1, 1], [], []>} : vector<8x8xbf16>, vector<8x64xbf16>, vector<8x64xf32> -> vector<8x64xf32>
    %127 = tpu.concatenate %108, %126 in 1 : vector<8x64xf32>, vector<8x64xf32> -> vector<8x128xf32>
    %128 = arith.index_cast %33 : i32 to index
    %c128_36 = arith.constant 128 : index
    %129 = vector.load %arg15[%128, %c128_36] : memref<8x384xf32, #tpu.memory_space<vmem>>, vector<8x128xf32>
    tpu.vector_store %arg15[%128, %c128_36], %127 {strides = array<i32>} : memref<8x384xf32, #tpu.memory_space<vmem>>, vector<8x128xf32>,
    %130 = arith.index_cast %33 : i32 to index
    %c256 = arith.constant 256 : index
    %131 = vector.load %arg14[%130, %c256] : memref<8x1152xf32, #tpu.memory_space<vmem>>, vector<8x128xf32>
    %132 = arith.truncf %131 : vector<8x128xf32> to vector<8x128xbf16>
    %133 = arith.index_cast %33 : i32 to index
    %c640 = arith.constant 640 : index
    %134 = vector.load %arg14[%133, %c640] : memref<8x1152xf32, #tpu.memory_space<vmem>>, vector<8x128xf32>
    %135 = arith.truncf %134 : vector<8x128xf32> to vector<8x128xbf16>
    %136 = arith.index_cast %33 : i32 to index
    %c1024 = arith.constant 1024 : index
    %137 = vector.load %arg14[%136, %c1024] : memref<8x1152xf32, #tpu.memory_space<vmem>>, vector<8x128xf32>
    %138 = arith.truncf %137 : vector<8x128xf32> to vector<8x128xbf16>
    %139 = vector.extract_strided_slice %132 {offsets = [0, 0], sizes = [8, 64], strides = [1, 1]} : vector<8x128xbf16> to vector<8x64xbf16>
    %140 = vector.extract_strided_slice %135 {offsets = [0, 0], sizes = [8, 64], strides = [1, 1]} : vector<8x128xbf16> to vector<8x64xbf16>
    %141 = vector.extract_strided_slice %138 {offsets = [0, 0], sizes = [8, 64], strides = [1, 1]} : vector<8x128xbf16> to vector<8x64xbf16>
    %cst_37 = arith.constant dense<0.000000e+00> : vector<8x8xf32>
    %142 = tpu.matmul %139, %140, %cst_37 {dimension_numbers = #tpu.dot_dimension_numbers<[1], [1], [0], [0], [0, 0, 1, 0], [], []>} : vector<8x64xbf16>, vector<8x64xbf16>, vector<8x8xf32> -> vector<8x8xf32>
    %cst_38 = arith.constant 0xFF800000 : f32
    %143 = vector.broadcast %cst_38 : f32 to vector<8x8xf32>
    %144 = arith.select %31, %142, %143 : vector<8x8xi1>, vector<8x8xf32>
    %cst_39 = arith.constant dense<0xFF800000> : vector<8xf32>
    %145 = vector.multi_reduction <maximumf>, %144, %cst_39 [1] : vector<8x8xf32> to vector<8xf32>
    %146 = vector.shape_cast %145 : vector<8xf32> to vector<8x1xf32>
    %147 = vector.broadcast %146 : vector<8x1xf32> to vector<8x8xf32>
    %148 = arith.subf %144, %147 : vector<8x8xf32>
    %149 = math.exp %148 : vector<8x8xf32>
    %cst_40 = arith.constant dense<0.000000e+00> : vector<8xf32>
    %150 = vector.multi_reduction <add>, %149, %cst_40 [1] : vector<8x8xf32> to vector<8xf32>
    %151 = vector.shape_cast %150 : vector<8xf32> to vector<8x1xf32>
    %152 = tpu.reciprocal %151 {approx = true} : vector<8x1xf32> -> vector<8x1xf32>
    %153 = vector.broadcast %152 : vector<8x1xf32> to vector<8x8xf32>
    %154 = arith.mulf %149, %153 : vector<8x8xf32>
    %155 = arith.truncf %154 : vector<8x8xf32> to vector<8x8xbf16>
    %cst_41 = arith.constant dense<0.000000e+00> : vector<8x64xf32>
    %156 = tpu.matmul %155, %141, %cst_41 {dimension_numbers = #tpu.dot_dimension_numbers<[1], [0], [0], [1], [0, 0, 1, 1], [], []>} : vector<8x8xbf16>, vector<8x64xbf16>, vector<8x64xf32> -> vector<8x64xf32>
    %157 = vector.extract_strided_slice %132 {offsets = [0, 64], sizes = [8, 64], strides = [1, 1]} : vector<8x128xbf16> to vector<8x64xbf16>
    %158 = vector.extract_strided_slice %135 {offsets = [0, 64], sizes = [8, 64], strides = [1, 1]} : vector<8x128xbf16> to vector<8x64xbf16>
    %159 = vector.extract_strided_slice %138 {offsets = [0, 64], sizes = [8, 64], strides = [1, 1]} : vector<8x128xbf16> to vector<8x64xbf16>
    %cst_42 = arith.constant dense<0.000000e+00> : vector<8x8xf32>
    %160 = tpu.matmul %157, %158, %cst_42 {dimension_numbers = #tpu.dot_dimension_numbers<[1], [1], [0], [0], [0, 0, 1, 0], [], []>} : vector<8x64xbf16>, vector<8x64xbf16>, vector<8x8xf32> -> vector<8x8xf32>
    %cst_43 = arith.constant 0xFF800000 : f32
    %161 = vector.broadcast %cst_43 : f32 to vector<8x8xf32>
    %162 = arith.select %31, %160, %161 : vector<8x8xi1>, vector<8x8xf32>
    %cst_44 = arith.constant dense<0xFF800000> : vector<8xf32>
    %163 = vector.multi_reduction <maximumf>, %162, %cst_44 [1] : vector<8x8xf32> to vector<8xf32>
    %164 = vector.shape_cast %163 : vector<8xf32> to vector<8x1xf32>
    %165 = vector.broadcast %164 : vector<8x1xf32> to vector<8x8xf32>
    %166 = arith.subf %162, %165 : vector<8x8xf32>
    %167 = math.exp %166 : vector<8x8xf32>
    %cst_45 = arith.constant dense<0.000000e+00> : vector<8xf32>
    %168 = vector.multi_reduction <add>, %167, %cst_45 [1] : vector<8x8xf32> to vector<8xf32>
    %169 = vector.shape_cast %168 : vector<8xf32> to vector<8x1xf32>
    %170 = tpu.reciprocal %169 {approx = true} : vector<8x1xf32> -> vector<8x1xf32>
    %171 = vector.broadcast %170 : vector<8x1xf32> to vector<8x8xf32>
    %172 = arith.mulf %167, %171 : vector<8x8xf32>
    %173 = arith.truncf %172 : vector<8x8xf32> to vector<8x8xbf16>
    %cst_46 = arith.constant dense<0.000000e+00> : vector<8x64xf32>
    %174 = tpu.matmul %173, %159, %cst_46 {dimension_numbers = #tpu.dot_dimension_numbers<[1], [0], [0], [1], [0, 0, 1, 1], [], []>} : vector<8x8xbf16>, vector<8x64xbf16>, vector<8x64xf32> -> vector<8x64xf32>
    %175 = tpu.concatenate %156, %174 in 1 : vector<8x64xf32>, vector<8x64xf32> -> vector<8x128xf32>
    %176 = arith.index_cast %33 : i32 to index
    %c256_47 = arith.constant 256 : index
    %177 = vector.load %arg15[%176, %c256_47] : memref<8x384xf32, #tpu.memory_space<vmem>>, vector<8x128xf32>
    tpu.vector_store %arg15[%176, %c256_47], %175 {strides = array<i32>} : memref<8x384xf32, #tpu.memory_space<vmem>>, vector<8x128xf32>,
    %c1_i32 = arith.constant 1 : i32
    %c0_48 = arith.constant 0 : index
    %c0_49 = arith.constant 0 : index
    %178 = vector.load %arg15[%c0_48, %c0_49] : memref<8x384xf32, #tpu.memory_space<vmem>>, vector<8x384xf32>
    %179 = arith.truncf %178 : vector<8x384xf32> to vector<8x384xbf16>
    %c0_50 = arith.constant 0 : index
    %c0_51 = arith.constant 0 : index
    %180 = vector.load %arg5[%c0_50, %c0_51] : memref<384x384xbf16, #tpu.memory_space<vmem>>, vector<384x384xbf16>
    %cst_52 = arith.constant dense<0.000000e+00> : vector<8x384xf32>
    %181 = tpu.matmul %179, %180, %cst_52 {dimension_numbers = #tpu.dot_dimension_numbers<[1], [0], [0], [1], [0, 0, 1, 1], [], []>} : vector<8x384xbf16>, vector<384x384xbf16>, vector<8x384xf32> -> vector<8x384xf32>
    %c0_53 = arith.constant 0 : index
    %c0_54 = arith.constant 0 : index
    %182 = vector.load %arg1[%c0_53, %c0_54] : memref<8x384xf32, #tpu.memory_space<vmem>>, vector<8x384xf32>
    %183 = arith.addf %182, %181 : vector<8x384xf32>
    %c0_55 = arith.constant 0 : index
    %c0_56 = arith.constant 0 : index
    %184 = vector.load %arg6[%c0_55, %c0_56] : memref<1x384xf32, #tpu.memory_space<vmem>>, vector<1x384xf32>
    %185 = vector.broadcast %184 : vector<1x384xf32> to vector<8x384xf32>
    %186 = arith.addf %183, %185 : vector<8x384xf32>
    %c0_57 = arith.constant 0 : index
    %c0_58 = arith.constant 0 : index
    %187 = vector.load %arg7[%c0_57, %c0_58] : memref<1x384xf32, #tpu.memory_space<vmem>>, vector<1x384xf32>
    %c0_59 = arith.constant 0 : index
    %c0_60 = arith.constant 0 : index
    %188 = vector.load %arg8[%c0_59, %c0_60] : memref<1x384xf32, #tpu.memory_space<vmem>>, vector<1x384xf32>
    %cst_61 = arith.constant dense<0.000000e+00> : vector<8xf32>
    %189 = vector.multi_reduction <add>, %186, %cst_61 [1] : vector<8x384xf32> to vector<8xf32>
    %190 = vector.shape_cast %189 : vector<8xf32> to vector<8x1xf32>
    %cst_62 = arith.constant 3.840000e+02 : f32
    %191 = vector.broadcast %cst_62 : f32 to vector<8x1xf32>
    %192 = arith.divf %190, %191 : vector<8x1xf32>
    %193 = vector.broadcast %192 : vector<8x1xf32> to vector<8x384xf32>
    %194 = arith.subf %186, %193 : vector<8x384xf32>
    %195 = arith.mulf %194, %194 : vector<8x384xf32>
    %cst_63 = arith.constant dense<0.000000e+00> : vector<8xf32>
    %196 = vector.multi_reduction <add>, %195, %cst_63 [1] : vector<8x384xf32> to vector<8xf32>
    %197 = vector.shape_cast %196 : vector<8xf32> to vector<8x1xf32>
    %cst_64 = arith.constant 3.840000e+02 : f32
    %198 = vector.broadcast %cst_64 : f32 to vector<8x1xf32>
    %199 = arith.divf %197, %198 : vector<8x1xf32>
    %200 = vector.broadcast %192 : vector<8x1xf32> to vector<8x384xf32>
    %201 = arith.subf %186, %200 : vector<8x384xf32>
    %cst_65 = arith.constant 9.99999974E-6 : f32
    %202 = vector.broadcast %cst_65 : f32 to vector<8x1xf32>
    %203 = arith.addf %199, %202 : vector<8x1xf32>
    %204 = math.rsqrt %203 : vector<8x1xf32>
    %205 = vector.broadcast %204 : vector<8x1xf32> to vector<8x384xf32>
    %206 = arith.mulf %201, %205 : vector<8x384xf32>
    %207 = vector.broadcast %187 : vector<1x384xf32> to vector<8x384xf32>
    %208 = arith.mulf %206, %207 : vector<8x384xf32>
    %209 = vector.broadcast %188 : vector<1x384xf32> to vector<8x384xf32>
    %210 = arith.addf %208, %209 : vector<8x384xf32>
    %211 = arith.truncf %210 : vector<8x384xf32> to vector<8x384xbf16>
    %c0_66 = arith.constant 0 : index
    %c0_67 = arith.constant 0 : index
    %212 = vector.load %arg9[%c0_66, %c0_67] : memref<384x1536xbf16, #tpu.memory_space<vmem>>, vector<384x1536xbf16>
    %cst_68 = arith.constant dense<0.000000e+00> : vector<8x1536xf32>
    %213 = tpu.matmul %211, %212, %cst_68 {dimension_numbers = #tpu.dot_dimension_numbers<[1], [0], [0], [1], [0, 0, 1, 1], [], []>} : vector<8x384xbf16>, vector<384x1536xbf16>, vector<8x1536xf32> -> vector<8x1536xf32>
    %c0_69 = arith.constant 0 : index
    %c0_70 = arith.constant 0 : index
    %214 = vector.load %arg10[%c0_69, %c0_70] : memref<1x1536xf32, #tpu.memory_space<vmem>>, vector<1x1536xf32>
    %215 = vector.broadcast %214 : vector<1x1536xf32> to vector<8x1536xf32>
    %216 = arith.addf %213, %215 : vector<8x1536xf32>
    %cst_71 = arith.constant 0.000000e+00 : f32
    %217 = vector.broadcast %cst_71 : f32 to vector<8x1536xf32>
    %218 = arith.maximumf %216, %217 : vector<8x1536xf32>
    %219 = arith.truncf %218 : vector<8x1536xf32> to vector<8x1536xbf16>
    %c0_72 = arith.constant 0 : index
    %c0_73 = arith.constant 0 : index
    %220 = vector.load %arg11[%c0_72, %c0_73] : memref<1536x384xbf16, #tpu.memory_space<vmem>>, vector<1536x384xbf16>
    %cst_74 = arith.constant dense<0.000000e+00> : vector<8x384xf32>
    %221 = tpu.matmul %219, %220, %cst_74 {dimension_numbers = #tpu.dot_dimension_numbers<[1], [0], [0], [1], [0, 0, 1, 1], [], []>} : vector<8x1536xbf16>, vector<1536x384xbf16>, vector<8x384xf32> -> vector<8x384xf32>
    %c0_75 = arith.constant 0 : index
    %c0_76 = arith.constant 0 : index
    %222 = vector.load %arg12[%c0_75, %c0_76] : memref<1x384xf32, #tpu.memory_space<vmem>>, vector<1x384xf32>
    %223 = vector.broadcast %222 : vector<1x384xf32> to vector<8x384xf32>
    %224 = arith.addf %221, %223 : vector<8x384xf32>
    %225 = arith.addf %186, %224 : vector<8x384xf32>
    %c0_77 = arith.constant 0 : index
    %c0_78 = arith.constant 0 : index
    %226 = vector.load %arg13[%c0_77, %c0_78] : memref<8x384xf32, #tpu.memory_space<vmem>>, vector<8x384xf32>
    tpu.vector_store %arg13[%c0_77, %c0_78], %225 {strides = array<i32>} : memref<8x384xf32, #tpu.memory_space<vmem>>, vector<8x384xf32>,
    return
  }
  func.func @transform_0(%arg0: i32) -> (i32, i32) {
    %c0_i32 = arith.constant 0 : i32
    %c0_i32_0 = arith.constant 0 : i32
    return %arg0, %c0_i32 : i32, i32
  }
  func.func @transform_1(%arg0: i32) -> (i32, i32) {
    %c0_i32 = arith.constant 0 : i32
    %c0_i32_0 = arith.constant 0 : i32
    %c0_i32_1 = arith.constant 0 : i32
    return %c0_i32, %c0_i32_0 : i32, i32
  }
  func.func @transform_2(%arg0: i32) -> (i32, i32) {
    %c0_i32 = arith.constant 0 : i32
    %c0_i32_0 = arith.constant 0 : i32
    %c0_i32_1 = arith.constant 0 : i32
    return %c0_i32, %c0_i32_0 : i32, i32
  }
  func.func @transform_3(%arg0: i32) -> (i32, i32) {
    %c0_i32 = arith.constant 0 : i32
    %c0_i32_0 = arith.constant 0 : i32
    %c0_i32_1 = arith.constant 0 : i32
    return %c0_i32, %c0_i32_0 : i32, i32
  }
  func.func @transform_4(%arg0: i32) -> (i32, i32) {
    %c0_i32 = arith.constant 0 : i32
    %c0_i32_0 = arith.constant 0 : i32
    %c0_i32_1 = arith.constant 0 : i32
    return %c0_i32, %c0_i32_0 : i32, i32
  }
  func.func @transform_5(%arg0: i32) -> (i32, i32) {
    %c0_i32 = arith.constant 0 : i32
    %c0_i32_0 = arith.constant 0 : i32
    %c0_i32_1 = arith.constant 0 : i32
    return %c0_i32, %c0_i32_0 : i32, i32
  }
  func.func @transform_6(%arg0: i32) -> (i32, i32) {
    %c0_i32 = arith.constant 0 : i32
    %c0_i32_0 = arith.constant 0 : i32
    %c0_i32_1 = arith.constant 0 : i32
    return %c0_i32, %c0_i32_0 : i32, i32
  }
  func.func @transform_7(%arg0: i32) -> (i32, i32) {
    %c0_i32 = arith.constant 0 : i32
    %c0_i32_0 = arith.constant 0 : i32
    %c0_i32_1 = arith.constant 0 : i32
    return %c0_i32, %c0_i32_0 : i32, i32
  }
  func.func @transform_8(%arg0: i32) -> (i32, i32) {
    %c0_i32 = arith.constant 0 : i32
    %c0_i32_0 = arith.constant 0 : i32
    %c0_i32_1 = arith.constant 0 : i32
    return %c0_i32, %c0_i32_0 : i32, i32
  }
  func.func @transform_9(%arg0: i32) -> (i32, i32) {
    %c0_i32 = arith.constant 0 : i32
    %c0_i32_0 = arith.constant 0 : i32
    %c0_i32_1 = arith.constant 0 : i32
    return %c0_i32, %c0_i32_0 : i32, i32
  }
  func.func @transform_10(%arg0: i32) -> (i32, i32) {
    %c0_i32 = arith.constant 0 : i32
    %c0_i32_0 = arith.constant 0 : i32
    %c0_i32_1 = arith.constant 0 : i32
    return %c0_i32, %c0_i32_0 : i32, i32
  }
  func.func @transform_11(%arg0: i32) -> (i32, i32) {
    %c0_i32 = arith.constant 0 : i32
    %c0_i32_0 = arith.constant 0 : i32
    %c0_i32_1 = arith.constant 0 : i32
    return %c0_i32, %c0_i32_0 : i32, i32
  }
  func.func @transform_12(%arg0: i32) -> (i32, i32) {
    %c0_i32 = arith.constant 0 : i32
    %c0_i32_0 = arith.constant 0 : i32
    return %arg0, %c0_i32 : i32, i32
  }
}

</mosaic_0001>

<llo_original>
// kernel: transformer_block.1
$region0: #{transformer_block.1}
  #allocation0 [shape = 'u32[]', space=smem, size = 0x4, offset = 0x4, fixed_abs, tag = 'smem constant byte address 0x4 - core index']
  #allocation1 [shape = 'u32[144,128]{1,0:T(1,128)}', space=vmem, size = 0x12000, scoped, tag = 'internal scratch']
  #allocation2 [shape = 'f32[8,1152]{1,0:T(8,128)}', space=vmem, size = 0x9000, scoped, tag = 'scratch operand']
  #allocation3 [shape = 'f32[8,384]{1,0:T(8,128)}', space=vmem, size = 0x3000, scoped, tag = 'scratch operand']
  %s0 = inlined_call_operand.hbm [shape: f32[16,384], index: 0, kind: input, shape index: {}]
  %s1 = inlined_call_operand.hbm [shape: f32[1,384], index: 1, kind: input, shape index: {}]
  %s2 = inlined_call_operand.hbm [shape: f32[1,384], index: 2, kind: input, shape index: {}]
  %s3 = inlined_call_operand.hbm [shape: bf16[384,1152], index: 3, kind: input, shape index: {}]
  %s4 = inlined_call_operand.hbm [shape: bf16[384,384], index: 4, kind: input, shape index: {}]
  %s5 = inlined_call_operand.hbm [shape: f32[1,384], index: 5, kind: input, shape index: {}]
  %s6 = inlined_call_operand.hbm [shape: f32[1,384], index: 6, kind: input, shape index: {}]
  %s7 = inlined_call_operand.hbm [shape: f32[1,384], index: 7, kind: input, shape index: {}]
  %s8 = inlined_call_operand.hbm [shape: bf16[384,1536], index: 8, kind: input, shape index: {}]
  %s9 = inlined_call_operand.hbm [shape: f32[1,1536], index: 9, kind: input, shape index: {}]
  %s10 = inlined_call_operand.hbm [shape: bf16[1536,384], index: 10, kind: input, shape index: {}]
  %s11 = inlined_call_operand.hbm [shape: f32[1,384], index: 11, kind: input, shape index: {}]
  %s12 = inlined_call_operand.hbm [shape: f32[16,384], index: 12, kind: output, shape index: {}]
  %s13 = sld [smem:[#allocation0]]
  $region129: #{transformer_block.1} parent=0
    _
  %s15 = ssub.s32 1, %s13
  %s16 = scalar_select 0, %s15, %s13
  $region1: #{transformer_block.1} parent=0
    #allocation4 [shape = 'u8[24576]{0}', space=vmem, size = 0x6000, scoped, tag = 'input window, operand 0']
    #allocation5 [shape = 's32[2]{0}', space=sflag, size = 0x8, scoped, tag = 'scoped memory for transformer_block.1']
    #allocation6 [shape = 's32[2]{0}', space=sflag, size = 0x8, scoped, tag = 'scoped memory for transformer_block.1']
    #allocation7 [shape = 'u8[1536]{0}', space=vmem, size = 0x800, scoped, tag = 'input window, operand 1, single buffered']
    #allocation8 [shape = 's32[1]{0}', space=sflag, size = 0x4, scoped, tag = 'scoped memory for transformer_block.1']
    #allocation9 [shape = 'u8[1536]{0}', space=vmem, size = 0x800, scoped, tag = 'input window, operand 2, single buffered']
    #allocation10 [shape = 'u8[884736]{0}', space=vmem, size = 0xd8000, scoped, tag = 'input window, operand 3, single buffered']
    #allocation11 [shape = 's32[1]{0}', space=sflag, size = 0x4, scoped, tag = 'scoped memory for transformer_block.1']
    #allocation12 [shape = 'u8[294912]{0}', space=vmem, size = 0x48000, scoped, tag = 'input window, operand 4, single buffered']
    #allocation13 [shape = 'u8[1536]{0}', space=vmem, size = 0x800, scoped, tag = 'input window, operand 5, single buffered']
    #allocation14 [shape = 's32[1]{0}', space=sflag, size = 0x4, scoped, tag = 'scoped memory for transformer_block.1']
    #allocation15 [shape = 'u8[1536]{0}', space=vmem, size = 0x800, scoped, tag = 'input window, operand 6, single buffered']
    #allocation16 [shape = 'u8[1536]{0}', space=vmem, size = 0x800, scoped, tag = 'input window, operand 7, single buffered']
    #allocation17 [shape = 's32[1]{0}', space=sflag, size = 0x4, scoped, tag = 'scoped memory for transformer_block.1']
    #allocation18 [shape = 'u8[1179648]{0}', space=vmem, size = 0x120000, scoped, tag = 'input window, operand 8, single buffered']
    #allocation19 [shape = 'u8[6144]{0}', space=vmem, size = 0x1800, scoped, tag = 'input window, operand 9, single buffered']
    #allocation20 [shape = 's32[1]{0}', space=sflag, size = 0x4, scoped, tag = 'scoped memory for transformer_block.1']
    #allocation21 [shape = 'u8[1179648]{0}', space=vmem, size = 0x120000, scoped, tag = 'input window, operand 10, single buffered']
    #allocation22 [shape = 'u8[1536]{0}', space=vmem, size = 0x800, scoped, tag = 'input window, operand 11, single buffered']
    #allocation23 [shape = 's32[1]{0}', space=sflag, size = 0x4, scoped, tag = 'scoped memory for transformer_block.1']
    #allocation24 [shape = 'u8[24576]{0}', space=vmem, size = 0x6000, scoped, tag = 'output window, operand 0']
    %17 = vsyncpa [#allocation5], 0
    %s18 = scalar_lea.sflag [#allocation5], 1
    %19 = vsyncpa %s18, 0
    %20 = vsyncpa [#allocation8], 0
    %21 = vsyncpa [#allocation11], 0
    %22 = vsyncpa [#allocation14], 0
    %23 = vsyncpa [#allocation17], 0
    %24 = vsyncpa [#allocation20], 0
    %25 = vsyncpa [#allocation23], 0
    %26 = vsyncpa [#allocation6], 0
    %s27 = scalar_lea.sflag [#allocation6], 1
    %28 = vsyncpa %s27, 0
    loop: start=0, step=1, limit=4
    $region2: #{transformer_block.1} parent=1 // loop_pre_header
      _
    $region3: #{transformer_block.1} parent=1 // loop_header
      %s30 = sphi 0, %s34
      %p31 = scmp.ge.s32.totalorder %s30, 4
      %s40 = sphi 0, %s42
      %s43 = sphi 0, %s40
      %s44 = sphi 0, %s43
      %s60 = sphi 0, %s44
      %s64 = sphi 0, %s64
      %s66 = sphi 0, %s64
      %s67 = sphi 0, %s66
      %s81 = sphi 0, %s67
      %s85 = sphi 0, %s85
      %s87 = sphi 0, %s85
      %s88 = sphi 0, %s87
      %s102 = sphi 0, %s88
      %s106 = sphi 0, %s106
      %s108 = sphi 0, %s106
      %s109 = sphi 0, %s108
      %s123 = sphi 0, %s109
      %s127 = sphi 0, %s127
      %s129 = sphi 0, %s127
      %s130 = sphi 0, %s129
      %s144 = sphi 0, %s130
      %s148 = sphi 0, %s148
      %s150 = sphi 0, %s148
      %s151 = sphi 0, %s150
      %s165 = sphi 0, %s151
      %s169 = sphi 0, %s169
      %s171 = sphi 0, %s169
      %s172 = sphi 0, %s171
      %s186 = sphi 0, %s172
      %s190 = sphi 0, %s190
      %s192 = sphi 0, %s190
      %s193 = sphi 0, %s192
      %s207 = sphi 0, %s193
      %s211 = sphi 0, %s211
      %s213 = sphi 0, %s211
      %s214 = sphi 0, %s213
      %s228 = sphi 0, %s214
      %s232 = sphi 0, %s232
      %s234 = sphi 0, %s232
      %s235 = sphi 0, %s234
      %s249 = sphi 0, %s235
      %s253 = sphi 0, %s253
      %s255 = sphi 0, %s253
      %s256 = sphi 0, %s255
      %s270 = sphi 0, %s256
      %s274 = sphi 0, %s274
      %s276 = sphi 0, %s274
      %s277 = sphi 0, %s276
      %s291 = sphi 0, %s277
      %s297 = sphi 0, %s299
      %s300 = sphi 0, %s297
      %s301 = sphi 0, %s300
      %s317 = sphi 0, %s301
    $region4: #{transformer_block.1} parent=1 // loop_header_branch
      %33 = sbr.rel (%p31) target = $region8
    $region5: #{transformer_block.1} parent=1 // loop_body
      %s35 = ssub.s32 %s30, 1
      %s36 = ssub.s32 %s30, 2
      %s37 = sadd.s32 %s30, 1
      %s38 = ssub.s32 %s30, %s37
      %p39 = scmp.eq.s32.totalorder %s38, 0
      %s41 = sadd.s32 %s40, 1
      %s42 = scalar_select %p39, %s40, %s41
      %p45 = pneg %p39
      %p46 = scmp.eq.s32.totalorder %s30, 1
      %p47 = por %p45, %p46
      %p48 = scmp.ne.s32.totalorder %s40, %s43
      %p49 = scmp.eq.s32.totalorder %s30, 0
      %p50 = por %p48, %p49
      %p51 = scmp.ne.s32.totalorder %s40, %s43
      %p52 = scmp.eq.s32.totalorder %s35, 1
      %p53 = por %p51, %p52
      %p54 = scmp.ne.s32.totalorder %s43, %s44
      %p55 = scmp.eq.s32.totalorder %s35, 0
      %p56 = por %p54, %p55
      %p57 = scmp.ne.s32.totalorder %s43, %s44
      %p58 = scmp.eq.s32.totalorder %s36, 1
      %p59 = por %p57, %p58
      %p61 = scmp.ne.s32.totalorder %s44, %s60
      %p62 = scmp.eq.s32.totalorder %s36, 0
      %p63 = por %p61, %p62
      %s65 = sadd.s32 %s64, 1
      %p68 = scmp.eq.s32.totalorder %s30, 1
      %p69 = scmp.ne.s32.totalorder %s64, %s66
      %p70 = scmp.eq.s32.totalorder %s30, 0
      %p71 = por %p69, %p70
      %p72 = scmp.ne.s32.totalorder %s64, %s66
      %p73 = scmp.eq.s32.totalorder %s35, 1
      %p74 = por %p72, %p73
      %p75 = scmp.ne.s32.totalorder %s66, %s67
      %p76 = scmp.eq.s32.totalorder %s35, 0
      %p77 = por %p75, %p76
      %p78 = scmp.ne.s32.totalorder %s66, %s67
      %p79 = scmp.eq.s32.totalorder %s36, 1
      %p80 = por %p78, %p79
      %p82 = scmp.ne.s32.totalorder %s67, %s81
      %p83 = scmp.eq.s32.totalorder %s36, 0
      %p84 = por %p82, %p83
      %s86 = sadd.s32 %s85, 1
      %p89 = scmp.eq.s32.totalorder %s30, 1
      %p90 = scmp.ne.s32.totalorder %s85, %s87
      %p91 = scmp.eq.s32.totalorder %s30, 0
      %p92 = por %p90, %p91
      %p93 = scmp.ne.s32.totalorder %s85, %s87
      %p94 = scmp.eq.s32.totalorder %s35, 1
      %p95 = por %p93, %p94
      %p96 = scmp.ne.s32.totalorder %s87, %s88
      %p97 = scmp.eq.s32.totalorder %s35, 0
      %p98 = por %p96, %p97
      %p99 = scmp.ne.s32.totalorder %s87, %s88
      %p100 = scmp.eq.s32.totalorder %s36, 1
      %p101 = por %p99, %p100
      %p103 = scmp.ne.s32.totalorder %s88, %s102
      %p104 = scmp.eq.s32.totalorder %s36, 0
      %p105 = por %p103, %p104
      %s107 = sadd.s32 %s106, 1
      %p110 = scmp.eq.s32.totalorder %s30, 1
      %p111 = scmp.ne.s32.totalorder %s106, %s108
      %p112 = scmp.eq.s32.totalorder %s30, 0
      %p113 = por %p111, %p112
      %p114 = scmp.ne.s32.totalorder %s106, %s108
      %p115 = scmp.eq.s32.totalorder %s35, 1
      %p116 = por %p114, %p115
      %p117 = scmp.ne.s32.totalorder %s108, %s109
      %p118 = scmp.eq.s32.totalorder %s35, 0
      %p119 = por %p117, %p118
      %p120 = scmp.ne.s32.totalorder %s108, %s109
      %p121 = scmp.eq.s32.totalorder %s36, 1
      %p122 = por %p120, %p121
      %p124 = scmp.ne.s32.totalorder %s109, %s123
      %p125 = scmp.eq.s32.totalorder %s36, 0
      %p126 = por %p124, %p125
      %s128 = sadd.s32 %s127, 1
      %p131 = scmp.eq.s32.totalorder %s30, 1
      %p132 = scmp.ne.s32.totalorder %s127, %s129
      %p133 = scmp.eq.s32.totalorder %s30, 0
      %p134 = por %p132, %p133
      %p135 = scmp.ne.s32.totalorder %s127, %s129
      %p136 = scmp.eq.s32.totalorder %s35, 1
      %p137 = por %p135, %p136
      %p138 = scmp.ne.s32.totalorder %s129, %s130
      %p139 = scmp.eq.s32.totalorder %s35, 0
      %p140 = por %p138, %p139
      %p141 = scmp.ne.s32.totalorder %s129, %s130
      %p142 = scmp.eq.s32.totalorder %s36, 1
      %p143 = por %p141, %p142
      %p145 = scmp.ne.s32.totalorder %s130, %s144
      %p146 = scmp.eq.s32.totalorder %s36, 0
      %p147 = por %p145, %p146
      %s149 = sadd.s32 %s148, 1
      %p152 = scmp.eq.s32.totalorder %s30, 1
      %p153 = scmp.ne.s32.totalorder %s148, %s150
      %p154 = scmp.eq.s32.totalorder %s30, 0
      %p155 = por %p153, %p154
      %p156 = scmp.ne.s32.totalorder %s148, %s150
      %p157 = scmp.eq.s32.totalorder %s35, 1
      %p158 = por %p156, %p157
      %p159 = scmp.ne.s32.totalorder %s150, %s151
      %p160 = scmp.eq.s32.totalorder %s35, 0
      %p161 = por %p159, %p160
      %p162 = scmp.ne.s32.totalorder %s150, %s151
      %p163 = scmp.eq.s32.totalorder %s36, 1
      %p164 = por %p162, %p163
      %p166 = scmp.ne.s32.totalorder %s151, %s165
      %p167 = scmp.eq.s32.totalorder %s36, 0
      %p168 = por %p166, %p167
      %s170 = sadd.s32 %s169, 1
      %p173 = scmp.eq.s32.totalorder %s30, 1
      %p174 = scmp.ne.s32.totalorder %s169, %s171
      %p175 = scmp.eq.s32.totalorder %s30, 0
      %p176 = por %p174, %p175
      %p177 = scmp.ne.s32.totalorder %s169, %s171
      %p178 = scmp.eq.s32.totalorder %s35, 1
      %p179 = por %p177, %p178
      %p180 = scmp.ne.s32.totalorder %s171, %s172
      %p181 = scmp.eq.s32.totalorder %s35, 0
      %p182 = por %p180, %p181
      %p183 = scmp.ne.s32.totalorder %s171, %s172
      %p184 = scmp.eq.s32.totalorder %s36, 1
      %p185 = por %p183, %p184
      %p187 = scmp.ne.s32.totalorder %s172, %s186
      %p188 = scmp.eq.s32.totalorder %s36, 0
      %p189 = por %p187, %p188
      %s191 = sadd.s32 %s190, 1
      %p194 = scmp.eq.s32.totalorder %s30, 1
      %p195 = scmp.ne.s32.totalorder %s190, %s192
      %p196 = scmp.eq.s32.totalorder %s30, 0
      %p197 = por %p195, %p196
      %p198 = scmp.ne.s32.totalorder %s190, %s192
      %p199 = scmp.eq.s32.totalorder %s35, 1
      %p200 = por %p198, %p199
      %p201 = scmp.ne.s32.totalorder %s192, %s193
      %p202 = scmp.eq.s32.totalorder %s35, 0
      %p203 = por %p201, %p202
      %p204 = scmp.ne.s32.totalorder %s192, %s193
      %p205 = scmp.eq.s32.totalorder %s36, 1
      %p206 = por %p204, %p205
      %p208 = scmp.ne.s32.totalorder %s193, %s207
      %p209 = scmp.eq.s32.totalorder %s36, 0
      %p210 = por %p208, %p209
      %s212 = sadd.s32 %s211, 1
      %p215 = scmp.eq.s32.totalorder %s30, 1
      %p216 = scmp.ne.s32.totalorder %s211, %s213
      %p217 = scmp.eq.s32.totalorder %s30, 0
      %p218 = por %p216, %p217
      %p219 = scmp.ne.s32.totalorder %s211, %s213
      %p220 = scmp.eq.s32.totalorder %s35, 1
      %p221 = por %p219, %p220
      %p222 = scmp.ne.s32.totalorder %s213, %s214
      %p223 = scmp.eq.s32.totalorder %s35, 0
      %p224 = por %p222, %p223
      %p225 = scmp.ne.s32.totalorder %s213, %s214
      %p226 = scmp.eq.s32.totalorder %s36, 1
      %p227 = por %p225, %p226
      %p229 = scmp.ne.s32.totalorder %s214, %s228
      %p230 = scmp.eq.s32.totalorder %s36, 0
      %p231 = por %p229, %p230
      %s233 = sadd.s32 %s232, 1
      %p236 = scmp.eq.s32.totalorder %s30, 1
      %p237 = scmp.ne.s32.totalorder %s232, %s234
      %p238 = scmp.eq.s32.totalorder %s30, 0
      %p239 = por %p237, %p238
      %p240 = scmp.ne.s32.totalorder %s232, %s234
      %p241 = scmp.eq.s32.totalorder %s35, 1
      %p242 = por %p240, %p241
      %p243 = scmp.ne.s32.totalorder %s234, %s235
      %p244 = scmp.eq.s32.totalorder %s35, 0
      %p245 = por %p243, %p244
      %p246 = scmp.ne.s32.totalorder %s234, %s235
      %p247 = scmp.eq.s32.totalorder %s36, 1
      %p248 = por %p246, %p247
      %p250 = scmp.ne.s32.totalorder %s235, %s249
      %p251 = scmp.eq.s32.totalorder %s36, 0
      %p252 = por %p250, %p251
      %s254 = sadd.s32 %s253, 1
      %p257 = scmp.eq.s32.totalorder %s30, 1
      %p258 = scmp.ne.s32.totalorder %s253, %s255
      %p259 = scmp.eq.s32.totalorder %s30, 0
      %p260 = por %p258, %p259
      %p261 = scmp.ne.s32.totalorder %s253, %s255
      %p262 = scmp.eq.s32.totalorder %s35, 1
      %p263 = por %p261, %p262
      %p264 = scmp.ne.s32.totalorder %s255, %s256
      %p265 = scmp.eq.s32.totalorder %s35, 0
      %p266 = por %p264, %p265
      %p267 = scmp.ne.s32.totalorder %s255, %s256
      %p268 = scmp.eq.s32.totalorder %s36, 1
      %p269 = por %p267, %p268
      %p271 = scmp.ne.s32.totalorder %s256, %s270
      %p272 = scmp.eq.s32.totalorder %s36, 0
      %p273 = por %p271, %p272
      %s275 = sadd.s32 %s274, 1
      %p278 = scmp.eq.s32.totalorder %s30, 1
      %p279 = scmp.ne.s32.totalorder %s274, %s276
      %p280 = scmp.eq.s32.totalorder %s30, 0
      %p281 = por %p279, %p280
      %p282 = scmp.ne.s32.totalorder %s274, %s276
      %p283 = scmp.eq.s32.totalorder %s35, 1
      %p284 = por %p282, %p283
      %p285 = scmp.ne.s32.totalorder %s276, %s277
      %p286 = scmp.eq.s32.totalorder %s35, 0
      %p287 = por %p285, %p286
      %p288 = scmp.ne.s32.totalorder %s276, %s277
      %p289 = scmp.eq.s32.totalorder %s36, 1
      %p290 = por %p288, %p289
      %p292 = scmp.ne.s32.totalorder %s277, %s291
      %p293 = scmp.eq.s32.totalorder %s36, 0
      %p294 = por %p292, %p293
      %s295 = ssub.s32 %s30, %s37
      %p296 = scmp.eq.s32.totalorder %s295, 0
      %s298 = sadd.s32 %s297, 1
      %s299 = scalar_select %p296, %s297, %s298
      %p302 = pneg %p296
      %p303 = scmp.eq.s32.totalorder %s30, 1
      %p304 = por %p302, %p303
      %p305 = scmp.ne.s32.totalorder %s297, %s300
      %p306 = scmp.eq.s32.totalorder %s30, 0
      %p307 = por %p305, %p306
      %p308 = scmp.ne.s32.totalorder %s297, %s300
      %p309 = scmp.eq.s32.totalorder %s35, 1
      %p310 = por %p308, %p309
      %p311 = scmp.ne.s32.totalorder %s300, %s301
      %p312 = scmp.eq.s32.totalorder %s35, 0
      %p313 = por %p311, %p312
      %p314 = scmp.ne.s32.totalorder %s300, %s301
      %p315 = scmp.eq.s32.totalorder %s36, 1
      %p316 = por %p314, %p315
      %p318 = scmp.ne.s32.totalorder %s301, %s317
      %p319 = scmp.eq.s32.totalorder %s36, 0
      %p320 = por %p318, %p319
      %p321 = scmp.le.s32.totalorder 1, %s30
      %p322 = scmp.lt.s32.totalorder %s30, 3
      %p323 = pnand %p321, %p322
      %p324 = pneg %p323
      // Predicated region
      $region9: #{transformer_block.1} parent=5 // pred_check
        _
      $region10: #{transformer_block.1} parent=5 // pred_check_branch
        %326 = sbr.rel (%p323) target = $region12
      $region11: #{transformer_block.1} parent=5 // pred_region
        %s327 = ssub.s32 %s30, 1
        // Predicated region
        $region13: #{transformer_block.1} parent=11 // pred_check
          %p328 = pneg %p77
        $region14: #{transformer_block.1} parent=11 // pred_check_branch
          %330 = sbr.rel (%p328) target = $region16
        $region15: #{transformer_block.1} parent=11 // pred_region
          %s332 = ssub.s32 48, 48
          %333 = vsyncadd [#allocation8], %s332
          %s335 = sshll.u32 [#allocation7], 4
          %s336 = int_to_ptr.vmem [resolvable:$true] %s335
          %338 = dma.hbm_to_vmem [thread:$0]  %s1, 48, %s336, [#allocation8]
        $region16: #{transformer_block.1} parent=11 // pred_fallthru
          _
        // Predicated region
        $region17: #{transformer_block.1} parent=11 // pred_check
          %p339 = pneg %p98
        $region18: #{transformer_block.1} parent=11 // pred_check_branch
          %341 = sbr.rel (%p339) target = $region20
        $region19: #{transformer_block.1} parent=11 // pred_region
          %s343 = ssub.s32 48, 48
          %344 = vsyncadd [#allocation8], %s343
          %s346 = sshll.u32 [#allocation9], 4
          %s347 = int_to_ptr.vmem [resolvable:$true] %s346
          %349 = dma.hbm_to_vmem [thread:$0]  %s2, 48, %s347, [#allocation8]
        $region20: #{transformer_block.1} parent=11 // pred_fallthru
          _
        // Predicated region
        $region21: #{transformer_block.1} parent=11 // pred_check
          %p350 = pneg %p119
        $region22: #{transformer_block.1} parent=11 // pred_check_branch
          %352 = sbr.rel (%p350) target = $region24
        $region23: #{transformer_block.1} parent=11 // pred_region
          %s354 = ssub.s32 27648, 27648
          %355 = vsyncadd [#allocation11], %s354
          %s356 = sshll.u32 [#allocation10], 4
          %s357 = int_to_ptr.vmem [resolvable:$true] %s356
          %362 = dma.hbm_to_vmem [thread:$0]  %s3, 27648, %s357, [#allocation11], 576, 576, 36
        $region24: #{transformer_block.1} parent=11 // pred_fallthru
          _
        // Predicated region
        $region25: #{transformer_block.1} parent=11 // pred_check
          %p363 = pneg %p140
        $region26: #{transformer_block.1} parent=11 // pred_check_branch
          %365 = sbr.rel (%p363) target = $region28
        $region27: #{transformer_block.1} parent=11 // pred_region
          %s367 = ssub.s32 9216, 9216
          %368 = vsyncadd [#allocation11], %s367
          %s369 = sshll.u32 [#allocation12], 4
          %s370 = int_to_ptr.vmem [resolvable:$true] %s369
          %375 = dma.hbm_to_vmem [thread:$0]  %s4, 9216, %s370, [#allocation11], 192, 192, 12
        $region28: #{transformer_block.1} parent=11 // pred_fallthru
          _
        // Predicated region
        $region29: #{transformer_block.1} parent=11 // pred_check
          %p376 = pneg %p161
        $region30: #{transformer_block.1} parent=11 // pred_check_branch
          %378 = sbr.rel (%p376) target = $region32
        $region31: #{transformer_block.1} parent=11 // pred_region
          %s380 = ssub.s32 48, 48
          %381 = vsyncadd [#allocation14], %s380
          %s383 = sshll.u32 [#allocation13], 4
          %s384 = int_to_ptr.vmem [resolvable:$true] %s383
          %386 = dma.hbm_to_vmem [thread:$0]  %s5, 48, %s384, [#allocation14]
        $region32: #{transformer_block.1} parent=11 // pred_fallthru
          _
        // Predicated region
        $region33: #{transformer_block.1} parent=11 // pred_check
          %p387 = pneg %p182
        $region34: #{transformer_block.1} parent=11 // pred_check_branch
          %389 = sbr.rel (%p387) target = $region36
        $region35: #{transformer_block.1} parent=11 // pred_region
          %s391 = ssub.s32 48, 48
          %392 = vsyncadd [#allocation14], %s391
          %s394 = sshll.u32 [#allocation15], 4
          %s395 = int_to_ptr.vmem [resolvable:$true] %s394
          %397 = dma.hbm_to_vmem [thread:$0]  %s6, 48, %s395, [#allocation14]
        $region36: #{transformer_block.1} parent=11 // pred_fallthru
          _
        // Predicated region
        $region37: #{transformer_block.1} parent=11 // pred_check
          %p398 = pneg %p203
        $region38: #{transformer_block.1} parent=11 // pred_check_branch
          %400 = sbr.rel (%p398) target = $region40
        $region39: #{transformer_block.1} parent=11 // pred_region
          %s402 = ssub.s32 48, 48
          %403 = vsyncadd [#allocation17], %s402
          %s405 = sshll.u32 [#allocation16], 4
          %s406 = int_to_ptr.vmem [resolvable:$true] %s405
          %408 = dma.hbm_to_vmem [thread:$0]  %s7, 48, %s406, [#allocation17]
        $region40: #{transformer_block.1} parent=11 // pred_fallthru
          _
        // Predicated region
        $region41: #{transformer_block.1} parent=11 // pred_check
          %p409 = pneg %p224
        $region42: #{transformer_block.1} parent=11 // pred_check_branch
          %411 = sbr.rel (%p409) target = $region44
        $region43: #{transformer_block.1} parent=11 // pred_region
          %s413 = ssub.s32 36864, 36864
          %414 = vsyncadd [#allocation17], %s413
          %s415 = sshll.u32 [#allocation18], 4
          %s416 = int_to_ptr.vmem [resolvable:$true] %s415
          %421 = dma.hbm_to_vmem [thread:$0]  %s8, 36864, %s416, [#allocation17], 768, 768, 48
        $region44: #{transformer_block.1} parent=11 // pred_fallthru
          _
        // Predicated region
        $region45: #{transformer_block.1} parent=11 // pred_check
          %p422 = pneg %p245
        $region46: #{transformer_block.1} parent=11 // pred_check_branch
          %424 = sbr.rel (%p422) target = $region48
        $region47: #{transformer_block.1} parent=11 // pred_region
          %s426 = ssub.s32 192, 192
          %427 = vsyncadd [#allocation20], %s426
          %s429 = sshll.u32 [#allocation19], 4
          %s430 = int_to_ptr.vmem [resolvable:$true] %s429
          %432 = dma.hbm_to_vmem [thread:$0]  %s9, 192, %s430, [#allocation20]
        $region48: #{transformer_block.1} parent=11 // pred_fallthru
          _
        // Predicated region
        $region49: #{transformer_block.1} parent=11 // pred_check
          %p433 = pneg %p266
        $region50: #{transformer_block.1} parent=11 // pred_check_branch
          %435 = sbr.rel (%p433) target = $region52
        $region51: #{transformer_block.1} parent=11 // pred_region
          %s437 = ssub.s32 36864, 36864
          %438 = vsyncadd [#allocation20], %s437
          %s439 = sshll.u32 [#allocation21], 4
          %s440 = int_to_ptr.vmem [resolvable:$true] %s439
          %445 = dma.hbm_to_vmem [thread:$0]  %s10, 36864, %s440, [#allocation20], 192, 192, 12
        $region52: #{transformer_block.1} parent=11 // pred_fallthru
          _
        // Predicated region
        $region53: #{transformer_block.1} parent=11 // pred_check
          %p446 = pneg %p287
        $region54: #{transformer_block.1} parent=11 // pred_check_branch
          %448 = sbr.rel (%p446) target = $region56
        $region55: #{transformer_block.1} parent=11 // pred_region
          %s450 = ssub.s32 48, 48
          %451 = vsyncadd [#allocation23], %s450
          %s453 = sshll.u32 [#allocation22], 4
          %s454 = int_to_ptr.vmem [resolvable:$true] %s453
          %456 = dma.hbm_to_vmem [thread:$0]  %s11, 48, %s454, [#allocation23]
        $region56: #{transformer_block.1} parent=11 // pred_fallthru
          _
      $region12: #{transformer_block.1} parent=5 // pred_fallthru
        _
      %p457 = scmp.lt.s32.totalorder %s30, 2
      // Predicated region
      $region57: #{transformer_block.1} parent=5 // pred_check
        %p458 = pneg %p457
      $region58: #{transformer_block.1} parent=5 // pred_check_branch
        %460 = sbr.rel (%p458) target = $region60
      $region59: #{transformer_block.1} parent=5 // pred_region
        // Predicated region
        $region61: #{transformer_block.1} parent=59 // pred_check
          %p461 = pneg %p50
        $region62: #{transformer_block.1} parent=59 // pred_check_branch
          %463 = sbr.rel (%p461) target = $region64
        $region63: #{transformer_block.1} parent=59 // pred_region
          %s464 = sand.u32 %s40, 1
          %s465 = scalar_lea.sflag [#allocation5], %s464
          %s466 = sand.u32 %s40, 1
          %s467 = smul.addr %s466, 24
          %s468 = scalar_lea.vmem [#allocation4], %s467
          %s470 = ssub.s32 384, 384
          %471 = vsyncadd %s465, %s470
          %s472 = smul.addr %s30, 3
          %s473 = smul.addr %s472, 128
          %s474 = scalar_lea.hbm %s0, %s473
          %s476 = sshll.u32 %s468, 4
          %s477 = int_to_ptr.vmem [resolvable:$true] %s476
          %479 = dma.hbm_to_vmem [thread:$0]  %s474, 384, %s477, %s465
        $region64: #{transformer_block.1} parent=59 // pred_fallthru
          _
      $region60: #{transformer_block.1} parent=5 // pred_fallthru
        _
      %p480 = scmp.le.s32.totalorder 1, %s30
      %p481 = scmp.lt.s32.totalorder %s30, 3
      %p482 = pnand %p480, %p481
      %p483 = pneg %p482
      // Predicated region
      $region65: #{transformer_block.1} parent=5 // pred_check
        _
      $region66: #{transformer_block.1} parent=5 // pred_check_branch
        %485 = sbr.rel (%p482) target = $region68
      $region67: #{transformer_block.1} parent=5 // pred_region
        %s486 = ssub.s32 %s30, 1
        %s487 = sand.u32 %s43, 1
        %s488 = scalar_lea.sflag [#allocation5], %s487
        %s489 = sand.u32 %s43, 1
        %s490 = smul.addr %s489, 24
        %s491 = scalar_lea.vmem [#allocation4], %s490
        // Predicated region
        $region69: #{transformer_block.1} parent=67 // pred_check
          %p492 = pneg %p56
        $region70: #{transformer_block.1} parent=67 // pred_check_branch
          %494 = sbr.rel (%p492) target = $region72
        $region71: #{transformer_block.1} parent=67 // pred_region
          %495 = dma.done %s488, 384
        $region72: #{transformer_block.1} parent=67 // pred_fallthru
          _
        // Predicated region
        $region73: #{transformer_block.1} parent=67 // pred_check
          %p496 = pneg %p77
        $region74: #{transformer_block.1} parent=67 // pred_check_branch
          %498 = sbr.rel (%p496) target = $region76
        $region75: #{transformer_block.1} parent=67 // pred_region
          %499 = dma.done [#allocation8], 48
        $region76: #{transformer_block.1} parent=67 // pred_fallthru
          _
        // Predicated region
        $region77: #{transformer_block.1} parent=67 // pred_check
          %p500 = pneg %p98
        $region78: #{transformer_block.1} parent=67 // pred_check_branch
          %502 = sbr.rel (%p500) target = $region80
        $region79: #{transformer_block.1} parent=67 // pred_region
          %503 = dma.done [#allocation8], 48
        $region80: #{transformer_block.1} parent=67 // pred_fallthru
          _
        // Predicated region
        $region81: #{transformer_block.1} parent=67 // pred_check
          %p504 = pneg %p119
        $region82: #{transformer_block.1} parent=67 // pred_check_branch
          %506 = sbr.rel (%p504) target = $region84
        $region83: #{transformer_block.1} parent=67 // pred_region
          %507 = dma.done [#allocation11], 27648
        $region84: #{transformer_block.1} parent=67 // pred_fallthru
          _
        // Predicated region
        $region85: #{transformer_block.1} parent=67 // pred_check
          %p508 = pneg %p140
        $region86: #{transformer_block.1} parent=67 // pred_check_branch
          %510 = sbr.rel (%p508) target = $region88
        $region87: #{transformer_block.1} parent=67 // pred_region
          %511 = dma.done [#allocation11], 9216
        $region88: #{transformer_block.1} parent=67 // pred_fallthru
          _
        // Predicated region
        $region89: #{transformer_block.1} parent=67 // pred_check
          %p512 = pneg %p161
        $region90: #{transformer_block.1} parent=67 // pred_check_branch
          %514 = sbr.rel (%p512) target = $region92
        $region91: #{transformer_block.1} parent=67 // pred_region
          %515 = dma.done [#allocation14], 48
        $region92: #{transformer_block.1} parent=67 // pred_fallthru
          _
        // Predicated region
        $region93: #{transformer_block.1} parent=67 // pred_check
          %p516 = pneg %p182
        $region94: #{transformer_block.1} parent=67 // pred_check_branch
          %518 = sbr.rel (%p516) target = $region96
        $region95: #{transformer_block.1} parent=67 // pred_region
          %519 = dma.done [#allocation14], 48
        $region96: #{transformer_block.1} parent=67 // pred_fallthru
          _
        // Predicated region
        $region97: #{transformer_block.1} parent=67 // pred_check
          %p520 = pneg %p203
        $region98: #{transformer_block.1} parent=67 // pred_check_branch
          %522 = sbr.rel (%p520) target = $region100
        $region99: #{transformer_block.1} parent=67 // pred_region
          %523 = dma.done [#allocation17], 48
        $region100: #{transformer_block.1} parent=67 // pred_fallthru
          _
        // Predicated region
        $region101: #{transformer_block.1} parent=67 // pred_check
          %p524 = pneg %p224
        $region102: #{transformer_block.1} parent=67 // pred_check_branch
          %526 = sbr.rel (%p524) target = $region104
        $region103: #{transformer_block.1} parent=67 // pred_region
          %527 = dma.done [#allocation17], 36864
        $region104: #{transformer_block.1} parent=67 // pred_fallthru
          _
        // Predicated region
        $region105: #{transformer_block.1} parent=67 // pred_check
          %p528 = pneg %p245
        $region106: #{transformer_block.1} parent=67 // pred_check_branch
          %530 = sbr.rel (%p528) target = $region108
        $region107: #{transformer_block.1} parent=67 // pred_region
          %531 = dma.done [#allocation20], 192
        $region108: #{transformer_block.1} parent=67 // pred_fallthru
          _
        // Predicated region
        $region109: #{transformer_block.1} parent=67 // pred_check
          %p532 = pneg %p266
        $region110: #{transformer_block.1} parent=67 // pred_check_branch
          %534 = sbr.rel (%p532) target = $region112
        $region111: #{transformer_block.1} parent=67 // pred_region
          %535 = dma.done [#allocation20], 36864
        $region112: #{transformer_block.1} parent=67 // pred_fallthru
          _
        // Predicated region
        $region113: #{transformer_block.1} parent=67 // pred_check
          %p536 = pneg %p287
        $region114: #{transformer_block.1} parent=67 // pred_check_branch
          %538 = sbr.rel (%p536) target = $region116
        $region115: #{transformer_block.1} parent=67 // pred_region
          %539 = dma.done [#allocation23], 48
        $region116: #{transformer_block.1} parent=67 // pred_fallthru
          _
        %s540 = sand.u32 %s43, 1
        %s541 = scalar_lea.sflag [#allocation5], %s540
        %s542 = sand.u32 %s43, 1
        %s543 = smul.addr %s542, 24
        %s544 = scalar_lea.vmem [#allocation4], %s543
        %p545 = pneg %p56
        %p546 = pneg %p53
        %p547 = pneg %p77
        %p548 = pneg %p74
        %p549 = pneg %p98
        %p550 = pneg %p95
        %p551 = pneg %p119
        %p552 = pneg %p116
        %p553 = pneg %p140
        %p554 = pneg %p137
        %p555 = pneg %p161
        %p556 = pneg %p158
        %p557 = pneg %p182
        %p558 = pneg %p179
        %p559 = pneg %p203
        %p560 = pneg %p200
        %p561 = pneg %p224
        %p562 = pneg %p221
        %p563 = pneg %p245
        %p564 = pneg %p242
        %p565 = pneg %p266
        %p566 = pneg %p263
        %p567 = pneg %p287
        %p568 = pneg %p284
        %p569 = pneg %p313
        %p570 = pneg %p310
        %s571 = sand.u32 %s300, 1
        %s572 = scalar_lea.sflag [#allocation6], %s571
        %s573 = sand.u32 %s300, 1
        %s574 = smul.addr %s573, 24
        %s575 = scalar_lea.vmem [#allocation24], %s574
        %v577 = vld [vmem:[%s491] sm:$0xff]
        %v578 = vld [vmem:[%s491 + $0x8] sm:$0xff]
        %v579 = vld [vmem:[%s491 + $0x10] sm:$0xff]
        %v580 = vld [vmem:[#allocation7] sm:$0x7]
        %v581 = vld [vmem:[#allocation9] sm:$0x7]
        %v582 = vadd.f32 %v577, %v578
        %v583 = vadd.f32 %v582, %v579
        %584 = vadd.xlane.f32.xlu0 %v583
        %v585 = vpop.xlane.xlu0 %584
        %v586 = vrcp.pop 384.0
        %v587 = vmul.f32 %v585, %v586
        %v588 = vsub.f32 %v577, %v587
        %v589 = vsub.f32 %v578, %v587
        %v590 = vsub.f32 %v579, %v587
        %v591 = vmul.f32 %v588, %v588
        %v592 = vmul.f32 %v589, %v589
        %v593 = vmul.f32 %v590, %v590
        %v594 = vadd.f32 %v591, %v592
        %v595 = vadd.f32 %v594, %v593
        %596 = vadd.xlane.f32.xlu0 %v595
        %v597 = vpop.xlane.xlu0 %596
        %v598 = vmul.f32 %v597, %v586
        %v599 = vadd.f32 %v598, 1e-05
        %v600 = vrsqrt.pop %v599
        %v601 = vmul.f32 %v588, %v600
        %v602 = vmul.f32 %v589, %v600
        %v603 = vmul.f32 %v590, %v600
        %v605 = vlaneseq
        %v606 = vshrl.u32 %v605, 7
        %v607 = vsub.s32 0, %v606
        %v608 = vrot.slane %v580, %v607
        %v609 = vlaneseq
        %v610 = vshrl.u32 %v609, 7
        %v611 = vsub.s32 1, %v610
        %v612 = vrot.slane %v580, %v611
        %v613 = vlaneseq
        %v614 = vshrl.u32 %v613, 7
        %v615 = vsub.s32 2, %v614
        %v616 = vrot.slane %v580, %v615
        %v620 = vmul.f32 %v601, %v608
        %v621 = vmul.f32 %v602, %v612
        %v622 = vmul.f32 %v603, %v616
        %v624 = vlaneseq
        %v625 = vshrl.u32 %v624, 7
        %v626 = vsub.s32 0, %v625
        %v627 = vrot.slane %v581, %v626
        %v628 = vlaneseq
        %v629 = vshrl.u32 %v628, 7
        %v630 = vsub.s32 1, %v629
        %v631 = vrot.slane %v581, %v630
        %v632 = vlaneseq
        %v633 = vshrl.u32 %v632, 7
        %v634 = vsub.s32 2, %v633
        %v635 = vrot.slane %v581, %v634
        %v639 = vadd.f32 %v620, %v627
        %v640 = vadd.f32 %v621, %v631
        %v641 = vadd.f32 %v622, %v635
        %v642 = vpack.c.bf16 %v639, %v639
        %v643 = vpack.c.bf16 %v640, %v640
        %v644 = vpack.c.bf16 %v641, %v641
        %v645 = vld [vmem:[#allocation10] sm:$0xff]
        %v646 = vld [vmem:[#allocation10 + $0x8] sm:$0xff]
        %v647 = vld [vmem:[#allocation10 + $0x10] sm:$0xff]
        %v648 = vld [vmem:[#allocation10 + $0x18] sm:$0xff]
        %v649 = vld [vmem:[#allocation10 + $0x20] sm:$0xf]
        %v650 = vld [vmem:[#allocation10 + $0x24] sm:$0xff]
        %v651 = vld [vmem:[#allocation10 + $0x2c] sm:$0xff]
        %v652 = vld [vmem:[#allocation10 + $0x34] sm:$0xff]
        %v653 = vld [vmem:[#allocation10 + $0x3c] sm:$0xff]
        %v654 = vld [vmem:[#allocation10 + $0x44] sm:$0xf]
        %v655 = vld [vmem:[#allocation10 + $0x48] sm:$0xff]
        %v656 = vld [vmem:[#allocation10 + $0x50] sm:$0xff]
        %v657 = vld [vmem:[#allocation10 + $0x58] sm:$0xff]
        %v658 = vld [vmem:[#allocation10 + $0x60] sm:$0xff]
        %v659 = vld [vmem:[#allocation10 + $0x68] sm:$0xf]
        %v660 = vld [vmem:[#allocation10 + $0x6c] sm:$0xff]
        %v661 = vld [vmem:[#allocation10 + $0x74] sm:$0xff]
        %v662 = vld [vmem:[#allocation10 + $0x7c] sm:$0xff]
        %v663 = vld [vmem:[#allocation10 + $0x84] sm:$0xff]
        %v664 = vld [vmem:[#allocation10 + $0x8c] sm:$0xf]
        %v665 = vld [vmem:[#allocation10 + $0x90] sm:$0xff]
        %v666 = vld [vmem:[#allocation10 + $0x98] sm:$0xff]
        %v667 = vld [vmem:[#allocation10 + $0xa0] sm:$0xff]
        %v668 = vld [vmem:[#allocation10 + $0xa8] sm:$0xff]
        %v669 = vld [vmem:[#allocation10 + $0xb0] sm:$0xf]
        %v670 = vld [vmem:[#allocation10 + $0xb4] sm:$0xff]
        %v671 = vld [vmem:[#allocation10 + $0xbc] sm:$0xff]
        %v672 = vld [vmem:[#allocation10 + $0xc4] sm:$0xff]
        %v673 = vld [vmem:[#allocation10 + $0xcc] sm:$0xff]
        %v674 = vld [vmem:[#allocation10 + $0xd4] sm:$0xf]
        %v675 = vld [vmem:[#allocation10 + $0xd8] sm:$0xff]
        %v676 = vld [vmem:[#allocation10 + $0xe0] sm:$0xff]
        %v677 = vld [vmem:[#allocation10 + $0xe8] sm:$0xff]
        %v678 = vld [vmem:[#allocation10 + $0xf0] sm:$0xff]
        %v679 = vld [vmem:[#allocation10 + $0xf8] sm:$0xf]
        %v680 = vld [vmem:[#allocation10 + $0xfc] sm:$0xff]
        %v681 = vld [vmem:[#allocation10 + $0x104] sm:$0xff]
        %v682 = vld [vmem:[#allocation10 + $0x10c] sm:$0xff]
        %v683 = vld [vmem:[#allocation10 + $0x114] sm:$0xff]
        %v684 = vld [vmem:[#allocation10 + $0x11c] sm:$0xf]
        %v685 = vld [vmem:[#allocation10 + $0x120] sm:$0xff]
        %v686 = vld [vmem:[#allocation10 + $0x128] sm:$0xff]
        %v687 = vld [vmem:[#allocation10 + $0x130] sm:$0xff]
        %v688 = vld [vmem:[#allocation10 + $0x138] sm:$0xff]
        %v689 = vld [vmem:[#allocation10 + $0x140] sm:$0xf]
        %v690 = vld [vmem:[#allocation10 + $0x144] sm:$0xff]
        %v691 = vld [vmem:[#allocation10 + $0x14c] sm:$0xff]
        %v692 = vld [vmem:[#allocation10 + $0x154] sm:$0xff]
        %v693 = vld [vmem:[#allocation10 + $0x15c] sm:$0xff]
        %v694 = vld [vmem:[#allocation10 + $0x164] sm:$0xf]
        %v695 = vld [vmem:[#allocation10 + $0x168] sm:$0xff]
        %v696 = vld [vmem:[#allocation10 + $0x170] sm:$0xff]
        %v697 = vld [vmem:[#allocation10 + $0x178] sm:$0xff]
        %v698 = vld [vmem:[#allocation10 + $0x180] sm:$0xff]
        %v699 = vld [vmem:[#allocation10 + $0x188] sm:$0xf]
        %v700 = vld [vmem:[#allocation10 + $0x18c] sm:$0xff]
        %v701 = vld [vmem:[#allocation10 + $0x194] sm:$0xff]
        %v702 = vld [vmem:[#allocation10 + $0x19c] sm:$0xff]
        %v703 = vld [vmem:[#allocation10 + $0x1a4] sm:$0xff]
        %v704 = vld [vmem:[#allocation10 + $0x1ac] sm:$0xf]
        %v705 = vld [vmem:[#allocation10 + $0x1b0] sm:$0xff]
        %v706 = vld [vmem:[#allocation10 + $0x1b8] sm:$0xff]
        %v707 = vld [vmem:[#allocation10 + $0x1c0] sm:$0xff]
        %v708 = vld [vmem:[#allocation10 + $0x1c8] sm:$0xff]
        %v709 = vld [vmem:[#allocation10 + $0x1d0] sm:$0xf]
        %v710 = vld [vmem:[#allocation10 + $0x1d4] sm:$0xff]
        %v711 = vld [vmem:[#allocation10 + $0x1dc] sm:$0xff]
        %v712 = vld [vmem:[#allocation10 + $0x1e4] sm:$0xff]
        %v713 = vld [vmem:[#allocation10 + $0x1ec] sm:$0xff]
        %v714 = vld [vmem:[#allocation10 + $0x1f4] sm:$0xf]
        %v715 = vld [vmem:[#allocation10 + $0x1f8] sm:$0xff]
        %v716 = vld [vmem:[#allocation10 + $0x200] sm:$0xff]
        %v717 = vld [vmem:[#allocation10 + $0x208] sm:$0xff]
        %v718 = vld [vmem:[#allocation10 + $0x210] sm:$0xff]
        %v719 = vld [vmem:[#allocation10 + $0x218] sm:$0xf]
        %v720 = vld [vmem:[#allocation10 + $0x21c] sm:$0xff]
        %v721 = vld [vmem:[#allocation10 + $0x224] sm:$0xff]
        %v722 = vld [vmem:[#allocation10 + $0x22c] sm:$0xff]
        %v723 = vld [vmem:[#allocation10 + $0x234] sm:$0xff]
        %v724 = vld [vmem:[#allocation10 + $0x23c] sm:$0xf]
        %v725 = vld [vmem:[#allocation10 + $0x240] sm:$0xff]
        %v726 = vld [vmem:[#allocation10 + $0x248] sm:$0xff]
        %v727 = vld [vmem:[#allocation10 + $0x250] sm:$0xff]
        %v728 = vld [vmem:[#allocation10 + $0x258] sm:$0xff]
        %v729 = vld [vmem:[#allocation10 + $0x260] sm:$0xf]
        %v730 = vld [vmem:[#allocation10 + $0x264] sm:$0xff]
        %v731 = vld [vmem:[#allocation10 + $0x26c] sm:$0xff]
        %v732 = vld [vmem:[#allocation10 + $0x274] sm:$0xff]
        %v733 = vld [vmem:[#allocation10 + $0x27c] sm:$0xff]
        %v734 = vld [vmem:[#allocation10 + $0x284] sm:$0xf]
        %v735 = vld [vmem:[#allocation10 + $0x288] sm:$0xff]
        %v736 = vld [vmem:[#allocation10 + $0x290] sm:$0xff]
        %v737 = vld [vmem:[#allocation10 + $0x298] sm:$0xff]
        %v738 = vld [vmem:[#allocation10 + $0x2a0] sm:$0xff]
        %v739 = vld [vmem:[#allocation10 + $0x2a8] sm:$0xf]
        %v740 = vld [vmem:[#allocation10 + $0x2ac] sm:$0xff]
        %v741 = vld [vmem:[#allocation10 + $0x2b4] sm:$0xff]
        %v742 = vld [vmem:[#allocation10 + $0x2bc] sm:$0xff]
        %v743 = vld [vmem:[#allocation10 + $0x2c4] sm:$0xff]
        %v744 = vld [vmem:[#allocation10 + $0x2cc] sm:$0xf]
        %v745 = vld [vmem:[#allocation10 + $0x2d0] sm:$0xff]
        %v746 = vld [vmem:[#allocation10 + $0x2d8] sm:$0xff]
        %v747 = vld [vmem:[#allocation10 + $0x2e0] sm:$0xff]
        %v748 = vld [vmem:[#allocation10 + $0x2e8] sm:$0xff]
        %v749 = vld [vmem:[#allocation10 + $0x2f0] sm:$0xf]
        %v750 = vld [vmem:[#allocation10 + $0x2f4] sm:$0xff]
        %v751 = vld [vmem:[#allocation10 + $0x2fc] sm:$0xff]
        %v752 = vld [vmem:[#allocation10 + $0x304] sm:$0xff]
        %v753 = vld [vmem:[#allocation10 + $0x30c] sm:$0xff]
        %v754 = vld [vmem:[#allocation10 + $0x314] sm:$0xf]
        %v755 = vld [vmem:[#allocation10 + $0x318] sm:$0xff]
        %v756 = vld [vmem:[#allocation10 + $0x320] sm:$0xff]
        %v757 = vld [vmem:[#allocation10 + $0x328] sm:$0xff]
        %v758 = vld [vmem:[#allocation10 + $0x330] sm:$0xff]
        %v759 = vld [vmem:[#allocation10 + $0x338] sm:$0xf]
        %v760 = vld [vmem:[#allocation10 + $0x33c] sm:$0xff]
        %v761 = vld [vmem:[#allocation10 + $0x344] sm:$0xff]
        %v762 = vld [vmem:[#allocation10 + $0x34c] sm:$0xff]
        %v763 = vld [vmem:[#allocation10 + $0x354] sm:$0xff]
        %v764 = vld [vmem:[#allocation10 + $0x35c] sm:$0xf]
        %v765 = vld [vmem:[#allocation10 + $0x360] sm:$0xff]
        %v766 = vld [vmem:[#allocation10 + $0x368] sm:$0xff]
        %v767 = vld [vmem:[#allocation10 + $0x370] sm:$0xff]
        %v768 = vld [vmem:[#allocation10 + $0x378] sm:$0xff]
        %v769 = vld [vmem:[#allocation10 + $0x380] sm:$0xf]
        %v770 = vld [vmem:[#allocation10 + $0x384] sm:$0xff]
        %v771 = vld [vmem:[#allocation10 + $0x38c] sm:$0xff]
        %v772 = vld [vmem:[#allocation10 + $0x394] sm:$0xff]
        %v773 = vld [vmem:[#allocation10 + $0x39c] sm:$0xff]
        %v774 = vld [vmem:[#allocation10 + $0x3a4] sm:$0xf]
        %v775 = vld [vmem:[#allocation10 + $0x3a8] sm:$0xff]
        %v776 = vld [vmem:[#allocation10 + $0x3b0] sm:$0xff]
        %v777 = vld [vmem:[#allocation10 + $0x3b8] sm:$0xff]
        %v778 = vld [vmem:[#allocation10 + $0x3c0] sm:$0xff]
        %v779 = vld [vmem:[#allocation10 + $0x3c8] sm:$0xf]
        %v780 = vld [vmem:[#allocation10 + $0x3cc] sm:$0xff]
        %v781 = vld [vmem:[#allocation10 + $0x3d4] sm:$0xff]
        %v782 = vld [vmem:[#allocation10 + $0x3dc] sm:$0xff]
        %v783 = vld [vmem:[#allocation10 + $0x3e4] sm:$0xff]
        %v784 = vld [vmem:[#allocation10 + $0x3ec] sm:$0xf]
        %v785 = vld [vmem:[#allocation10 + $0x3f0] sm:$0xff]
        %v786 = vld [vmem:[#allocation10 + $0x3f8] sm:$0xff]
        %v787 = vld [vmem:[#allocation10 + $0x400] sm:$0xff]
        %v788 = vld [vmem:[#allocation10 + $0x408] sm:$0xff]
        %v789 = vld [vmem:[#allocation10 + $0x410] sm:$0xf]
        %v790 = vld [vmem:[#allocation10 + $0x414] sm:$0xff]
        %v791 = vld [vmem:[#allocation10 + $0x41c] sm:$0xff]
        %v792 = vld [vmem:[#allocation10 + $0x424] sm:$0xff]
        %v793 = vld [vmem:[#allocation10 + $0x42c] sm:$0xff]
        %v794 = vld [vmem:[#allocation10 + $0x434] sm:$0xf]
        %v795 = vld [vmem:[#allocation10 + $0x438] sm:$0xff]
        %v796 = vld [vmem:[#allocation10 + $0x440] sm:$0xff]
        %v797 = vld [vmem:[#allocation10 + $0x448] sm:$0xff]
        %v798 = vld [vmem:[#allocation10 + $0x450] sm:$0xff]
        %v799 = vld [vmem:[#allocation10 + $0x458] sm:$0xf]
        %v800 = vld [vmem:[#allocation10 + $0x45c] sm:$0xff]
        %v801 = vld [vmem:[#allocation10 + $0x464] sm:$0xff]
        %v802 = vld [vmem:[#allocation10 + $0x46c] sm:$0xff]
        %v803 = vld [vmem:[#allocation10 + $0x474] sm:$0xff]
        %v804 = vld [vmem:[#allocation10 + $0x47c] sm:$0xf]
        %v805 = vld [vmem:[#allocation10 + $0x480] sm:$0xff]
        %v806 = vld [vmem:[#allocation10 + $0x488] sm:$0xff]
        %v807 = vld [vmem:[#allocation10 + $0x490] sm:$0xff]
        %v808 = vld [vmem:[#allocation10 + $0x498] sm:$0xff]
        %v809 = vld [vmem:[#allocation10 + $0x4a0] sm:$0xf]
        %v810 = vld [vmem:[#allocation10 + $0x4a4] sm:$0xff]
        %v811 = vld [vmem:[#allocation10 + $0x4ac] sm:$0xff]
        %v812 = vld [vmem:[#allocation10 + $0x4b4] sm:$0xff]
        %v813 = vld [vmem:[#allocation10 + $0x4bc] sm:$0xff]
        %v814 = vld [vmem:[#allocation10 + $0x4c4] sm:$0xf]
        %v815 = vld [vmem:[#allocation10 + $0x4c8] sm:$0xff]
        %v816 = vld [vmem:[#allocation10 + $0x4d0] sm:$0xff]
        %v817 = vld [vmem:[#allocation10 + $0x4d8] sm:$0xff]
        %v818 = vld [vmem:[#allocation10 + $0x4e0] sm:$0xff]
        %v819 = vld [vmem:[#allocation10 + $0x4e8] sm:$0xf]
        %v820 = vld [vmem:[#allocation10 + $0x4ec] sm:$0xff]
        %v821 = vld [vmem:[#allocation10 + $0x4f4] sm:$0xff]
        %v822 = vld [vmem:[#allocation10 + $0x4fc] sm:$0xff]
        %v823 = vld [vmem:[#allocation10 + $0x504] sm:$0xff]
        %v824 = vld [vmem:[#allocation10 + $0x50c] sm:$0xf]
        %v825 = vld [vmem:[#allocation10 + $0x510] sm:$0xff]
        %v826 = vld [vmem:[#allocation10 + $0x518] sm:$0xff]
        %v827 = vld [vmem:[#allocation10 + $0x520] sm:$0xff]
        %v828 = vld [vmem:[#allocation10 + $0x528] sm:$0xff]
        %v829 = vld [vmem:[#allocation10 + $0x530] sm:$0xf]
        %v830 = vld [vmem:[#allocation10 + $0x534] sm:$0xff]
        %v831 = vld [vmem:[#allocation10 + $0x53c] sm:$0xff]
        %v832 = vld [vmem:[#allocation10 + $0x544] sm:$0xff]
        %v833 = vld [vmem:[#allocation10 + $0x54c] sm:$0xff]
        %v834 = vld [vmem:[#allocation10 + $0x554] sm:$0xf]
        %v835 = vld [vmem:[#allocation10 + $0x558] sm:$0xff]
        %v836 = vld [vmem:[#allocation10 + $0x560] sm:$0xff]
        %v837 = vld [vmem:[#allocation10 + $0x568] sm:$0xff]
        %v838 = vld [vmem:[#allocation10 + $0x570] sm:$0xff]
        %v839 = vld [vmem:[#allocation10 + $0x578] sm:$0xf]
        %v840 = vld [vmem:[#allocation10 + $0x57c] sm:$0xff]
        %v841 = vld [vmem:[#allocation10 + $0x584] sm:$0xff]
        %v842 = vld [vmem:[#allocation10 + $0x58c] sm:$0xff]
        %v843 = vld [vmem:[#allocation10 + $0x594] sm:$0xff]
        %v844 = vld [vmem:[#allocation10 + $0x59c] sm:$0xf]
        %v845 = vld [vmem:[#allocation10 + $0x5a0] sm:$0xff]
        %v846 = vld [vmem:[#allocation10 + $0x5a8] sm:$0xff]
        %v847 = vld [vmem:[#allocation10 + $0x5b0] sm:$0xff]
        %v848 = vld [vmem:[#allocation10 + $0x5b8] sm:$0xff]
        %v849 = vld [vmem:[#allocation10 + $0x5c0] sm:$0xf]
        %v850 = vld [vmem:[#allocation10 + $0x5c4] sm:$0xff]
        %v851 = vld [vmem:[#allocation10 + $0x5cc] sm:$0xff]
        %v852 = vld [vmem:[#allocation10 + $0x5d4] sm:$0xff]
        %v853 = vld [vmem:[#allocation10 + $0x5dc] sm:$0xff]
        %v854 = vld [vmem:[#allocation10 + $0x5e4] sm:$0xf]
        %v855 = vld [vmem:[#allocation10 + $0x5e8] sm:$0xff]
        %v856 = vld [vmem:[#allocation10 + $0x5f0] sm:$0xff]
        %v857 = vld [vmem:[#allocation10 + $0x5f8] sm:$0xff]
        %v858 = vld [vmem:[#allocation10 + $0x600] sm:$0xff]
        %v859 = vld [vmem:[#allocation10 + $0x608] sm:$0xf]
        %v860 = vld [vmem:[#allocation10 + $0x60c] sm:$0xff]
        %v861 = vld [vmem:[#allocation10 + $0x614] sm:$0xff]
        %v862 = vld [vmem:[#allocation10 + $0x61c] sm:$0xff]
        %v863 = vld [vmem:[#allocation10 + $0x624] sm:$0xff]
        %v864 = vld [vmem:[#allocation10 + $0x62c] sm:$0xf]
        %v865 = vld [vmem:[#allocation10 + $0x630] sm:$0xff]
        %v866 = vld [vmem:[#allocation10 + $0x638] sm:$0xff]
        %v867 = vld [vmem:[#allocation10 + $0x640] sm:$0xff]
        %v868 = vld [vmem:[#allocation10 + $0x648] sm:$0xff]
        %v869 = vld [vmem:[#allocation10 + $0x650] sm:$0xf]
        %v870 = vld [vmem:[#allocation10 + $0x654] sm:$0xff]
        %v871 = vld [vmem:[#allocation10 + $0x65c] sm:$0xff]
        %v872 = vld [vmem:[#allocation10 + $0x664] sm:$0xff]
        %v873 = vld [vmem:[#allocation10 + $0x66c] sm:$0xff]
        %v874 = vld [vmem:[#allocation10 + $0x674] sm:$0xf]
        %v875 = vld [vmem:[#allocation10 + $0x678] sm:$0xff]
        %v876 = vld [vmem:[#allocation10 + $0x680] sm:$0xff]
        %v877 = vld [vmem:[#allocation10 + $0x688] sm:$0xff]
        %v878 = vld [vmem:[#allocation10 + $0x690] sm:$0xff]
        %v879 = vld [vmem:[#allocation10 + $0x698] sm:$0xf]
        %v880 = vld [vmem:[#allocation10 + $0x69c] sm:$0xff]
        %v881 = vld [vmem:[#allocation10 + $0x6a4] sm:$0xff]
        %v882 = vld [vmem:[#allocation10 + $0x6ac] sm:$0xff]
        %v883 = vld [vmem:[#allocation10 + $0x6b4] sm:$0xff]
        %v884 = vld [vmem:[#allocation10 + $0x6bc] sm:$0xf]
        %v1125 = vunpack.c.l.b16 %v645
        %v1126 = vunpack.c.h.b16 %v645
        %v1127 = vunpack.c.l.b16 %v646
        %v1128 = vunpack.c.h.b16 %v646
        %v1129 = vunpack.c.l.b16 %v647
        %v1130 = vunpack.c.h.b16 %v647
        %v1131 = vunpack.c.l.b16 %v648
        %v1132 = vunpack.c.h.b16 %v648
        %v1133 = vunpack.c.l.b16 %v649
        %v1134 = vunpack.c.l.b16 %v650
        %v1135 = vunpack.c.h.b16 %v650
        %v1136 = vunpack.c.l.b16 %v651
        %v1137 = vunpack.c.h.b16 %v651
        %v1138 = vunpack.c.l.b16 %v652
        %v1139 = vunpack.c.h.b16 %v652
        %v1140 = vunpack.c.l.b16 %v653
        %v1141 = vunpack.c.h.b16 %v653
        %v1142 = vunpack.c.l.b16 %v654
        %v1143 = vunpack.c.l.b16 %v655
        %v1144 = vunpack.c.h.b16 %v655
        %v1145 = vunpack.c.l.b16 %v656
        %v1146 = vunpack.c.h.b16 %v656
        %v1147 = vunpack.c.l.b16 %v657
        %v1148 = vunpack.c.h.b16 %v657
        %v1149 = vunpack.c.l.b16 %v658
        %v1150 = vunpack.c.h.b16 %v658
        %v1151 = vunpack.c.l.b16 %v659
        %v1152 = vunpack.c.l.b16 %v660
        %v1153 = vunpack.c.h.b16 %v660
        %v1154 = vunpack.c.l.b16 %v661
        %v1155 = vunpack.c.h.b16 %v661
        %v1156 = vunpack.c.l.b16 %v662
        %v1157 = vunpack.c.h.b16 %v662
        %v1158 = vunpack.c.l.b16 %v663
        %v1159 = vunpack.c.h.b16 %v663
        %v1160 = vunpack.c.l.b16 %v664
        %v1161 = vunpack.c.l.b16 %v665
        %v1162 = vunpack.c.h.b16 %v665
        %v1163 = vunpack.c.l.b16 %v666
        %v1164 = vunpack.c.h.b16 %v666
        %v1165 = vunpack.c.l.b16 %v667
        %v1166 = vunpack.c.h.b16 %v667
        %v1167 = vunpack.c.l.b16 %v668
        %v1168 = vunpack.c.h.b16 %v668
        %v1169 = vunpack.c.l.b16 %v669
        %v1170 = vunpack.c.l.b16 %v670
        %v1171 = vunpack.c.h.b16 %v670
        %v1172 = vunpack.c.l.b16 %v671
        %v1173 = vunpack.c.h.b16 %v671
        %v1174 = vunpack.c.l.b16 %v672
        %v1175 = vunpack.c.h.b16 %v672
        %v1176 = vunpack.c.l.b16 %v673
        %v1177 = vunpack.c.h.b16 %v673
        %v1178 = vunpack.c.l.b16 %v674
        %v1179 = vunpack.c.l.b16 %v675
        %v1180 = vunpack.c.h.b16 %v675
        %v1181 = vunpack.c.l.b16 %v676
        %v1182 = vunpack.c.h.b16 %v676
        %v1183 = vunpack.c.l.b16 %v677
        %v1184 = vunpack.c.h.b16 %v677
        %v1185 = vunpack.c.l.b16 %v678
        %v1186 = vunpack.c.h.b16 %v678
        %v1187 = vunpack.c.l.b16 %v679
        %v1188 = vunpack.c.l.b16 %v680
        %v1189 = vunpack.c.h.b16 %v680
        %v1190 = vunpack.c.l.b16 %v681
        %v1191 = vunpack.c.h.b16 %v681
        %v1192 = vunpack.c.l.b16 %v682
        %v1193 = vunpack.c.h.b16 %v682
        %v1194 = vunpack.c.l.b16 %v683
        %v1195 = vunpack.c.h.b16 %v683
        %v1196 = vunpack.c.l.b16 %v684
        %v1197 = vunpack.c.l.b16 %v685
        %v1198 = vunpack.c.h.b16 %v685
        %v1199 = vunpack.c.l.b16 %v686
        %v1200 = vunpack.c.h.b16 %v686
        %v1201 = vunpack.c.l.b16 %v687
        %v1202 = vunpack.c.h.b16 %v687
        %v1203 = vunpack.c.l.b16 %v688
        %v1204 = vunpack.c.h.b16 %v688
        %v1205 = vunpack.c.l.b16 %v689
        %v1206 = vunpack.c.l.b16 %v690
        %v1207 = vunpack.c.h.b16 %v690
        %v1208 = vunpack.c.l.b16 %v691
        %v1209 = vunpack.c.h.b16 %v691
        %v1210 = vunpack.c.l.b16 %v692
        %v1211 = vunpack.c.h.b16 %v692
        %v1212 = vunpack.c.l.b16 %v693
        %v1213 = vunpack.c.h.b16 %v693
        %v1214 = vunpack.c.l.b16 %v694
        %v1215 = vunpack.c.l.b16 %v695
        %v1216 = vunpack.c.h.b16 %v695
        %v1217 = vunpack.c.l.b16 %v696
        %v1218 = vunpack.c.h.b16 %v696
        %v1219 = vunpack.c.l.b16 %v697
        %v1220 = vunpack.c.h.b16 %v697
        %v1221 = vunpack.c.l.b16 %v698
        %v1222 = vunpack.c.h.b16 %v698
        %v1223 = vunpack.c.l.b16 %v699
        %v1224 = vunpack.c.l.b16 %v700
        %v1225 = vunpack.c.h.b16 %v700
        %v1226 = vunpack.c.l.b16 %v701
        %v1227 = vunpack.c.h.b16 %v701
        %v1228 = vunpack.c.l.b16 %v702
        %v1229 = vunpack.c.h.b16 %v702
        %v1230 = vunpack.c.l.b16 %v703
        %v1231 = vunpack.c.h.b16 %v703
        %v1232 = vunpack.c.l.b16 %v704
        %v1233 = vunpack.c.l.b16 %v705
        %v1234 = vunpack.c.h.b16 %v705
        %v1235 = vunpack.c.l.b16 %v706
        %v1236 = vunpack.c.h.b16 %v706
        %v1237 = vunpack.c.l.b16 %v707
        %v1238 = vunpack.c.h.b16 %v707
        %v1239 = vunpack.c.l.b16 %v708
        %v1240 = vunpack.c.h.b16 %v708
        %v1241 = vunpack.c.l.b16 %v709
        %v1242 = vunpack.c.l.b16 %v710
        %v1243 = vunpack.c.h.b16 %v710
        %v1244 = vunpack.c.l.b16 %v711
        %v1245 = vunpack.c.h.b16 %v711
        %v1246 = vunpack.c.l.b16 %v712
        %v1247 = vunpack.c.h.b16 %v712
        %v1248 = vunpack.c.l.b16 %v713
        %v1249 = vunpack.c.h.b16 %v713
        %v1250 = vunpack.c.l.b16 %v714
        %v1251 = vunpack.c.l.b16 %v715
        %v1252 = vunpack.c.h.b16 %v715
        %v1253 = vunpack.c.l.b16 %v716
        %v1254 = vunpack.c.h.b16 %v716
        %v1255 = vunpack.c.l.b16 %v717
        %v1256 = vunpack.c.h.b16 %v717
        %v1257 = vunpack.c.l.b16 %v718
        %v1258 = vunpack.c.h.b16 %v718
        %v1259 = vunpack.c.l.b16 %v719
        %v1260 = vunpack.c.l.b16 %v720
        %v1261 = vunpack.c.h.b16 %v720
        %v1262 = vunpack.c.l.b16 %v721
        %v1263 = vunpack.c.h.b16 %v721
        %v1264 = vunpack.c.l.b16 %v722
        %v1265 = vunpack.c.h.b16 %v722
        %v1266 = vunpack.c.l.b16 %v723
        %v1267 = vunpack.c.h.b16 %v723
        %v1268 = vunpack.c.l.b16 %v724
        %v1269 = vunpack.c.l.b16 %v725
        %v1270 = vunpack.c.h.b16 %v725
        %v1271 = vunpack.c.l.b16 %v726
        %v1272 = vunpack.c.h.b16 %v726
        %v1273 = vunpack.c.l.b16 %v727
        %v1274 = vunpack.c.h.b16 %v727
        %v1275 = vunpack.c.l.b16 %v728
        %v1276 = vunpack.c.h.b16 %v728
        %v1277 = vunpack.c.l.b16 %v729
        %v1278 = vunpack.c.l.b16 %v730
        %v1279 = vunpack.c.h.b16 %v730
        %v1280 = vunpack.c.l.b16 %v731
        %v1281 = vunpack.c.h.b16 %v731
        %v1282 = vunpack.c.l.b16 %v732
        %v1283 = vunpack.c.h.b16 %v732
        %v1284 = vunpack.c.l.b16 %v733
        %v1285 = vunpack.c.h.b16 %v733
        %v1286 = vunpack.c.l.b16 %v734
        %v1287 = vunpack.c.l.b16 %v735
        %v1288 = vunpack.c.h.b16 %v735
        %v1289 = vunpack.c.l.b16 %v736
        %v1290 = vunpack.c.h.b16 %v736
        %v1291 = vunpack.c.l.b16 %v737
        %v1292 = vunpack.c.h.b16 %v737
        %v1293 = vunpack.c.l.b16 %v738
        %v1294 = vunpack.c.h.b16 %v738
        %v1295 = vunpack.c.l.b16 %v739
        %v1296 = vunpack.c.l.b16 %v740
        %v1297 = vunpack.c.h.b16 %v740
        %v1298 = vunpack.c.l.b16 %v741
        %v1299 = vunpack.c.h.b16 %v741
        %v1300 = vunpack.c.l.b16 %v742
        %v1301 = vunpack.c.h.b16 %v742
        %v1302 = vunpack.c.l.b16 %v743
        %v1303 = vunpack.c.h.b16 %v743
        %v1304 = vunpack.c.l.b16 %v744
        %v1305 = vunpack.c.l.b16 %v745
        %v1306 = vunpack.c.h.b16 %v745
        %v1307 = vunpack.c.l.b16 %v746
        %v1308 = vunpack.c.h.b16 %v746
        %v1309 = vunpack.c.l.b16 %v747
        %v1310 = vunpack.c.h.b16 %v747
        %v1311 = vunpack.c.l.b16 %v748
        %v1312 = vunpack.c.h.b16 %v748
        %v1313 = vunpack.c.l.b16 %v749
        %v1314 = vunpack.c.l.b16 %v750
        %v1315 = vunpack.c.h.b16 %v750
        %v1316 = vunpack.c.l.b16 %v751
        %v1317 = vunpack.c.h.b16 %v751
        %v1318 = vunpack.c.l.b16 %v752
        %v1319 = vunpack.c.h.b16 %v752
        %v1320 = vunpack.c.l.b16 %v753
        %v1321 = vunpack.c.h.b16 %v753
        %v1322 = vunpack.c.l.b16 %v754
        %v1323 = vunpack.c.l.b16 %v755
        %v1324 = vunpack.c.h.b16 %v755
        %v1325 = vunpack.c.l.b16 %v756
        %v1326 = vunpack.c.h.b16 %v756
        %v1327 = vunpack.c.l.b16 %v757
        %v1328 = vunpack.c.h.b16 %v757
        %v1329 = vunpack.c.l.b16 %v758
        %v1330 = vunpack.c.h.b16 %v758
        %v1331 = vunpack.c.l.b16 %v759
        %v1332 = vunpack.c.l.b16 %v760
        %v1333 = vunpack.c.h.b16 %v760
        %v1334 = vunpack.c.l.b16 %v761
        %v1335 = vunpack.c.h.b16 %v761
        %v1336 = vunpack.c.l.b16 %v762
        %v1337 = vunpack.c.h.b16 %v762
        %v1338 = vunpack.c.l.b16 %v763
        %v1339 = vunpack.c.h.b16 %v763
        %v1340 = vunpack.c.l.b16 %v764
        %v1341 = vunpack.c.l.b16 %v765
        %v1342 = vunpack.c.h.b16 %v765
        %v1343 = vunpack.c.l.b16 %v766
        %v1344 = vunpack.c.h.b16 %v766
        %v1345 = vunpack.c.l.b16 %v767
        %v1346 = vunpack.c.h.b16 %v767
        %v1347 = vunpack.c.l.b16 %v768
        %v1348 = vunpack.c.h.b16 %v768
        %v1349 = vunpack.c.l.b16 %v769
        %v1350 = vunpack.c.l.b16 %v770
        %v1351 = vunpack.c.h.b16 %v770
        %v1352 = vunpack.c.l.b16 %v771
        %v1353 = vunpack.c.h.b16 %v771
        %v1354 = vunpack.c.l.b16 %v772
        %v1355 = vunpack.c.h.b16 %v772
        %v1356 = vunpack.c.l.b16 %v773
        %v1357 = vunpack.c.h.b16 %v773
        %v1358 = vunpack.c.l.b16 %v774
        %v1359 = vunpack.c.l.b16 %v775
        %v1360 = vunpack.c.h.b16 %v775
        %v1361 = vunpack.c.l.b16 %v776
        %v1362 = vunpack.c.h.b16 %v776
        %v1363 = vunpack.c.l.b16 %v777
        %v1364 = vunpack.c.h.b16 %v777
        %v1365 = vunpack.c.l.b16 %v778
        %v1366 = vunpack.c.h.b16 %v778
        %v1367 = vunpack.c.l.b16 %v779
        %v1368 = vunpack.c.l.b16 %v780
        %v1369 = vunpack.c.h.b16 %v780
        %v1370 = vunpack.c.l.b16 %v781
        %v1371 = vunpack.c.h.b16 %v781
        %v1372 = vunpack.c.l.b16 %v782
        %v1373 = vunpack.c.h.b16 %v782
        %v1374 = vunpack.c.l.b16 %v783
        %v1375 = vunpack.c.h.b16 %v783
        %v1376 = vunpack.c.l.b16 %v784
        %v1377 = vunpack.c.l.b16 %v785
        %v1378 = vunpack.c.h.b16 %v785
        %v1379 = vunpack.c.l.b16 %v786
        %v1380 = vunpack.c.h.b16 %v786
        %v1381 = vunpack.c.l.b16 %v787
        %v1382 = vunpack.c.h.b16 %v787
        %v1383 = vunpack.c.l.b16 %v788
        %v1384 = vunpack.c.h.b16 %v788
        %v1385 = vunpack.c.l.b16 %v789
        %v1386 = vunpack.c.l.b16 %v790
        %v1387 = vunpack.c.h.b16 %v790
        %v1388 = vunpack.c.l.b16 %v791
        %v1389 = vunpack.c.h.b16 %v791
        %v1390 = vunpack.c.l.b16 %v792
        %v1391 = vunpack.c.h.b16 %v792
        %v1392 = vunpack.c.l.b16 %v793
        %v1393 = vunpack.c.h.b16 %v793
        %v1394 = vunpack.c.l.b16 %v794
        %v1395 = vunpack.c.l.b16 %v795
        %v1396 = vunpack.c.h.b16 %v795
        %v1397 = vunpack.c.l.b16 %v796
        %v1398 = vunpack.c.h.b16 %v796
        %v1399 = vunpack.c.l.b16 %v797
        %v1400 = vunpack.c.h.b16 %v797
        %v1401 = vunpack.c.l.b16 %v798
        %v1402 = vunpack.c.h.b16 %v798
        %v1403 = vunpack.c.l.b16 %v799
        %v1404 = vunpack.c.l.b16 %v800
        %v1405 = vunpack.c.h.b16 %v800
        %v1406 = vunpack.c.l.b16 %v801
        %v1407 = vunpack.c.h.b16 %v801
        %v1408 = vunpack.c.l.b16 %v802
        %v1409 = vunpack.c.h.b16 %v802
        %v1410 = vunpack.c.l.b16 %v803
        %v1411 = vunpack.c.h.b16 %v803
        %v1412 = vunpack.c.l.b16 %v804
        %v1413 = vunpack.c.l.b16 %v805
        %v1414 = vunpack.c.h.b16 %v805
        %v1415 = vunpack.c.l.b16 %v806
        %v1416 = vunpack.c.h.b16 %v806
        %v1417 = vunpack.c.l.b16 %v807
        %v1418 = vunpack.c.h.b16 %v807
        %v1419 = vunpack.c.l.b16 %v808
        %v1420 = vunpack.c.h.b16 %v808
        %v1421 = vunpack.c.l.b16 %v809
        %v1422 = vunpack.c.l.b16 %v810
        %v1423 = vunpack.c.h.b16 %v810
        %v1424 = vunpack.c.l.b16 %v811
        %v1425 = vunpack.c.h.b16 %v811
        %v1426 = vunpack.c.l.b16 %v812
        %v1427 = vunpack.c.h.b16 %v812
        %v1428 = vunpack.c.l.b16 %v813
        %v1429 = vunpack.c.h.b16 %v813
        %v1430 = vunpack.c.l.b16 %v814
        %v1431 = vunpack.c.l.b16 %v815
        %v1432 = vunpack.c.h.b16 %v815
        %v1433 = vunpack.c.l.b16 %v816
        %v1434 = vunpack.c.h.b16 %v816
        %v1435 = vunpack.c.l.b16 %v817
        %v1436 = vunpack.c.h.b16 %v817
        %v1437 = vunpack.c.l.b16 %v818
        %v1438 = vunpack.c.h.b16 %v818
        %v1439 = vunpack.c.l.b16 %v819
        %v1440 = vunpack.c.l.b16 %v820
        %v1441 = vunpack.c.h.b16 %v820
        %v1442 = vunpack.c.l.b16 %v821
        %v1443 = vunpack.c.h.b16 %v821
        %v1444 = vunpack.c.l.b16 %v822
        %v1445 = vunpack.c.h.b16 %v822
        %v1446 = vunpack.c.l.b16 %v823
        %v1447 = vunpack.c.h.b16 %v823
        %v1448 = vunpack.c.l.b16 %v824
        %v1449 = vunpack.c.l.b16 %v825
        %v1450 = vunpack.c.h.b16 %v825
        %v1451 = vunpack.c.l.b16 %v826
        %v1452 = vunpack.c.h.b16 %v826
        %v1453 = vunpack.c.l.b16 %v827
        %v1454 = vunpack.c.h.b16 %v827
        %v1455 = vunpack.c.l.b16 %v828
        %v1456 = vunpack.c.h.b16 %v828
        %v1457 = vunpack.c.l.b16 %v829
        %v1458 = vunpack.c.l.b16 %v830
        %v1459 = vunpack.c.h.b16 %v830
        %v1460 = vunpack.c.l.b16 %v831
        %v1461 = vunpack.c.h.b16 %v831
        %v1462 = vunpack.c.l.b16 %v832
        %v1463 = vunpack.c.h.b16 %v832
        %v1464 = vunpack.c.l.b16 %v833
        %v1465 = vunpack.c.h.b16 %v833
        %v1466 = vunpack.c.l.b16 %v834
        %v1467 = vunpack.c.l.b16 %v835
        %v1468 = vunpack.c.h.b16 %v835
        %v1469 = vunpack.c.l.b16 %v836
        %v1470 = vunpack.c.h.b16 %v836
        %v1471 = vunpack.c.l.b16 %v837
        %v1472 = vunpack.c.h.b16 %v837
        %v1473 = vunpack.c.l.b16 %v838
        %v1474 = vunpack.c.h.b16 %v838
        %v1475 = vunpack.c.l.b16 %v839
        %v1476 = vunpack.c.l.b16 %v840
        %v1477 = vunpack.c.h.b16 %v840
        %v1478 = vunpack.c.l.b16 %v841
        %v1479 = vunpack.c.h.b16 %v841
        %v1480 = vunpack.c.l.b16 %v842
        %v1481 = vunpack.c.h.b16 %v842
        %v1482 = vunpack.c.l.b16 %v843
        %v1483 = vunpack.c.h.b16 %v843
        %v1484 = vunpack.c.l.b16 %v844
        %v1485 = vunpack.c.l.b16 %v845
        %v1486 = vunpack.c.h.b16 %v845
        %v1487 = vunpack.c.l.b16 %v846
        %v1488 = vunpack.c.h.b16 %v846
        %v1489 = vunpack.c.l.b16 %v847
        %v1490 = vunpack.c.h.b16 %v847
        %v1491 = vunpack.c.l.b16 %v848
        %v1492 = vunpack.c.h.b16 %v848
        %v1493 = vunpack.c.l.b16 %v849
        %v1494 = vunpack.c.l.b16 %v850
        %v1495 = vunpack.c.h.b16 %v850
        %v1496 = vunpack.c.l.b16 %v851
        %v1497 = vunpack.c.h.b16 %v851
        %v1498 = vunpack.c.l.b16 %v852
        %v1499 = vunpack.c.h.b16 %v852
        %v1500 = vunpack.c.l.b16 %v853
        %v1501 = vunpack.c.h.b16 %v853
        %v1502 = vunpack.c.l.b16 %v854
        %v1503 = vunpack.c.l.b16 %v855
        %v1504 = vunpack.c.h.b16 %v855
        %v1505 = vunpack.c.l.b16 %v856
        %v1506 = vunpack.c.h.b16 %v856
        %v1507 = vunpack.c.l.b16 %v857
        %v1508 = vunpack.c.h.b16 %v857
        %v1509 = vunpack.c.l.b16 %v858
        %v1510 = vunpack.c.h.b16 %v858
        %v1511 = vunpack.c.l.b16 %v859
        %v1512 = vunpack.c.l.b16 %v860
        %v1513 = vunpack.c.h.b16 %v860
        %v1514 = vunpack.c.l.b16 %v861
        %v1515 = vunpack.c.h.b16 %v861
        %v1516 = vunpack.c.l.b16 %v862
        %v1517 = vunpack.c.h.b16 %v862
        %v1518 = vunpack.c.l.b16 %v863
        %v1519 = vunpack.c.h.b16 %v863
        %v1520 = vunpack.c.l.b16 %v864
        %v1521 = vunpack.c.l.b16 %v865
        %v1522 = vunpack.c.h.b16 %v865
        %v1523 = vunpack.c.l.b16 %v866
        %v1524 = vunpack.c.h.b16 %v866
        %v1525 = vunpack.c.l.b16 %v867
        %v1526 = vunpack.c.h.b16 %v867
        %v1527 = vunpack.c.l.b16 %v868
        %v1528 = vunpack.c.h.b16 %v868
        %v1529 = vunpack.c.l.b16 %v869
        %v1530 = vunpack.c.l.b16 %v870
        %v1531 = vunpack.c.h.b16 %v870
        %v1532 = vunpack.c.l.b16 %v871
        %v1533 = vunpack.c.h.b16 %v871
        %v1534 = vunpack.c.l.b16 %v872
        %v1535 = vunpack.c.h.b16 %v872
        %v1536 = vunpack.c.l.b16 %v873
        %v1537 = vunpack.c.h.b16 %v873
        %v1538 = vunpack.c.l.b16 %v874
        %v1539 = vunpack.c.l.b16 %v875
        %v1540 = vunpack.c.h.b16 %v875
        %v1541 = vunpack.c.l.b16 %v876
        %v1542 = vunpack.c.h.b16 %v876
        %v1543 = vunpack.c.l.b16 %v877
        %v1544 = vunpack.c.h.b16 %v877
        %v1545 = vunpack.c.l.b16 %v878
        %v1546 = vunpack.c.h.b16 %v878
        %v1547 = vunpack.c.l.b16 %v879
        %v1548 = vunpack.c.l.b16 %v880
        %v1549 = vunpack.c.h.b16 %v880
        %v1550 = vunpack.c.l.b16 %v881
        %v1551 = vunpack.c.h.b16 %v881
        %v1552 = vunpack.c.l.b16 %v882
        %v1553 = vunpack.c.h.b16 %v882
        %v1554 = vunpack.c.l.b16 %v883
        %v1555 = vunpack.c.h.b16 %v883
        %v1556 = vunpack.c.l.b16 %v884
        %v1557 = vpack.c.b16 %v1134, %v1125
        %v1558 = vpack.c.b16 %v1135, %v1126
        %v1559 = vpack.c.b16 %v1136, %v1127
        %v1560 = vpack.c.b16 %v1137, %v1128
        %v1561 = vpack.c.b16 %v1138, %v1129
        %v1562 = vpack.c.b16 %v1139, %v1130
        %v1563 = vpack.c.b16 %v1140, %v1131
        %v1564 = vpack.c.b16 %v1141, %v1132
        %v1565 = vpack.c.b16 %v1142, %v1133
        %v1566 = vpack.c.b16 %v1152, %v1143
        %v1567 = vpack.c.b16 %v1153, %v1144
        %v1568 = vpack.c.b16 %v1154, %v1145
        %v1569 = vpack.c.b16 %v1155, %v1146
        %v1570 = vpack.c.b16 %v1156, %v1147
        %v1571 = vpack.c.b16 %v1157, %v1148
        %v1572 = vpack.c.b16 %v1158, %v1149
        %v1573 = vpack.c.b16 %v1159, %v1150
        %v1574 = vpack.c.b16 %v1160, %v1151
        %v1575 = vpack.c.b16 %v1170, %v1161
        %v1576 = vpack.c.b16 %v1171, %v1162
        %v1577 = vpack.c.b16 %v1172, %v1163
        %v1578 = vpack.c.b16 %v1173, %v1164
        %v1579 = vpack.c.b16 %v1174, %v1165
        %v1580 = vpack.c.b16 %v1175, %v1166
        %v1581 = vpack.c.b16 %v1176, %v1167
        %v1582 = vpack.c.b16 %v1177, %v1168
        %v1583 = vpack.c.b16 %v1178, %v1169
        %v1584 = vpack.c.b16 %v1188, %v1179
        %v1585 = vpack.c.b16 %v1189, %v1180
        %v1586 = vpack.c.b16 %v1190, %v1181
        %v1587 = vpack.c.b16 %v1191, %v1182
        %v1588 = vpack.c.b16 %v1192, %v1183
        %v1589 = vpack.c.b16 %v1193, %v1184
        %v1590 = vpack.c.b16 %v1194, %v1185
        %v1591 = vpack.c.b16 %v1195, %v1186
        %v1592 = vpack.c.b16 %v1196, %v1187
        %v1593 = vpack.c.b16 %v1206, %v1197
        %v1594 = vpack.c.b16 %v1207, %v1198
        %v1595 = vpack.c.b16 %v1208, %v1199
        %v1596 = vpack.c.b16 %v1209, %v1200
        %v1597 = vpack.c.b16 %v1210, %v1201
        %v1598 = vpack.c.b16 %v1211, %v1202
        %v1599 = vpack.c.b16 %v1212, %v1203
        %v1600 = vpack.c.b16 %v1213, %v1204
        %v1601 = vpack.c.b16 %v1214, %v1205
        %v1602 = vpack.c.b16 %v1224, %v1215
        %v1603 = vpack.c.b16 %v1225, %v1216
        %v1604 = vpack.c.b16 %v1226, %v1217
        %v1605 = vpack.c.b16 %v1227, %v1218
        %v1606 = vpack.c.b16 %v1228, %v1219
        %v1607 = vpack.c.b16 %v1229, %v1220
        %v1608 = vpack.c.b16 %v1230, %v1221
        %v1609 = vpack.c.b16 %v1231, %v1222
        %v1610 = vpack.c.b16 %v1232, %v1223
        %v1611 = vpack.c.b16 %v1242, %v1233
        %v1612 = vpack.c.b16 %v1243, %v1234
        %v1613 = vpack.c.b16 %v1244, %v1235
        %v1614 = vpack.c.b16 %v1245, %v1236
        %v1615 = vpack.c.b16 %v1246, %v1237
        %v1616 = vpack.c.b16 %v1247, %v1238
        %v1617 = vpack.c.b16 %v1248, %v1239
        %v1618 = vpack.c.b16 %v1249, %v1240
        %v1619 = vpack.c.b16 %v1250, %v1241
        %v1620 = vpack.c.b16 %v1260, %v1251
        %v1621 = vpack.c.b16 %v1261, %v1252
        %v1622 = vpack.c.b16 %v1262, %v1253
        %v1623 = vpack.c.b16 %v1263, %v1254
        %v1624 = vpack.c.b16 %v1264, %v1255
        %v1625 = vpack.c.b16 %v1265, %v1256
        %v1626 = vpack.c.b16 %v1266, %v1257
        %v1627 = vpack.c.b16 %v1267, %v1258
        %v1628 = vpack.c.b16 %v1268, %v1259
        %v1629 = vpack.c.b16 %v1278, %v1269
        %v1630 = vpack.c.b16 %v1279, %v1270
        %v1631 = vpack.c.b16 %v1280, %v1271
        %v1632 = vpack.c.b16 %v1281, %v1272
        %v1633 = vpack.c.b16 %v1282, %v1273
        %v1634 = vpack.c.b16 %v1283, %v1274
        %v1635 = vpack.c.b16 %v1284, %v1275
        %v1636 = vpack.c.b16 %v1285, %v1276
        %v1637 = vpack.c.b16 %v1286, %v1277
        %v1638 = vpack.c.b16 %v1296, %v1287
        %v1639 = vpack.c.b16 %v1297, %v1288
        %v1640 = vpack.c.b16 %v1298, %v1289
        %v1641 = vpack.c.b16 %v1299, %v1290
        %v1642 = vpack.c.b16 %v1300, %v1291
        %v1643 = vpack.c.b16 %v1301, %v1292
        %v1644 = vpack.c.b16 %v1302, %v1293
        %v1645 = vpack.c.b16 %v1303, %v1294
        %v1646 = vpack.c.b16 %v1304, %v1295
        %v1647 = vpack.c.b16 %v1314, %v1305
        %v1648 = vpack.c.b16 %v1315, %v1306
        %v1649 = vpack.c.b16 %v1316, %v1307
        %v1650 = vpack.c.b16 %v1317, %v1308
        %v1651 = vpack.c.b16 %v1318, %v1309
        %v1652 = vpack.c.b16 %v1319, %v1310
        %v1653 = vpack.c.b16 %v1320, %v1311
        %v1654 = vpack.c.b16 %v1321, %v1312
        %v1655 = vpack.c.b16 %v1322, %v1313
        %v1656 = vpack.c.b16 %v1332, %v1323
        %v1657 = vpack.c.b16 %v1333, %v1324
        %v1658 = vpack.c.b16 %v1334, %v1325
        %v1659 = vpack.c.b16 %v1335, %v1326
        %v1660 = vpack.c.b16 %v1336, %v1327
        %v1661 = vpack.c.b16 %v1337, %v1328
        %v1662 = vpack.c.b16 %v1338, %v1329
        %v1663 = vpack.c.b16 %v1339, %v1330
        %v1664 = vpack.c.b16 %v1340, %v1331
        %v1665 = vpack.c.b16 %v1350, %v1341
        %v1666 = vpack.c.b16 %v1351, %v1342
        %v1667 = vpack.c.b16 %v1352, %v1343
        %v1668 = vpack.c.b16 %v1353, %v1344
        %v1669 = vpack.c.b16 %v1354, %v1345
        %v1670 = vpack.c.b16 %v1355, %v1346
        %v1671 = vpack.c.b16 %v1356, %v1347
        %v1672 = vpack.c.b16 %v1357, %v1348
        %v1673 = vpack.c.b16 %v1358, %v1349
        %v1674 = vpack.c.b16 %v1368, %v1359
        %v1675 = vpack.c.b16 %v1369, %v1360
        %v1676 = vpack.c.b16 %v1370, %v1361
        %v1677 = vpack.c.b16 %v1371, %v1362
        %v1678 = vpack.c.b16 %v1372, %v1363
        %v1679 = vpack.c.b16 %v1373, %v1364
        %v1680 = vpack.c.b16 %v1374, %v1365
        %v1681 = vpack.c.b16 %v1375, %v1366
        %v1682 = vpack.c.b16 %v1376, %v1367
        %v1683 = vpack.c.b16 %v1386, %v1377
        %v1684 = vpack.c.b16 %v1387, %v1378
        %v1685 = vpack.c.b16 %v1388, %v1379
        %v1686 = vpack.c.b16 %v1389, %v1380
        %v1687 = vpack.c.b16 %v1390, %v1381
        %v1688 = vpack.c.b16 %v1391, %v1382
        %v1689 = vpack.c.b16 %v1392, %v1383
        %v1690 = vpack.c.b16 %v1393, %v1384
        %v1691 = vpack.c.b16 %v1394, %v1385
        %v1692 = vpack.c.b16 %v1404, %v1395
        %v1693 = vpack.c.b16 %v1405, %v1396
        %v1694 = vpack.c.b16 %v1406, %v1397
        %v1695 = vpack.c.b16 %v1407, %v1398
        %v1696 = vpack.c.b16 %v1408, %v1399
        %v1697 = vpack.c.b16 %v1409, %v1400
        %v1698 = vpack.c.b16 %v1410, %v1401
        %v1699 = vpack.c.b16 %v1411, %v1402
        %v1700 = vpack.c.b16 %v1412, %v1403
        %v1701 = vpack.c.b16 %v1422, %v1413
        %v1702 = vpack.c.b16 %v1423, %v1414
        %v1703 = vpack.c.b16 %v1424, %v1415
        %v1704 = vpack.c.b16 %v1425, %v1416
        %v1705 = vpack.c.b16 %v1426, %v1417
        %v1706 = vpack.c.b16 %v1427, %v1418
        %v1707 = vpack.c.b16 %v1428, %v1419
        %v1708 = vpack.c.b16 %v1429, %v1420
        %v1709 = vpack.c.b16 %v1430, %v1421
        %v1710 = vpack.c.b16 %v1440, %v1431
        %v1711 = vpack.c.b16 %v1441, %v1432
        %v1712 = vpack.c.b16 %v1442, %v1433
        %v1713 = vpack.c.b16 %v1443, %v1434
        %v1714 = vpack.c.b16 %v1444, %v1435
        %v1715 = vpack.c.b16 %v1445, %v1436
        %v1716 = vpack.c.b16 %v1446, %v1437
        %v1717 = vpack.c.b16 %v1447, %v1438
        %v1718 = vpack.c.b16 %v1448, %v1439
        %v1719 = vpack.c.b16 %v1458, %v1449
        %v1720 = vpack.c.b16 %v1459, %v1450
        %v1721 = vpack.c.b16 %v1460, %v1451
        %v1722 = vpack.c.b16 %v1461, %v1452
        %v1723 = vpack.c.b16 %v1462, %v1453
        %v1724 = vpack.c.b16 %v1463, %v1454
        %v1725 = vpack.c.b16 %v1464, %v1455
        %v1726 = vpack.c.b16 %v1465, %v1456
        %v1727 = vpack.c.b16 %v1466, %v1457
        %v1728 = vpack.c.b16 %v1476, %v1467
        %v1729 = vpack.c.b16 %v1477, %v1468
        %v1730 = vpack.c.b16 %v1478, %v1469
        %v1731 = vpack.c.b16 %v1479, %v1470
        %v1732 = vpack.c.b16 %v1480, %v1471
        %v1733 = vpack.c.b16 %v1481, %v1472
        %v1734 = vpack.c.b16 %v1482, %v1473
        %v1735 = vpack.c.b16 %v1483, %v1474
        %v1736 = vpack.c.b16 %v1484, %v1475
        %v1737 = vpack.c.b16 %v1494, %v1485
        %v1738 = vpack.c.b16 %v1495, %v1486
        %v1739 = vpack.c.b16 %v1496, %v1487
        %v1740 = vpack.c.b16 %v1497, %v1488
        %v1741 = vpack.c.b16 %v1498, %v1489
        %v1742 = vpack.c.b16 %v1499, %v1490
        %v1743 = vpack.c.b16 %v1500, %v1491
        %v1744 = vpack.c.b16 %v1501, %v1492
        %v1745 = vpack.c.b16 %v1502, %v1493
        %v1746 = vpack.c.b16 %v1512, %v1503
        %v1747 = vpack.c.b16 %v1513, %v1504
        %v1748 = vpack.c.b16 %v1514, %v1505
        %v1749 = vpack.c.b16 %v1515, %v1506
        %v1750 = vpack.c.b16 %v1516, %v1507
        %v1751 = vpack.c.b16 %v1517, %v1508
        %v1752 = vpack.c.b16 %v1518, %v1509
        %v1753 = vpack.c.b16 %v1519, %v1510
        %v1754 = vpack.c.b16 %v1520, %v1511
        %v1755 = vpack.c.b16 %v1530, %v1521
        %v1756 = vpack.c.b16 %v1531, %v1522
        %v1757 = vpack.c.b16 %v1532, %v1523
        %v1758 = vpack.c.b16 %v1533, %v1524
        %v1759 = vpack.c.b16 %v1534, %v1525
        %v1760 = vpack.c.b16 %v1535, %v1526
        %v1761 = vpack.c.b16 %v1536, %v1527
        %v1762 = vpack.c.b16 %v1537, %v1528
        %v1763 = vpack.c.b16 %v1538, %v1529
        %v1764 = vpack.c.b16 %v1548, %v1539
        %v1765 = vpack.c.b16 %v1549, %v1540
        %v1766 = vpack.c.b16 %v1550, %v1541
        %v1767 = vpack.c.b16 %v1551, %v1542
        %v1768 = vpack.c.b16 %v1552, %v1543
        %v1769 = vpack.c.b16 %v1553, %v1544
        %v1770 = vpack.c.b16 %v1554, %v1545
        %v1771 = vpack.c.b16 %v1555, %v1546
        %v1772 = vpack.c.b16 %v1556, %v1547
        %1989 = vmatprep.subr.bf16.mxu0 %v1621
        %1990 = vmatpush1.bf16.msra.mxu0 %v1620
        %1991 = vmatprep.subr.bf16.mxu0 %v1612
        %1992 = vmatpush1.bf16.msra.mxu0 %v1611
        %1993 = vmatprep.subr.bf16.mxu0 %v1603
        %1994 = vmatpush1.bf16.msra.mxu0 %v1602
        %1995 = vmatprep.subr.bf16.mxu0 %v1594
        %1996 = vmatpush1.bf16.msra.mxu0 %v1593
        %1997 = vmatprep.subr.bf16.mxu0 %v1585
        %1998 = vmatpush1.bf16.msra.mxu0 %v1584
        %1999 = vmatprep.subr.bf16.mxu0 %v1576
        %2000 = vmatpush1.bf16.msra.mxu0 %v1575
        %2001 = vmatprep.subr.bf16.mxu0 %v1567
        %2002 = vmatpush1.bf16.msra.mxu0 %v1566
        %2003 = vmatprep.subr.bf16.mxu0 %v1558
        %2004 = vmatpush1.bf16.msra.mxu0 %v1557
        %2005 = vmatprep.subr.bf16.mxu0 %v1693
        %2006 = vmatpush2.bf16.msra.mxu0 %v1692
        %2007 = vmatprep.subr.bf16.mxu0 %v1684
        %2008 = vmatpush2.bf16.msra.mxu0 %v1683
        %2009 = vmatprep.subr.bf16.mxu0 %v1675
        %2010 = vmatpush2.bf16.msra.mxu0 %v1674
        %2011 = vmatprep.subr.bf16.mxu0 %v1666
        %2012 = vmatpush2.bf16.msra.mxu0 %v1665
        %2013 = vmatprep.subr.bf16.mxu0 %v1657
        %2014 = vmatpush2.bf16.msra.mxu0 %v1656
        %2015 = vmatprep.subr.bf16.mxu0 %v1648
        %2016 = vmatpush2.bf16.msra.mxu0 %v1647
        %2017 = vmatprep.subr.bf16.mxu0 %v1639
        %2018 = vmatpush2.bf16.msra.mxu0 %v1638
        %2019 = vmatprep.subr.bf16.mxu0 %v1630
        %2020 = vmatpush2.bf16.msra.mxu0 %v1629
        %2021 = vmatprep.mubr.bf16.mxu0 %v643
        %2022 = vmatmul.mubr.bf16.gmra.mxu0 %v642
        %v2023 = vpop.f32.mrf.mxu0
        %v2024 = vadd.f32 0.0, %v2023
        %v2025 = vpop.f32.mrf.mxu0
        %v2026 = vadd.f32 0.0, %v2025
        %v2027 = vpop.f32.mrf.mxu0
        %v2028 = vpop.f32.mrf.mxu0
        %2029 = vdwg.mxu0
        %2030 = vmatprep.subr.bf16.mxu0 %v1765
        %2031 = vmatpush1.bf16.msra.mxu0 %v1764
        %2032 = vmatprep.subr.bf16.mxu0 %v1756
        %2033 = vmatpush1.bf16.msra.mxu0 %v1755
        %2034 = vmatprep.subr.bf16.mxu0 %v1747
        %2035 = vmatpush1.bf16.msra.mxu0 %v1746
        %2036 = vmatprep.subr.bf16.mxu0 %v1738
        %2037 = vmatpush1.bf16.msra.mxu0 %v1737
        %2038 = vmatprep.subr.bf16.mxu0 %v1729
        %2039 = vmatpush1.bf16.msra.mxu0 %v1728
        %2040 = vmatprep.subr.bf16.mxu0 %v1720
        %2041 = vmatpush1.bf16.msra.mxu0 %v1719
        %2042 = vmatprep.subr.bf16.mxu0 %v1711
        %2043 = vmatpush1.bf16.msra.mxu0 %v1710
        %2044 = vmatprep.subr.bf16.mxu0 %v1702
        %2045 = vmatpush1.bf16.msra.mxu0 %v1701
        %2046 = vmatprep.subr.bf16.mxu0 0
        %2047 = vmatpush2.bf16.msra.mxu0 0
        %2048 = vmatprep.subr.bf16.mxu0 0
        %2049 = vmatpush2.bf16.msra.mxu0 0
        %2050 = vmatprep.subr.bf16.mxu0 0
        %2051 = vmatpush2.bf16.msra.mxu0 0
        %2052 = vmatprep.subr.bf16.mxu0 0
        %2053 = vmatpush2.bf16.msra.mxu0 0
        %2054 = vmatprep.subr.bf16.mxu0 0
        %2055 = vmatpush2.bf16.msra.mxu0 0
        %2056 = vmatprep.subr.bf16.mxu0 0
        %2057 = vmatpush2.bf16.msra.mxu0 0
        %2058 = vmatprep.subr.bf16.mxu0 0
        %2059 = vmatpush2.bf16.msra.mxu0 0
        %2060 = vmatprep.subr.bf16.mxu0 0
        %2061 = vmatpush2.bf16.msra.mxu0 0
        %2062 = vmatprep.mubr.bf16.mxu0 0
        %2063 = vmatmul.mubr.bf16.gmra.mxu0 %v644
        %v2064 = vpop.f32.mrf.mxu0
        %v2065 = vadd.f32 %v2024, %v2064
        %v2066 = vpop.f32.mrf.mxu0
        %v2067 = vadd.f32 %v2026, %v2066
        %v2068 = vpop.f32.mrf.mxu0
        %v2069 = vpop.f32.mrf.mxu0
        %2070 = vdwg.mxu0
        %2071 = vmatprep.subr.bf16.mxu0 %v1623
        %2072 = vmatpush1.bf16.msra.mxu0 %v1622
        %2073 = vmatprep.subr.bf16.mxu0 %v1614
        %2074 = vmatpush1.bf16.msra.mxu0 %v1613
        %2075 = vmatprep.subr.bf16.mxu0 %v1605
        %2076 = vmatpush1.bf16.msra.mxu0 %v1604
        %2077 = vmatprep.subr.bf16.mxu0 %v1596
        %2078 = vmatpush1.bf16.msra.mxu0 %v1595
        %2079 = vmatprep.subr.bf16.mxu0 %v1587
        %2080 = vmatpush1.bf16.msra.mxu0 %v1586
        %2081 = vmatprep.subr.bf16.mxu0 %v1578
        %2082 = vmatpush1.bf16.msra.mxu0 %v1577
        %2083 = vmatprep.subr.bf16.mxu0 %v1569
        %2084 = vmatpush1.bf16.msra.mxu0 %v1568
        %2085 = vmatprep.subr.bf16.mxu0 %v1560
        %2086 = vmatpush1.bf16.msra.mxu0 %v1559
        %2087 = vmatprep.subr.bf16.mxu0 %v1695
        %2088 = vmatpush2.bf16.msra.mxu0 %v1694
        %2089 = vmatprep.subr.bf16.mxu0 %v1686
        %2090 = vmatpush2.bf16.msra.mxu0 %v1685
        %2091 = vmatprep.subr.bf16.mxu0 %v1677
        %2092 = vmatpush2.bf16.msra.mxu0 %v1676
        %2093 = vmatprep.subr.bf16.mxu0 %v1668
        %2094 = vmatpush2.bf16.msra.mxu0 %v1667
        %2095 = vmatprep.subr.bf16.mxu0 %v1659
        %2096 = vmatpush2.bf16.msra.mxu0 %v1658
        %2097 = vmatprep.subr.bf16.mxu0 %v1650
        %2098 = vmatpush2.bf16.msra.mxu0 %v1649
        %2099 = vmatprep.subr.bf16.mxu0 %v1641
        %2100 = vmatpush2.bf16.msra.mxu0 %v1640
        %2101 = vmatprep.subr.bf16.mxu0 %v1632
        %2102 = vmatpush2.bf16.msra.mxu0 %v1631
        %2103 = vmatprep.mubr.bf16.mxu0 %v643
        %2104 = vmatmul.mubr.bf16.gmra.mxu0 %v642
        %v2105 = vpop.f32.mrf.mxu0
        %v2106 = vadd.f32 0.0, %v2105
        %v2107 = vpop.f32.mrf.mxu0
        %v2108 = vadd.f32 0.0, %v2107
        %v2109 = vpop.f32.mrf.mxu0
        %v2110 = vpop.f32.mrf.mxu0
        %2111 = vdwg.mxu0
        %2112 = vmatprep.subr.bf16.mxu0 %v1767
        %2113 = vmatpush1.bf16.msra.mxu0 %v1766
        %2114 = vmatprep.subr.bf16.mxu0 %v1758
        %2115 = vmatpush1.bf16.msra.mxu0 %v1757
        %2116 = vmatprep.subr.bf16.mxu0 %v1749
        %2117 = vmatpush1.bf16.msra.mxu0 %v1748
        %2118 = vmatprep.subr.bf16.mxu0 %v1740
        %2119 = vmatpush1.bf16.msra.mxu0 %v1739
        %2120 = vmatprep.subr.bf16.mxu0 %v1731
        %2121 = vmatpush1.bf16.msra.mxu0 %v1730
        %2122 = vmatprep.subr.bf16.mxu0 %v1722
        %2123 = vmatpush1.bf16.msra.mxu0 %v1721
        %2124 = vmatprep.subr.bf16.mxu0 %v1713
        %2125 = vmatpush1.bf16.msra.mxu0 %v1712
        %2126 = vmatprep.subr.bf16.mxu0 %v1704
        %2127 = vmatpush1.bf16.msra.mxu0 %v1703
        %2128 = vmatprep.subr.bf16.mxu0 0
        %2129 = vmatpush2.bf16.msra.mxu0 0
        %2130 = vmatprep.subr.bf16.mxu0 0
        %2131 = vmatpush2.bf16.msra.mxu0 0
        %2132 = vmatprep.subr.bf16.mxu0 0
        %2133 = vmatpush2.bf16.msra.mxu0 0
        %2134 = vmatprep.subr.bf16.mxu0 0
        %2135 = vmatpush2.bf16.msra.mxu0 0
        %2136 = vmatprep.subr.bf16.mxu0 0
        %2137 = vmatpush2.bf16.msra.mxu0 0
        %2138 = vmatprep.subr.bf16.mxu0 0
        %2139 = vmatpush2.bf16.msra.mxu0 0
        %2140 = vmatprep.subr.bf16.mxu0 0
        %2141 = vmatpush2.bf16.msra.mxu0 0
        %2142 = vmatprep.subr.bf16.mxu0 0
        %2143 = vmatpush2.bf16.msra.mxu0 0
        %2144 = vmatprep.mubr.bf16.mxu0 0
        %2145 = vmatmul.mubr.bf16.gmra.mxu0 %v644
        %v2146 = vpop.f32.mrf.mxu0
        %v2147 = vadd.f32 %v2106, %v2146
        %v2148 = vpop.f32.mrf.mxu0
        %v2149 = vadd.f32 %v2108, %v2148
        %v2150 = vpop.f32.mrf.mxu0
        %v2151 = vpop.f32.mrf.mxu0
        %2152 = vdwg.mxu0
        %2153 = vmatprep.subr.bf16.mxu0 %v1625
        %2154 = vmatpush1.bf16.msra.mxu0 %v1624
        %2155 = vmatprep.subr.bf16.mxu0 %v1616
        %2156 = vmatpush1.bf16.msra.mxu0 %v1615
        %2157 = vmatprep.subr.bf16.mxu0 %v1607
        %2158 = vmatpush1.bf16.msra.mxu0 %v1606
        %2159 = vmatprep.subr.bf16.mxu0 %v1598
        %2160 = vmatpush1.bf16.msra.mxu0 %v1597
        %2161 = vmatprep.subr.bf16.mxu0 %v1589
        %2162 = vmatpush1.bf16.msra.mxu0 %v1588
        %2163 = vmatprep.subr.bf16.mxu0 %v1580
        %2164 = vmatpush1.bf16.msra.mxu0 %v1579
        %2165 = vmatprep.subr.bf16.mxu0 %v1571
        %2166 = vmatpush1.bf16.msra.mxu0 %v1570
        %2167 = vmatprep.subr.bf16.mxu0 %v1562
        %2168 = vmatpush1.bf16.msra.mxu0 %v1561
        %2169 = vmatprep.subr.bf16.mxu0 %v1697
        %2170 = vmatpush2.bf16.msra.mxu0 %v1696
        %2171 = vmatprep.subr.bf16.mxu0 %v1688
        %2172 = vmatpush2.bf16.msra.mxu0 %v1687
        %2173 = vmatprep.subr.bf16.mxu0 %v1679
        %2174 = vmatpush2.bf16.msra.mxu0 %v1678
        %2175 = vmatprep.subr.bf16.mxu0 %v1670
        %2176 = vmatpush2.bf16.msra.mxu0 %v1669
        %2177 = vmatprep.subr.bf16.mxu0 %v1661
        %2178 = vmatpush2.bf16.msra.mxu0 %v1660
        %2179 = vmatprep.subr.bf16.mxu0 %v1652
        %2180 = vmatpush2.bf16.msra.mxu0 %v1651
        %2181 = vmatprep.subr.bf16.mxu0 %v1643
        %2182 = vmatpush2.bf16.msra.mxu0 %v1642
        %2183 = vmatprep.subr.bf16.mxu0 %v1634
        %2184 = vmatpush2.bf16.msra.mxu0 %v1633
        %2185 = vmatprep.mubr.bf16.mxu0 %v643
        %2186 = vmatmul.mubr.bf16.gmra.mxu0 %v642
        %v2187 = vpop.f32.mrf.mxu0
        %v2188 = vadd.f32 0.0, %v2187
        %v2189 = vpop.f32.mrf.mxu0
        %v2190 = vadd.f32 0.0, %v2189
        %v2191 = vpop.f32.mrf.mxu0
        %v2192 = vpop.f32.mrf.mxu0
        %2193 = vdwg.mxu0
        %2194 = vmatprep.subr.bf16.mxu0 %v1769
        %2195 = vmatpush1.bf16.msra.mxu0 %v1768
        %2196 = vmatprep.subr.bf16.mxu0 %v1760
        %2197 = vmatpush1.bf16.msra.mxu0 %v1759
        %2198 = vmatprep.subr.bf16.mxu0 %v1751
        %2199 = vmatpush1.bf16.msra.mxu0 %v1750
        %2200 = vmatprep.subr.bf16.mxu0 %v1742
        %2201 = vmatpush1.bf16.msra.mxu0 %v1741
        %2202 = vmatprep.subr.bf16.mxu0 %v1733
        %2203 = vmatpush1.bf16.msra.mxu0 %v1732
        %2204 = vmatprep.subr.bf16.mxu0 %v1724
        %2205 = vmatpush1.bf16.msra.mxu0 %v1723
        %2206 = vmatprep.subr.bf16.mxu0 %v1715
        %2207 = vmatpush1.bf16.msra.mxu0 %v1714
        %2208 = vmatprep.subr.bf16.mxu0 %v1706
        %2209 = vmatpush1.bf16.msra.mxu0 %v1705
        %2210 = vmatprep.subr.bf16.mxu0 0
        %2211 = vmatpush2.bf16.msra.mxu0 0
        %2212 = vmatprep.subr.bf16.mxu0 0
        %2213 = vmatpush2.bf16.msra.mxu0 0
        %2214 = vmatprep.subr.bf16.mxu0 0
        %2215 = vmatpush2.bf16.msra.mxu0 0
        %2216 = vmatprep.subr.bf16.mxu0 0
        %2217 = vmatpush2.bf16.msra.mxu0 0
        %2218 = vmatprep.subr.bf16.mxu0 0
        %2219 = vmatpush2.bf16.msra.mxu0 0
        %2220 = vmatprep.subr.bf16.mxu0 0
        %2221 = vmatpush2.bf16.msra.mxu0 0
        %2222 = vmatprep.subr.bf16.mxu0 0
        %2223 = vmatpush2.bf16.msra.mxu0 0
        %2224 = vmatprep.subr.bf16.mxu0 0
        %2225 = vmatpush2.bf16.msra.mxu0 0
        %2226 = vmatprep.mubr.bf16.mxu0 0
        %2227 = vmatmul.mubr.bf16.gmra.mxu0 %v644
        %v2228 = vpop.f32.mrf.mxu0
        %v2229 = vadd.f32 %v2188, %v2228
        %v2230 = vpop.f32.mrf.mxu0
        %v2231 = vadd.f32 %v2190, %v2230
        %v2232 = vpop.f32.mrf.mxu0
        %v2233 = vpop.f32.mrf.mxu0
        %2234 = vdwg.mxu0
        %2235 = vmatprep.subr.bf16.mxu0 %v1627
        %2236 = vmatpush1.bf16.msra.mxu0 %v1626
        %2237 = vmatprep.subr.bf16.mxu0 %v1618
        %2238 = vmatpush1.bf16.msra.mxu0 %v1617
        %2239 = vmatprep.subr.bf16.mxu0 %v1609
        %2240 = vmatpush1.bf16.msra.mxu0 %v1608
        %2241 = vmatprep.subr.bf16.mxu0 %v1600
        %2242 = vmatpush1.bf16.msra.mxu0 %v1599
        %2243 = vmatprep.subr.bf16.mxu0 %v1591
        %2244 = vmatpush1.bf16.msra.mxu0 %v1590
        %2245 = vmatprep.subr.bf16.mxu0 %v1582
        %2246 = vmatpush1.bf16.msra.mxu0 %v1581
        %2247 = vmatprep.subr.bf16.mxu0 %v1573
        %2248 = vmatpush1.bf16.msra.mxu0 %v1572
        %2249 = vmatprep.subr.bf16.mxu0 %v1564
        %2250 = vmatpush1.bf16.msra.mxu0 %v1563
        %2251 = vmatprep.subr.bf16.mxu0 %v1699
        %2252 = vmatpush2.bf16.msra.mxu0 %v1698
        %2253 = vmatprep.subr.bf16.mxu0 %v1690
        %2254 = vmatpush2.bf16.msra.mxu0 %v1689
        %2255 = vmatprep.subr.bf16.mxu0 %v1681
        %2256 = vmatpush2.bf16.msra.mxu0 %v1680
        %2257 = vmatprep.subr.bf16.mxu0 %v1672
        %2258 = vmatpush2.bf16.msra.mxu0 %v1671
        %2259 = vmatprep.subr.bf16.mxu0 %v1663
        %2260 = vmatpush2.bf16.msra.mxu0 %v1662
        %2261 = vmatprep.subr.bf16.mxu0 %v1654
        %2262 = vmatpush2.bf16.msra.mxu0 %v1653
        %2263 = vmatprep.subr.bf16.mxu0 %v1645
        %2264 = vmatpush2.bf16.msra.mxu0 %v1644
        %2265 = vmatprep.subr.bf16.mxu0 %v1636
        %2266 = vmatpush2.bf16.msra.mxu0 %v1635
        %2267 = vmatprep.mubr.bf16.mxu0 %v643
        %2268 = vmatmul.mubr.bf16.gmra.mxu0 %v642
        %v2269 = vpop.f32.mrf.mxu0
        %v2270 = vadd.f32 0.0, %v2269
        %v2271 = vpop.f32.mrf.mxu0
        %v2272 = vadd.f32 0.0, %v2271
        %v2273 = vpop.f32.mrf.mxu0
        %v2274 = vpop.f32.mrf.mxu0
        %2275 = vdwg.mxu0
        %2276 = vmatprep.subr.bf16.mxu0 %v1771
        %2277 = vmatpush1.bf16.msra.mxu0 %v1770
        %2278 = vmatprep.subr.bf16.mxu0 %v1762
        %2279 = vmatpush1.bf16.msra.mxu0 %v1761
        %2280 = vmatprep.subr.bf16.mxu0 %v1753
        %2281 = vmatpush1.bf16.msra.mxu0 %v1752
        %2282 = vmatprep.subr.bf16.mxu0 %v1744
        %2283 = vmatpush1.bf16.msra.mxu0 %v1743
        %2284 = vmatprep.subr.bf16.mxu0 %v1735
        %2285 = vmatpush1.bf16.msra.mxu0 %v1734
        %2286 = vmatprep.subr.bf16.mxu0 %v1726
        %2287 = vmatpush1.bf16.msra.mxu0 %v1725
        %2288 = vmatprep.subr.bf16.mxu0 %v1717
        %2289 = vmatpush1.bf16.msra.mxu0 %v1716
        %2290 = vmatprep.subr.bf16.mxu0 %v1708
        %2291 = vmatpush1.bf16.msra.mxu0 %v1707
        %2292 = vmatprep.subr.bf16.mxu0 0
        %2293 = vmatpush2.bf16.msra.mxu0 0
        %2294 = vmatprep.subr.bf16.mxu0 0
        %2295 = vmatpush2.bf16.msra.mxu0 0
        %2296 = vmatprep.subr.bf16.mxu0 0
        %2297 = vmatpush2.bf16.msra.mxu0 0
        %2298 = vmatprep.subr.bf16.mxu0 0
        %2299 = vmatpush2.bf16.msra.mxu0 0
        %2300 = vmatprep.subr.bf16.mxu0 0
        %2301 = vmatpush2.bf16.msra.mxu0 0
        %2302 = vmatprep.subr.bf16.mxu0 0
        %2303 = vmatpush2.bf16.msra.mxu0 0
        %2304 = vmatprep.subr.bf16.mxu0 0
        %2305 = vmatpush2.bf16.msra.mxu0 0
        %2306 = vmatprep.subr.bf16.mxu0 0
        %2307 = vmatpush2.bf16.msra.mxu0 0
        %2308 = vmatprep.mubr.bf16.mxu0 0
        %2309 = vmatmul.mubr.bf16.gmra.mxu0 %v644
        %v2310 = vpop.f32.mrf.mxu0
        %v2311 = vadd.f32 %v2270, %v2310
        %v2312 = vpop.f32.mrf.mxu0
        %v2313 = vadd.f32 %v2272, %v2312
        %v2314 = vpop.f32.mrf.mxu0
        %v2315 = vpop.f32.mrf.mxu0
        %2316 = vdwg.mxu0
        %2317 = vmatprep.subr.bf16.mxu0 0
        %2318 = vmatpush1.bf16.msra.mxu0 %v1628
        %2319 = vmatprep.subr.bf16.mxu0 0
        %2320 = vmatpush1.bf16.msra.mxu0 %v1619
        %2321 = vmatprep.subr.bf16.mxu0 0
        %2322 = vmatpush1.bf16.msra.mxu0 %v1610
        %2323 = vmatprep.subr.bf16.mxu0 0
        %2324 = vmatpush1.bf16.msra.mxu0 %v1601
        %2325 = vmatprep.subr.bf16.mxu0 0
        %2326 = vmatpush1.bf16.msra.mxu0 %v1592
        %2327 = vmatprep.subr.bf16.mxu0 0
        %2328 = vmatpush1.bf16.msra.mxu0 %v1583
        %2329 = vmatprep.subr.bf16.mxu0 0
        %2330 = vmatpush1.bf16.msra.mxu0 %v1574
        %2331 = vmatprep.subr.bf16.mxu0 0
        %2332 = vmatpush1.bf16.msra.mxu0 %v1565
        %2333 = vmatprep.subr.bf16.mxu0 0
        %2334 = vmatpush2.bf16.msra.mxu0 %v1700
        %2335 = vmatprep.subr.bf16.mxu0 0
        %2336 = vmatpush2.bf16.msra.mxu0 %v1691
        %2337 = vmatprep.subr.bf16.mxu0 0
        %2338 = vmatpush2.bf16.msra.mxu0 %v1682
        %2339 = vmatprep.subr.bf16.mxu0 0
        %2340 = vmatpush2.bf16.msra.mxu0 %v1673
        %2341 = vmatprep.subr.bf16.mxu0 0
        %2342 = vmatpush2.bf16.msra.mxu0 %v1664
        %2343 = vmatprep.subr.bf16.mxu0 0
        %2344 = vmatpush2.bf16.msra.mxu0 %v1655
        %2345 = vmatprep.subr.bf16.mxu0 0
        %2346 = vmatpush2.bf16.msra.mxu0 %v1646
        %2347 = vmatprep.subr.bf16.mxu0 0
        %2348 = vmatpush2.bf16.msra.mxu0 %v1637
        %2349 = vmatprep.mubr.bf16.mxu0 %v643
        %2350 = vmatmul.mubr.bf16.gmra.mxu0 %v642
        %v2351 = vpop.f32.mrf.mxu0
        %v2352 = vadd.f32 0.0, %v2351
        %v2353 = vpop.f32.mrf.mxu0
        %v2354 = vpop.f32.mrf.mxu0
        %v2355 = vpop.f32.mrf.mxu0
        %2356 = vdwg.mxu0
        %2357 = vmatprep.subr.bf16.mxu0 0
        %2358 = vmatpush1.bf16.msra.mxu0 %v1772
        %2359 = vmatprep.subr.bf16.mxu0 0
        %2360 = vmatpush1.bf16.msra.mxu0 %v1763
        %2361 = vmatprep.subr.bf16.mxu0 0
        %2362 = vmatpush1.bf16.msra.mxu0 %v1754
        %2363 = vmatprep.subr.bf16.mxu0 0
        %2364 = vmatpush1.bf16.msra.mxu0 %v1745
        %2365 = vmatprep.subr.bf16.mxu0 0
        %2366 = vmatpush1.bf16.msra.mxu0 %v1736
        %2367 = vmatprep.subr.bf16.mxu0 0
        %2368 = vmatpush1.bf16.msra.mxu0 %v1727
        %2369 = vmatprep.subr.bf16.mxu0 0
        %2370 = vmatpush1.bf16.msra.mxu0 %v1718
        %2371 = vmatprep.subr.bf16.mxu0 0
        %2372 = vmatpush1.bf16.msra.mxu0 %v1709
        %2373 = vmatprep.subr.bf16.mxu0 0
        %2374 = vmatpush2.bf16.msra.mxu0 0
        %2375 = vmatprep.subr.bf16.mxu0 0
        %2376 = vmatpush2.bf16.msra.mxu0 0
        %2377 = vmatprep.subr.bf16.mxu0 0
        %2378 = vmatpush2.bf16.msra.mxu0 0
        %2379 = vmatprep.subr.bf16.mxu0 0
        %2380 = vmatpush2.bf16.msra.mxu0 0
        %2381 = vmatprep.subr.bf16.mxu0 0
        %2382 = vmatpush2.bf16.msra.mxu0 0
        %2383 = vmatprep.subr.bf16.mxu0 0
        %2384 = vmatpush2.bf16.msra.mxu0 0
        %2385 = vmatprep.subr.bf16.mxu0 0
        %2386 = vmatpush2.bf16.msra.mxu0 0
        %2387 = vmatprep.subr.bf16.mxu0 0
        %2388 = vmatpush2.bf16.msra.mxu0 0
        %2389 = vmatprep.mubr.bf16.mxu0 0
        %2390 = vmatmul.mubr.bf16.gmra.mxu0 %v644
        %v2391 = vpop.f32.mrf.mxu0
        %v2392 = vadd.f32 %v2352, %v2391
        %v2393 = vpop.f32.mrf.mxu0
        %v2394 = vpop.f32.mrf.mxu0
        %v2395 = vpop.f32.mrf.mxu0
        %2396 = vdwg.mxu0
        %2397 = vst [vmem:[#allocation2] sm:$0xff] %v2065
        %2398 = vst [vmem:[#allocation2 + $0x8] sm:$0xff] %v2067
        %2399 = vst [vmem:[#allocation2 + $0x10] sm:$0xff] %v2147
        %2400 = vst [vmem:[#allocation2 + $0x18] sm:$0xff] %v2149
        %2401 = vst [vmem:[#allocation2 + $0x20] sm:$0xff] %v2229
        %2402 = vst [vmem:[#allocation2 + $0x28] sm:$0xff] %v2231
        %2403 = vst [vmem:[#allocation2 + $0x30] sm:$0xff] %v2311
        %2404 = vst [vmem:[#allocation2 + $0x38] sm:$0xff] %v2313
        %2405 = vst [vmem:[#allocation2 + $0x40] sm:$0xff] %v2392
        %v2406 = vlaneseq
        %v2407 = vshrl.u32 %v2406, 7
        %v2408 = vlaneseq
        %v2409 = vand.u32 %v2408, 127
        %vm2410 = vcmp.ge.s32.totalorder %v2407, %v2409
        %s2411 = smul.u32 0, 9
        %s2412 = smul.addr %s2411, 8
        %s2413 = scalar_lea.vmem [#allocation2], %s2412
        %v2414 = vld [vmem:[%s2413] sm:$0xff]
        %v2415 = vpack.c.bf16 %v2414, %v2414
        %v2416 = vld [vmem:[%s2413 + $0x18] sm:$0xff]
        %v2417 = vpack.c.bf16 %v2416, %v2416
        %v2418 = vld [vmem:[%s2413 + $0x30] sm:$0xff]
        %v2419 = vpack.c.bf16 %v2418, %v2418
        %vm2420 = vcmask 523264
        %v2422 = vsel %vm2420, %v2415, 0
        %v2425 = vsel %vm2420, %v2417, 0
        %2427 = vmatprep.subr.bf16.mxu0 0
        %2428 = vmatpush1.bf16.xpose.msra.mxu0 0
        %2429 = vmatprep.subr.bf16.mxu0 0
        %2430 = vmatpush1.bf16.xpose.msra.mxu0 0
        %2431 = vmatprep.subr.bf16.mxu0 0
        %2432 = vmatpush1.bf16.xpose.msra.mxu0 0
        %2433 = vmatprep.subr.bf16.mxu0 0
        %2434 = vmatpush1.bf16.xpose.msra.mxu0 0
        %2435 = vmatprep.subr.bf16.mxu0 0
        %2436 = vmatpush1.bf16.xpose.msra.mxu0 0
        %2437 = vmatprep.subr.bf16.mxu0 0
        %2438 = vmatpush1.bf16.xpose.msra.mxu0 0
        %2439 = vmatprep.subr.bf16.mxu0 0
        %2440 = vmatpush1.bf16.xpose.msra.mxu0 0
        %2441 = vmatprep.subr.bf16.mxu0 0
        %2442 = vmatpush1.bf16.xpose.msra.mxu0 %v2425
        %2443 = vmatprep.subr.bf16.mxu0 0
        %2444 = vmatpush2.bf16.xpose.msra.mxu0 0
        %2445 = vmatprep.subr.bf16.mxu0 0
        %2446 = vmatpush2.bf16.xpose.msra.mxu0 0
        %2447 = vmatprep.subr.bf16.mxu0 0
        %2448 = vmatpush2.bf16.xpose.msra.mxu0 0
        %2449 = vmatprep.subr.bf16.mxu0 0
        %2450 = vmatpush2.bf16.xpose.msra.mxu0 0
        %2451 = vmatprep.subr.bf16.mxu0 0
        %2452 = vmatpush2.bf16.xpose.msra.mxu0 0
        %2453 = vmatprep.subr.bf16.mxu0 0
        %2454 = vmatpush2.bf16.xpose.msra.mxu0 0
        %2455 = vmatprep.subr.bf16.mxu0 0
        %2456 = vmatpush2.bf16.xpose.msra.mxu0 0
        %2457 = vmatprep.subr.bf16.mxu0 0
        %2458 = vmatpush2.bf16.xpose.msra.mxu0 0
        %2459 = vmatprep.mubr.bf16.mxu0 0
        %2460 = vmatmul.mubr.bf16.gmra.mxu0 %v2422
        %v2461 = vpop.f32.mrf.mxu0
        %v2462 = vadd.f32 0.0, %v2461
        %v2463 = vpop.f32.mrf.mxu0
        %v2464 = vpop.f32.mrf.mxu0
        %v2465 = vpop.f32.mrf.mxu0
        %2466 = vdwg.mxu0
        %v2467 = vsel %vm2410, %v2462, -inf
        %vm2468 = vcmask 64512
        %v2469 = vsel %vm2468, %v2467, -inf
        %2470 = vmax.xlane.f32.xlu0 %v2469
        %v2471 = vpop.xlane.xlu0 %2470
        %v2472 = vsub.f32 %v2467, %v2471
        %v2473 = vmul.f32 %v2472, 1.442695
        %v2474 = vpow.pop %v2473
        %v2475 = vsel %vm2468, %v2474, 0.0
        %2476 = vadd.xlane.f32.xlu0 %v2475
        %v2477 = vpop.xlane.xlu0 %2476
        %v2478 = vrcp.pop %v2477
        %v2479 = vmul.f32 %v2474, %v2478
        %v2480 = vpack.c.bf16 %v2479, %v2479
        %v2482 = vsel %vm2468, %v2480, 0
        %vm2484 = vcmask 1043456
        %v2486 = vsel %vm2484, %v2419, 0
        %2488 = vmatprep.subr.bf16.mxu0 0
        %2489 = vmatpush1.bf16.msra.mxu0 0
        %2490 = vmatprep.subr.bf16.mxu0 0
        %2491 = vmatpush1.bf16.msra.mxu0 0
        %2492 = vmatprep.subr.bf16.mxu0 0
        %2493 = vmatpush1.bf16.msra.mxu0 0
        %2494 = vmatprep.subr.bf16.mxu0 0
        %2495 = vmatpush1.bf16.msra.mxu0 0
        %2496 = vmatprep.subr.bf16.mxu0 0
        %2497 = vmatpush1.bf16.msra.mxu0 0
        %2498 = vmatprep.subr.bf16.mxu0 0
        %2499 = vmatpush1.bf16.msra.mxu0 0
        %2500 = vmatprep.subr.bf16.mxu0 0
        %2501 = vmatpush1.bf16.msra.mxu0 0
        %2502 = vmatprep.subr.bf16.mxu0 0
        %2503 = vmatpush1.bf16.msra.mxu0 %v2486
        %2504 = vmatprep.subr.bf16.mxu0 0
        %2505 = vmatpush2.bf16.msra.mxu0 0
        %2506 = vmatprep.subr.bf16.mxu0 0
        %2507 = vmatpush2.bf16.msra.mxu0 0
        %2508 = vmatprep.subr.bf16.mxu0 0
        %2509 = vmatpush2.bf16.msra.mxu0 0
        %2510 = vmatprep.subr.bf16.mxu0 0
        %2511 = vmatpush2.bf16.msra.mxu0 0
        %2512 = vmatprep.subr.bf16.mxu0 0
        %2513 = vmatpush2.bf16.msra.mxu0 0
        %2514 = vmatprep.subr.bf16.mxu0 0
        %2515 = vmatpush2.bf16.msra.mxu0 0
        %2516 = vmatprep.subr.bf16.mxu0 0
        %2517 = vmatpush2.bf16.msra.mxu0 0
        %2518 = vmatprep.subr.bf16.mxu0 0
        %2519 = vmatpush2.bf16.msra.mxu0 0
        %2520 = vmatprep.mubr.bf16.mxu0 0
        %2521 = vmatmul.mubr.bf16.gmra.mxu0 %v2482
        %v2522 = vpop.f32.mrf.mxu0
        %v2523 = vadd.f32 0.0, %v2522
        %v2524 = vpop.f32.mrf.mxu0
        %v2525 = vpop.f32.mrf.mxu0
        %v2526 = vpop.f32.mrf.mxu0
        %2527 = vdwg.mxu0
        %2529 = vrot.lane.b32.xlu0 %v2415, 64
        %v2530 = vpop.permute.xlu0 %2529
        %2532 = vrot.lane.b32.xlu0 %v2417, 64
        %v2533 = vpop.permute.xlu0 %2532
        %v2535 = vsel %vm2420, %v2530, 0
        %v2538 = vsel %vm2420, %v2533, 0
        %2540 = vmatprep.subr.bf16.mxu0 0
        %2541 = vmatpush1.bf16.xpose.msra.mxu0 0
        %2542 = vmatprep.subr.bf16.mxu0 0
        %2543 = vmatpush1.bf16.xpose.msra.mxu0 0
        %2544 = vmatprep.subr.bf16.mxu0 0
        %2545 = vmatpush1.bf16.xpose.msra.mxu0 0
        %2546 = vmatprep.subr.bf16.mxu0 0
        %2547 = vmatpush1.bf16.xpose.msra.mxu0 0
        %2548 = vmatprep.subr.bf16.mxu0 0
        %2549 = vmatpush1.bf16.xpose.msra.mxu0 0
        %2550 = vmatprep.subr.bf16.mxu0 0
        %2551 = vmatpush1.bf16.xpose.msra.mxu0 0
        %2552 = vmatprep.subr.bf16.mxu0 0
        %2553 = vmatpush1.bf16.xpose.msra.mxu0 0
        %2554 = vmatprep.subr.bf16.mxu0 0
        %2555 = vmatpush1.bf16.xpose.msra.mxu0 %v2538
        %2556 = vmatprep.subr.bf16.mxu0 0
        %2557 = vmatpush2.bf16.xpose.msra.mxu0 0
        %2558 = vmatprep.subr.bf16.mxu0 0
        %2559 = vmatpush2.bf16.xpose.msra.mxu0 0
        %2560 = vmatprep.subr.bf16.mxu0 0
        %2561 = vmatpush2.bf16.xpose.msra.mxu0 0
        %2562 = vmatprep.subr.bf16.mxu0 0
        %2563 = vmatpush2.bf16.xpose.msra.mxu0 0
        %2564 = vmatprep.subr.bf16.mxu0 0
        %2565 = vmatpush2.bf16.xpose.msra.mxu0 0
        %2566 = vmatprep.subr.bf16.mxu0 0
        %2567 = vmatpush2.bf16.xpose.msra.mxu0 0
        %2568 = vmatprep.subr.bf16.mxu0 0
        %2569 = vmatpush2.bf16.xpose.msra.mxu0 0
        %2570 = vmatprep.subr.bf16.mxu0 0
        %2571 = vmatpush2.bf16.xpose.msra.mxu0 0
        %2572 = vmatprep.mubr.bf16.mxu0 0
        %2573 = vmatmul.mubr.bf16.gmra.mxu0 %v2535
        %v2574 = vpop.f32.mrf.mxu0
        %v2575 = vadd.f32 0.0, %v2574
        %v2576 = vpop.f32.mrf.mxu0
        %v2577 = vpop.f32.mrf.mxu0
        %v2578 = vpop.f32.mrf.mxu0
        %2579 = vdwg.mxu0
        %v2580 = vsel %vm2410, %v2575, -inf
        %v2581 = vsel %vm2468, %v2580, -inf
        %2582 = vmax.xlane.f32.xlu0 %v2581
        %v2583 = vpop.xlane.xlu0 %2582
        %v2584 = vsub.f32 %v2580, %v2583
        %v2585 = vmul.f32 %v2584, 1.442695
        %v2586 = vpow.pop %v2585
        %v2587 = vsel %vm2468, %v2586, 0.0
        %2588 = vadd.xlane.f32.xlu0 %v2587
        %v2589 = vpop.xlane.xlu0 %2588
        %v2590 = vrcp.pop %v2589
        %v2591 = vmul.f32 %v2586, %v2590
        %v2592 = vpack.c.bf16 %v2591, %v2591
        %2594 = vrot.lane.b32.xlu0 %v2419, 64
        %v2595 = vpop.permute.xlu0 %2594
        %v2597 = vsel %vm2468, %v2592, 0
        %v2600 = vsel %vm2484, %v2595, 0
        %2602 = vmatprep.subr.bf16.mxu0 0
        %2603 = vmatpush1.bf16.msra.mxu0 0
        %2604 = vmatprep.subr.bf16.mxu0 0
        %2605 = vmatpush1.bf16.msra.mxu0 0
        %2606 = vmatprep.subr.bf16.mxu0 0
        %2607 = vmatpush1.bf16.msra.mxu0 0
        %2608 = vmatprep.subr.bf16.mxu0 0
        %2609 = vmatpush1.bf16.msra.mxu0 0
        %2610 = vmatprep.subr.bf16.mxu0 0
        %2611 = vmatpush1.bf16.msra.mxu0 0
        %2612 = vmatprep.subr.bf16.mxu0 0
        %2613 = vmatpush1.bf16.msra.mxu0 0
        %2614 = vmatprep.subr.bf16.mxu0 0
        %2615 = vmatpush1.bf16.msra.mxu0 0
        %2616 = vmatprep.subr.bf16.mxu0 0
        %2617 = vmatpush1.bf16.msra.mxu0 %v2600
        %2618 = vmatprep.subr.bf16.mxu0 0
        %2619 = vmatpush2.bf16.msra.mxu0 0
        %2620 = vmatprep.subr.bf16.mxu0 0
        %2621 = vmatpush2.bf16.msra.mxu0 0
        %2622 = vmatprep.subr.bf16.mxu0 0
        %2623 = vmatpush2.bf16.msra.mxu0 0
        %2624 = vmatprep.subr.bf16.mxu0 0
        %2625 = vmatpush2.bf16.msra.mxu0 0
        %2626 = vmatprep.subr.bf16.mxu0 0
        %2627 = vmatpush2.bf16.msra.mxu0 0
        %2628 = vmatprep.subr.bf16.mxu0 0
        %2629 = vmatpush2.bf16.msra.mxu0 0
        %2630 = vmatprep.subr.bf16.mxu0 0
        %2631 = vmatpush2.bf16.msra.mxu0 0
        %2632 = vmatprep.subr.bf16.mxu0 0
        %2633 = vmatpush2.bf16.msra.mxu0 0
        %2634 = vmatprep.mubr.bf16.mxu0 0
        %2635 = vmatmul.mubr.bf16.gmra.mxu0 %v2597
        %v2636 = vpop.f32.mrf.mxu0
        %v2637 = vadd.f32 0.0, %v2636
        %v2638 = vpop.f32.mrf.mxu0
        %v2639 = vpop.f32.mrf.mxu0
        %v2640 = vpop.f32.mrf.mxu0
        %2641 = vdwg.mxu0
        %2643 = vrot.lane.b32.xlu0 %v2637, 64
        %v2644 = vpop.permute.xlu0 %2643
        %v2646 = vsel %vm2420, %v2523, %v2644
        %s2647 = smul.u32 0, 3
        %s2648 = smul.addr %s2647, 8
        %s2649 = scalar_lea.vmem [#allocation3], %s2648
        %2650 = vst [vmem:[%s2649] sm:$0xff] %v2646
        %v2651 = vld [vmem:[%s2413 + $0x8] sm:$0xff]
        %v2652 = vpack.c.bf16 %v2651, %v2651
        %v2653 = vld [vmem:[%s2413 + $0x20] sm:$0xff]
        %v2654 = vpack.c.bf16 %v2653, %v2653
        %v2655 = vld [vmem:[%s2413 + $0x38] sm:$0xff]
        %v2656 = vpack.c.bf16 %v2655, %v2655
        %v2658 = vsel %vm2420, %v2652, 0
        %v2661 = vsel %vm2420, %v2654, 0
        %2663 = vmatprep.subr.bf16.mxu0 0
        %2664 = vmatpush1.bf16.xpose.msra.mxu0 0
        %2665 = vmatprep.subr.bf16.mxu0 0
        %2666 = vmatpush1.bf16.xpose.msra.mxu0 0
        %2667 = vmatprep.subr.bf16.mxu0 0
        %2668 = vmatpush1.bf16.xpose.msra.mxu0 0
        %2669 = vmatprep.subr.bf16.mxu0 0
        %2670 = vmatpush1.bf16.xpose.msra.mxu0 0
        %2671 = vmatprep.subr.bf16.mxu0 0
        %2672 = vmatpush1.bf16.xpose.msra.mxu0 0
        %2673 = vmatprep.subr.bf16.mxu0 0
        %2674 = vmatpush1.bf16.xpose.msra.mxu0 0
        %2675 = vmatprep.subr.bf16.mxu0 0
        %2676 = vmatpush1.bf16.xpose.msra.mxu0 0
        %2677 = vmatprep.subr.bf16.mxu0 0
        %2678 = vmatpush1.bf16.xpose.msra.mxu0 %v2661
        %2679 = vmatprep.subr.bf16.mxu0 0
        %2680 = vmatpush2.bf16.xpose.msra.mxu0 0
        %2681 = vmatprep.subr.bf16.mxu0 0
        %2682 = vmatpush2.bf16.xpose.msra.mxu0 0
        %2683 = vmatprep.subr.bf16.mxu0 0
        %2684 = vmatpush2.bf16.xpose.msra.mxu0 0
        %2685 = vmatprep.subr.bf16.mxu0 0
        %2686 = vmatpush2.bf16.xpose.msra.mxu0 0
        %2687 = vmatprep.subr.bf16.mxu0 0
        %2688 = vmatpush2.bf16.xpose.msra.mxu0 0
        %2689 = vmatprep.subr.bf16.mxu0 0
        %2690 = vmatpush2.bf16.xpose.msra.mxu0 0
        %2691 = vmatprep.subr.bf16.mxu0 0
        %2692 = vmatpush2.bf16.xpose.msra.mxu0 0
        %2693 = vmatprep.subr.bf16.mxu0 0
        %2694 = vmatpush2.bf16.xpose.msra.mxu0 0
        %2695 = vmatprep.mubr.bf16.mxu0 0
        %2696 = vmatmul.mubr.bf16.gmra.mxu0 %v2658
        %v2697 = vpop.f32.mrf.mxu0
        %v2698 = vadd.f32 0.0, %v2697
        %v2699 = vpop.f32.mrf.mxu0
        %v2700 = vpop.f32.mrf.mxu0
        %v2701 = vpop.f32.mrf.mxu0
        %2702 = vdwg.mxu0
        %v2703 = vsel %vm2410, %v2698, -inf
        %v2704 = vsel %vm2468, %v2703, -inf
        %2705 = vmax.xlane.f32.xlu0 %v2704
        %v2706 = vpop.xlane.xlu0 %2705
        %v2707 = vsub.f32 %v2703, %v2706
        %v2708 = vmul.f32 %v2707, 1.442695
        %v2709 = vpow.pop %v2708
        %v2710 = vsel %vm2468, %v2709, 0.0
        %2711 = vadd.xlane.f32.xlu0 %v2710
        %v2712 = vpop.xlane.xlu0 %2711
        %v2713 = vrcp.pop %v2712
        %v2714 = vmul.f32 %v2709, %v2713
        %v2715 = vpack.c.bf16 %v2714, %v2714
        %v2717 = vsel %vm2468, %v2715, 0
        %v2720 = vsel %vm2484, %v2656, 0
        %2722 = vmatprep.subr.bf16.mxu0 0
        %2723 = vmatpush1.bf16.msra.mxu0 0
        %2724 = vmatprep.subr.bf16.mxu0 0
        %2725 = vmatpush1.bf16.msra.mxu0 0
        %2726 = vmatprep.subr.bf16.mxu0 0
        %2727 = vmatpush1.bf16.msra.mxu0 0
        %2728 = vmatprep.subr.bf16.mxu0 0
        %2729 = vmatpush1.bf16.msra.mxu0 0
        %2730 = vmatprep.subr.bf16.mxu0 0
        %2731 = vmatpush1.bf16.msra.mxu0 0
        %2732 = vmatprep.subr.bf16.mxu0 0
        %2733 = vmatpush1.bf16.msra.mxu0 0
        %2734 = vmatprep.subr.bf16.mxu0 0
        %2735 = vmatpush1.bf16.msra.mxu0 0
        %2736 = vmatprep.subr.bf16.mxu0 0
        %2737 = vmatpush1.bf16.msra.mxu0 %v2720
        %2738 = vmatprep.subr.bf16.mxu0 0
        %2739 = vmatpush2.bf16.msra.mxu0 0
        %2740 = vmatprep.subr.bf16.mxu0 0
        %2741 = vmatpush2.bf16.msra.mxu0 0
        %2742 = vmatprep.subr.bf16.mxu0 0
        %2743 = vmatpush2.bf16.msra.mxu0 0
        %2744 = vmatprep.subr.bf16.mxu0 0
        %2745 = vmatpush2.bf16.msra.mxu0 0
        %2746 = vmatprep.subr.bf16.mxu0 0
        %2747 = vmatpush2.bf16.msra.mxu0 0
        %2748 = vmatprep.subr.bf16.mxu0 0
        %2749 = vmatpush2.bf16.msra.mxu0 0
        %2750 = vmatprep.subr.bf16.mxu0 0
        %2751 = vmatpush2.bf16.msra.mxu0 0
        %2752 = vmatprep.subr.bf16.mxu0 0
        %2753 = vmatpush2.bf16.msra.mxu0 0
        %2754 = vmatprep.mubr.bf16.mxu0 0
        %2755 = vmatmul.mubr.bf16.gmra.mxu0 %v2717
        %v2756 = vpop.f32.mrf.mxu0
        %v2757 = vadd.f32 0.0, %v2756
        %v2758 = vpop.f32.mrf.mxu0
        %v2759 = vpop.f32.mrf.mxu0
        %v2760 = vpop.f32.mrf.mxu0
        %2761 = vdwg.mxu0
        %2763 = vrot.lane.b32.xlu0 %v2652, 64
        %v2764 = vpop.permute.xlu0 %2763
        %2766 = vrot.lane.b32.xlu0 %v2654, 64
        %v2767 = vpop.permute.xlu0 %2766
        %v2769 = vsel %vm2420, %v2764, 0
        %v2772 = vsel %vm2420, %v2767, 0
        %2774 = vmatprep.subr.bf16.mxu0 0
        %2775 = vmatpush1.bf16.xpose.msra.mxu0 0
        %2776 = vmatprep.subr.bf16.mxu0 0
        %2777 = vmatpush1.bf16.xpose.msra.mxu0 0
        %2778 = vmatprep.subr.bf16.mxu0 0
        %2779 = vmatpush1.bf16.xpose.msra.mxu0 0
        %2780 = vmatprep.subr.bf16.mxu0 0
        %2781 = vmatpush1.bf16.xpose.msra.mxu0 0
        %2782 = vmatprep.subr.bf16.mxu0 0
        %2783 = vmatpush1.bf16.xpose.msra.mxu0 0
        %2784 = vmatprep.subr.bf16.mxu0 0
        %2785 = vmatpush1.bf16.xpose.msra.mxu0 0
        %2786 = vmatprep.subr.bf16.mxu0 0
        %2787 = vmatpush1.bf16.xpose.msra.mxu0 0
        %2788 = vmatprep.subr.bf16.mxu0 0
        %2789 = vmatpush1.bf16.xpose.msra.mxu0 %v2772
        %2790 = vmatprep.subr.bf16.mxu0 0
        %2791 = vmatpush2.bf16.xpose.msra.mxu0 0
        %2792 = vmatprep.subr.bf16.mxu0 0
        %2793 = vmatpush2.bf16.xpose.msra.mxu0 0
        %2794 = vmatprep.subr.bf16.mxu0 0
        %2795 = vmatpush2.bf16.xpose.msra.mxu0 0
        %2796 = vmatprep.subr.bf16.mxu0 0
        %2797 = vmatpush2.bf16.xpose.msra.mxu0 0
        %2798 = vmatprep.subr.bf16.mxu0 0
        %2799 = vmatpush2.bf16.xpose.msra.mxu0 0
        %2800 = vmatprep.subr.bf16.mxu0 0
        %2801 = vmatpush2.bf16.xpose.msra.mxu0 0
        %2802 = vmatprep.subr.bf16.mxu0 0
        %2803 = vmatpush2.bf16.xpose.msra.mxu0 0
        %2804 = vmatprep.subr.bf16.mxu0 0
        %2805 = vmatpush2.bf16.xpose.msra.mxu0 0
        %2806 = vmatprep.mubr.bf16.mxu0 0
        %2807 = vmatmul.mubr.bf16.gmra.mxu0 %v2769
        %v2808 = vpop.f32.mrf.mxu0
        %v2809 = vadd.f32 0.0, %v2808
        %v2810 = vpop.f32.mrf.mxu0
        %v2811 = vpop.f32.mrf.mxu0
        %v2812 = vpop.f32.mrf.mxu0
        %2813 = vdwg.mxu0
        %v2814 = vsel %vm2410, %v2809, -inf
        %v2815 = vsel %vm2468, %v2814, -inf
        %2816 = vmax.xlane.f32.xlu0 %v2815
        %v2817 = vpop.xlane.xlu0 %2816
        %v2818 = vsub.f32 %v2814, %v2817
        %v2819 = vmul.f32 %v2818, 1.442695
        %v2820 = vpow.pop %v2819
        %v2821 = vsel %vm2468, %v2820, 0.0
        %2822 = vadd.xlane.f32.xlu0 %v2821
        %v2823 = vpop.xlane.xlu0 %2822
        %v2824 = vrcp.pop %v2823
        %v2825 = vmul.f32 %v2820, %v2824
        %v2826 = vpack.c.bf16 %v2825, %v2825
        %2828 = vrot.lane.b32.xlu0 %v2656, 64
        %v2829 = vpop.permute.xlu0 %2828
        %v2831 = vsel %vm2468, %v2826, 0
        %v2834 = vsel %vm2484, %v2829, 0
        %2836 = vmatprep.subr.bf16.mxu0 0
        %2837 = vmatpush1.bf16.msra.mxu0 0
        %2838 = vmatprep.subr.bf16.mxu0 0
        %2839 = vmatpush1.bf16.msra.mxu0 0
        %2840 = vmatprep.subr.bf16.mxu0 0
        %2841 = vmatpush1.bf16.msra.mxu0 0
        %2842 = vmatprep.subr.bf16.mxu0 0
        %2843 = vmatpush1.bf16.msra.mxu0 0
        %2844 = vmatprep.subr.bf16.mxu0 0
        %2845 = vmatpush1.bf16.msra.mxu0 0
        %2846 = vmatprep.subr.bf16.mxu0 0
        %2847 = vmatpush1.bf16.msra.mxu0 0
        %2848 = vmatprep.subr.bf16.mxu0 0
        %2849 = vmatpush1.bf16.msra.mxu0 0
        %2850 = vmatprep.subr.bf16.mxu0 0
        %2851 = vmatpush1.bf16.msra.mxu0 %v2834
        %2852 = vmatprep.subr.bf16.mxu0 0
        %2853 = vmatpush2.bf16.msra.mxu0 0
        %2854 = vmatprep.subr.bf16.mxu0 0
        %2855 = vmatpush2.bf16.msra.mxu0 0
        %2856 = vmatprep.subr.bf16.mxu0 0
        %2857 = vmatpush2.bf16.msra.mxu0 0
        %2858 = vmatprep.subr.bf16.mxu0 0
        %2859 = vmatpush2.bf16.msra.mxu0 0
        %2860 = vmatprep.subr.bf16.mxu0 0
        %2861 = vmatpush2.bf16.msra.mxu0 0
        %2862 = vmatprep.subr.bf16.mxu0 0
        %2863 = vmatpush2.bf16.msra.mxu0 0
        %2864 = vmatprep.subr.bf16.mxu0 0
        %2865 = vmatpush2.bf16.msra.mxu0 0
        %2866 = vmatprep.subr.bf16.mxu0 0
        %2867 = vmatpush2.bf16.msra.mxu0 0
        %2868 = vmatprep.mubr.bf16.mxu0 0
        %2869 = vmatmul.mubr.bf16.gmra.mxu0 %v2831
        %v2870 = vpop.f32.mrf.mxu0
        %v2871 = vadd.f32 0.0, %v2870
        %v2872 = vpop.f32.mrf.mxu0
        %v2873 = vpop.f32.mrf.mxu0
        %v2874 = vpop.f32.mrf.mxu0
        %2875 = vdwg.mxu0
        %2877 = vrot.lane.b32.xlu0 %v2871, 64
        %v2878 = vpop.permute.xlu0 %2877
        %v2880 = vsel %vm2420, %v2757, %v2878
        %2881 = vst [vmem:[%s2649 + $0x8] sm:$0xff] %v2880
        %v2882 = vld [vmem:[%s2413 + $0x10] sm:$0xff]
        %v2883 = vpack.c.bf16 %v2882, %v2882
        %v2884 = vld [vmem:[%s2413 + $0x28] sm:$0xff]
        %v2885 = vpack.c.bf16 %v2884, %v2884
        %v2886 = vld [vmem:[%s2413 + $0x40] sm:$0xff]
        %v2887 = vpack.c.bf16 %v2886, %v2886
        %v2889 = vsel %vm2420, %v2883, 0
        %v2892 = vsel %vm2420, %v2885, 0
        %2894 = vmatprep.subr.bf16.mxu0 0
        %2895 = vmatpush1.bf16.xpose.msra.mxu0 0
        %2896 = vmatprep.subr.bf16.mxu0 0
        %2897 = vmatpush1.bf16.xpose.msra.mxu0 0
        %2898 = vmatprep.subr.bf16.mxu0 0
        %2899 = vmatpush1.bf16.xpose.msra.mxu0 0
        %2900 = vmatprep.subr.bf16.mxu0 0
        %2901 = vmatpush1.bf16.xpose.msra.mxu0 0
        %2902 = vmatprep.subr.bf16.mxu0 0
        %2903 = vmatpush1.bf16.xpose.msra.mxu0 0
        %2904 = vmatprep.subr.bf16.mxu0 0
        %2905 = vmatpush1.bf16.xpose.msra.mxu0 0
        %2906 = vmatprep.subr.bf16.mxu0 0
        %2907 = vmatpush1.bf16.xpose.msra.mxu0 0
        %2908 = vmatprep.subr.bf16.mxu0 0
        %2909 = vmatpush1.bf16.xpose.msra.mxu0 %v2892
        %2910 = vmatprep.subr.bf16.mxu0 0
        %2911 = vmatpush2.bf16.xpose.msra.mxu0 0
        %2912 = vmatprep.subr.bf16.mxu0 0
        %2913 = vmatpush2.bf16.xpose.msra.mxu0 0
        %2914 = vmatprep.subr.bf16.mxu0 0
        %2915 = vmatpush2.bf16.xpose.msra.mxu0 0
        %2916 = vmatprep.subr.bf16.mxu0 0
        %2917 = vmatpush2.bf16.xpose.msra.mxu0 0
        %2918 = vmatprep.subr.bf16.mxu0 0
        %2919 = vmatpush2.bf16.xpose.msra.mxu0 0
        %2920 = vmatprep.subr.bf16.mxu0 0
        %2921 = vmatpush2.bf16.xpose.msra.mxu0 0
        %2922 = vmatprep.subr.bf16.mxu0 0
        %2923 = vmatpush2.bf16.xpose.msra.mxu0 0
        %2924 = vmatprep.subr.bf16.mxu0 0
        %2925 = vmatpush2.bf16.xpose.msra.mxu0 0
        %2926 = vmatprep.mubr.bf16.mxu0 0
        %2927 = vmatmul.mubr.bf16.gmra.mxu0 %v2889
        %v2928 = vpop.f32.mrf.mxu0
        %v2929 = vadd.f32 0.0, %v2928
        %v2930 = vpop.f32.mrf.mxu0
        %v2931 = vpop.f32.mrf.mxu0
        %v2932 = vpop.f32.mrf.mxu0
        %2933 = vdwg.mxu0
        %v2934 = vsel %vm2410, %v2929, -inf
        %v2935 = vsel %vm2468, %v2934, -inf
        %2936 = vmax.xlane.f32.xlu0 %v2935
        %v2937 = vpop.xlane.xlu0 %2936
        %v2938 = vsub.f32 %v2934, %v2937
        %v2939 = vmul.f32 %v2938, 1.442695
        %v2940 = vpow.pop %v2939
        %v2941 = vsel %vm2468, %v2940, 0.0
        %2942 = vadd.xlane.f32.xlu0 %v2941
        %v2943 = vpop.xlane.xlu0 %2942
        %v2944 = vrcp.pop %v2943
        %v2945 = vmul.f32 %v2940, %v2944
        %v2946 = vpack.c.bf16 %v2945, %v2945
        %v2948 = vsel %vm2468, %v2946, 0
        %v2951 = vsel %vm2484, %v2887, 0
        %2953 = vmatprep.subr.bf16.mxu0 0
        %2954 = vmatpush1.bf16.msra.mxu0 0
        %2955 = vmatprep.subr.bf16.mxu0 0
        %2956 = vmatpush1.bf16.msra.mxu0 0
        %2957 = vmatprep.subr.bf16.mxu0 0
        %2958 = vmatpush1.bf16.msra.mxu0 0
        %2959 = vmatprep.subr.bf16.mxu0 0
        %2960 = vmatpush1.bf16.msra.mxu0 0
        %2961 = vmatprep.subr.bf16.mxu0 0
        %2962 = vmatpush1.bf16.msra.mxu0 0
        %2963 = vmatprep.subr.bf16.mxu0 0
        %2964 = vmatpush1.bf16.msra.mxu0 0
        %2965 = vmatprep.subr.bf16.mxu0 0
        %2966 = vmatpush1.bf16.msra.mxu0 0
        %2967 = vmatprep.subr.bf16.mxu0 0
        %2968 = vmatpush1.bf16.msra.mxu0 %v2951
        %2969 = vmatprep.subr.bf16.mxu0 0
        %2970 = vmatpush2.bf16.msra.mxu0 0
        %2971 = vmatprep.subr.bf16.mxu0 0
        %2972 = vmatpush2.bf16.msra.mxu0 0
        %2973 = vmatprep.subr.bf16.mxu0 0
        %2974 = vmatpush2.bf16.msra.mxu0 0
        %2975 = vmatprep.subr.bf16.mxu0 0
        %2976 = vmatpush2.bf16.msra.mxu0 0
        %2977 = vmatprep.subr.bf16.mxu0 0
        %2978 = vmatpush2.bf16.msra.mxu0 0
        %2979 = vmatprep.subr.bf16.mxu0 0
        %2980 = vmatpush2.bf16.msra.mxu0 0
        %2981 = vmatprep.subr.bf16.mxu0 0
        %2982 = vmatpush2.bf16.msra.mxu0 0
        %2983 = vmatprep.subr.bf16.mxu0 0
        %2984 = vmatpush2.bf16.msra.mxu0 0
        %2985 = vmatprep.mubr.bf16.mxu0 0
        %2986 = vmatmul.mubr.bf16.gmra.mxu0 %v2948
        %v2987 = vpop.f32.mrf.mxu0
        %v2988 = vadd.f32 0.0, %v2987
        %v2989 = vpop.f32.mrf.mxu0
        %v2990 = vpop.f32.mrf.mxu0
        %v2991 = vpop.f32.mrf.mxu0
        %2992 = vdwg.mxu0
        %2994 = vrot.lane.b32.xlu0 %v2883, 64
        %v2995 = vpop.permute.xlu0 %2994
        %2997 = vrot.lane.b32.xlu0 %v2885, 64
        %v2998 = vpop.permute.xlu0 %2997
        %v3000 = vsel %vm2420, %v2995, 0
        %v3003 = vsel %vm2420, %v2998, 0
        %3005 = vmatprep.subr.bf16.mxu0 0
        %3006 = vmatpush1.bf16.xpose.msra.mxu0 0
        %3007 = vmatprep.subr.bf16.mxu0 0
        %3008 = vmatpush1.bf16.xpose.msra.mxu0 0
        %3009 = vmatprep.subr.bf16.mxu0 0
        %3010 = vmatpush1.bf16.xpose.msra.mxu0 0
        %3011 = vmatprep.subr.bf16.mxu0 0
        %3012 = vmatpush1.bf16.xpose.msra.mxu0 0
        %3013 = vmatprep.subr.bf16.mxu0 0
        %3014 = vmatpush1.bf16.xpose.msra.mxu0 0
        %3015 = vmatprep.subr.bf16.mxu0 0
        %3016 = vmatpush1.bf16.xpose.msra.mxu0 0
        %3017 = vmatprep.subr.bf16.mxu0 0
        %3018 = vmatpush1.bf16.xpose.msra.mxu0 0
        %3019 = vmatprep.subr.bf16.mxu0 0
        %3020 = vmatpush1.bf16.xpose.msra.mxu0 %v3003
        %3021 = vmatprep.subr.bf16.mxu0 0
        %3022 = vmatpush2.bf16.xpose.msra.mxu0 0
        %3023 = vmatprep.subr.bf16.mxu0 0
        %3024 = vmatpush2.bf16.xpose.msra.mxu0 0
        %3025 = vmatprep.subr.bf16.mxu0 0
        %3026 = vmatpush2.bf16.xpose.msra.mxu0 0
        %3027 = vmatprep.subr.bf16.mxu0 0
        %3028 = vmatpush2.bf16.xpose.msra.mxu0 0
        %3029 = vmatprep.subr.bf16.mxu0 0
        %3030 = vmatpush2.bf16.xpose.msra.mxu0 0
        %3031 = vmatprep.subr.bf16.mxu0 0
        %3032 = vmatpush2.bf16.xpose.msra.mxu0 0
        %3033 = vmatprep.subr.bf16.mxu0 0
        %3034 = vmatpush2.bf16.xpose.msra.mxu0 0
        %3035 = vmatprep.subr.bf16.mxu0 0
        %3036 = vmatpush2.bf16.xpose.msra.mxu0 0
        %3037 = vmatprep.mubr.bf16.mxu0 0
        %3038 = vmatmul.mubr.bf16.gmra.mxu0 %v3000
        %v3039 = vpop.f32.mrf.mxu0
        %v3040 = vadd.f32 0.0, %v3039
        %v3041 = vpop.f32.mrf.mxu0
        %v3042 = vpop.f32.mrf.mxu0
        %v3043 = vpop.f32.mrf.mxu0
        %3044 = vdwg.mxu0
        %v3045 = vsel %vm2410, %v3040, -inf
        %v3046 = vsel %vm2468, %v3045, -inf
        %3047 = vmax.xlane.f32.xlu0 %v3046
        %v3048 = vpop.xlane.xlu0 %3047
        %v3049 = vsub.f32 %v3045, %v3048
        %v3050 = vmul.f32 %v3049, 1.442695
        %v3051 = vpow.pop %v3050
        %v3052 = vsel %vm2468, %v3051, 0.0
        %3053 = vadd.xlane.f32.xlu0 %v3052
        %v3054 = vpop.xlane.xlu0 %3053
        %v3055 = vrcp.pop %v3054
        %v3056 = vmul.f32 %v3051, %v3055
        %v3057 = vpack.c.bf16 %v3056, %v3056
        %3059 = vrot.lane.b32.xlu0 %v2887, 64
        %v3060 = vpop.permute.xlu0 %3059
        %v3062 = vsel %vm2468, %v3057, 0
        %v3065 = vsel %vm2484, %v3060, 0
        %3067 = vmatprep.subr.bf16.mxu0 0
        %3068 = vmatpush1.bf16.msra.mxu0 0
        %3069 = vmatprep.subr.bf16.mxu0 0
        %3070 = vmatpush1.bf16.msra.mxu0 0
        %3071 = vmatprep.subr.bf16.mxu0 0
        %3072 = vmatpush1.bf16.msra.mxu0 0
        %3073 = vmatprep.subr.bf16.mxu0 0
        %3074 = vmatpush1.bf16.msra.mxu0 0
        %3075 = vmatprep.subr.bf16.mxu0 0
        %3076 = vmatpush1.bf16.msra.mxu0 0
        %3077 = vmatprep.subr.bf16.mxu0 0
        %3078 = vmatpush1.bf16.msra.mxu0 0
        %3079 = vmatprep.subr.bf16.mxu0 0
        %3080 = vmatpush1.bf16.msra.mxu0 0
        %3081 = vmatprep.subr.bf16.mxu0 0
        %3082 = vmatpush1.bf16.msra.mxu0 %v3065
        %3083 = vmatprep.subr.bf16.mxu0 0
        %3084 = vmatpush2.bf16.msra.mxu0 0
        %3085 = vmatprep.subr.bf16.mxu0 0
        %3086 = vmatpush2.bf16.msra.mxu0 0
        %3087 = vmatprep.subr.bf16.mxu0 0
        %3088 = vmatpush2.bf16.msra.mxu0 0
        %3089 = vmatprep.subr.bf16.mxu0 0
        %3090 = vmatpush2.bf16.msra.mxu0 0
        %3091 = vmatprep.subr.bf16.mxu0 0
        %3092 = vmatpush2.bf16.msra.mxu0 0
        %3093 = vmatprep.subr.bf16.mxu0 0
        %3094 = vmatpush2.bf16.msra.mxu0 0
        %3095 = vmatprep.subr.bf16.mxu0 0
        %3096 = vmatpush2.bf16.msra.mxu0 0
        %3097 = vmatprep.subr.bf16.mxu0 0
        %3098 = vmatpush2.bf16.msra.mxu0 0
        %3099 = vmatprep.mubr.bf16.mxu0 0
        %3100 = vmatmul.mubr.bf16.gmra.mxu0 %v3062
        %v3101 = vpop.f32.mrf.mxu0
        %v3102 = vadd.f32 0.0, %v3101
        %v3103 = vpop.f32.mrf.mxu0
        %v3104 = vpop.f32.mrf.mxu0
        %v3105 = vpop.f32.mrf.mxu0
        %3106 = vdwg.mxu0
        %3108 = vrot.lane.b32.xlu0 %v3102, 64
        %v3109 = vpop.permute.xlu0 %3108
        %v3111 = vsel %vm2420, %v2988, %v3109
        %3112 = vst [vmem:[%s2649 + $0x10] sm:$0xff] %v3111
        %v3113 = vld [vmem:[#allocation3] sm:$0xff]
        %v3114 = vld [vmem:[#allocation3 + $0x8] sm:$0xff]
        %v3115 = vld [vmem:[#allocation3 + $0x10] sm:$0xff]
        %v3116 = vpack.c.bf16 %v3113, %v3113
        %v3117 = vpack.c.bf16 %v3114, %v3114
        %v3118 = vpack.c.bf16 %v3115, %v3115
        %v3119 = vld [vmem:[#allocation12] sm:$0xff]
        %v3120 = vld [vmem:[#allocation12 + $0x8] sm:$0xf]
        %v3121 = vld [vmem:[#allocation12 + $0xc] sm:$0xff]
        %v3122 = vld [vmem:[#allocation12 + $0x14] sm:$0xf]
        %v3123 = vld [vmem:[#allocation12 + $0x18] sm:$0xff]
        %v3124 = vld [vmem:[#allocation12 + $0x20] sm:$0xf]
        %v3125 = vld [vmem:[#allocation12 + $0x24] sm:$0xff]
        %v3126 = vld [vmem:[#allocation12 + $0x2c] sm:$0xf]
        %v3127 = vld [vmem:[#allocation12 + $0x30] sm:$0xff]
        %v3128 = vld [vmem:[#allocation12 + $0x38] sm:$0xf]
        %v3129 = vld [vmem:[#allocation12 + $0x3c] sm:$0xff]
        %v3130 = vld [vmem:[#allocation12 + $0x44] sm:$0xf]
        %v3131 = vld [vmem:[#allocation12 + $0x48] sm:$0xff]
        %v3132 = vld [vmem:[#allocation12 + $0x50] sm:$0xf]
        %v3133 = vld [vmem:[#allocation12 + $0x54] sm:$0xff]
        %v3134 = vld [vmem:[#allocation12 + $0x5c] sm:$0xf]
        %v3135 = vld [vmem:[#allocation12 + $0x60] sm:$0xff]
        %v3136 = vld [vmem:[#allocation12 + $0x68] sm:$0xf]
        %v3137 = vld [vmem:[#allocation12 + $0x6c] sm:$0xff]
        %v3138 = vld [vmem:[#allocation12 + $0x74] sm:$0xf]
        %v3139 = vld [vmem:[#allocation12 + $0x78] sm:$0xff]
        %v3140 = vld [vmem:[#allocation12 + $0x80] sm:$0xf]
        %v3141 = vld [vmem:[#allocation12 + $0x84] sm:$0xff]
        %v3142 = vld [vmem:[#allocation12 + $0x8c] sm:$0xf]
        %v3143 = vld [vmem:[#allocation12 + $0x90] sm:$0xff]
        %v3144 = vld [vmem:[#allocation12 + $0x98] sm:$0xf]
        %v3145 = vld [vmem:[#allocation12 + $0x9c] sm:$0xff]
        %v3146 = vld [vmem:[#allocation12 + $0xa4] sm:$0xf]
        %v3147 = vld [vmem:[#allocation12 + $0xa8] sm:$0xff]
        %v3148 = vld [vmem:[#allocation12 + $0xb0] sm:$0xf]
        %v3149 = vld [vmem:[#allocation12 + $0xb4] sm:$0xff]
        %v3150 = vld [vmem:[#allocation12 + $0xbc] sm:$0xf]
        %v3151 = vld [vmem:[#allocation12 + $0xc0] sm:$0xff]
        %v3152 = vld [vmem:[#allocation12 + $0xc8] sm:$0xf]
        %v3153 = vld [vmem:[#allocation12 + $0xcc] sm:$0xff]
        %v3154 = vld [vmem:[#allocation12 + $0xd4] sm:$0xf]
        %v3155 = vld [vmem:[#allocation12 + $0xd8] sm:$0xff]
        %v3156 = vld [vmem:[#allocation12 + $0xe0] sm:$0xf]
        %v3157 = vld [vmem:[#allocation12 + $0xe4] sm:$0xff]
        %v3158 = vld [vmem:[#allocation12 + $0xec] sm:$0xf]
        %v3159 = vld [vmem:[#allocation12 + $0xf0] sm:$0xff]
        %v3160 = vld [vmem:[#allocation12 + $0xf8] sm:$0xf]
        %v3161 = vld [vmem:[#allocation12 + $0xfc] sm:$0xff]
        %v3162 = vld [vmem:[#allocation12 + $0x104] sm:$0xf]
        %v3163 = vld [vmem:[#allocation12 + $0x108] sm:$0xff]
        %v3164 = vld [vmem:[#allocation12 + $0x110] sm:$0xf]
        %v3165 = vld [vmem:[#allocation12 + $0x114] sm:$0xff]
        %v3166 = vld [vmem:[#allocation12 + $0x11c] sm:$0xf]
        %v3167 = vld [vmem:[#allocation12 + $0x120] sm:$0xff]
        %v3168 = vld [vmem:[#allocation12 + $0x128] sm:$0xf]
        %v3169 = vld [vmem:[#allocation12 + $0x12c] sm:$0xff]
        %v3170 = vld [vmem:[#allocation12 + $0x134] sm:$0xf]
        %v3171 = vld [vmem:[#allocation12 + $0x138] sm:$0xff]
        %v3172 = vld [vmem:[#allocation12 + $0x140] sm:$0xf]
        %v3173 = vld [vmem:[#allocation12 + $0x144] sm:$0xff]
        %v3174 = vld [vmem:[#allocation12 + $0x14c] sm:$0xf]
        %v3175 = vld [vmem:[#allocation12 + $0x150] sm:$0xff]
        %v3176 = vld [vmem:[#allocation12 + $0x158] sm:$0xf]
        %v3177 = vld [vmem:[#allocation12 + $0x15c] sm:$0xff]
        %v3178 = vld [vmem:[#allocation12 + $0x164] sm:$0xf]
        %v3179 = vld [vmem:[#allocation12 + $0x168] sm:$0xff]
        %v3180 = vld [vmem:[#allocation12 + $0x170] sm:$0xf]
        %v3181 = vld [vmem:[#allocation12 + $0x174] sm:$0xff]
        %v3182 = vld [vmem:[#allocation12 + $0x17c] sm:$0xf]
        %v3183 = vld [vmem:[#allocation12 + $0x180] sm:$0xff]
        %v3184 = vld [vmem:[#allocation12 + $0x188] sm:$0xf]
        %v3185 = vld [vmem:[#allocation12 + $0x18c] sm:$0xff]
        %v3186 = vld [vmem:[#allocation12 + $0x194] sm:$0xf]
        %v3187 = vld [vmem:[#allocation12 + $0x198] sm:$0xff]
        %v3188 = vld [vmem:[#allocation12 + $0x1a0] sm:$0xf]
        %v3189 = vld [vmem:[#allocation12 + $0x1a4] sm:$0xff]
        %v3190 = vld [vmem:[#allocation12 + $0x1ac] sm:$0xf]
        %v3191 = vld [vmem:[#allocation12 + $0x1b0] sm:$0xff]
        %v3192 = vld [vmem:[#allocation12 + $0x1b8] sm:$0xf]
        %v3193 = vld [vmem:[#allocation12 + $0x1bc] sm:$0xff]
        %v3194 = vld [vmem:[#allocation12 + $0x1c4] sm:$0xf]
        %v3195 = vld [vmem:[#allocation12 + $0x1c8] sm:$0xff]
        %v3196 = vld [vmem:[#allocation12 + $0x1d0] sm:$0xf]
        %v3197 = vld [vmem:[#allocation12 + $0x1d4] sm:$0xff]
        %v3198 = vld [vmem:[#allocation12 + $0x1dc] sm:$0xf]
        %v3199 = vld [vmem:[#allocation12 + $0x1e0] sm:$0xff]
        %v3200 = vld [vmem:[#allocation12 + $0x1e8] sm:$0xf]
        %v3201 = vld [vmem:[#allocation12 + $0x1ec] sm:$0xff]
        %v3202 = vld [vmem:[#allocation12 + $0x1f4] sm:$0xf]
        %v3203 = vld [vmem:[#allocation12 + $0x1f8] sm:$0xff]
        %v3204 = vld [vmem:[#allocation12 + $0x200] sm:$0xf]
        %v3205 = vld [vmem:[#allocation12 + $0x204] sm:$0xff]
        %v3206 = vld [vmem:[#allocation12 + $0x20c] sm:$0xf]
        %v3207 = vld [vmem:[#allocation12 + $0x210] sm:$0xff]
        %v3208 = vld [vmem:[#allocation12 + $0x218] sm:$0xf]
        %v3209 = vld [vmem:[#allocation12 + $0x21c] sm:$0xff]
        %v3210 = vld [vmem:[#allocation12 + $0x224] sm:$0xf]
        %v3211 = vld [vmem:[#allocation12 + $0x228] sm:$0xff]
        %v3212 = vld [vmem:[#allocation12 + $0x230] sm:$0xf]
        %v3213 = vld [vmem:[#allocation12 + $0x234] sm:$0xff]
        %v3214 = vld [vmem:[#allocation12 + $0x23c] sm:$0xf]
        %v3311 = vunpack.c.l.b16 %v3119
        %v3312 = vunpack.c.h.b16 %v3119
        %v3313 = vunpack.c.l.b16 %v3120
        %v3314 = vunpack.c.l.b16 %v3121
        %v3315 = vunpack.c.h.b16 %v3121
        %v3316 = vunpack.c.l.b16 %v3122
        %v3317 = vunpack.c.l.b16 %v3123
        %v3318 = vunpack.c.h.b16 %v3123
        %v3319 = vunpack.c.l.b16 %v3124
        %v3320 = vunpack.c.l.b16 %v3125
        %v3321 = vunpack.c.h.b16 %v3125
        %v3322 = vunpack.c.l.b16 %v3126
        %v3323 = vunpack.c.l.b16 %v3127
        %v3324 = vunpack.c.h.b16 %v3127
        %v3325 = vunpack.c.l.b16 %v3128
        %v3326 = vunpack.c.l.b16 %v3129
        %v3327 = vunpack.c.h.b16 %v3129
        %v3328 = vunpack.c.l.b16 %v3130
        %v3329 = vunpack.c.l.b16 %v3131
        %v3330 = vunpack.c.h.b16 %v3131
        %v3331 = vunpack.c.l.b16 %v3132
        %v3332 = vunpack.c.l.b16 %v3133
        %v3333 = vunpack.c.h.b16 %v3133
        %v3334 = vunpack.c.l.b16 %v3134
        %v3335 = vunpack.c.l.b16 %v3135
        %v3336 = vunpack.c.h.b16 %v3135
        %v3337 = vunpack.c.l.b16 %v3136
        %v3338 = vunpack.c.l.b16 %v3137
        %v3339 = vunpack.c.h.b16 %v3137
        %v3340 = vunpack.c.l.b16 %v3138
        %v3341 = vunpack.c.l.b16 %v3139
        %v3342 = vunpack.c.h.b16 %v3139
        %v3343 = vunpack.c.l.b16 %v3140
        %v3344 = vunpack.c.l.b16 %v3141
        %v3345 = vunpack.c.h.b16 %v3141
        %v3346 = vunpack.c.l.b16 %v3142
        %v3347 = vunpack.c.l.b16 %v3143
        %v3348 = vunpack.c.h.b16 %v3143
        %v3349 = vunpack.c.l.b16 %v3144
        %v3350 = vunpack.c.l.b16 %v3145
        %v3351 = vunpack.c.h.b16 %v3145
        %v3352 = vunpack.c.l.b16 %v3146
        %v3353 = vunpack.c.l.b16 %v3147
        %v3354 = vunpack.c.h.b16 %v3147
        %v3355 = vunpack.c.l.b16 %v3148
        %v3356 = vunpack.c.l.b16 %v3149
        %v3357 = vunpack.c.h.b16 %v3149
        %v3358 = vunpack.c.l.b16 %v3150
        %v3359 = vunpack.c.l.b16 %v3151
        %v3360 = vunpack.c.h.b16 %v3151
        %v3361 = vunpack.c.l.b16 %v3152
        %v3362 = vunpack.c.l.b16 %v3153
        %v3363 = vunpack.c.h.b16 %v3153
        %v3364 = vunpack.c.l.b16 %v3154
        %v3365 = vunpack.c.l.b16 %v3155
        %v3366 = vunpack.c.h.b16 %v3155
        %v3367 = vunpack.c.l.b16 %v3156
        %v3368 = vunpack.c.l.b16 %v3157
        %v3369 = vunpack.c.h.b16 %v3157
        %v3370 = vunpack.c.l.b16 %v3158
        %v3371 = vunpack.c.l.b16 %v3159
        %v3372 = vunpack.c.h.b16 %v3159
        %v3373 = vunpack.c.l.b16 %v3160
        %v3374 = vunpack.c.l.b16 %v3161
        %v3375 = vunpack.c.h.b16 %v3161
        %v3376 = vunpack.c.l.b16 %v3162
        %v3377 = vunpack.c.l.b16 %v3163
        %v3378 = vunpack.c.h.b16 %v3163
        %v3379 = vunpack.c.l.b16 %v3164
        %v3380 = vunpack.c.l.b16 %v3165
        %v3381 = vunpack.c.h.b16 %v3165
        %v3382 = vunpack.c.l.b16 %v3166
        %v3383 = vunpack.c.l.b16 %v3167
        %v3384 = vunpack.c.h.b16 %v3167
        %v3385 = vunpack.c.l.b16 %v3168
        %v3386 = vunpack.c.l.b16 %v3169
        %v3387 = vunpack.c.h.b16 %v3169
        %v3388 = vunpack.c.l.b16 %v3170
        %v3389 = vunpack.c.l.b16 %v3171
        %v3390 = vunpack.c.h.b16 %v3171
        %v3391 = vunpack.c.l.b16 %v3172
        %v3392 = vunpack.c.l.b16 %v3173
        %v3393 = vunpack.c.h.b16 %v3173
        %v3394 = vunpack.c.l.b16 %v3174
        %v3395 = vunpack.c.l.b16 %v3175
        %v3396 = vunpack.c.h.b16 %v3175
        %v3397 = vunpack.c.l.b16 %v3176
        %v3398 = vunpack.c.l.b16 %v3177
        %v3399 = vunpack.c.h.b16 %v3177
        %v3400 = vunpack.c.l.b16 %v3178
        %v3401 = vunpack.c.l.b16 %v3179
        %v3402 = vunpack.c.h.b16 %v3179
        %v3403 = vunpack.c.l.b16 %v3180
        %v3404 = vunpack.c.l.b16 %v3181
        %v3405 = vunpack.c.h.b16 %v3181
        %v3406 = vunpack.c.l.b16 %v3182
        %v3407 = vunpack.c.l.b16 %v3183
        %v3408 = vunpack.c.h.b16 %v3183
        %v3409 = vunpack.c.l.b16 %v3184
        %v3410 = vunpack.c.l.b16 %v3185
        %v3411 = vunpack.c.h.b16 %v3185
        %v3412 = vunpack.c.l.b16 %v3186
        %v3413 = vunpack.c.l.b16 %v3187
        %v3414 = vunpack.c.h.b16 %v3187
        %v3415 = vunpack.c.l.b16 %v3188
        %v3416 = vunpack.c.l.b16 %v3189
        %v3417 = vunpack.c.h.b16 %v3189
        %v3418 = vunpack.c.l.b16 %v3190
        %v3419 = vunpack.c.l.b16 %v3191
        %v3420 = vunpack.c.h.b16 %v3191
        %v3421 = vunpack.c.l.b16 %v3192
        %v3422 = vunpack.c.l.b16 %v3193
        %v3423 = vunpack.c.h.b16 %v3193
        %v3424 = vunpack.c.l.b16 %v3194
        %v3425 = vunpack.c.l.b16 %v3195
        %v3426 = vunpack.c.h.b16 %v3195
        %v3427 = vunpack.c.l.b16 %v3196
        %v3428 = vunpack.c.l.b16 %v3197
        %v3429 = vunpack.c.h.b16 %v3197
        %v3430 = vunpack.c.l.b16 %v3198
        %v3431 = vunpack.c.l.b16 %v3199
        %v3432 = vunpack.c.h.b16 %v3199
        %v3433 = vunpack.c.l.b16 %v3200
        %v3434 = vunpack.c.l.b16 %v3201
        %v3435 = vunpack.c.h.b16 %v3201
        %v3436 = vunpack.c.l.b16 %v3202
        %v3437 = vunpack.c.l.b16 %v3203
        %v3438 = vunpack.c.h.b16 %v3203
        %v3439 = vunpack.c.l.b16 %v3204
        %v3440 = vunpack.c.l.b16 %v3205
        %v3441 = vunpack.c.h.b16 %v3205
        %v3442 = vunpack.c.l.b16 %v3206
        %v3443 = vunpack.c.l.b16 %v3207
        %v3444 = vunpack.c.h.b16 %v3207
        %v3445 = vunpack.c.l.b16 %v3208
        %v3446 = vunpack.c.l.b16 %v3209
        %v3447 = vunpack.c.h.b16 %v3209
        %v3448 = vunpack.c.l.b16 %v3210
        %v3449 = vunpack.c.l.b16 %v3211
        %v3450 = vunpack.c.h.b16 %v3211
        %v3451 = vunpack.c.l.b16 %v3212
        %v3452 = vunpack.c.l.b16 %v3213
        %v3453 = vunpack.c.h.b16 %v3213
        %v3454 = vunpack.c.l.b16 %v3214
        %v3455 = vpack.c.b16 %v3314, %v3311
        %v3456 = vpack.c.b16 %v3315, %v3312
        %v3457 = vpack.c.b16 %v3316, %v3313
        %v3458 = vpack.c.b16 %v3320, %v3317
        %v3459 = vpack.c.b16 %v3321, %v3318
        %v3460 = vpack.c.b16 %v3322, %v3319
        %v3461 = vpack.c.b16 %v3326, %v3323
        %v3462 = vpack.c.b16 %v3327, %v3324
        %v3463 = vpack.c.b16 %v3328, %v3325
        %v3464 = vpack.c.b16 %v3332, %v3329
        %v3465 = vpack.c.b16 %v3333, %v3330
        %v3466 = vpack.c.b16 %v3334, %v3331
        %v3467 = vpack.c.b16 %v3338, %v3335
        %v3468 = vpack.c.b16 %v3339, %v3336
        %v3469 = vpack.c.b16 %v3340, %v3337
        %v3470 = vpack.c.b16 %v3344, %v3341
        %v3471 = vpack.c.b16 %v3345, %v3342
        %v3472 = vpack.c.b16 %v3346, %v3343
        %v3473 = vpack.c.b16 %v3350, %v3347
        %v3474 = vpack.c.b16 %v3351, %v3348
        %v3475 = vpack.c.b16 %v3352, %v3349
        %v3476 = vpack.c.b16 %v3356, %v3353
        %v3477 = vpack.c.b16 %v3357, %v3354
        %v3478 = vpack.c.b16 %v3358, %v3355
        %v3479 = vpack.c.b16 %v3362, %v3359
        %v3480 = vpack.c.b16 %v3363, %v3360
        %v3481 = vpack.c.b16 %v3364, %v3361
        %v3482 = vpack.c.b16 %v3368, %v3365
        %v3483 = vpack.c.b16 %v3369, %v3366
        %v3484 = vpack.c.b16 %v3370, %v3367
        %v3485 = vpack.c.b16 %v3374, %v3371
        %v3486 = vpack.c.b16 %v3375, %v3372
        %v3487 = vpack.c.b16 %v3376, %v3373
        %v3488 = vpack.c.b16 %v3380, %v3377
        %v3489 = vpack.c.b16 %v3381, %v3378
        %v3490 = vpack.c.b16 %v3382, %v3379
        %v3491 = vpack.c.b16 %v3386, %v3383
        %v3492 = vpack.c.b16 %v3387, %v3384
        %v3493 = vpack.c.b16 %v3388, %v3385
        %v3494 = vpack.c.b16 %v3392, %v3389
        %v3495 = vpack.c.b16 %v3393, %v3390
        %v3496 = vpack.c.b16 %v3394, %v3391
        %v3497 = vpack.c.b16 %v3398, %v3395
        %v3498 = vpack.c.b16 %v3399, %v3396
        %v3499 = vpack.c.b16 %v3400, %v3397
        %v3500 = vpack.c.b16 %v3404, %v3401
        %v3501 = vpack.c.b16 %v3405, %v3402
        %v3502 = vpack.c.b16 %v3406, %v3403
        %v3503 = vpack.c.b16 %v3410, %v3407
        %v3504 = vpack.c.b16 %v3411, %v3408
        %v3505 = vpack.c.b16 %v3412, %v3409
        %v3506 = vpack.c.b16 %v3416, %v3413
        %v3507 = vpack.c.b16 %v3417, %v3414
        %v3508 = vpack.c.b16 %v3418, %v3415
        %v3509 = vpack.c.b16 %v3422, %v3419
        %v3510 = vpack.c.b16 %v3423, %v3420
        %v3511 = vpack.c.b16 %v3424, %v3421
        %v3512 = vpack.c.b16 %v3428, %v3425
        %v3513 = vpack.c.b16 %v3429, %v3426
        %v3514 = vpack.c.b16 %v3430, %v3427
        %v3515 = vpack.c.b16 %v3434, %v3431
        %v3516 = vpack.c.b16 %v3435, %v3432
        %v3517 = vpack.c.b16 %v3436, %v3433
        %v3518 = vpack.c.b16 %v3440, %v3437
        %v3519 = vpack.c.b16 %v3441, %v3438
        %v3520 = vpack.c.b16 %v3442, %v3439
        %v3521 = vpack.c.b16 %v3446, %v3443
        %v3522 = vpack.c.b16 %v3447, %v3444
        %v3523 = vpack.c.b16 %v3448, %v3445
        %v3524 = vpack.c.b16 %v3452, %v3449
        %v3525 = vpack.c.b16 %v3453, %v3450
        %v3526 = vpack.c.b16 %v3454, %v3451
        %3599 = vmatprep.subr.bf16.mxu0 %v3477
        %3600 = vmatpush1.bf16.msra.mxu0 %v3476
        %3601 = vmatprep.subr.bf16.mxu0 %v3474
        %3602 = vmatpush1.bf16.msra.mxu0 %v3473
        %3603 = vmatprep.subr.bf16.mxu0 %v3471
        %3604 = vmatpush1.bf16.msra.mxu0 %v3470
        %3605 = vmatprep.subr.bf16.mxu0 %v3468
        %3606 = vmatpush1.bf16.msra.mxu0 %v3467
        %3607 = vmatprep.subr.bf16.mxu0 %v3465
        %3608 = vmatpush1.bf16.msra.mxu0 %v3464
        %3609 = vmatprep.subr.bf16.mxu0 %v3462
        %3610 = vmatpush1.bf16.msra.mxu0 %v3461
        %3611 = vmatprep.subr.bf16.mxu0 %v3459
        %3612 = vmatpush1.bf16.msra.mxu0 %v3458
        %3613 = vmatprep.subr.bf16.mxu0 %v3456
        %3614 = vmatpush1.bf16.msra.mxu0 %v3455
        %3615 = vmatprep.subr.bf16.mxu0 %v3501
        %3616 = vmatpush2.bf16.msra.mxu0 %v3500
        %3617 = vmatprep.subr.bf16.mxu0 %v3498
        %3618 = vmatpush2.bf16.msra.mxu0 %v3497
        %3619 = vmatprep.subr.bf16.mxu0 %v3495
        %3620 = vmatpush2.bf16.msra.mxu0 %v3494
        %3621 = vmatprep.subr.bf16.mxu0 %v3492
        %3622 = vmatpush2.bf16.msra.mxu0 %v3491
        %3623 = vmatprep.subr.bf16.mxu0 %v3489
        %3624 = vmatpush2.bf16.msra.mxu0 %v3488
        %3625 = vmatprep.subr.bf16.mxu0 %v3486
        %3626 = vmatpush2.bf16.msra.mxu0 %v3485
        %3627 = vmatprep.subr.bf16.mxu0 %v3483
        %3628 = vmatpush2.bf16.msra.mxu0 %v3482
        %3629 = vmatprep.subr.bf16.mxu0 %v3480
        %3630 = vmatpush2.bf16.msra.mxu0 %v3479
        %3631 = vmatprep.mubr.bf16.mxu0 %v3117
        %3632 = vmatmul.mubr.bf16.gmra.mxu0 %v3116
        %v3633 = vpop.f32.mrf.mxu0
        %v3634 = vadd.f32 0.0, %v3633
        %v3635 = vpop.f32.mrf.mxu0
        %v3636 = vadd.f32 0.0, %v3635
        %v3637 = vpop.f32.mrf.mxu0
        %v3638 = vpop.f32.mrf.mxu0
        %3639 = vdwg.mxu0
        %3640 = vmatprep.subr.bf16.mxu0 %v3525
        %3641 = vmatpush1.bf16.msra.mxu0 %v3524
        %3642 = vmatprep.subr.bf16.mxu0 %v3522
        %3643 = vmatpush1.bf16.msra.mxu0 %v3521
        %3644 = vmatprep.subr.bf16.mxu0 %v3519
        %3645 = vmatpush1.bf16.msra.mxu0 %v3518
        %3646 = vmatprep.subr.bf16.mxu0 %v3516
        %3647 = vmatpush1.bf16.msra.mxu0 %v3515
        %3648 = vmatprep.subr.bf16.mxu0 %v3513
        %3649 = vmatpush1.bf16.msra.mxu0 %v3512
        %3650 = vmatprep.subr.bf16.mxu0 %v3510
        %3651 = vmatpush1.bf16.msra.mxu0 %v3509
        %3652 = vmatprep.subr.bf16.mxu0 %v3507
        %3653 = vmatpush1.bf16.msra.mxu0 %v3506
        %3654 = vmatprep.subr.bf16.mxu0 %v3504
        %3655 = vmatpush1.bf16.msra.mxu0 %v3503
        %3656 = vmatprep.subr.bf16.mxu0 0
        %3657 = vmatpush2.bf16.msra.mxu0 0
        %3658 = vmatprep.subr.bf16.mxu0 0
        %3659 = vmatpush2.bf16.msra.mxu0 0
        %3660 = vmatprep.subr.bf16.mxu0 0
        %3661 = vmatpush2.bf16.msra.mxu0 0
        %3662 = vmatprep.subr.bf16.mxu0 0
        %3663 = vmatpush2.bf16.msra.mxu0 0
        %3664 = vmatprep.subr.bf16.mxu0 0
        %3665 = vmatpush2.bf16.msra.mxu0 0
        %3666 = vmatprep.subr.bf16.mxu0 0
        %3667 = vmatpush2.bf16.msra.mxu0 0
        %3668 = vmatprep.subr.bf16.mxu0 0
        %3669 = vmatpush2.bf16.msra.mxu0 0
        %3670 = vmatprep.subr.bf16.mxu0 0
        %3671 = vmatpush2.bf16.msra.mxu0 0
        %3672 = vmatprep.mubr.bf16.mxu0 0
        %3673 = vmatmul.mubr.bf16.gmra.mxu0 %v3118
        %v3674 = vpop.f32.mrf.mxu0
        %v3675 = vadd.f32 %v3634, %v3674
        %v3676 = vpop.f32.mrf.mxu0
        %v3677 = vadd.f32 %v3636, %v3676
        %v3678 = vpop.f32.mrf.mxu0
        %v3679 = vpop.f32.mrf.mxu0
        %3680 = vdwg.mxu0
        %3681 = vmatprep.subr.bf16.mxu0 0
        %3682 = vmatpush1.bf16.msra.mxu0 %v3478
        %3683 = vmatprep.subr.bf16.mxu0 0
        %3684 = vmatpush1.bf16.msra.mxu0 %v3475
        %3685 = vmatprep.subr.bf16.mxu0 0
        %3686 = vmatpush1.bf16.msra.mxu0 %v3472
        %3687 = vmatprep.subr.bf16.mxu0 0
        %3688 = vmatpush1.bf16.msra.mxu0 %v3469
        %3689 = vmatprep.subr.bf16.mxu0 0
        %3690 = vmatpush1.bf16.msra.mxu0 %v3466
        %3691 = vmatprep.subr.bf16.mxu0 0
        %3692 = vmatpush1.bf16.msra.mxu0 %v3463
        %3693 = vmatprep.subr.bf16.mxu0 0
        %3694 = vmatpush1.bf16.msra.mxu0 %v3460
        %3695 = vmatprep.subr.bf16.mxu0 0
        %3696 = vmatpush1.bf16.msra.mxu0 %v3457
        %3697 = vmatprep.subr.bf16.mxu0 0
        %3698 = vmatpush2.bf16.msra.mxu0 %v3502
        %3699 = vmatprep.subr.bf16.mxu0 0
        %3700 = vmatpush2.bf16.msra.mxu0 %v3499
        %3701 = vmatprep.subr.bf16.mxu0 0
        %3702 = vmatpush2.bf16.msra.mxu0 %v3496
        %3703 = vmatprep.subr.bf16.mxu0 0
        %3704 = vmatpush2.bf16.msra.mxu0 %v3493
        %3705 = vmatprep.subr.bf16.mxu0 0
        %3706 = vmatpush2.bf16.msra.mxu0 %v3490
        %3707 = vmatprep.subr.bf16.mxu0 0
        %3708 = vmatpush2.bf16.msra.mxu0 %v3487
        %3709 = vmatprep.subr.bf16.mxu0 0
        %3710 = vmatpush2.bf16.msra.mxu0 %v3484
        %3711 = vmatprep.subr.bf16.mxu0 0
        %3712 = vmatpush2.bf16.msra.mxu0 %v3481
        %3713 = vmatprep.mubr.bf16.mxu0 %v3117
        %3714 = vmatmul.mubr.bf16.gmra.mxu0 %v3116
        %v3715 = vpop.f32.mrf.mxu0
        %v3716 = vadd.f32 0.0, %v3715
        %v3717 = vpop.f32.mrf.mxu0
        %v3718 = vpop.f32.mrf.mxu0
        %v3719 = vpop.f32.mrf.mxu0
        %3720 = vdwg.mxu0
        %3721 = vmatprep.subr.bf16.mxu0 0
        %3722 = vmatpush1.bf16.msra.mxu0 %v3526
        %3723 = vmatprep.subr.bf16.mxu0 0
        %3724 = vmatpush1.bf16.msra.mxu0 %v3523
        %3725 = vmatprep.subr.bf16.mxu0 0
        %3726 = vmatpush1.bf16.msra.mxu0 %v3520
        %3727 = vmatprep.subr.bf16.mxu0 0
        %3728 = vmatpush1.bf16.msra.mxu0 %v3517
        %3729 = vmatprep.subr.bf16.mxu0 0
        %3730 = vmatpush1.bf16.msra.mxu0 %v3514
        %3731 = vmatprep.subr.bf16.mxu0 0
        %3732 = vmatpush1.bf16.msra.mxu0 %v3511
        %3733 = vmatprep.subr.bf16.mxu0 0
        %3734 = vmatpush1.bf16.msra.mxu0 %v3508
        %3735 = vmatprep.subr.bf16.mxu0 0
        %3736 = vmatpush1.bf16.msra.mxu0 %v3505
        %3737 = vmatprep.subr.bf16.mxu0 0
        %3738 = vmatpush2.bf16.msra.mxu0 0
        %3739 = vmatprep.subr.bf16.mxu0 0
        %3740 = vmatpush2.bf16.msra.mxu0 0
        %3741 = vmatprep.subr.bf16.mxu0 0
        %3742 = vmatpush2.bf16.msra.mxu0 0
        %3743 = vmatprep.subr.bf16.mxu0 0
        %3744 = vmatpush2.bf16.msra.mxu0 0
        %3745 = vmatprep.subr.bf16.mxu0 0
        %3746 = vmatpush2.bf16.msra.mxu0 0
        %3747 = vmatprep.subr.bf16.mxu0 0
        %3748 = vmatpush2.bf16.msra.mxu0 0
        %3749 = vmatprep.subr.bf16.mxu0 0
        %3750 = vmatpush2.bf16.msra.mxu0 0
        %3751 = vmatprep.subr.bf16.mxu0 0
        %3752 = vmatpush2.bf16.msra.mxu0 0
        %3753 = vmatprep.mubr.bf16.mxu0 0
        %3754 = vmatmul.mubr.bf16.gmra.mxu0 %v3118
        %v3755 = vpop.f32.mrf.mxu0
        %v3756 = vadd.f32 %v3716, %v3755
        %v3757 = vpop.f32.mrf.mxu0
        %v3758 = vpop.f32.mrf.mxu0
        %v3759 = vpop.f32.mrf.mxu0
        %3760 = vdwg.mxu0
        %v3761 = vld [vmem:[%s491] sm:$0xff]
        %v3762 = vld [vmem:[%s491 + $0x8] sm:$0xff]
        %v3763 = vld [vmem:[%s491 + $0x10] sm:$0xff]
        %v3764 = vadd.f32 %v3761, %v3675
        %v3765 = vadd.f32 %v3762, %v3677
        %v3766 = vadd.f32 %v3763, %v3756
        %v3767 = vld [vmem:[#allocation13] sm:$0x7]
        %v3769 = vlaneseq
        %v3770 = vshrl.u32 %v3769, 7
        %v3771 = vsub.s32 0, %v3770
        %v3772 = vrot.slane %v3767, %v3771
        %v3773 = vlaneseq
        %v3774 = vshrl.u32 %v3773, 7
        %v3775 = vsub.s32 1, %v3774
        %v3776 = vrot.slane %v3767, %v3775
        %v3777 = vlaneseq
        %v3778 = vshrl.u32 %v3777, 7
        %v3779 = vsub.s32 2, %v3778
        %v3780 = vrot.slane %v3767, %v3779
        %v3784 = vadd.f32 %v3764, %v3772
        %v3785 = vadd.f32 %v3765, %v3776
        %v3786 = vadd.f32 %v3766, %v3780
        %v3787 = vld [vmem:[#allocation15] sm:$0x7]
        %v3788 = vld [vmem:[#allocation16] sm:$0x7]
        %v3789 = vadd.f32 %v3784, %v3785
        %v3790 = vadd.f32 %v3789, %v3786
        %3791 = vadd.xlane.f32.xlu0 %v3790
        %v3792 = vpop.xlane.xlu0 %3791
        %v3793 = vmul.f32 %v3792, %v586
        %v3794 = vsub.f32 %v3784, %v3793
        %v3795 = vsub.f32 %v3785, %v3793
        %v3796 = vsub.f32 %v3786, %v3793
        %v3797 = vmul.f32 %v3794, %v3794
        %v3798 = vmul.f32 %v3795, %v3795
        %v3799 = vmul.f32 %v3796, %v3796
        %v3800 = vadd.f32 %v3797, %v3798
        %v3801 = vadd.f32 %v3800, %v3799
        %3802 = vadd.xlane.f32.xlu0 %v3801
        %v3803 = vpop.xlane.xlu0 %3802
        %v3804 = vmul.f32 %v3803, %v586
        %v3805 = vadd.f32 %v3804, 1e-05
        %v3806 = vrsqrt.pop %v3805
        %v3807 = vmul.f32 %v3794, %v3806
        %v3808 = vmul.f32 %v3795, %v3806
        %v3809 = vmul.f32 %v3796, %v3806
        %v3811 = vlaneseq
        %v3812 = vshrl.u32 %v3811, 7
        %v3813 = vsub.s32 0, %v3812
        %v3814 = vrot.slane %v3787, %v3813
        %v3815 = vlaneseq
        %v3816 = vshrl.u32 %v3815, 7
        %v3817 = vsub.s32 1, %v3816
        %v3818 = vrot.slane %v3787, %v3817
        %v3819 = vlaneseq
        %v3820 = vshrl.u32 %v3819, 7
        %v3821 = vsub.s32 2, %v3820
        %v3822 = vrot.slane %v3787, %v3821
        %v3826 = vmul.f32 %v3807, %v3814
        %v3827 = vmul.f32 %v3808, %v3818
        %v3828 = vmul.f32 %v3809, %v3822
        %v3830 = vlaneseq
        %v3831 = vshrl.u32 %v3830, 7
        %v3832 = vsub.s32 0, %v3831
        %v3833 = vrot.slane %v3788, %v3832
        %v3834 = vlaneseq
        %v3835 = vshrl.u32 %v3834, 7
        %v3836 = vsub.s32 1, %v3835
        %v3837 = vrot.slane %v3788, %v3836
        %v3838 = vlaneseq
        %v3839 = vshrl.u32 %v3838, 7
        %v3840 = vsub.s32 2, %v3839
        %v3841 = vrot.slane %v3788, %v3840
        %v3845 = vadd.f32 %v3826, %v3833
        %v3846 = vadd.f32 %v3827, %v3837
        %v3847 = vadd.f32 %v3828, %v3841
        %v3848 = vpack.c.bf16 %v3845, %v3845
        %v3849 = vpack.c.bf16 %v3846, %v3846
        %v3850 = vpack.c.bf16 %v3847, %v3847
        %v3851 = vld [vmem:[#allocation18] sm:$0xff]
        %v3852 = vld [vmem:[#allocation18 + $0x8] sm:$0xff]
        %v3853 = vld [vmem:[#allocation18 + $0x10] sm:$0xff]
        %v3854 = vld [vmem:[#allocation18 + $0x18] sm:$0xff]
        %v3855 = vld [vmem:[#allocation18 + $0x20] sm:$0xff]
        %v3856 = vld [vmem:[#allocation18 + $0x28] sm:$0xff]
        %v3857 = vld [vmem:[#allocation18 + $0x30] sm:$0xff]
        %v3858 = vld [vmem:[#allocation18 + $0x38] sm:$0xff]
        %v3859 = vld [vmem:[#allocation18 + $0x40] sm:$0xff]
        %v3860 = vld [vmem:[#allocation18 + $0x48] sm:$0xff]
        %v3861 = vld [vmem:[#allocation18 + $0x50] sm:$0xff]
        %v3862 = vld [vmem:[#allocation18 + $0x58] sm:$0xff]
        %v3863 = vld [vmem:[#allocation18 + $0x60] sm:$0xff]
        %v3864 = vld [vmem:[#allocation18 + $0x68] sm:$0xff]
        %v3865 = vld [vmem:[#allocation18 + $0x70] sm:$0xff]
        %v3866 = vld [vmem:[#allocation18 + $0x78] sm:$0xff]
        %v3867 = vld [vmem:[#allocation18 + $0x80] sm:$0xff]
        %v3868 = vld [vmem:[#allocation18 + $0x88] sm:$0xff]
        %v3869 = vld [vmem:[#allocation18 + $0x90] sm:$0xff]
        %v3870 = vld [vmem:[#allocation18 + $0x98] sm:$0xff]
        %v3871 = vld [vmem:[#allocation18 + $0xa0] sm:$0xff]
        %v3872 = vld [vmem:[#allocation18 + $0xa8] sm:$0xff]
        %v3873 = vld [vmem:[#allocation18 + $0xb0] sm:$0xff]
        %v3874 = vld [vmem:[#allocation18 + $0xb8] sm:$0xff]
        %v3875 = vld [vmem:[#allocation18 + $0xc0] sm:$0xff]
        %v3876 = vld [vmem:[#allocation18 + $0xc8] sm:$0xff]
        %v3877 = vld [vmem:[#allocation18 + $0xd0] sm:$0xff]
        %v3878 = vld [vmem:[#allocation18 + $0xd8] sm:$0xff]
        %v3879 = vld [vmem:[#allocation18 + $0xe0] sm:$0xff]
        %v3880 = vld [vmem:[#allocation18 + $0xe8] sm:$0xff]
        %v3881 = vld [vmem:[#allocation18 + $0xf0] sm:$0xff]
        %v3882 = vld [vmem:[#allocation18 + $0xf8] sm:$0xff]
        %v3883 = vld [vmem:[#allocation18 + $0x100] sm:$0xff]
        %v3884 = vld [vmem:[#allocation18 + $0x108] sm:$0xff]
        %v3885 = vld [vmem:[#allocation18 + $0x110] sm:$0xff]
        %v3886 = vld [vmem:[#allocation18 + $0x118] sm:$0xff]
        %v3887 = vld [vmem:[#allocation18 + $0x120] sm:$0xff]
        %v3888 = vld [vmem:[#allocation18 + $0x128] sm:$0xff]
        %v3889 = vld [vmem:[#allocation18 + $0x130] sm:$0xff]
        %v3890 = vld [vmem:[#allocation18 + $0x138] sm:$0xff]
        %v3891 = vld [vmem:[#allocation18 + $0x140] sm:$0xff]
        %v3892 = vld [vmem:[#allocation18 + $0x148] sm:$0xff]
        %v3893 = vld [vmem:[#allocation18 + $0x150] sm:$0xff]
        %v3894 = vld [vmem:[#allocation18 + $0x158] sm:$0xff]
        %v3895 = vld [vmem:[#allocation18 + $0x160] sm:$0xff]
        %v3896 = vld [vmem:[#allocation18 + $0x168] sm:$0xff]
        %v3897 = vld [vmem:[#allocation18 + $0x170] sm:$0xff]
        %v3898 = vld [vmem:[#allocation18 + $0x178] sm:$0xff]
        %v3899 = vld [vmem:[#allocation18 + $0x180] sm:$0xff]
        %v3900 = vld [vmem:[#allocation18 + $0x188] sm:$0xff]
        %v3901 = vld [vmem:[#allocation18 + $0x190] sm:$0xff]
        %v3902 = vld [vmem:[#allocation18 + $0x198] sm:$0xff]
        %v3903 = vld [vmem:[#allocation18 + $0x1a0] sm:$0xff]
        %v3904 = vld [vmem:[#allocation18 + $0x1a8] sm:$0xff]
        %v3905 = vld [vmem:[#allocation18 + $0x1b0] sm:$0xff]
        %v3906 = vld [vmem:[#allocation18 + $0x1b8] sm:$0xff]
        %v3907 = vld [vmem:[#allocation18 + $0x1c0] sm:$0xff]
        %v3908 = vld [vmem:[#allocation18 + $0x1c8] sm:$0xff]
        %v3909 = vld [vmem:[#allocation18 + $0x1d0] sm:$0xff]
        %v3910 = vld [vmem:[#allocation18 + $0x1d8] sm:$0xff]
        %v3911 = vld [vmem:[#allocation18 + $0x1e0] sm:$0xff]
        %v3912 = vld [vmem:[#allocation18 + $0x1e8] sm:$0xff]
        %v3913 = vld [vmem:[#allocation18 + $0x1f0] sm:$0xff]
        %v3914 = vld [vmem:[#allocation18 + $0x1f8] sm:$0xff]
        %v3915 = vld [vmem:[#allocation18 + $0x200] sm:$0xff]
        %v3916 = vld [vmem:[#allocation18 + $0x208] sm:$0xff]
        %v3917 = vld [vmem:[#allocation18 + $0x210] sm:$0xff]
        %v3918 = vld [vmem:[#allocation18 + $0x218] sm:$0xff]
        %v3919 = vld [vmem:[#allocation18 + $0x220] sm:$0xff]
        %v3920 = vld [vmem:[#allocation18 + $0x228] sm:$0xff]
        %v3921 = vld [vmem:[#allocation18 + $0x230] sm:$0xff]
        %v3922 = vld [vmem:[#allocation18 + $0x238] sm:$0xff]
        %v3923 = vld [vmem:[#allocation18 + $0x240] sm:$0xff]
        %v3924 = vld [vmem:[#allocation18 + $0x248] sm:$0xff]
        %v3925 = vld [vmem:[#allocation18 + $0x250] sm:$0xff]
        %v3926 = vld [vmem:[#allocation18 + $0x258] sm:$0xff]
        %v3927 = vld [vmem:[#allocation18 + $0x260] sm:$0xff]
        %v3928 = vld [vmem:[#allocation18 + $0x268] sm:$0xff]
        %v3929 = vld [vmem:[#allocation18 + $0x270] sm:$0xff]
        %v3930 = vld [vmem:[#allocation18 + $0x278] sm:$0xff]
        %v3931 = vld [vmem:[#allocation18 + $0x280] sm:$0xff]
        %v3932 = vld [vmem:[#allocation18 + $0x288] sm:$0xff]
        %v3933 = vld [vmem:[#allocation18 + $0x290] sm:$0xff]
        %v3934 = vld [vmem:[#allocation18 + $0x298] sm:$0xff]
        %v3935 = vld [vmem:[#allocation18 + $0x2a0] sm:$0xff]
        %v3936 = vld [vmem:[#allocation18 + $0x2a8] sm:$0xff]
        %v3937 = vld [vmem:[#allocation18 + $0x2b0] sm:$0xff]
        %v3938 = vld [vmem:[#allocation18 + $0x2b8] sm:$0xff]
        %v3939 = vld [vmem:[#allocation18 + $0x2c0] sm:$0xff]
        %v3940 = vld [vmem:[#allocation18 + $0x2c8] sm:$0xff]
        %v3941 = vld [vmem:[#allocation18 + $0x2d0] sm:$0xff]
        %v3942 = vld [vmem:[#allocation18 + $0x2d8] sm:$0xff]
        %v3943 = vld [vmem:[#allocation18 + $0x2e0] sm:$0xff]
        %v3944 = vld [vmem:[#allocation18 + $0x2e8] sm:$0xff]
        %v3945 = vld [vmem:[#allocation18 + $0x2f0] sm:$0xff]
        %v3946 = vld [vmem:[#allocation18 + $0x2f8] sm:$0xff]
        %v3947 = vld [vmem:[#allocation18 + $0x300] sm:$0xff]
        %v3948 = vld [vmem:[#allocation18 + $0x308] sm:$0xff]
        %v3949 = vld [vmem:[#allocation18 + $0x310] sm:$0xff]
        %v3950 = vld [vmem:[#allocation18 + $0x318] sm:$0xff]
        %v3951 = vld [vmem:[#allocation18 + $0x320] sm:$0xff]
        %v3952 = vld [vmem:[#allocation18 + $0x328] sm:$0xff]
        %v3953 = vld [vmem:[#allocation18 + $0x330] sm:$0xff]
        %v3954 = vld [vmem:[#allocation18 + $0x338] sm:$0xff]
        %v3955 = vld [vmem:[#allocation18 + $0x340] sm:$0xff]
        %v3956 = vld [vmem:[#allocation18 + $0x348] sm:$0xff]
        %v3957 = vld [vmem:[#allocation18 + $0x350] sm:$0xff]
        %v3958 = vld [vmem:[#allocation18 + $0x358] sm:$0xff]
        %v3959 = vld [vmem:[#allocation18 + $0x360] sm:$0xff]
        %v3960 = vld [vmem:[#allocation18 + $0x368] sm:$0xff]
        %v3961 = vld [vmem:[#allocation18 + $0x370] sm:$0xff]
        %v3962 = vld [vmem:[#allocation18 + $0x378] sm:$0xff]
        %v3963 = vld [vmem:[#allocation18 + $0x380] sm:$0xff]
        %v3964 = vld [vmem:[#allocation18 + $0x388] sm:$0xff]
        %v3965 = vld [vmem:[#allocation18 + $0x390] sm:$0xff]
        %v3966 = vld [vmem:[#allocation18 + $0x398] sm:$0xff]
        %v3967 = vld [vmem:[#allocation18 + $0x3a0] sm:$0xff]
        %v3968 = vld [vmem:[#allocation18 + $0x3a8] sm:$0xff]
        %v3969 = vld [vmem:[#allocation18 + $0x3b0] sm:$0xff]
        %v3970 = vld [vmem:[#allocation18 + $0x3b8] sm:$0xff]
        %v3971 = vld [vmem:[#allocation18 + $0x3c0] sm:$0xff]
        %v3972 = vld [vmem:[#allocation18 + $0x3c8] sm:$0xff]
        %v3973 = vld [vmem:[#allocation18 + $0x3d0] sm:$0xff]
        %v3974 = vld [vmem:[#allocation18 + $0x3d8] sm:$0xff]
        %v3975 = vld [vmem:[#allocation18 + $0x3e0] sm:$0xff]
        %v3976 = vld [vmem:[#allocation18 + $0x3e8] sm:$0xff]
        %v3977 = vld [vmem:[#allocation18 + $0x3f0] sm:$0xff]
        %v3978 = vld [vmem:[#allocation18 + $0x3f8] sm:$0xff]
        %v3979 = vld [vmem:[#allocation18 + $0x400] sm:$0xff]
        %v3980 = vld [vmem:[#allocation18 + $0x408] sm:$0xff]
        %v3981 = vld [vmem:[#allocation18 + $0x410] sm:$0xff]
        %v3982 = vld [vmem:[#allocation18 + $0x418] sm:$0xff]
        %v3983 = vld [vmem:[#allocation18 + $0x420] sm:$0xff]
        %v3984 = vld [vmem:[#allocation18 + $0x428] sm:$0xff]
        %v3985 = vld [vmem:[#allocation18 + $0x430] sm:$0xff]
        %v3986 = vld [vmem:[#allocation18 + $0x438] sm:$0xff]
        %v3987 = vld [vmem:[#allocation18 + $0x440] sm:$0xff]
        %v3988 = vld [vmem:[#allocation18 + $0x448] sm:$0xff]
        %v3989 = vld [vmem:[#allocation18 + $0x450] sm:$0xff]
        %v3990 = vld [vmem:[#allocation18 + $0x458] sm:$0xff]
        %v3991 = vld [vmem:[#allocation18 + $0x460] sm:$0xff]
        %v3992 = vld [vmem:[#allocation18 + $0x468] sm:$0xff]
        %v3993 = vld [vmem:[#allocation18 + $0x470] sm:$0xff]
        %v3994 = vld [vmem:[#allocation18 + $0x478] sm:$0xff]
        %v3995 = vld [vmem:[#allocation18 + $0x480] sm:$0xff]
        %v3996 = vld [vmem:[#allocation18 + $0x488] sm:$0xff]
        %v3997 = vld [vmem:[#allocation18 + $0x490] sm:$0xff]
        %v3998 = vld [vmem:[#allocation18 + $0x498] sm:$0xff]
        %v3999 = vld [vmem:[#allocation18 + $0x4a0] sm:$0xff]
        %v4000 = vld [vmem:[#allocation18 + $0x4a8] sm:$0xff]
        %v4001 = vld [vmem:[#allocation18 + $0x4b0] sm:$0xff]
        %v4002 = vld [vmem:[#allocation18 + $0x4b8] sm:$0xff]
        %v4003 = vld [vmem:[#allocation18 + $0x4c0] sm:$0xff]
        %v4004 = vld [vmem:[#allocation18 + $0x4c8] sm:$0xff]
        %v4005 = vld [vmem:[#allocation18 + $0x4d0] sm:$0xff]
        %v4006 = vld [vmem:[#allocation18 + $0x4d8] sm:$0xff]
        %v4007 = vld [vmem:[#allocation18 + $0x4e0] sm:$0xff]
        %v4008 = vld [vmem:[#allocation18 + $0x4e8] sm:$0xff]
        %v4009 = vld [vmem:[#allocation18 + $0x4f0] sm:$0xff]
        %v4010 = vld [vmem:[#allocation18 + $0x4f8] sm:$0xff]
        %v4011 = vld [vmem:[#allocation18 + $0x500] sm:$0xff]
        %v4012 = vld [vmem:[#allocation18 + $0x508] sm:$0xff]
        %v4013 = vld [vmem:[#allocation18 + $0x510] sm:$0xff]
        %v4014 = vld [vmem:[#allocation18 + $0x518] sm:$0xff]
        %v4015 = vld [vmem:[#allocation18 + $0x520] sm:$0xff]
        %v4016 = vld [vmem:[#allocation18 + $0x528] sm:$0xff]
        %v4017 = vld [vmem:[#allocation18 + $0x530] sm:$0xff]
        %v4018 = vld [vmem:[#allocation18 + $0x538] sm:$0xff]
        %v4019 = vld [vmem:[#allocation18 + $0x540] sm:$0xff]
        %v4020 = vld [vmem:[#allocation18 + $0x548] sm:$0xff]
        %v4021 = vld [vmem:[#allocation18 + $0x550] sm:$0xff]
        %v4022 = vld [vmem:[#allocation18 + $0x558] sm:$0xff]
        %v4023 = vld [vmem:[#allocation18 + $0x560] sm:$0xff]
        %v4024 = vld [vmem:[#allocation18 + $0x568] sm:$0xff]
        %v4025 = vld [vmem:[#allocation18 + $0x570] sm:$0xff]
        %v4026 = vld [vmem:[#allocation18 + $0x578] sm:$0xff]
        %v4027 = vld [vmem:[#allocation18 + $0x580] sm:$0xff]
        %v4028 = vld [vmem:[#allocation18 + $0x588] sm:$0xff]
        %v4029 = vld [vmem:[#allocation18 + $0x590] sm:$0xff]
        %v4030 = vld [vmem:[#allocation18 + $0x598] sm:$0xff]
        %v4031 = vld [vmem:[#allocation18 + $0x5a0] sm:$0xff]
        %v4032 = vld [vmem:[#allocation18 + $0x5a8] sm:$0xff]
        %v4033 = vld [vmem:[#allocation18 + $0x5b0] sm:$0xff]
        %v4034 = vld [vmem:[#allocation18 + $0x5b8] sm:$0xff]
        %v4035 = vld [vmem:[#allocation18 + $0x5c0] sm:$0xff]
        %v4036 = vld [vmem:[#allocation18 + $0x5c8] sm:$0xff]
        %v4037 = vld [vmem:[#allocation18 + $0x5d0] sm:$0xff]
        %v4038 = vld [vmem:[#allocation18 + $0x5d8] sm:$0xff]
        %v4039 = vld [vmem:[#allocation18 + $0x5e0] sm:$0xff]
        %v4040 = vld [vmem:[#allocation18 + $0x5e8] sm:$0xff]
        %v4041 = vld [vmem:[#allocation18 + $0x5f0] sm:$0xff]
        %v4042 = vld [vmem:[#allocation18 + $0x5f8] sm:$0xff]
        %v4043 = vld [vmem:[#allocation18 + $0x600] sm:$0xff]
        %v4044 = vld [vmem:[#allocation18 + $0x608] sm:$0xff]
        %v4045 = vld [vmem:[#allocation18 + $0x610] sm:$0xff]
        %v4046 = vld [vmem:[#allocation18 + $0x618] sm:$0xff]
        %v4047 = vld [vmem:[#allocation18 + $0x620] sm:$0xff]
        %v4048 = vld [vmem:[#allocation18 + $0x628] sm:$0xff]
        %v4049 = vld [vmem:[#allocation18 + $0x630] sm:$0xff]
        %v4050 = vld [vmem:[#allocation18 + $0x638] sm:$0xff]
        %v4051 = vld [vmem:[#allocation18 + $0x640] sm:$0xff]
        %v4052 = vld [vmem:[#allocation18 + $0x648] sm:$0xff]
        %v4053 = vld [vmem:[#allocation18 + $0x650] sm:$0xff]
        %v4054 = vld [vmem:[#allocation18 + $0x658] sm:$0xff]
        %v4055 = vld [vmem:[#allocation18 + $0x660] sm:$0xff]
        %v4056 = vld [vmem:[#allocation18 + $0x668] sm:$0xff]
        %v4057 = vld [vmem:[#allocation18 + $0x670] sm:$0xff]
        %v4058 = vld [vmem:[#allocation18 + $0x678] sm:$0xff]
        %v4059 = vld [vmem:[#allocation18 + $0x680] sm:$0xff]
        %v4060 = vld [vmem:[#allocation18 + $0x688] sm:$0xff]
        %v4061 = vld [vmem:[#allocation18 + $0x690] sm:$0xff]
        %v4062 = vld [vmem:[#allocation18 + $0x698] sm:$0xff]
        %v4063 = vld [vmem:[#allocation18 + $0x6a0] sm:$0xff]
        %v4064 = vld [vmem:[#allocation18 + $0x6a8] sm:$0xff]
        %v4065 = vld [vmem:[#allocation18 + $0x6b0] sm:$0xff]
        %v4066 = vld [vmem:[#allocation18 + $0x6b8] sm:$0xff]
        %v4067 = vld [vmem:[#allocation18 + $0x6c0] sm:$0xff]
        %v4068 = vld [vmem:[#allocation18 + $0x6c8] sm:$0xff]
        %v4069 = vld [vmem:[#allocation18 + $0x6d0] sm:$0xff]
        %v4070 = vld [vmem:[#allocation18 + $0x6d8] sm:$0xff]
        %v4071 = vld [vmem:[#allocation18 + $0x6e0] sm:$0xff]
        %v4072 = vld [vmem:[#allocation18 + $0x6e8] sm:$0xff]
        %v4073 = vld [vmem:[#allocation18 + $0x6f0] sm:$0xff]
        %v4074 = vld [vmem:[#allocation18 + $0x6f8] sm:$0xff]
        %v4075 = vld [vmem:[#allocation18 + $0x700] sm:$0xff]
        %v4076 = vld [vmem:[#allocation18 + $0x708] sm:$0xff]
        %v4077 = vld [vmem:[#allocation18 + $0x710] sm:$0xff]
        %v4078 = vld [vmem:[#allocation18 + $0x718] sm:$0xff]
        %v4079 = vld [vmem:[#allocation18 + $0x720] sm:$0xff]
        %v4080 = vld [vmem:[#allocation18 + $0x728] sm:$0xff]
        %v4081 = vld [vmem:[#allocation18 + $0x730] sm:$0xff]
        %v4082 = vld [vmem:[#allocation18 + $0x738] sm:$0xff]
        %v4083 = vld [vmem:[#allocation18 + $0x740] sm:$0xff]
        %v4084 = vld [vmem:[#allocation18 + $0x748] sm:$0xff]
        %v4085 = vld [vmem:[#allocation18 + $0x750] sm:$0xff]
        %v4086 = vld [vmem:[#allocation18 + $0x758] sm:$0xff]
        %v4087 = vld [vmem:[#allocation18 + $0x760] sm:$0xff]
        %v4088 = vld [vmem:[#allocation18 + $0x768] sm:$0xff]
        %v4089 = vld [vmem:[#allocation18 + $0x770] sm:$0xff]
        %v4090 = vld [vmem:[#allocation18 + $0x778] sm:$0xff]
        %v4091 = vld [vmem:[#allocation18 + $0x780] sm:$0xff]
        %v4092 = vld [vmem:[#allocation18 + $0x788] sm:$0xff]
        %v4093 = vld [vmem:[#allocation18 + $0x790] sm:$0xff]
        %v4094 = vld [vmem:[#allocation18 + $0x798] sm:$0xff]
        %v4095 = vld [vmem:[#allocation18 + $0x7a0] sm:$0xff]
        %v4096 = vld [vmem:[#allocation18 + $0x7a8] sm:$0xff]
        %v4097 = vld [vmem:[#allocation18 + $0x7b0] sm:$0xff]
        %v4098 = vld [vmem:[#allocation18 + $0x7b8] sm:$0xff]
        %v4099 = vld [vmem:[#allocation18 + $0x7c0] sm:$0xff]
        %v4100 = vld [vmem:[#allocation18 + $0x7c8] sm:$0xff]
        %v4101 = vld [vmem:[#allocation18 + $0x7d0] sm:$0xff]
        %v4102 = vld [vmem:[#allocation18 + $0x7d8] sm:$0xff]
        %v4103 = vld [vmem:[#allocation18 + $0x7e0] sm:$0xff]
        %v4104 = vld [vmem:[#allocation18 + $0x7e8] sm:$0xff]
        %v4105 = vld [vmem:[#allocation18 + $0x7f0] sm:$0xff]
        %v4106 = vld [vmem:[#allocation18 + $0x7f8] sm:$0xff]
        %v4107 = vld [vmem:[#allocation18 + $0x800] sm:$0xff]
        %v4108 = vld [vmem:[#allocation18 + $0x808] sm:$0xff]
        %v4109 = vld [vmem:[#allocation18 + $0x810] sm:$0xff]
        %v4110 = vld [vmem:[#allocation18 + $0x818] sm:$0xff]
        %v4111 = vld [vmem:[#allocation18 + $0x820] sm:$0xff]
        %v4112 = vld [vmem:[#allocation18 + $0x828] sm:$0xff]
        %v4113 = vld [vmem:[#allocation18 + $0x830] sm:$0xff]
        %v4114 = vld [vmem:[#allocation18 + $0x838] sm:$0xff]
        %v4115 = vld [vmem:[#allocation18 + $0x840] sm:$0xff]
        %v4116 = vld [vmem:[#allocation18 + $0x848] sm:$0xff]
        %v4117 = vld [vmem:[#allocation18 + $0x850] sm:$0xff]
        %v4118 = vld [vmem:[#allocation18 + $0x858] sm:$0xff]
        %v4119 = vld [vmem:[#allocation18 + $0x860] sm:$0xff]
        %v4120 = vld [vmem:[#allocation18 + $0x868] sm:$0xff]
        %v4121 = vld [vmem:[#allocation18 + $0x870] sm:$0xff]
        %v4122 = vld [vmem:[#allocation18 + $0x878] sm:$0xff]
        %v4123 = vld [vmem:[#allocation18 + $0x880] sm:$0xff]
        %v4124 = vld [vmem:[#allocation18 + $0x888] sm:$0xff]
        %v4125 = vld [vmem:[#allocation18 + $0x890] sm:$0xff]
        %v4126 = vld [vmem:[#allocation18 + $0x898] sm:$0xff]
        %v4127 = vld [vmem:[#allocation18 + $0x8a0] sm:$0xff]
        %v4128 = vld [vmem:[#allocation18 + $0x8a8] sm:$0xff]
        %v4129 = vld [vmem:[#allocation18 + $0x8b0] sm:$0xff]
        %v4130 = vld [vmem:[#allocation18 + $0x8b8] sm:$0xff]
        %v4131 = vld [vmem:[#allocation18 + $0x8c0] sm:$0xff]
        %v4132 = vld [vmem:[#allocation18 + $0x8c8] sm:$0xff]
        %v4133 = vld [vmem:[#allocation18 + $0x8d0] sm:$0xff]
        %v4134 = vld [vmem:[#allocation18 + $0x8d8] sm:$0xff]
        %v4135 = vld [vmem:[#allocation18 + $0x8e0] sm:$0xff]
        %v4136 = vld [vmem:[#allocation18 + $0x8e8] sm:$0xff]
        %v4137 = vld [vmem:[#allocation18 + $0x8f0] sm:$0xff]
        %v4138 = vld [vmem:[#allocation18 + $0x8f8] sm:$0xff]
        %v4139 = vld [vmem:[#allocation19] sm:$0xff]
        %v4140 = vld [vmem:[#allocation19 + $0x8] sm:$0xf]
        %v4143 = vlaneseq
        %v4144 = vshrl.u32 %v4143, 7
        %v4145 = vsub.s32 0, %v4144
        %v4146 = vrot.slane %v4139, %v4145
        %v4147 = vlaneseq
        %v4148 = vshrl.u32 %v4147, 7
        %v4149 = vsub.s32 1, %v4148
        %v4150 = vrot.slane %v4139, %v4149
        %v4151 = vlaneseq
        %v4152 = vshrl.u32 %v4151, 7
        %v4153 = vsub.s32 2, %v4152
        %v4154 = vrot.slane %v4139, %v4153
        %v4155 = vlaneseq
        %v4156 = vshrl.u32 %v4155, 7
        %v4157 = vsub.s32 3, %v4156
        %v4158 = vrot.slane %v4139, %v4157
        %v4159 = vlaneseq
        %v4160 = vshrl.u32 %v4159, 7
        %v4161 = vsub.s32 4, %v4160
        %v4162 = vrot.slane %v4139, %v4161
        %v4163 = vlaneseq
        %v4164 = vshrl.u32 %v4163, 7
        %v4165 = vsub.s32 5, %v4164
        %v4166 = vrot.slane %v4139, %v4165
        %v4167 = vlaneseq
        %v4168 = vshrl.u32 %v4167, 7
        %v4169 = vsub.s32 6, %v4168
        %v4170 = vrot.slane %v4139, %v4169
        %v4171 = vlaneseq
        %v4172 = vshrl.u32 %v4171, 7
        %v4173 = vsub.s32 7, %v4172
        %v4174 = vrot.slane %v4139, %v4173
        %v4175 = vlaneseq
        %v4176 = vshrl.u32 %v4175, 7
        %v4177 = vsub.s32 0, %v4176
        %v4178 = vrot.slane %v4140, %v4177
        %v4179 = vlaneseq
        %v4180 = vshrl.u32 %v4179, 7
        %v4181 = vsub.s32 1, %v4180
        %v4182 = vrot.slane %v4140, %v4181
        %v4183 = vlaneseq
        %v4184 = vshrl.u32 %v4183, 7
        %v4185 = vsub.s32 2, %v4184
        %v4186 = vrot.slane %v4140, %v4185
        %v4187 = vlaneseq
        %v4188 = vshrl.u32 %v4187, 7
        %v4189 = vsub.s32 3, %v4188
        %v4190 = vrot.slane %v4140, %v4189
        %v4491 = vunpack.c.l.b16 %v3851
        %v4492 = vunpack.c.h.b16 %v3851
        %v4493 = vunpack.c.l.b16 %v3852
        %v4494 = vunpack.c.h.b16 %v3852
        %v4495 = vunpack.c.l.b16 %v3853
        %v4496 = vunpack.c.h.b16 %v3853
        %v4497 = vunpack.c.l.b16 %v3854
        %v4498 = vunpack.c.h.b16 %v3854
        %v4499 = vunpack.c.l.b16 %v3855
        %v4500 = vunpack.c.h.b16 %v3855
        %v4501 = vunpack.c.l.b16 %v3856
        %v4502 = vunpack.c.h.b16 %v3856
        %v4503 = vunpack.c.l.b16 %v3857
        %v4504 = vunpack.c.h.b16 %v3857
        %v4505 = vunpack.c.l.b16 %v3858
        %v4506 = vunpack.c.h.b16 %v3858
        %v4507 = vunpack.c.l.b16 %v3859
        %v4508 = vunpack.c.h.b16 %v3859
        %v4509 = vunpack.c.l.b16 %v3860
        %v4510 = vunpack.c.h.b16 %v3860
        %v4511 = vunpack.c.l.b16 %v3861
        %v4512 = vunpack.c.h.b16 %v3861
        %v4513 = vunpack.c.l.b16 %v3862
        %v4514 = vunpack.c.h.b16 %v3862
        %v4515 = vunpack.c.l.b16 %v3863
        %v4516 = vunpack.c.h.b16 %v3863
        %v4517 = vunpack.c.l.b16 %v3864
        %v4518 = vunpack.c.h.b16 %v3864
        %v4519 = vunpack.c.l.b16 %v3865
        %v4520 = vunpack.c.h.b16 %v3865
        %v4521 = vunpack.c.l.b16 %v3866
        %v4522 = vunpack.c.h.b16 %v3866
        %v4523 = vunpack.c.l.b16 %v3867
        %v4524 = vunpack.c.h.b16 %v3867
        %v4525 = vunpack.c.l.b16 %v3868
        %v4526 = vunpack.c.h.b16 %v3868
        %v4527 = vunpack.c.l.b16 %v3869
        %v4528 = vunpack.c.h.b16 %v3869
        %v4529 = vunpack.c.l.b16 %v3870
        %v4530 = vunpack.c.h.b16 %v3870
        %v4531 = vunpack.c.l.b16 %v3871
        %v4532 = vunpack.c.h.b16 %v3871
        %v4533 = vunpack.c.l.b16 %v3872
        %v4534 = vunpack.c.h.b16 %v3872
        %v4535 = vunpack.c.l.b16 %v3873
        %v4536 = vunpack.c.h.b16 %v3873
        %v4537 = vunpack.c.l.b16 %v3874
        %v4538 = vunpack.c.h.b16 %v3874
        %v4539 = vunpack.c.l.b16 %v3875
        %v4540 = vunpack.c.h.b16 %v3875
        %v4541 = vunpack.c.l.b16 %v3876
        %v4542 = vunpack.c.h.b16 %v3876
        %v4543 = vunpack.c.l.b16 %v3877
        %v4544 = vunpack.c.h.b16 %v3877
        %v4545 = vunpack.c.l.b16 %v3878
        %v4546 = vunpack.c.h.b16 %v3878
        %v4547 = vunpack.c.l.b16 %v3879
        %v4548 = vunpack.c.h.b16 %v3879
        %v4549 = vunpack.c.l.b16 %v3880
        %v4550 = vunpack.c.h.b16 %v3880
        %v4551 = vunpack.c.l.b16 %v3881
        %v4552 = vunpack.c.h.b16 %v3881
        %v4553 = vunpack.c.l.b16 %v3882
        %v4554 = vunpack.c.h.b16 %v3882
        %v4555 = vunpack.c.l.b16 %v3883
        %v4556 = vunpack.c.h.b16 %v3883
        %v4557 = vunpack.c.l.b16 %v3884
        %v4558 = vunpack.c.h.b16 %v3884
        %v4559 = vunpack.c.l.b16 %v3885
        %v4560 = vunpack.c.h.b16 %v3885
        %v4561 = vunpack.c.l.b16 %v3886
        %v4562 = vunpack.c.h.b16 %v3886
        %v4563 = vunpack.c.l.b16 %v3887
        %v4564 = vunpack.c.h.b16 %v3887
        %v4565 = vunpack.c.l.b16 %v3888
        %v4566 = vunpack.c.h.b16 %v3888
        %v4567 = vunpack.c.l.b16 %v3889
        %v4568 = vunpack.c.h.b16 %v3889
        %v4569 = vunpack.c.l.b16 %v3890
        %v4570 = vunpack.c.h.b16 %v3890
        %v4571 = vunpack.c.l.b16 %v3891
        %v4572 = vunpack.c.h.b16 %v3891
        %v4573 = vunpack.c.l.b16 %v3892
        %v4574 = vunpack.c.h.b16 %v3892
        %v4575 = vunpack.c.l.b16 %v3893
        %v4576 = vunpack.c.h.b16 %v3893
        %v4577 = vunpack.c.l.b16 %v3894
        %v4578 = vunpack.c.h.b16 %v3894
        %v4579 = vunpack.c.l.b16 %v3895
        %v4580 = vunpack.c.h.b16 %v3895
        %v4581 = vunpack.c.l.b16 %v3896
        %v4582 = vunpack.c.h.b16 %v3896
        %v4583 = vunpack.c.l.b16 %v3897
        %v4584 = vunpack.c.h.b16 %v3897
        %v4585 = vunpack.c.l.b16 %v3898
        %v4586 = vunpack.c.h.b16 %v3898
        %v4587 = vunpack.c.l.b16 %v3899
        %v4588 = vunpack.c.h.b16 %v3899
        %v4589 = vunpack.c.l.b16 %v3900
        %v4590 = vunpack.c.h.b16 %v3900
        %v4591 = vunpack.c.l.b16 %v3901
        %v4592 = vunpack.c.h.b16 %v3901
        %v4593 = vunpack.c.l.b16 %v3902
        %v4594 = vunpack.c.h.b16 %v3902
        %v4595 = vunpack.c.l.b16 %v3903
        %v4596 = vunpack.c.h.b16 %v3903
        %v4597 = vunpack.c.l.b16 %v3904
        %v4598 = vunpack.c.h.b16 %v3904
        %v4599 = vunpack.c.l.b16 %v3905
        %v4600 = vunpack.c.h.b16 %v3905
        %v4601 = vunpack.c.l.b16 %v3906
        %v4602 = vunpack.c.h.b16 %v3906
        %v4603 = vunpack.c.l.b16 %v3907
        %v4604 = vunpack.c.h.b16 %v3907
        %v4605 = vunpack.c.l.b16 %v3908
        %v4606 = vunpack.c.h.b16 %v3908
        %v4607 = vunpack.c.l.b16 %v3909
        %v4608 = vunpack.c.h.b16 %v3909
        %v4609 = vunpack.c.l.b16 %v3910
        %v4610 = vunpack.c.h.b16 %v3910
        %v4611 = vunpack.c.l.b16 %v3911
        %v4612 = vunpack.c.h.b16 %v3911
        %v4613 = vunpack.c.l.b16 %v3912
        %v4614 = vunpack.c.h.b16 %v3912
        %v4615 = vunpack.c.l.b16 %v3913
        %v4616 = vunpack.c.h.b16 %v3913
        %v4617 = vunpack.c.l.b16 %v3914
        %v4618 = vunpack.c.h.b16 %v3914
        %v4619 = vunpack.c.l.b16 %v3915
        %v4620 = vunpack.c.h.b16 %v3915
        %v4621 = vunpack.c.l.b16 %v3916
        %v4622 = vunpack.c.h.b16 %v3916
        %v4623 = vunpack.c.l.b16 %v3917
        %v4624 = vunpack.c.h.b16 %v3917
        %v4625 = vunpack.c.l.b16 %v3918
        %v4626 = vunpack.c.h.b16 %v3918
        %v4627 = vunpack.c.l.b16 %v3919
        %v4628 = vunpack.c.h.b16 %v3919
        %v4629 = vunpack.c.l.b16 %v3920
        %v4630 = vunpack.c.h.b16 %v3920
        %v4631 = vunpack.c.l.b16 %v3921
        %v4632 = vunpack.c.h.b16 %v3921
        %v4633 = vunpack.c.l.b16 %v3922
        %v4634 = vunpack.c.h.b16 %v3922
        %v4635 = vunpack.c.l.b16 %v3923
        %v4636 = vunpack.c.h.b16 %v3923
        %v4637 = vunpack.c.l.b16 %v3924
        %v4638 = vunpack.c.h.b16 %v3924
        %v4639 = vunpack.c.l.b16 %v3925
        %v4640 = vunpack.c.h.b16 %v3925
        %v4641 = vunpack.c.l.b16 %v3926
        %v4642 = vunpack.c.h.b16 %v3926
        %v4643 = vunpack.c.l.b16 %v3927
        %v4644 = vunpack.c.h.b16 %v3927
        %v4645 = vunpack.c.l.b16 %v3928
        %v4646 = vunpack.c.h.b16 %v3928
        %v4647 = vunpack.c.l.b16 %v3929
        %v4648 = vunpack.c.h.b16 %v3929
        %v4649 = vunpack.c.l.b16 %v3930
        %v4650 = vunpack.c.h.b16 %v3930
        %v4651 = vunpack.c.l.b16 %v3931
        %v4652 = vunpack.c.h.b16 %v3931
        %v4653 = vunpack.c.l.b16 %v3932
        %v4654 = vunpack.c.h.b16 %v3932
        %v4655 = vunpack.c.l.b16 %v3933
        %v4656 = vunpack.c.h.b16 %v3933
        %v4657 = vunpack.c.l.b16 %v3934
        %v4658 = vunpack.c.h.b16 %v3934
        %v4659 = vunpack.c.l.b16 %v3935
        %v4660 = vunpack.c.h.b16 %v3935
        %v4661 = vunpack.c.l.b16 %v3936
        %v4662 = vunpack.c.h.b16 %v3936
        %v4663 = vunpack.c.l.b16 %v3937
        %v4664 = vunpack.c.h.b16 %v3937
        %v4665 = vunpack.c.l.b16 %v3938
        %v4666 = vunpack.c.h.b16 %v3938
        %v4667 = vunpack.c.l.b16 %v3939
        %v4668 = vunpack.c.h.b16 %v3939
        %v4669 = vunpack.c.l.b16 %v3940
        %v4670 = vunpack.c.h.b16 %v3940
        %v4671 = vunpack.c.l.b16 %v3941
        %v4672 = vunpack.c.h.b16 %v3941
        %v4673 = vunpack.c.l.b16 %v3942
        %v4674 = vunpack.c.h.b16 %v3942
        %v4675 = vunpack.c.l.b16 %v3943
        %v4676 = vunpack.c.h.b16 %v3943
        %v4677 = vunpack.c.l.b16 %v3944
        %v4678 = vunpack.c.h.b16 %v3944
        %v4679 = vunpack.c.l.b16 %v3945
        %v4680 = vunpack.c.h.b16 %v3945
        %v4681 = vunpack.c.l.b16 %v3946
        %v4682 = vunpack.c.h.b16 %v3946
        %v4683 = vunpack.c.l.b16 %v3947
        %v4684 = vunpack.c.h.b16 %v3947
        %v4685 = vunpack.c.l.b16 %v3948
        %v4686 = vunpack.c.h.b16 %v3948
        %v4687 = vunpack.c.l.b16 %v3949
        %v4688 = vunpack.c.h.b16 %v3949
        %v4689 = vunpack.c.l.b16 %v3950
        %v4690 = vunpack.c.h.b16 %v3950
        %v4691 = vunpack.c.l.b16 %v3951
        %v4692 = vunpack.c.h.b16 %v3951
        %v4693 = vunpack.c.l.b16 %v3952
        %v4694 = vunpack.c.h.b16 %v3952
        %v4695 = vunpack.c.l.b16 %v3953
        %v4696 = vunpack.c.h.b16 %v3953
        %v4697 = vunpack.c.l.b16 %v3954
        %v4698 = vunpack.c.h.b16 %v3954
        %v4699 = vunpack.c.l.b16 %v3955
        %v4700 = vunpack.c.h.b16 %v3955
        %v4701 = vunpack.c.l.b16 %v3956
        %v4702 = vunpack.c.h.b16 %v3956
        %v4703 = vunpack.c.l.b16 %v3957
        %v4704 = vunpack.c.h.b16 %v3957
        %v4705 = vunpack.c.l.b16 %v3958
        %v4706 = vunpack.c.h.b16 %v3958
        %v4707 = vunpack.c.l.b16 %v3959
        %v4708 = vunpack.c.h.b16 %v3959
        %v4709 = vunpack.c.l.b16 %v3960
        %v4710 = vunpack.c.h.b16 %v3960
        %v4711 = vunpack.c.l.b16 %v3961
        %v4712 = vunpack.c.h.b16 %v3961
        %v4713 = vunpack.c.l.b16 %v3962
        %v4714 = vunpack.c.h.b16 %v3962
        %v4715 = vunpack.c.l.b16 %v3963
        %v4716 = vunpack.c.h.b16 %v3963
        %v4717 = vunpack.c.l.b16 %v3964
        %v4718 = vunpack.c.h.b16 %v3964
        %v4719 = vunpack.c.l.b16 %v3965
        %v4720 = vunpack.c.h.b16 %v3965
        %v4721 = vunpack.c.l.b16 %v3966
        %v4722 = vunpack.c.h.b16 %v3966
        %v4723 = vunpack.c.l.b16 %v3967
        %v4724 = vunpack.c.h.b16 %v3967
        %v4725 = vunpack.c.l.b16 %v3968
        %v4726 = vunpack.c.h.b16 %v3968
        %v4727 = vunpack.c.l.b16 %v3969
        %v4728 = vunpack.c.h.b16 %v3969
        %v4729 = vunpack.c.l.b16 %v3970
        %v4730 = vunpack.c.h.b16 %v3970
        %v4731 = vunpack.c.l.b16 %v3971
        %v4732 = vunpack.c.h.b16 %v3971
        %v4733 = vunpack.c.l.b16 %v3972
        %v4734 = vunpack.c.h.b16 %v3972
        %v4735 = vunpack.c.l.b16 %v3973
        %v4736 = vunpack.c.h.b16 %v3973
        %v4737 = vunpack.c.l.b16 %v3974
        %v4738 = vunpack.c.h.b16 %v3974
        %v4739 = vunpack.c.l.b16 %v3975
        %v4740 = vunpack.c.h.b16 %v3975
        %v4741 = vunpack.c.l.b16 %v3976
        %v4742 = vunpack.c.h.b16 %v3976
        %v4743 = vunpack.c.l.b16 %v3977
        %v4744 = vunpack.c.h.b16 %v3977
        %v4745 = vunpack.c.l.b16 %v3978
        %v4746 = vunpack.c.h.b16 %v3978
        %v4747 = vunpack.c.l.b16 %v3979
        %v4748 = vunpack.c.h.b16 %v3979
        %v4749 = vunpack.c.l.b16 %v3980
        %v4750 = vunpack.c.h.b16 %v3980
        %v4751 = vunpack.c.l.b16 %v3981
        %v4752 = vunpack.c.h.b16 %v3981
        %v4753 = vunpack.c.l.b16 %v3982
        %v4754 = vunpack.c.h.b16 %v3982
        %v4755 = vunpack.c.l.b16 %v3983
        %v4756 = vunpack.c.h.b16 %v3983
        %v4757 = vunpack.c.l.b16 %v3984
        %v4758 = vunpack.c.h.b16 %v3984
        %v4759 = vunpack.c.l.b16 %v3985
        %v4760 = vunpack.c.h.b16 %v3985
        %v4761 = vunpack.c.l.b16 %v3986
        %v4762 = vunpack.c.h.b16 %v3986
        %v4763 = vunpack.c.l.b16 %v3987
        %v4764 = vunpack.c.h.b16 %v3987
        %v4765 = vunpack.c.l.b16 %v3988
        %v4766 = vunpack.c.h.b16 %v3988
        %v4767 = vunpack.c.l.b16 %v3989
        %v4768 = vunpack.c.h.b16 %v3989
        %v4769 = vunpack.c.l.b16 %v3990
        %v4770 = vunpack.c.h.b16 %v3990
        %v4771 = vunpack.c.l.b16 %v3991
        %v4772 = vunpack.c.h.b16 %v3991
        %v4773 = vunpack.c.l.b16 %v3992
        %v4774 = vunpack.c.h.b16 %v3992
        %v4775 = vunpack.c.l.b16 %v3993
        %v4776 = vunpack.c.h.b16 %v3993
        %v4777 = vunpack.c.l.b16 %v3994
        %v4778 = vunpack.c.h.b16 %v3994
        %v4779 = vunpack.c.l.b16 %v3995
        %v4780 = vunpack.c.h.b16 %v3995
        %v4781 = vunpack.c.l.b16 %v3996
        %v4782 = vunpack.c.h.b16 %v3996
        %v4783 = vunpack.c.l.b16 %v3997
        %v4784 = vunpack.c.h.b16 %v3997
        %v4785 = vunpack.c.l.b16 %v3998
        %v4786 = vunpack.c.h.b16 %v3998
        %v4787 = vunpack.c.l.b16 %v3999
        %v4788 = vunpack.c.h.b16 %v3999
        %v4789 = vunpack.c.l.b16 %v4000
        %v4790 = vunpack.c.h.b16 %v4000
        %v4791 = vunpack.c.l.b16 %v4001
        %v4792 = vunpack.c.h.b16 %v4001
        %v4793 = vunpack.c.l.b16 %v4002
        %v4794 = vunpack.c.h.b16 %v4002
        %v4795 = vunpack.c.l.b16 %v4003
        %v4796 = vunpack.c.h.b16 %v4003
        %v4797 = vunpack.c.l.b16 %v4004
        %v4798 = vunpack.c.h.b16 %v4004
        %v4799 = vunpack.c.l.b16 %v4005
        %v4800 = vunpack.c.h.b16 %v4005
        %v4801 = vunpack.c.l.b16 %v4006
        %v4802 = vunpack.c.h.b16 %v4006
        %v4803 = vunpack.c.l.b16 %v4007
        %v4804 = vunpack.c.h.b16 %v4007
        %v4805 = vunpack.c.l.b16 %v4008
        %v4806 = vunpack.c.h.b16 %v4008
        %v4807 = vunpack.c.l.b16 %v4009
        %v4808 = vunpack.c.h.b16 %v4009
        %v4809 = vunpack.c.l.b16 %v4010
        %v4810 = vunpack.c.h.b16 %v4010
        %v4811 = vunpack.c.l.b16 %v4011
        %v4812 = vunpack.c.h.b16 %v4011
        %v4813 = vunpack.c.l.b16 %v4012
        %v4814 = vunpack.c.h.b16 %v4012
        %v4815 = vunpack.c.l.b16 %v4013
        %v4816 = vunpack.c.h.b16 %v4013
        %v4817 = vunpack.c.l.b16 %v4014
        %v4818 = vunpack.c.h.b16 %v4014
        %v4819 = vunpack.c.l.b16 %v4015
        %v4820 = vunpack.c.h.b16 %v4015
        %v4821 = vunpack.c.l.b16 %v4016
        %v4822 = vunpack.c.h.b16 %v4016
        %v4823 = vunpack.c.l.b16 %v4017
        %v4824 = vunpack.c.h.b16 %v4017
        %v4825 = vunpack.c.l.b16 %v4018
        %v4826 = vunpack.c.h.b16 %v4018
        %v4827 = vunpack.c.l.b16 %v4019
        %v4828 = vunpack.c.h.b16 %v4019
        %v4829 = vunpack.c.l.b16 %v4020
        %v4830 = vunpack.c.h.b16 %v4020
        %v4831 = vunpack.c.l.b16 %v4021
        %v4832 = vunpack.c.h.b16 %v4021
        %v4833 = vunpack.c.l.b16 %v4022
        %v4834 = vunpack.c.h.b16 %v4022
        %v4835 = vunpack.c.l.b16 %v4023
        %v4836 = vunpack.c.h.b16 %v4023
        %v4837 = vunpack.c.l.b16 %v4024
        %v4838 = vunpack.c.h.b16 %v4024
        %v4839 = vunpack.c.l.b16 %v4025
        %v4840 = vunpack.c.h.b16 %v4025
        %v4841 = vunpack.c.l.b16 %v4026
        %v4842 = vunpack.c.h.b16 %v4026
        %v4843 = vunpack.c.l.b16 %v4027
        %v4844 = vunpack.c.h.b16 %v4027
        %v4845 = vunpack.c.l.b16 %v4028
        %v4846 = vunpack.c.h.b16 %v4028
        %v4847 = vunpack.c.l.b16 %v4029
        %v4848 = vunpack.c.h.b16 %v4029
        %v4849 = vunpack.c.l.b16 %v4030
        %v4850 = vunpack.c.h.b16 %v4030
        %v4851 = vunpack.c.l.b16 %v4031
        %v4852 = vunpack.c.h.b16 %v4031
        %v4853 = vunpack.c.l.b16 %v4032
        %v4854 = vunpack.c.h.b16 %v4032
        %v4855 = vunpack.c.l.b16 %v4033
        %v4856 = vunpack.c.h.b16 %v4033
        %v4857 = vunpack.c.l.b16 %v4034
        %v4858 = vunpack.c.h.b16 %v4034
        %v4859 = vunpack.c.l.b16 %v4035
        %v4860 = vunpack.c.h.b16 %v4035
        %v4861 = vunpack.c.l.b16 %v4036
        %v4862 = vunpack.c.h.b16 %v4036
        %v4863 = vunpack.c.l.b16 %v4037
        %v4864 = vunpack.c.h.b16 %v4037
        %v4865 = vunpack.c.l.b16 %v4038
        %v4866 = vunpack.c.h.b16 %v4038
        %v4867 = vunpack.c.l.b16 %v4039
        %v4868 = vunpack.c.h.b16 %v4039
        %v4869 = vunpack.c.l.b16 %v4040
        %v4870 = vunpack.c.h.b16 %v4040
        %v4871 = vunpack.c.l.b16 %v4041
        %v4872 = vunpack.c.h.b16 %v4041
        %v4873 = vunpack.c.l.b16 %v4042
        %v4874 = vunpack.c.h.b16 %v4042
        %v4875 = vunpack.c.l.b16 %v4043
        %v4876 = vunpack.c.h.b16 %v4043
        %v4877 = vunpack.c.l.b16 %v4044
        %v4878 = vunpack.c.h.b16 %v4044
        %v4879 = vunpack.c.l.b16 %v4045
        %v4880 = vunpack.c.h.b16 %v4045
        %v4881 = vunpack.c.l.b16 %v4046
        %v4882 = vunpack.c.h.b16 %v4046
        %v4883 = vunpack.c.l.b16 %v4047
        %v4884 = vunpack.c.h.b16 %v4047
        %v4885 = vunpack.c.l.b16 %v4048
        %v4886 = vunpack.c.h.b16 %v4048
        %v4887 = vunpack.c.l.b16 %v4049
        %v4888 = vunpack.c.h.b16 %v4049
        %v4889 = vunpack.c.l.b16 %v4050
        %v4890 = vunpack.c.h.b16 %v4050
        %v4891 = vunpack.c.l.b16 %v4051
        %v4892 = vunpack.c.h.b16 %v4051
        %v4893 = vunpack.c.l.b16 %v4052
        %v4894 = vunpack.c.h.b16 %v4052
        %v4895 = vunpack.c.l.b16 %v4053
        %v4896 = vunpack.c.h.b16 %v4053
        %v4897 = vunpack.c.l.b16 %v4054
        %v4898 = vunpack.c.h.b16 %v4054
        %v4899 = vunpack.c.l.b16 %v4055
        %v4900 = vunpack.c.h.b16 %v4055
        %v4901 = vunpack.c.l.b16 %v4056
        %v4902 = vunpack.c.h.b16 %v4056
        %v4903 = vunpack.c.l.b16 %v4057
        %v4904 = vunpack.c.h.b16 %v4057
        %v4905 = vunpack.c.l.b16 %v4058
        %v4906 = vunpack.c.h.b16 %v4058
        %v4907 = vunpack.c.l.b16 %v4059
        %v4908 = vunpack.c.h.b16 %v4059
        %v4909 = vunpack.c.l.b16 %v4060
        %v4910 = vunpack.c.h.b16 %v4060
        %v4911 = vunpack.c.l.b16 %v4061
        %v4912 = vunpack.c.h.b16 %v4061
        %v4913 = vunpack.c.l.b16 %v4062
        %v4914 = vunpack.c.h.b16 %v4062
        %v4915 = vunpack.c.l.b16 %v4063
        %v4916 = vunpack.c.h.b16 %v4063
        %v4917 = vunpack.c.l.b16 %v4064
        %v4918 = vunpack.c.h.b16 %v4064
        %v4919 = vunpack.c.l.b16 %v4065
        %v4920 = vunpack.c.h.b16 %v4065
        %v4921 = vunpack.c.l.b16 %v4066
        %v4922 = vunpack.c.h.b16 %v4066
        %v4923 = vunpack.c.l.b16 %v4067
        %v4924 = vunpack.c.h.b16 %v4067
        %v4925 = vunpack.c.l.b16 %v4068
        %v4926 = vunpack.c.h.b16 %v4068
        %v4927 = vunpack.c.l.b16 %v4069
        %v4928 = vunpack.c.h.b16 %v4069
        %v4929 = vunpack.c.l.b16 %v4070
        %v4930 = vunpack.c.h.b16 %v4070
        %v4931 = vunpack.c.l.b16 %v4071
        %v4932 = vunpack.c.h.b16 %v4071
        %v4933 = vunpack.c.l.b16 %v4072
        %v4934 = vunpack.c.h.b16 %v4072
        %v4935 = vunpack.c.l.b16 %v4073
        %v4936 = vunpack.c.h.b16 %v4073
        %v4937 = vunpack.c.l.b16 %v4074
        %v4938 = vunpack.c.h.b16 %v4074
        %v4939 = vunpack.c.l.b16 %v4075
        %v4940 = vunpack.c.h.b16 %v4075
        %v4941 = vunpack.c.l.b16 %v4076
        %v4942 = vunpack.c.h.b16 %v4076
        %v4943 = vunpack.c.l.b16 %v4077
        %v4944 = vunpack.c.h.b16 %v4077
        %v4945 = vunpack.c.l.b16 %v4078
        %v4946 = vunpack.c.h.b16 %v4078
        %v4947 = vunpack.c.l.b16 %v4079
        %v4948 = vunpack.c.h.b16 %v4079
        %v4949 = vunpack.c.l.b16 %v4080
        %v4950 = vunpack.c.h.b16 %v4080
        %v4951 = vunpack.c.l.b16 %v4081
        %v4952 = vunpack.c.h.b16 %v4081
        %v4953 = vunpack.c.l.b16 %v4082
        %v4954 = vunpack.c.h.b16 %v4082
        %v4955 = vunpack.c.l.b16 %v4083
        %v4956 = vunpack.c.h.b16 %v4083
        %v4957 = vunpack.c.l.b16 %v4084
        %v4958 = vunpack.c.h.b16 %v4084
        %v4959 = vunpack.c.l.b16 %v4085
        %v4960 = vunpack.c.h.b16 %v4085
        %v4961 = vunpack.c.l.b16 %v4086
        %v4962 = vunpack.c.h.b16 %v4086
        %v4963 = vunpack.c.l.b16 %v4087
        %v4964 = vunpack.c.h.b16 %v4087
        %v4965 = vunpack.c.l.b16 %v4088
        %v4966 = vunpack.c.h.b16 %v4088
        %v4967 = vunpack.c.l.b16 %v4089
        %v4968 = vunpack.c.h.b16 %v4089
        %v4969 = vunpack.c.l.b16 %v4090
        %v4970 = vunpack.c.h.b16 %v4090
        %v4971 = vunpack.c.l.b16 %v4091
        %v4972 = vunpack.c.h.b16 %v4091
        %v4973 = vunpack.c.l.b16 %v4092
        %v4974 = vunpack.c.h.b16 %v4092
        %v4975 = vunpack.c.l.b16 %v4093
        %v4976 = vunpack.c.h.b16 %v4093
        %v4977 = vunpack.c.l.b16 %v4094
        %v4978 = vunpack.c.h.b16 %v4094
        %v4979 = vunpack.c.l.b16 %v4095
        %v4980 = vunpack.c.h.b16 %v4095
        %v4981 = vunpack.c.l.b16 %v4096
        %v4982 = vunpack.c.h.b16 %v4096
        %v4983 = vunpack.c.l.b16 %v4097
        %v4984 = vunpack.c.h.b16 %v4097
        %v4985 = vunpack.c.l.b16 %v4098
        %v4986 = vunpack.c.h.b16 %v4098
        %v4987 = vunpack.c.l.b16 %v4099
        %v4988 = vunpack.c.h.b16 %v4099
        %v4989 = vunpack.c.l.b16 %v4100
        %v4990 = vunpack.c.h.b16 %v4100
        %v4991 = vunpack.c.l.b16 %v4101
        %v4992 = vunpack.c.h.b16 %v4101
        %v4993 = vunpack.c.l.b16 %v4102
        %v4994 = vunpack.c.h.b16 %v4102
        %v4995 = vunpack.c.l.b16 %v4103
        %v4996 = vunpack.c.h.b16 %v4103
        %v4997 = vunpack.c.l.b16 %v4104
        %v4998 = vunpack.c.h.b16 %v4104
        %v4999 = vunpack.c.l.b16 %v4105
        %v5000 = vunpack.c.h.b16 %v4105
        %v5001 = vunpack.c.l.b16 %v4106
        %v5002 = vunpack.c.h.b16 %v4106
        %v5003 = vunpack.c.l.b16 %v4107
        %v5004 = vunpack.c.h.b16 %v4107
        %v5005 = vunpack.c.l.b16 %v4108
        %v5006 = vunpack.c.h.b16 %v4108
        %v5007 = vunpack.c.l.b16 %v4109
        %v5008 = vunpack.c.h.b16 %v4109
        %v5009 = vunpack.c.l.b16 %v4110
        %v5010 = vunpack.c.h.b16 %v4110
        %v5011 = vunpack.c.l.b16 %v4111
        %v5012 = vunpack.c.h.b16 %v4111
        %v5013 = vunpack.c.l.b16 %v4112
        %v5014 = vunpack.c.h.b16 %v4112
        %v5015 = vunpack.c.l.b16 %v4113
        %v5016 = vunpack.c.h.b16 %v4113
        %v5017 = vunpack.c.l.b16 %v4114
        %v5018 = vunpack.c.h.b16 %v4114
        %v5019 = vunpack.c.l.b16 %v4115
        %v5020 = vunpack.c.h.b16 %v4115
        %v5021 = vunpack.c.l.b16 %v4116
        %v5022 = vunpack.c.h.b16 %v4116
        %v5023 = vunpack.c.l.b16 %v4117
        %v5024 = vunpack.c.h.b16 %v4117
        %v5025 = vunpack.c.l.b16 %v4118
        %v5026 = vunpack.c.h.b16 %v4118
        %v5027 = vunpack.c.l.b16 %v4119
        %v5028 = vunpack.c.h.b16 %v4119
        %v5029 = vunpack.c.l.b16 %v4120
        %v5030 = vunpack.c.h.b16 %v4120
        %v5031 = vunpack.c.l.b16 %v4121
        %v5032 = vunpack.c.h.b16 %v4121
        %v5033 = vunpack.c.l.b16 %v4122
        %v5034 = vunpack.c.h.b16 %v4122
        %v5035 = vunpack.c.l.b16 %v4123
        %v5036 = vunpack.c.h.b16 %v4123
        %v5037 = vunpack.c.l.b16 %v4124
        %v5038 = vunpack.c.h.b16 %v4124
        %v5039 = vunpack.c.l.b16 %v4125
        %v5040 = vunpack.c.h.b16 %v4125
        %v5041 = vunpack.c.l.b16 %v4126
        %v5042 = vunpack.c.h.b16 %v4126
        %v5043 = vunpack.c.l.b16 %v4127
        %v5044 = vunpack.c.h.b16 %v4127
        %v5045 = vunpack.c.l.b16 %v4128
        %v5046 = vunpack.c.h.b16 %v4128
        %v5047 = vunpack.c.l.b16 %v4129
        %v5048 = vunpack.c.h.b16 %v4129
        %v5049 = vunpack.c.l.b16 %v4130
        %v5050 = vunpack.c.h.b16 %v4130
        %v5051 = vunpack.c.l.b16 %v4131
        %v5052 = vunpack.c.h.b16 %v4131
        %v5053 = vunpack.c.l.b16 %v4132
        %v5054 = vunpack.c.h.b16 %v4132
        %v5055 = vunpack.c.l.b16 %v4133
        %v5056 = vunpack.c.h.b16 %v4133
        %v5057 = vunpack.c.l.b16 %v4134
        %v5058 = vunpack.c.h.b16 %v4134
        %v5059 = vunpack.c.l.b16 %v4135
        %v5060 = vunpack.c.h.b16 %v4135
        %v5061 = vunpack.c.l.b16 %v4136
        %v5062 = vunpack.c.h.b16 %v4136
        %v5063 = vunpack.c.l.b16 %v4137
        %v5064 = vunpack.c.h.b16 %v4137
        %v5065 = vunpack.c.l.b16 %v4138
        %v5066 = vunpack.c.h.b16 %v4138
        %v5067 = vpack.c.b16 %v4503, %v4491
        %v5068 = vpack.c.b16 %v4504, %v4492
        %v5069 = vpack.c.b16 %v4505, %v4493
        %v5070 = vpack.c.b16 %v4506, %v4494
        %v5071 = vpack.c.b16 %v4507, %v4495
        %v5072 = vpack.c.b16 %v4508, %v4496
        %v5073 = vpack.c.b16 %v4509, %v4497
        %v5074 = vpack.c.b16 %v4510, %v4498
        %v5075 = vpack.c.b16 %v4511, %v4499
        %v5076 = vpack.c.b16 %v4512, %v4500
        %v5077 = vpack.c.b16 %v4513, %v4501
        %v5078 = vpack.c.b16 %v4514, %v4502
        %v5079 = vpack.c.b16 %v4527, %v4515
        %v5080 = vpack.c.b16 %v4528, %v4516
        %v5081 = vpack.c.b16 %v4529, %v4517
        %v5082 = vpack.c.b16 %v4530, %v4518
        %v5083 = vpack.c.b16 %v4531, %v4519
        %v5084 = vpack.c.b16 %v4532, %v4520
        %v5085 = vpack.c.b16 %v4533, %v4521
        %v5086 = vpack.c.b16 %v4534, %v4522
        %v5087 = vpack.c.b16 %v4535, %v4523
        %v5088 = vpack.c.b16 %v4536, %v4524
        %v5089 = vpack.c.b16 %v4537, %v4525
        %v5090 = vpack.c.b16 %v4538, %v4526
        %v5091 = vpack.c.b16 %v4551, %v4539
        %v5092 = vpack.c.b16 %v4552, %v4540
        %v5093 = vpack.c.b16 %v4553, %v4541
        %v5094 = vpack.c.b16 %v4554, %v4542
        %v5095 = vpack.c.b16 %v4555, %v4543
        %v5096 = vpack.c.b16 %v4556, %v4544
        %v5097 = vpack.c.b16 %v4557, %v4545
        %v5098 = vpack.c.b16 %v4558, %v4546
        %v5099 = vpack.c.b16 %v4559, %v4547
        %v5100 = vpack.c.b16 %v4560, %v4548
        %v5101 = vpack.c.b16 %v4561, %v4549
        %v5102 = vpack.c.b16 %v4562, %v4550
        %v5103 = vpack.c.b16 %v4575, %v4563
        %v5104 = vpack.c.b16 %v4576, %v4564
        %v5105 = vpack.c.b16 %v4577, %v4565
        %v5106 = vpack.c.b16 %v4578, %v4566
        %v5107 = vpack.c.b16 %v4579, %v4567
        %v5108 = vpack.c.b16 %v4580, %v4568
        %v5109 = vpack.c.b16 %v4581, %v4569
        %v5110 = vpack.c.b16 %v4582, %v4570
        %v5111 = vpack.c.b16 %v4583, %v4571
        %v5112 = vpack.c.b16 %v4584, %v4572
        %v5113 = vpack.c.b16 %v4585, %v4573
        %v5114 = vpack.c.b16 %v4586, %v4574
        %v5115 = vpack.c.b16 %v4599, %v4587
        %v5116 = vpack.c.b16 %v4600, %v4588
        %v5117 = vpack.c.b16 %v4601, %v4589
        %v5118 = vpack.c.b16 %v4602, %v4590
        %v5119 = vpack.c.b16 %v4603, %v4591
        %v5120 = vpack.c.b16 %v4604, %v4592
        %v5121 = vpack.c.b16 %v4605, %v4593
        %v5122 = vpack.c.b16 %v4606, %v4594
        %v5123 = vpack.c.b16 %v4607, %v4595
        %v5124 = vpack.c.b16 %v4608, %v4596
        %v5125 = vpack.c.b16 %v4609, %v4597
        %v5126 = vpack.c.b16 %v4610, %v4598
        %v5127 = vpack.c.b16 %v4623, %v4611
        %v5128 = vpack.c.b16 %v4624, %v4612
        %v5129 = vpack.c.b16 %v4625, %v4613
        %v5130 = vpack.c.b16 %v4626, %v4614
        %v5131 = vpack.c.b16 %v4627, %v4615
        %v5132 = vpack.c.b16 %v4628, %v4616
        %v5133 = vpack.c.b16 %v4629, %v4617
        %v5134 = vpack.c.b16 %v4630, %v4618
        %v5135 = vpack.c.b16 %v4631, %v4619
        %v5136 = vpack.c.b16 %v4632, %v4620
        %v5137 = vpack.c.b16 %v4633, %v4621
        %v5138 = vpack.c.b16 %v4634, %v4622
        %v5139 = vpack.c.b16 %v4647, %v4635
        %v5140 = vpack.c.b16 %v4648, %v4636
        %v5141 = vpack.c.b16 %v4649, %v4637
        %v5142 = vpack.c.b16 %v4650, %v4638
        %v5143 = vpack.c.b16 %v4651, %v4639
        %v5144 = vpack.c.b16 %v4652, %v4640
        %v5145 = vpack.c.b16 %v4653, %v4641
        %v5146 = vpack.c.b16 %v4654, %v4642
        %v5147 = vpack.c.b16 %v4655, %v4643
        %v5148 = vpack.c.b16 %v4656, %v4644
        %v5149 = vpack.c.b16 %v4657, %v4645
        %v5150 = vpack.c.b16 %v4658, %v4646
        %v5151 = vpack.c.b16 %v4671, %v4659
        %v5152 = vpack.c.b16 %v4672, %v4660
        %v5153 = vpack.c.b16 %v4673, %v4661
        %v5154 = vpack.c.b16 %v4674, %v4662
        %v5155 = vpack.c.b16 %v4675, %v4663
        %v5156 = vpack.c.b16 %v4676, %v4664
        %v5157 = vpack.c.b16 %v4677, %v4665
        %v5158 = vpack.c.b16 %v4678, %v4666
        %v5159 = vpack.c.b16 %v4679, %v4667
        %v5160 = vpack.c.b16 %v4680, %v4668
        %v5161 = vpack.c.b16 %v4681, %v4669
        %v5162 = vpack.c.b16 %v4682, %v4670
        %v5163 = vpack.c.b16 %v4695, %v4683
        %v5164 = vpack.c.b16 %v4696, %v4684
        %v5165 = vpack.c.b16 %v4697, %v4685
        %v5166 = vpack.c.b16 %v4698, %v4686
        %v5167 = vpack.c.b16 %v4699, %v4687
        %v5168 = vpack.c.b16 %v4700, %v4688
        %v5169 = vpack.c.b16 %v4701, %v4689
        %v5170 = vpack.c.b16 %v4702, %v4690
        %v5171 = vpack.c.b16 %v4703, %v4691
        %v5172 = vpack.c.b16 %v4704, %v4692
        %v5173 = vpack.c.b16 %v4705, %v4693
        %v5174 = vpack.c.b16 %v4706, %v4694
        %v5175 = vpack.c.b16 %v4719, %v4707
        %v5176 = vpack.c.b16 %v4720, %v4708
        %v5177 = vpack.c.b16 %v4721, %v4709
        %v5178 = vpack.c.b16 %v4722, %v4710
        %v5179 = vpack.c.b16 %v4723, %v4711
        %v5180 = vpack.c.b16 %v4724, %v4712
        %v5181 = vpack.c.b16 %v4725, %v4713
        %v5182 = vpack.c.b16 %v4726, %v4714
        %v5183 = vpack.c.b16 %v4727, %v4715
        %v5184 = vpack.c.b16 %v4728, %v4716
        %v5185 = vpack.c.b16 %v4729, %v4717
        %v5186 = vpack.c.b16 %v4730, %v4718
        %v5187 = vpack.c.b16 %v4743, %v4731
        %v5188 = vpack.c.b16 %v4744, %v4732
        %v5189 = vpack.c.b16 %v4745, %v4733
        %v5190 = vpack.c.b16 %v4746, %v4734
        %v5191 = vpack.c.b16 %v4747, %v4735
        %v5192 = vpack.c.b16 %v4748, %v4736
        %v5193 = vpack.c.b16 %v4749, %v4737
        %v5194 = vpack.c.b16 %v4750, %v4738
        %v5195 = vpack.c.b16 %v4751, %v4739
        %v5196 = vpack.c.b16 %v4752, %v4740
        %v5197 = vpack.c.b16 %v4753, %v4741
        %v5198 = vpack.c.b16 %v4754, %v4742
        %v5199 = vpack.c.b16 %v4767, %v4755
        %v5200 = vpack.c.b16 %v4768, %v4756
        %v5201 = vpack.c.b16 %v4769, %v4757
        %v5202 = vpack.c.b16 %v4770, %v4758
        %v5203 = vpack.c.b16 %v4771, %v4759
        %v5204 = vpack.c.b16 %v4772, %v4760
        %v5205 = vpack.c.b16 %v4773, %v4761
        %v5206 = vpack.c.b16 %v4774, %v4762
        %v5207 = vpack.c.b16 %v4775, %v4763
        %v5208 = vpack.c.b16 %v4776, %v4764
        %v5209 = vpack.c.b16 %v4777, %v4765
        %v5210 = vpack.c.b16 %v4778, %v4766
        %v5211 = vpack.c.b16 %v4791, %v4779
        %v5212 = vpack.c.b16 %v4792, %v4780
        %v5213 = vpack.c.b16 %v4793, %v4781
        %v5214 = vpack.c.b16 %v4794, %v4782
        %v5215 = vpack.c.b16 %v4795, %v4783
        %v5216 = vpack.c.b16 %v4796, %v4784
        %v5217 = vpack.c.b16 %v4797, %v4785
        %v5218 = vpack.c.b16 %v4798, %v4786
        %v5219 = vpack.c.b16 %v4799, %v4787
        %v5220 = vpack.c.b16 %v4800, %v4788
        %v5221 = vpack.c.b16 %v4801, %v4789
        %v5222 = vpack.c.b16 %v4802, %v4790
        %v5223 = vpack.c.b16 %v4815, %v4803
        %v5224 = vpack.c.b16 %v4816, %v4804
        %v5225 = vpack.c.b16 %v4817, %v4805
        %v5226 = vpack.c.b16 %v4818, %v4806
        %v5227 = vpack.c.b16 %v4819, %v4807
        %v5228 = vpack.c.b16 %v4820, %v4808
        %v5229 = vpack.c.b16 %v4821, %v4809
        %v5230 = vpack.c.b16 %v4822, %v4810
        %v5231 = vpack.c.b16 %v4823, %v4811
        %v5232 = vpack.c.b16 %v4824, %v4812
        %v5233 = vpack.c.b16 %v4825, %v4813
        %v5234 = vpack.c.b16 %v4826, %v4814
        %v5235 = vpack.c.b16 %v4839, %v4827
        %v5236 = vpack.c.b16 %v4840, %v4828
        %v5237 = vpack.c.b16 %v4841, %v4829
        %v5238 = vpack.c.b16 %v4842, %v4830
        %v5239 = vpack.c.b16 %v4843, %v4831
        %v5240 = vpack.c.b16 %v4844, %v4832
        %v5241 = vpack.c.b16 %v4845, %v4833
        %v5242 = vpack.c.b16 %v4846, %v4834
        %v5243 = vpack.c.b16 %v4847, %v4835
        %v5244 = vpack.c.b16 %v4848, %v4836
        %v5245 = vpack.c.b16 %v4849, %v4837
        %v5246 = vpack.c.b16 %v4850, %v4838
        %v5247 = vpack.c.b16 %v4863, %v4851
        %v5248 = vpack.c.b16 %v4864, %v4852
        %v5249 = vpack.c.b16 %v4865, %v4853
        %v5250 = vpack.c.b16 %v4866, %v4854
        %v5251 = vpack.c.b16 %v4867, %v4855
        %v5252 = vpack.c.b16 %v4868, %v4856
        %v5253 = vpack.c.b16 %v4869, %v4857
        %v5254 = vpack.c.b16 %v4870, %v4858
        %v5255 = vpack.c.b16 %v4871, %v4859
        %v5256 = vpack.c.b16 %v4872, %v4860
        %v5257 = vpack.c.b16 %v4873, %v4861
        %v5258 = vpack.c.b16 %v4874, %v4862
        %v5259 = vpack.c.b16 %v4887, %v4875
        %v5260 = vpack.c.b16 %v4888, %v4876
        %v5261 = vpack.c.b16 %v4889, %v4877
        %v5262 = vpack.c.b16 %v4890, %v4878
        %v5263 = vpack.c.b16 %v4891, %v4879
        %v5264 = vpack.c.b16 %v4892, %v4880
        %v5265 = vpack.c.b16 %v4893, %v4881
        %v5266 = vpack.c.b16 %v4894, %v4882
        %v5267 = vpack.c.b16 %v4895, %v4883
        %v5268 = vpack.c.b16 %v4896, %v4884
        %v5269 = vpack.c.b16 %v4897, %v4885
        %v5270 = vpack.c.b16 %v4898, %v4886
        %v5271 = vpack.c.b16 %v4911, %v4899
        %v5272 = vpack.c.b16 %v4912, %v4900
        %v5273 = vpack.c.b16 %v4913, %v4901
        %v5274 = vpack.c.b16 %v4914, %v4902
        %v5275 = vpack.c.b16 %v4915, %v4903
        %v5276 = vpack.c.b16 %v4916, %v4904
        %v5277 = vpack.c.b16 %v4917, %v4905
        %v5278 = vpack.c.b16 %v4918, %v4906
        %v5279 = vpack.c.b16 %v4919, %v4907
        %v5280 = vpack.c.b16 %v4920, %v4908
        %v5281 = vpack.c.b16 %v4921, %v4909
        %v5282 = vpack.c.b16 %v4922, %v4910
        %v5283 = vpack.c.b16 %v4935, %v4923
        %v5284 = vpack.c.b16 %v4936, %v4924
        %v5285 = vpack.c.b16 %v4937, %v4925
        %v5286 = vpack.c.b16 %v4938, %v4926
        %v5287 = vpack.c.b16 %v4939, %v4927
        %v5288 = vpack.c.b16 %v4940, %v4928
        %v5289 = vpack.c.b16 %v4941, %v4929
        %v5290 = vpack.c.b16 %v4942, %v4930
        %v5291 = vpack.c.b16 %v4943, %v4931
        %v5292 = vpack.c.b16 %v4944, %v4932
        %v5293 = vpack.c.b16 %v4945, %v4933
        %v5294 = vpack.c.b16 %v4946, %v4934
        %v5295 = vpack.c.b16 %v4959, %v4947
        %v5296 = vpack.c.b16 %v4960, %v4948
        %v5297 = vpack.c.b16 %v4961, %v4949
        %v5298 = vpack.c.b16 %v4962, %v4950
        %v5299 = vpack.c.b16 %v4963, %v4951
        %v5300 = vpack.c.b16 %v4964, %v4952
        %v5301 = vpack.c.b16 %v4965, %v4953
        %v5302 = vpack.c.b16 %v4966, %v4954
        %v5303 = vpack.c.b16 %v4967, %v4955
        %v5304 = vpack.c.b16 %v4968, %v4956
        %v5305 = vpack.c.b16 %v4969, %v4957
        %v5306 = vpack.c.b16 %v4970, %v4958
        %v5307 = vpack.c.b16 %v4983, %v4971
        %v5308 = vpack.c.b16 %v4984, %v4972
        %v5309 = vpack.c.b16 %v4985, %v4973
        %v5310 = vpack.c.b16 %v4986, %v4974
        %v5311 = vpack.c.b16 %v4987, %v4975
        %v5312 = vpack.c.b16 %v4988, %v4976
        %v5313 = vpack.c.b16 %v4989, %v4977
        %v5314 = vpack.c.b16 %v4990, %v4978
        %v5315 = vpack.c.b16 %v4991, %v4979
        %v5316 = vpack.c.b16 %v4992, %v4980
        %v5317 = vpack.c.b16 %v4993, %v4981
        %v5318 = vpack.c.b16 %v4994, %v4982
        %v5319 = vpack.c.b16 %v5007, %v4995
        %v5320 = vpack.c.b16 %v5008, %v4996
        %v5321 = vpack.c.b16 %v5009, %v4997
        %v5322 = vpack.c.b16 %v5010, %v4998
        %v5323 = vpack.c.b16 %v5011, %v4999
        %v5324 = vpack.c.b16 %v5012, %v5000
        %v5325 = vpack.c.b16 %v5013, %v5001
        %v5326 = vpack.c.b16 %v5014, %v5002
        %v5327 = vpack.c.b16 %v5015, %v5003
        %v5328 = vpack.c.b16 %v5016, %v5004
        %v5329 = vpack.c.b16 %v5017, %v5005
        %v5330 = vpack.c.b16 %v5018, %v5006
        %v5331 = vpack.c.b16 %v5031, %v5019
        %v5332 = vpack.c.b16 %v5032, %v5020
        %v5333 = vpack.c.b16 %v5033, %v5021
        %v5334 = vpack.c.b16 %v5034, %v5022
        %v5335 = vpack.c.b16 %v5035, %v5023
        %v5336 = vpack.c.b16 %v5036, %v5024
        %v5337 = vpack.c.b16 %v5037, %v5025
        %v5338 = vpack.c.b16 %v5038, %v5026
        %v5339 = vpack.c.b16 %v5039, %v5027
        %v5340 = vpack.c.b16 %v5040, %v5028
        %v5341 = vpack.c.b16 %v5041, %v5029
        %v5342 = vpack.c.b16 %v5042, %v5030
        %v5343 = vpack.c.b16 %v5055, %v5043
        %v5344 = vpack.c.b16 %v5056, %v5044
        %v5345 = vpack.c.b16 %v5057, %v5045
        %v5346 = vpack.c.b16 %v5058, %v5046
        %v5347 = vpack.c.b16 %v5059, %v5047
        %v5348 = vpack.c.b16 %v5060, %v5048
        %v5349 = vpack.c.b16 %v5061, %v5049
        %v5350 = vpack.c.b16 %v5062, %v5050
        %v5351 = vpack.c.b16 %v5063, %v5051
        %v5352 = vpack.c.b16 %v5064, %v5052
        %v5353 = vpack.c.b16 %v5065, %v5053
        %v5354 = vpack.c.b16 %v5066, %v5054
        %5643 = vmatprep.subr.bf16.mxu0 %v5152
        %5644 = vmatpush1.bf16.msra.mxu0 %v5151
        %5645 = vmatprep.subr.bf16.mxu0 %v5140
        %5646 = vmatpush1.bf16.msra.mxu0 %v5139
        %5647 = vmatprep.subr.bf16.mxu0 %v5128
        %5648 = vmatpush1.bf16.msra.mxu0 %v5127
        %5649 = vmatprep.subr.bf16.mxu0 %v5116
        %5650 = vmatpush1.bf16.msra.mxu0 %v5115
        %5651 = vmatprep.subr.bf16.mxu0 %v5104
        %5652 = vmatpush1.bf16.msra.mxu0 %v5103
        %5653 = vmatprep.subr.bf16.mxu0 %v5092
        %5654 = vmatpush1.bf16.msra.mxu0 %v5091
        %5655 = vmatprep.subr.bf16.mxu0 %v5080
        %5656 = vmatpush1.bf16.msra.mxu0 %v5079
        %5657 = vmatprep.subr.bf16.mxu0 %v5068
        %5658 = vmatpush1.bf16.msra.mxu0 %v5067
        %5659 = vmatprep.subr.bf16.mxu0 %v5248
        %5660 = vmatpush2.bf16.msra.mxu0 %v5247
        %5661 = vmatprep.subr.bf16.mxu0 %v5236
        %5662 = vmatpush2.bf16.msra.mxu0 %v5235
        %5663 = vmatprep.subr.bf16.mxu0 %v5224
        %5664 = vmatpush2.bf16.msra.mxu0 %v5223
        %5665 = vmatprep.subr.bf16.mxu0 %v5212
        %5666 = vmatpush2.bf16.msra.mxu0 %v5211
        %5667 = vmatprep.subr.bf16.mxu0 %v5200
        %5668 = vmatpush2.bf16.msra.mxu0 %v5199
        %5669 = vmatprep.subr.bf16.mxu0 %v5188
        %5670 = vmatpush2.bf16.msra.mxu0 %v5187
        %5671 = vmatprep.subr.bf16.mxu0 %v5176
        %5672 = vmatpush2.bf16.msra.mxu0 %v5175
        %5673 = vmatprep.subr.bf16.mxu0 %v5164
        %5674 = vmatpush2.bf16.msra.mxu0 %v5163
        %5675 = vmatprep.mubr.bf16.mxu0 %v3849
        %5676 = vmatmul.mubr.bf16.gmra.mxu0 %v3848
        %v5677 = vpop.f32.mrf.mxu0
        %v5678 = vadd.f32 %v4146, %v5677
        %v5679 = vpop.f32.mrf.mxu0
        %v5680 = vadd.f32 %v4150, %v5679
        %v5681 = vpop.f32.mrf.mxu0
        %v5682 = vpop.f32.mrf.mxu0
        %5683 = vdwg.mxu0
        %5684 = vmatprep.subr.bf16.mxu0 %v5344
        %5685 = vmatpush1.bf16.msra.mxu0 %v5343
        %5686 = vmatprep.subr.bf16.mxu0 %v5332
        %5687 = vmatpush1.bf16.msra.mxu0 %v5331
        %5688 = vmatprep.subr.bf16.mxu0 %v5320
        %5689 = vmatpush1.bf16.msra.mxu0 %v5319
        %5690 = vmatprep.subr.bf16.mxu0 %v5308
        %5691 = vmatpush1.bf16.msra.mxu0 %v5307
        %5692 = vmatprep.subr.bf16.mxu0 %v5296
        %5693 = vmatpush1.bf16.msra.mxu0 %v5295
        %5694 = vmatprep.subr.bf16.mxu0 %v5284
        %5695 = vmatpush1.bf16.msra.mxu0 %v5283
        %5696 = vmatprep.subr.bf16.mxu0 %v5272
        %5697 = vmatpush1.bf16.msra.mxu0 %v5271
        %5698 = vmatprep.subr.bf16.mxu0 %v5260
        %5699 = vmatpush1.bf16.msra.mxu0 %v5259
        %5700 = vmatprep.subr.bf16.mxu0 0
        %5701 = vmatpush2.bf16.msra.mxu0 0
        %5702 = vmatprep.subr.bf16.mxu0 0
        %5703 = vmatpush2.bf16.msra.mxu0 0
        %5704 = vmatprep.subr.bf16.mxu0 0
        %5705 = vmatpush2.bf16.msra.mxu0 0
        %5706 = vmatprep.subr.bf16.mxu0 0
        %5707 = vmatpush2.bf16.msra.mxu0 0
        %5708 = vmatprep.subr.bf16.mxu0 0
        %5709 = vmatpush2.bf16.msra.mxu0 0
        %5710 = vmatprep.subr.bf16.mxu0 0
        %5711 = vmatpush2.bf16.msra.mxu0 0
        %5712 = vmatprep.subr.bf16.mxu0 0
        %5713 = vmatpush2.bf16.msra.mxu0 0
        %5714 = vmatprep.subr.bf16.mxu0 0
        %5715 = vmatpush2.bf16.msra.mxu0 0
        %5716 = vmatprep.mubr.bf16.mxu0 0
        %5717 = vmatmul.mubr.bf16.gmra.mxu0 %v3850
        %v5718 = vpop.f32.mrf.mxu0
        %v5719 = vadd.f32 %v5678, %v5718
        %v5720 = vpop.f32.mrf.mxu0
        %v5721 = vadd.f32 %v5680, %v5720
        %v5722 = vpop.f32.mrf.mxu0
        %v5723 = vpop.f32.mrf.mxu0
        %5724 = vdwg.mxu0
        %5725 = vmatprep.subr.bf16.mxu0 %v5154
        %5726 = vmatpush1.bf16.msra.mxu0 %v5153
        %5727 = vmatprep.subr.bf16.mxu0 %v5142
        %5728 = vmatpush1.bf16.msra.mxu0 %v5141
        %5729 = vmatprep.subr.bf16.mxu0 %v5130
        %5730 = vmatpush1.bf16.msra.mxu0 %v5129
        %5731 = vmatprep.subr.bf16.mxu0 %v5118
        %5732 = vmatpush1.bf16.msra.mxu0 %v5117
        %5733 = vmatprep.subr.bf16.mxu0 %v5106
        %5734 = vmatpush1.bf16.msra.mxu0 %v5105
        %5735 = vmatprep.subr.bf16.mxu0 %v5094
        %5736 = vmatpush1.bf16.msra.mxu0 %v5093
        %5737 = vmatprep.subr.bf16.mxu0 %v5082
        %5738 = vmatpush1.bf16.msra.mxu0 %v5081
        %5739 = vmatprep.subr.bf16.mxu0 %v5070
        %5740 = vmatpush1.bf16.msra.mxu0 %v5069
        %5741 = vmatprep.subr.bf16.mxu0 %v5250
        %5742 = vmatpush2.bf16.msra.mxu0 %v5249
        %5743 = vmatprep.subr.bf16.mxu0 %v5238
        %5744 = vmatpush2.bf16.msra.mxu0 %v5237
        %5745 = vmatprep.subr.bf16.mxu0 %v5226
        %5746 = vmatpush2.bf16.msra.mxu0 %v5225
        %5747 = vmatprep.subr.bf16.mxu0 %v5214
        %5748 = vmatpush2.bf16.msra.mxu0 %v5213
        %5749 = vmatprep.subr.bf16.mxu0 %v5202
        %5750 = vmatpush2.bf16.msra.mxu0 %v5201
        %5751 = vmatprep.subr.bf16.mxu0 %v5190
        %5752 = vmatpush2.bf16.msra.mxu0 %v5189
        %5753 = vmatprep.subr.bf16.mxu0 %v5178
        %5754 = vmatpush2.bf16.msra.mxu0 %v5177
        %5755 = vmatprep.subr.bf16.mxu0 %v5166
        %5756 = vmatpush2.bf16.msra.mxu0 %v5165
        %5757 = vmatprep.mubr.bf16.mxu0 %v3849
        %5758 = vmatmul.mubr.bf16.gmra.mxu0 %v3848
        %v5759 = vpop.f32.mrf.mxu0
        %v5760 = vadd.f32 %v4154, %v5759
        %v5761 = vpop.f32.mrf.mxu0
        %v5762 = vadd.f32 %v4158, %v5761
        %v5763 = vpop.f32.mrf.mxu0
        %v5764 = vpop.f32.mrf.mxu0
        %5765 = vdwg.mxu0
        %5766 = vmatprep.subr.bf16.mxu0 %v5346
        %5767 = vmatpush1.bf16.msra.mxu0 %v5345
        %5768 = vmatprep.subr.bf16.mxu0 %v5334
        %5769 = vmatpush1.bf16.msra.mxu0 %v5333
        %5770 = vmatprep.subr.bf16.mxu0 %v5322
        %5771 = vmatpush1.bf16.msra.mxu0 %v5321
        %5772 = vmatprep.subr.bf16.mxu0 %v5310
        %5773 = vmatpush1.bf16.msra.mxu0 %v5309
        %5774 = vmatprep.subr.bf16.mxu0 %v5298
        %5775 = vmatpush1.bf16.msra.mxu0 %v5297
        %5776 = vmatprep.subr.bf16.mxu0 %v5286
        %5777 = vmatpush1.bf16.msra.mxu0 %v5285
        %5778 = vmatprep.subr.bf16.mxu0 %v5274
        %5779 = vmatpush1.bf16.msra.mxu0 %v5273
        %5780 = vmatprep.subr.bf16.mxu0 %v5262
        %5781 = vmatpush1.bf16.msra.mxu0 %v5261
        %5782 = vmatprep.subr.bf16.mxu0 0
        %5783 = vmatpush2.bf16.msra.mxu0 0
        %5784 = vmatprep.subr.bf16.mxu0 0
        %5785 = vmatpush2.bf16.msra.mxu0 0
        %5786 = vmatprep.subr.bf16.mxu0 0
        %5787 = vmatpush2.bf16.msra.mxu0 0
        %5788 = vmatprep.subr.bf16.mxu0 0
        %5789 = vmatpush2.bf16.msra.mxu0 0
        %5790 = vmatprep.subr.bf16.mxu0 0
        %5791 = vmatpush2.bf16.msra.mxu0 0
        %5792 = vmatprep.subr.bf16.mxu0 0
        %5793 = vmatpush2.bf16.msra.mxu0 0
        %5794 = vmatprep.subr.bf16.mxu0 0
        %5795 = vmatpush2.bf16.msra.mxu0 0
        %5796 = vmatprep.subr.bf16.mxu0 0
        %5797 = vmatpush2.bf16.msra.mxu0 0
        %5798 = vmatprep.mubr.bf16.mxu0 0
        %5799 = vmatmul.mubr.bf16.gmra.mxu0 %v3850
        %v5800 = vpop.f32.mrf.mxu0
        %v5801 = vadd.f32 %v5760, %v5800
        %v5802 = vpop.f32.mrf.mxu0
        %v5803 = vadd.f32 %v5762, %v5802
        %v5804 = vpop.f32.mrf.mxu0
        %v5805 = vpop.f32.mrf.mxu0
        %5806 = vdwg.mxu0
        %5807 = vmatprep.subr.bf16.mxu0 %v5156
        %5808 = vmatpush1.bf16.msra.mxu0 %v5155
        %5809 = vmatprep.subr.bf16.mxu0 %v5144
        %5810 = vmatpush1.bf16.msra.mxu0 %v5143
        %5811 = vmatprep.subr.bf16.mxu0 %v5132
        %5812 = vmatpush1.bf16.msra.mxu0 %v5131
        %5813 = vmatprep.subr.bf16.mxu0 %v5120
        %5814 = vmatpush1.bf16.msra.mxu0 %v5119
        %5815 = vmatprep.subr.bf16.mxu0 %v5108
        %5816 = vmatpush1.bf16.msra.mxu0 %v5107
        %5817 = vmatprep.subr.bf16.mxu0 %v5096
        %5818 = vmatpush1.bf16.msra.mxu0 %v5095
        %5819 = vmatprep.subr.bf16.mxu0 %v5084
        %5820 = vmatpush1.bf16.msra.mxu0 %v5083
        %5821 = vmatprep.subr.bf16.mxu0 %v5072
        %5822 = vmatpush1.bf16.msra.mxu0 %v5071
        %5823 = vmatprep.subr.bf16.mxu0 %v5252
        %5824 = vmatpush2.bf16.msra.mxu0 %v5251
        %5825 = vmatprep.subr.bf16.mxu0 %v5240
        %5826 = vmatpush2.bf16.msra.mxu0 %v5239
        %5827 = vmatprep.subr.bf16.mxu0 %v5228
        %5828 = vmatpush2.bf16.msra.mxu0 %v5227
        %5829 = vmatprep.subr.bf16.mxu0 %v5216
        %5830 = vmatpush2.bf16.msra.mxu0 %v5215
        %5831 = vmatprep.subr.bf16.mxu0 %v5204
        %5832 = vmatpush2.bf16.msra.mxu0 %v5203
        %5833 = vmatprep.subr.bf16.mxu0 %v5192
        %5834 = vmatpush2.bf16.msra.mxu0 %v5191
        %5835 = vmatprep.subr.bf16.mxu0 %v5180
        %5836 = vmatpush2.bf16.msra.mxu0 %v5179
        %5837 = vmatprep.subr.bf16.mxu0 %v5168
        %5838 = vmatpush2.bf16.msra.mxu0 %v5167
        %5839 = vmatprep.mubr.bf16.mxu0 %v3849
        %5840 = vmatmul.mubr.bf16.gmra.mxu0 %v3848
        %v5841 = vpop.f32.mrf.mxu0
        %v5842 = vadd.f32 %v4162, %v5841
        %v5843 = vpop.f32.mrf.mxu0
        %v5844 = vadd.f32 %v4166, %v5843
        %v5845 = vpop.f32.mrf.mxu0
        %v5846 = vpop.f32.mrf.mxu0
        %5847 = vdwg.mxu0
        %5848 = vmatprep.subr.bf16.mxu0 %v5348
        %5849 = vmatpush1.bf16.msra.mxu0 %v5347
        %5850 = vmatprep.subr.bf16.mxu0 %v5336
        %5851 = vmatpush1.bf16.msra.mxu0 %v5335
        %5852 = vmatprep.subr.bf16.mxu0 %v5324
        %5853 = vmatpush1.bf16.msra.mxu0 %v5323
        %5854 = vmatprep.subr.bf16.mxu0 %v5312
        %5855 = vmatpush1.bf16.msra.mxu0 %v5311
        %5856 = vmatprep.subr.bf16.mxu0 %v5300
        %5857 = vmatpush1.bf16.msra.mxu0 %v5299
        %5858 = vmatprep.subr.bf16.mxu0 %v5288
        %5859 = vmatpush1.bf16.msra.mxu0 %v5287
        %5860 = vmatprep.subr.bf16.mxu0 %v5276
        %5861 = vmatpush1.bf16.msra.mxu0 %v5275
        %5862 = vmatprep.subr.bf16.mxu0 %v5264
        %5863 = vmatpush1.bf16.msra.mxu0 %v5263
        %5864 = vmatprep.subr.bf16.mxu0 0
        %5865 = vmatpush2.bf16.msra.mxu0 0
        %5866 = vmatprep.subr.bf16.mxu0 0
        %5867 = vmatpush2.bf16.msra.mxu0 0
        %5868 = vmatprep.subr.bf16.mxu0 0
        %5869 = vmatpush2.bf16.msra.mxu0 0
        %5870 = vmatprep.subr.bf16.mxu0 0
        %5871 = vmatpush2.bf16.msra.mxu0 0
        %5872 = vmatprep.subr.bf16.mxu0 0
        %5873 = vmatpush2.bf16.msra.mxu0 0
        %5874 = vmatprep.subr.bf16.mxu0 0
        %5875 = vmatpush2.bf16.msra.mxu0 0
        %5876 = vmatprep.subr.bf16.mxu0 0
        %5877 = vmatpush2.bf16.msra.mxu0 0
        %5878 = vmatprep.subr.bf16.mxu0 0
        %5879 = vmatpush2.bf16.msra.mxu0 0
        %5880 = vmatprep.mubr.bf16.mxu0 0
        %5881 = vmatmul.mubr.bf16.gmra.mxu0 %v3850
        %v5882 = vpop.f32.mrf.mxu0
        %v5883 = vadd.f32 %v5842, %v5882
        %v5884 = vpop.f32.mrf.mxu0
        %v5885 = vadd.f32 %v5844, %v5884
        %v5886 = vpop.f32.mrf.mxu0
        %v5887 = vpop.f32.mrf.mxu0
        %5888 = vdwg.mxu0
        %5889 = vmatprep.subr.bf16.mxu0 %v5158
        %5890 = vmatpush1.bf16.msra.mxu0 %v5157
        %5891 = vmatprep.subr.bf16.mxu0 %v5146
        %5892 = vmatpush1.bf16.msra.mxu0 %v5145
        %5893 = vmatprep.subr.bf16.mxu0 %v5134
        %5894 = vmatpush1.bf16.msra.mxu0 %v5133
        %5895 = vmatprep.subr.bf16.mxu0 %v5122
        %5896 = vmatpush1.bf16.msra.mxu0 %v5121
        %5897 = vmatprep.subr.bf16.mxu0 %v5110
        %5898 = vmatpush1.bf16.msra.mxu0 %v5109
        %5899 = vmatprep.subr.bf16.mxu0 %v5098
        %5900 = vmatpush1.bf16.msra.mxu0 %v5097
        %5901 = vmatprep.subr.bf16.mxu0 %v5086
        %5902 = vmatpush1.bf16.msra.mxu0 %v5085
        %5903 = vmatprep.subr.bf16.mxu0 %v5074
        %5904 = vmatpush1.bf16.msra.mxu0 %v5073
        %5905 = vmatprep.subr.bf16.mxu0 %v5254
        %5906 = vmatpush2.bf16.msra.mxu0 %v5253
        %5907 = vmatprep.subr.bf16.mxu0 %v5242
        %5908 = vmatpush2.bf16.msra.mxu0 %v5241
        %5909 = vmatprep.subr.bf16.mxu0 %v5230
        %5910 = vmatpush2.bf16.msra.mxu0 %v5229
        %5911 = vmatprep.subr.bf16.mxu0 %v5218
        %5912 = vmatpush2.bf16.msra.mxu0 %v5217
        %5913 = vmatprep.subr.bf16.mxu0 %v5206
        %5914 = vmatpush2.bf16.msra.mxu0 %v5205
        %5915 = vmatprep.subr.bf16.mxu0 %v5194
        %5916 = vmatpush2.bf16.msra.mxu0 %v5193
        %5917 = vmatprep.subr.bf16.mxu0 %v5182
        %5918 = vmatpush2.bf16.msra.mxu0 %v5181
        %5919 = vmatprep.subr.bf16.mxu0 %v5170
        %5920 = vmatpush2.bf16.msra.mxu0 %v5169
        %5921 = vmatprep.mubr.bf16.mxu0 %v3849
        %5922 = vmatmul.mubr.bf16.gmra.mxu0 %v3848
        %v5923 = vpop.f32.mrf.mxu0
        %v5924 = vadd.f32 %v4170, %v5923
        %v5925 = vpop.f32.mrf.mxu0
        %v5926 = vadd.f32 %v4174, %v5925
        %v5927 = vpop.f32.mrf.mxu0
        %v5928 = vpop.f32.mrf.mxu0
        %5929 = vdwg.mxu0
        %5930 = vmatprep.subr.bf16.mxu0 %v5350
        %5931 = vmatpush1.bf16.msra.mxu0 %v5349
        %5932 = vmatprep.subr.bf16.mxu0 %v5338
        %5933 = vmatpush1.bf16.msra.mxu0 %v5337
        %5934 = vmatprep.subr.bf16.mxu0 %v5326
        %5935 = vmatpush1.bf16.msra.mxu0 %v5325
        %5936 = vmatprep.subr.bf16.mxu0 %v5314
        %5937 = vmatpush1.bf16.msra.mxu0 %v5313
        %5938 = vmatprep.subr.bf16.mxu0 %v5302
        %5939 = vmatpush1.bf16.msra.mxu0 %v5301
        %5940 = vmatprep.subr.bf16.mxu0 %v5290
        %5941 = vmatpush1.bf16.msra.mxu0 %v5289
        %5942 = vmatprep.subr.bf16.mxu0 %v5278
        %5943 = vmatpush1.bf16.msra.mxu0 %v5277
        %5944 = vmatprep.subr.bf16.mxu0 %v5266
        %5945 = vmatpush1.bf16.msra.mxu0 %v5265
        %5946 = vmatprep.subr.bf16.mxu0 0
        %5947 = vmatpush2.bf16.msra.mxu0 0
        %5948 = vmatprep.subr.bf16.mxu0 0
        %5949 = vmatpush2.bf16.msra.mxu0 0
        %5950 = vmatprep.subr.bf16.mxu0 0
        %5951 = vmatpush2.bf16.msra.mxu0 0
        %5952 = vmatprep.subr.bf16.mxu0 0
        %5953 = vmatpush2.bf16.msra.mxu0 0
        %5954 = vmatprep.subr.bf16.mxu0 0
        %5955 = vmatpush2.bf16.msra.mxu0 0
        %5956 = vmatprep.subr.bf16.mxu0 0
        %5957 = vmatpush2.bf16.msra.mxu0 0
        %5958 = vmatprep.subr.bf16.mxu0 0
        %5959 = vmatpush2.bf16.msra.mxu0 0
        %5960 = vmatprep.subr.bf16.mxu0 0
        %5961 = vmatpush2.bf16.msra.mxu0 0
        %5962 = vmatprep.mubr.bf16.mxu0 0
        %5963 = vmatmul.mubr.bf16.gmra.mxu0 %v3850
        %v5964 = vpop.f32.mrf.mxu0
        %v5965 = vadd.f32 %v5924, %v5964
        %v5966 = vpop.f32.mrf.mxu0
        %v5967 = vadd.f32 %v5926, %v5966
        %v5968 = vpop.f32.mrf.mxu0
        %v5969 = vpop.f32.mrf.mxu0
        %5970 = vdwg.mxu0
        %5971 = vmatprep.subr.bf16.mxu0 %v5160
        %5972 = vmatpush1.bf16.msra.mxu0 %v5159
        %5973 = vmatprep.subr.bf16.mxu0 %v5148
        %5974 = vmatpush1.bf16.msra.mxu0 %v5147
        %5975 = vmatprep.subr.bf16.mxu0 %v5136
        %5976 = vmatpush1.bf16.msra.mxu0 %v5135
        %5977 = vmatprep.subr.bf16.mxu0 %v5124
        %5978 = vmatpush1.bf16.msra.mxu0 %v5123
        %5979 = vmatprep.subr.bf16.mxu0 %v5112
        %5980 = vmatpush1.bf16.msra.mxu0 %v5111
        %5981 = vmatprep.subr.bf16.mxu0 %v5100
        %5982 = vmatpush1.bf16.msra.mxu0 %v5099
        %5983 = vmatprep.subr.bf16.mxu0 %v5088
        %5984 = vmatpush1.bf16.msra.mxu0 %v5087
        %5985 = vmatprep.subr.bf16.mxu0 %v5076
        %5986 = vmatpush1.bf16.msra.mxu0 %v5075
        %5987 = vmatprep.subr.bf16.mxu0 %v5256
        %5988 = vmatpush2.bf16.msra.mxu0 %v5255
        %5989 = vmatprep.subr.bf16.mxu0 %v5244
        %5990 = vmatpush2.bf16.msra.mxu0 %v5243
        %5991 = vmatprep.subr.bf16.mxu0 %v5232
        %5992 = vmatpush2.bf16.msra.mxu0 %v5231
        %5993 = vmatprep.subr.bf16.mxu0 %v5220
        %5994 = vmatpush2.bf16.msra.mxu0 %v5219
        %5995 = vmatprep.subr.bf16.mxu0 %v5208
        %5996 = vmatpush2.bf16.msra.mxu0 %v5207
        %5997 = vmatprep.subr.bf16.mxu0 %v5196
        %5998 = vmatpush2.bf16.msra.mxu0 %v5195
        %5999 = vmatprep.subr.bf16.mxu0 %v5184
        %6000 = vmatpush2.bf16.msra.mxu0 %v5183
        %6001 = vmatprep.subr.bf16.mxu0 %v5172
        %6002 = vmatpush2.bf16.msra.mxu0 %v5171
        %6003 = vmatprep.mubr.bf16.mxu0 %v3849
        %6004 = vmatmul.mubr.bf16.gmra.mxu0 %v3848
        %v6005 = vpop.f32.mrf.mxu0
        %v6006 = vadd.f32 %v4178, %v6005
        %v6007 = vpop.f32.mrf.mxu0
        %v6008 = vadd.f32 %v4182, %v6007
        %v6009 = vpop.f32.mrf.mxu0
        %v6010 = vpop.f32.mrf.mxu0
        %6011 = vdwg.mxu0
        %6012 = vmatprep.subr.bf16.mxu0 %v5352
        %6013 = vmatpush1.bf16.msra.mxu0 %v5351
        %6014 = vmatprep.subr.bf16.mxu0 %v5340
        %6015 = vmatpush1.bf16.msra.mxu0 %v5339
        %6016 = vmatprep.subr.bf16.mxu0 %v5328
        %6017 = vmatpush1.bf16.msra.mxu0 %v5327
        %6018 = vmatprep.subr.bf16.mxu0 %v5316
        %6019 = vmatpush1.bf16.msra.mxu0 %v5315
        %6020 = vmatprep.subr.bf16.mxu0 %v5304
        %6021 = vmatpush1.bf16.msra.mxu0 %v5303
        %6022 = vmatprep.subr.bf16.mxu0 %v5292
        %6023 = vmatpush1.bf16.msra.mxu0 %v5291
        %6024 = vmatprep.subr.bf16.mxu0 %v5280
        %6025 = vmatpush1.bf16.msra.mxu0 %v5279
        %6026 = vmatprep.subr.bf16.mxu0 %v5268
        %6027 = vmatpush1.bf16.msra.mxu0 %v5267
        %6028 = vmatprep.subr.bf16.mxu0 0
        %6029 = vmatpush2.bf16.msra.mxu0 0
        %6030 = vmatprep.subr.bf16.mxu0 0
        %6031 = vmatpush2.bf16.msra.mxu0 0
        %6032 = vmatprep.subr.bf16.mxu0 0
        %6033 = vmatpush2.bf16.msra.mxu0 0
        %6034 = vmatprep.subr.bf16.mxu0 0
        %6035 = vmatpush2.bf16.msra.mxu0 0
        %6036 = vmatprep.subr.bf16.mxu0 0
        %6037 = vmatpush2.bf16.msra.mxu0 0
        %6038 = vmatprep.subr.bf16.mxu0 0
        %6039 = vmatpush2.bf16.msra.mxu0 0
        %6040 = vmatprep.subr.bf16.mxu0 0
        %6041 = vmatpush2.bf16.msra.mxu0 0
        %6042 = vmatprep.subr.bf16.mxu0 0
        %6043 = vmatpush2.bf16.msra.mxu0 0
        %6044 = vmatprep.mubr.bf16.mxu0 0
        %6045 = vmatmul.mubr.bf16.gmra.mxu0 %v3850
        %v6046 = vpop.f32.mrf.mxu0
        %v6047 = vadd.f32 %v6006, %v6046
        %v6048 = vpop.f32.mrf.mxu0
        %v6049 = vadd.f32 %v6008, %v6048
        %v6050 = vpop.f32.mrf.mxu0
        %v6051 = vpop.f32.mrf.mxu0
        %6052 = vdwg.mxu0
        %6053 = vmatprep.subr.bf16.mxu0 %v5162
        %6054 = vmatpush1.bf16.msra.mxu0 %v5161
        %6055 = vmatprep.subr.bf16.mxu0 %v5150
        %6056 = vmatpush1.bf16.msra.mxu0 %v5149
        %6057 = vmatprep.subr.bf16.mxu0 %v5138
        %6058 = vmatpush1.bf16.msra.mxu0 %v5137
        %6059 = vmatprep.subr.bf16.mxu0 %v5126
        %6060 = vmatpush1.bf16.msra.mxu0 %v5125
        %6061 = vmatprep.subr.bf16.mxu0 %v5114
        %6062 = vmatpush1.bf16.msra.mxu0 %v5113
        %6063 = vmatprep.subr.bf16.mxu0 %v5102
        %6064 = vmatpush1.bf16.msra.mxu0 %v5101
        %6065 = vmatprep.subr.bf16.mxu0 %v5090
        %6066 = vmatpush1.bf16.msra.mxu0 %v5089
        %6067 = vmatprep.subr.bf16.mxu0 %v5078
        %6068 = vmatpush1.bf16.msra.mxu0 %v5077
        %6069 = vmatprep.subr.bf16.mxu0 %v5258
        %6070 = vmatpush2.bf16.msra.mxu0 %v5257
        %6071 = vmatprep.subr.bf16.mxu0 %v5246
        %6072 = vmatpush2.bf16.msra.mxu0 %v5245
        %6073 = vmatprep.subr.bf16.mxu0 %v5234
        %6074 = vmatpush2.bf16.msra.mxu0 %v5233
        %6075 = vmatprep.subr.bf16.mxu0 %v5222
        %6076 = vmatpush2.bf16.msra.mxu0 %v5221
        %6077 = vmatprep.subr.bf16.mxu0 %v5210
        %6078 = vmatpush2.bf16.msra.mxu0 %v5209
        %6079 = vmatprep.subr.bf16.mxu0 %v5198
        %6080 = vmatpush2.bf16.msra.mxu0 %v5197
        %6081 = vmatprep.subr.bf16.mxu0 %v5186
        %6082 = vmatpush2.bf16.msra.mxu0 %v5185
        %6083 = vmatprep.subr.bf16.mxu0 %v5174
        %6084 = vmatpush2.bf16.msra.mxu0 %v5173
        %6085 = vmatprep.mubr.bf16.mxu0 %v3849
        %6086 = vmatmul.mubr.bf16.gmra.mxu0 %v3848
        %v6087 = vpop.f32.mrf.mxu0
        %v6088 = vadd.f32 %v4186, %v6087
        %v6089 = vpop.f32.mrf.mxu0
        %v6090 = vadd.f32 %v4190, %v6089
        %v6091 = vpop.f32.mrf.mxu0
        %v6092 = vpop.f32.mrf.mxu0
        %6093 = vdwg.mxu0
        %6094 = vmatprep.subr.bf16.mxu0 %v5354
        %6095 = vmatpush1.bf16.msra.mxu0 %v5353
        %6096 = vmatprep.subr.bf16.mxu0 %v5342
        %6097 = vmatpush1.bf16.msra.mxu0 %v5341
        %6098 = vmatprep.subr.bf16.mxu0 %v5330
        %6099 = vmatpush1.bf16.msra.mxu0 %v5329
        %6100 = vmatprep.subr.bf16.mxu0 %v5318
        %6101 = vmatpush1.bf16.msra.mxu0 %v5317
        %6102 = vmatprep.subr.bf16.mxu0 %v5306
        %6103 = vmatpush1.bf16.msra.mxu0 %v5305
        %6104 = vmatprep.subr.bf16.mxu0 %v5294
        %6105 = vmatpush1.bf16.msra.mxu0 %v5293
        %6106 = vmatprep.subr.bf16.mxu0 %v5282
        %6107 = vmatpush1.bf16.msra.mxu0 %v5281
        %6108 = vmatprep.subr.bf16.mxu0 %v5270
        %6109 = vmatpush1.bf16.msra.mxu0 %v5269
        %6110 = vmatprep.subr.bf16.mxu0 0
        %6111 = vmatpush2.bf16.msra.mxu0 0
        %6112 = vmatprep.subr.bf16.mxu0 0
        %6113 = vmatpush2.bf16.msra.mxu0 0
        %6114 = vmatprep.subr.bf16.mxu0 0
        %6115 = vmatpush2.bf16.msra.mxu0 0
        %6116 = vmatprep.subr.bf16.mxu0 0
        %6117 = vmatpush2.bf16.msra.mxu0 0
        %6118 = vmatprep.subr.bf16.mxu0 0
        %6119 = vmatpush2.bf16.msra.mxu0 0
        %6120 = vmatprep.subr.bf16.mxu0 0
        %6121 = vmatpush2.bf16.msra.mxu0 0
        %6122 = vmatprep.subr.bf16.mxu0 0
        %6123 = vmatpush2.bf16.msra.mxu0 0
        %6124 = vmatprep.subr.bf16.mxu0 0
        %6125 = vmatpush2.bf16.msra.mxu0 0
        %6126 = vmatprep.mubr.bf16.mxu0 0
        %6127 = vmatmul.mubr.bf16.gmra.mxu0 %v3850
        %v6128 = vpop.f32.mrf.mxu0
        %v6129 = vadd.f32 %v6088, %v6128
        %v6130 = vpop.f32.mrf.mxu0
        %v6131 = vadd.f32 %v6090, %v6130
        %v6132 = vpop.f32.mrf.mxu0
        %v6133 = vpop.f32.mrf.mxu0
        %6134 = vdwg.mxu0
        %v6135 = vmax.f32 %v5719, 0.0
        %v6136 = vmax.f32 %v5721, 0.0
        %v6137 = vmax.f32 %v5801, 0.0
        %v6138 = vmax.f32 %v5803, 0.0
        %v6139 = vmax.f32 %v5883, 0.0
        %v6140 = vmax.f32 %v5885, 0.0
        %v6141 = vmax.f32 %v5965, 0.0
        %v6142 = vmax.f32 %v5967, 0.0
        %v6143 = vmax.f32 %v6047, 0.0
        %v6144 = vmax.f32 %v6049, 0.0
        %v6145 = vmax.f32 %v6129, 0.0
        %v6146 = vmax.f32 %v6131, 0.0
        %v6147 = vpack.c.bf16 %v6135, %v6135
        %v6148 = vpack.c.bf16 %v6136, %v6136
        %v6149 = vpack.c.bf16 %v6137, %v6137
        %v6150 = vpack.c.bf16 %v6138, %v6138
        %v6151 = vpack.c.bf16 %v6139, %v6139
        %v6152 = vpack.c.bf16 %v6140, %v6140
        %v6153 = vpack.c.bf16 %v6141, %v6141
        %v6154 = vpack.c.bf16 %v6142, %v6142
        %v6155 = vpack.c.bf16 %v6143, %v6143
        %v6156 = vpack.c.bf16 %v6144, %v6144
        %v6157 = vpack.c.bf16 %v6145, %v6145
        %v6158 = vpack.c.bf16 %v6146, %v6146
        %v6159 = vld [vmem:[#allocation21] sm:$0xff]
        %v6160 = vld [vmem:[#allocation21 + $0x8] sm:$0xf]
        %v6161 = vld [vmem:[#allocation21 + $0xc] sm:$0xff]
        %v6162 = vld [vmem:[#allocation21 + $0x14] sm:$0xf]
        %v6163 = vld [vmem:[#allocation21 + $0x18] sm:$0xff]
        %v6164 = vld [vmem:[#allocation21 + $0x20] sm:$0xf]
        %v6165 = vld [vmem:[#allocation21 + $0x24] sm:$0xff]
        %v6166 = vld [vmem:[#allocation21 + $0x2c] sm:$0xf]
        %v6167 = vld [vmem:[#allocation21 + $0x30] sm:$0xff]
        %v6168 = vld [vmem:[#allocation21 + $0x38] sm:$0xf]
        %v6169 = vld [vmem:[#allocation21 + $0x3c] sm:$0xff]
        %v6170 = vld [vmem:[#allocation21 + $0x44] sm:$0xf]
        %v6171 = vld [vmem:[#allocation21 + $0x48] sm:$0xff]
        %v6172 = vld [vmem:[#allocation21 + $0x50] sm:$0xf]
        %v6173 = vld [vmem:[#allocation21 + $0x54] sm:$0xff]
        %v6174 = vld [vmem:[#allocation21 + $0x5c] sm:$0xf]
        %v6175 = vld [vmem:[#allocation21 + $0x60] sm:$0xff]
        %v6176 = vld [vmem:[#allocation21 + $0x68] sm:$0xf]
        %v6177 = vld [vmem:[#allocation21 + $0x6c] sm:$0xff]
        %v6178 = vld [vmem:[#allocation21 + $0x74] sm:$0xf]
        %v6179 = vld [vmem:[#allocation21 + $0x78] sm:$0xff]
        %v6180 = vld [vmem:[#allocation21 + $0x80] sm:$0xf]
        %v6181 = vld [vmem:[#allocation21 + $0x84] sm:$0xff]
        %v6182 = vld [vmem:[#allocation21 + $0x8c] sm:$0xf]
        %v6183 = vld [vmem:[#allocation21 + $0x90] sm:$0xff]
        %v6184 = vld [vmem:[#allocation21 + $0x98] sm:$0xf]
        %v6185 = vld [vmem:[#allocation21 + $0x9c] sm:$0xff]
        %v6186 = vld [vmem:[#allocation21 + $0xa4] sm:$0xf]
        %v6187 = vld [vmem:[#allocation21 + $0xa8] sm:$0xff]
        %v6188 = vld [vmem:[#allocation21 + $0xb0] sm:$0xf]
        %v6189 = vld [vmem:[#allocation21 + $0xb4] sm:$0xff]
        %v6190 = vld [vmem:[#allocation21 + $0xbc] sm:$0xf]
        %v6191 = vld [vmem:[#allocation21 + $0xc0] sm:$0xff]
        %v6192 = vld [vmem:[#allocation21 + $0xc8] sm:$0xf]
        %v6193 = vld [vmem:[#allocation21 + $0xcc] sm:$0xff]
        %v6194 = vld [vmem:[#allocation21 + $0xd4] sm:$0xf]
        %v6195 = vld [vmem:[#allocation21 + $0xd8] sm:$0xff]
        %v6196 = vld [vmem:[#allocation21 + $0xe0] sm:$0xf]
        %v6197 = vld [vmem:[#allocation21 + $0xe4] sm:$0xff]
        %v6198 = vld [vmem:[#allocation21 + $0xec] sm:$0xf]
        %v6199 = vld [vmem:[#allocation21 + $0xf0] sm:$0xff]
        %v6200 = vld [vmem:[#allocation21 + $0xf8] sm:$0xf]
        %v6201 = vld [vmem:[#allocation21 + $0xfc] sm:$0xff]
        %v6202 = vld [vmem:[#allocation21 + $0x104] sm:$0xf]
        %v6203 = vld [vmem:[#allocation21 + $0x108] sm:$0xff]
        %v6204 = vld [vmem:[#allocation21 + $0x110] sm:$0xf]
        %v6205 = vld [vmem:[#allocation21 + $0x114] sm:$0xff]
        %v6206 = vld [vmem:[#allocation21 + $0x11c] sm:$0xf]
        %v6207 = vld [vmem:[#allocation21 + $0x120] sm:$0xff]
        %v6208 = vld [vmem:[#allocation21 + $0x128] sm:$0xf]
        %v6209 = vld [vmem:[#allocation21 + $0x12c] sm:$0xff]
        %v6210 = vld [vmem:[#allocation21 + $0x134] sm:$0xf]
        %v6211 = vld [vmem:[#allocation21 + $0x138] sm:$0xff]
        %v6212 = vld [vmem:[#allocation21 + $0x140] sm:$0xf]
        %v6213 = vld [vmem:[#allocation21 + $0x144] sm:$0xff]
        %v6214 = vld [vmem:[#allocation21 + $0x14c] sm:$0xf]
        %v6215 = vld [vmem:[#allocation21 + $0x150] sm:$0xff]
        %v6216 = vld [vmem:[#allocation21 + $0x158] sm:$0xf]
        %v6217 = vld [vmem:[#allocation21 + $0x15c] sm:$0xff]
        %v6218 = vld [vmem:[#allocation21 + $0x164] sm:$0xf]
        %v6219 = vld [vmem:[#allocation21 + $0x168] sm:$0xff]
        %v6220 = vld [vmem:[#allocation21 + $0x170] sm:$0xf]
        %v6221 = vld [vmem:[#allocation21 + $0x174] sm:$0xff]
        %v6222 = vld [vmem:[#allocation21 + $0x17c] sm:$0xf]
        %v6223 = vld [vmem:[#allocation21 + $0x180] sm:$0xff]
        %v6224 = vld [vmem:[#allocation21 + $0x188] sm:$0xf]
        %v6225 = vld [vmem:[#allocation21 + $0x18c] sm:$0xff]
        %v6226 = vld [vmem:[#allocation21 + $0x194] sm:$0xf]
        %v6227 = vld [vmem:[#allocation21 + $0x198] sm:$0xff]
        %v6228 = vld [vmem:[#allocation21 + $0x1a0] sm:$0xf]
        %v6229 = vld [vmem:[#allocation21 + $0x1a4] sm:$0xff]
        %v6230 = vld [vmem:[#allocation21 + $0x1ac] sm:$0xf]
        %v6231 = vld [vmem:[#allocation21 + $0x1b0] sm:$0xff]
        %v6232 = vld [vmem:[#allocation21 + $0x1b8] sm:$0xf]
        %v6233 = vld [vmem:[#allocation21 + $0x1bc] sm:$0xff]
        %v6234 = vld [vmem:[#allocation21 + $0x1c4] sm:$0xf]
        %v6235 = vld [vmem:[#allocation21 + $0x1c8] sm:$0xff]
        %v6236 = vld [vmem:[#allocation21 + $0x1d0] sm:$0xf]
        %v6237 = vld [vmem:[#allocation21 + $0x1d4] sm:$0xff]
        %v6238 = vld [vmem:[#allocation21 + $0x1dc] sm:$0xf]
        %v6239 = vld [vmem:[#allocation21 + $0x1e0] sm:$0xff]
        %v6240 = vld [vmem:[#allocation21 + $0x1e8] sm:$0xf]
        %v6241 = vld [vmem:[#allocation21 + $0x1ec] sm:$0xff]
        %v6242 = vld [vmem:[#allocation21 + $0x1f4] sm:$0xf]
        %v6243 = vld [vmem:[#allocation21 + $0x1f8] sm:$0xff]
        %v6244 = vld [vmem:[#allocation21 + $0x200] sm:$0xf]
        %v6245 = vld [vmem:[#allocation21 + $0x204] sm:$0xff]
        %v6246 = vld [vmem:[#allocation21 + $0x20c] sm:$0xf]
        %v6247 = vld [vmem:[#allocation21 + $0x210] sm:$0xff]
        %v6248 = vld [vmem:[#allocation21 + $0x218] sm:$0xf]
        %v6249 = vld [vmem:[#allocation21 + $0x21c] sm:$0xff]
        %v6250 = vld [vmem:[#allocation21 + $0x224] sm:$0xf]
        %v6251 = vld [vmem:[#allocation21 + $0x228] sm:$0xff]
        %v6252 = vld [vmem:[#allocation21 + $0x230] sm:$0xf]
        %v6253 = vld [vmem:[#allocation21 + $0x234] sm:$0xff]
        %v6254 = vld [vmem:[#allocation21 + $0x23c] sm:$0xf]
        %v6255 = vld [vmem:[#allocation21 + $0x240] sm:$0xff]
        %v6256 = vld [vmem:[#allocation21 + $0x248] sm:$0xf]
        %v6257 = vld [vmem:[#allocation21 + $0x24c] sm:$0xff]
        %v6258 = vld [vmem:[#allocation21 + $0x254] sm:$0xf]
        %v6259 = vld [vmem:[#allocation21 + $0x258] sm:$0xff]
        %v6260 = vld [vmem:[#allocation21 + $0x260] sm:$0xf]
        %v6261 = vld [vmem:[#allocation21 + $0x264] sm:$0xff]
        %v6262 = vld [vmem:[#allocation21 + $0x26c] sm:$0xf]
        %v6263 = vld [vmem:[#allocation21 + $0x270] sm:$0xff]
        %v6264 = vld [vmem:[#allocation21 + $0x278] sm:$0xf]
        %v6265 = vld [vmem:[#allocation21 + $0x27c] sm:$0xff]
        %v6266 = vld [vmem:[#allocation21 + $0x284] sm:$0xf]
        %v6267 = vld [vmem:[#allocation21 + $0x288] sm:$0xff]
        %v6268 = vld [vmem:[#allocation21 + $0x290] sm:$0xf]
        %v6269 = vld [vmem:[#allocation21 + $0x294] sm:$0xff]
        %v6270 = vld [vmem:[#allocation21 + $0x29c] sm:$0xf]
        %v6271 = vld [vmem:[#allocation21 + $0x2a0] sm:$0xff]
        %v6272 = vld [vmem:[#allocation21 + $0x2a8] sm:$0xf]
        %v6273 = vld [vmem:[#allocation21 + $0x2ac] sm:$0xff]
        %v6274 = vld [vmem:[#allocation21 + $0x2b4] sm:$0xf]
        %v6275 = vld [vmem:[#allocation21 + $0x2b8] sm:$0xff]
        %v6276 = vld [vmem:[#allocation21 + $0x2c0] sm:$0xf]
        %v6277 = vld [vmem:[#allocation21 + $0x2c4] sm:$0xff]
        %v6278 = vld [vmem:[#allocation21 + $0x2cc] sm:$0xf]
        %v6279 = vld [vmem:[#allocation21 + $0x2d0] sm:$0xff]
        %v6280 = vld [vmem:[#allocation21 + $0x2d8] sm:$0xf]
        %v6281 = vld [vmem:[#allocation21 + $0x2dc] sm:$0xff]
        %v6282 = vld [vmem:[#allocation21 + $0x2e4] sm:$0xf]
        %v6283 = vld [vmem:[#allocation21 + $0x2e8] sm:$0xff]
        %v6284 = vld [vmem:[#allocation21 + $0x2f0] sm:$0xf]
        %v6285 = vld [vmem:[#allocation21 + $0x2f4] sm:$0xff]
        %v6286 = vld [vmem:[#allocation21 + $0x2fc] sm:$0xf]
        %v6287 = vld [vmem:[#allocation21 + $0x300] sm:$0xff]
        %v6288 = vld [vmem:[#allocation21 + $0x308] sm:$0xf]
        %v6289 = vld [vmem:[#allocation21 + $0x30c] sm:$0xff]
        %v6290 = vld [vmem:[#allocation21 + $0x314] sm:$0xf]
        %v6291 = vld [vmem:[#allocation21 + $0x318] sm:$0xff]
        %v6292 = vld [vmem:[#allocation21 + $0x320] sm:$0xf]
        %v6293 = vld [vmem:[#allocation21 + $0x324] sm:$0xff]
        %v6294 = vld [vmem:[#allocation21 + $0x32c] sm:$0xf]
        %v6295 = vld [vmem:[#allocation21 + $0x330] sm:$0xff]
        %v6296 = vld [vmem:[#allocation21 + $0x338] sm:$0xf]
        %v6297 = vld [vmem:[#allocation21 + $0x33c] sm:$0xff]
        %v6298 = vld [vmem:[#allocation21 + $0x344] sm:$0xf]
        %v6299 = vld [vmem:[#allocation21 + $0x348] sm:$0xff]
        %v6300 = vld [vmem:[#allocation21 + $0x350] sm:$0xf]
        %v6301 = vld [vmem:[#allocation21 + $0x354] sm:$0xff]
        %v6302 = vld [vmem:[#allocation21 + $0x35c] sm:$0xf]
        %v6303 = vld [vmem:[#allocation21 + $0x360] sm:$0xff]
        %v6304 = vld [vmem:[#allocation21 + $0x368] sm:$0xf]
        %v6305 = vld [vmem:[#allocation21 + $0x36c] sm:$0xff]
        %v6306 = vld [vmem:[#allocation21 + $0x374] sm:$0xf]
        %v6307 = vld [vmem:[#allocation21 + $0x378] sm:$0xff]
        %v6308 = vld [vmem:[#allocation21 + $0x380] sm:$0xf]
        %v6309 = vld [vmem:[#allocation21 + $0x384] sm:$0xff]
        %v6310 = vld [vmem:[#allocation21 + $0x38c] sm:$0xf]
        %v6311 = vld [vmem:[#allocation21 + $0x390] sm:$0xff]
        %v6312 = vld [vmem:[#allocation21 + $0x398] sm:$0xf]
        %v6313 = vld [vmem:[#allocation21 + $0x39c] sm:$0xff]
        %v6314 = vld [vmem:[#allocation21 + $0x3a4] sm:$0xf]
        %v6315 = vld [vmem:[#allocation21 + $0x3a8] sm:$0xff]
        %v6316 = vld [vmem:[#allocation21 + $0x3b0] sm:$0xf]
        %v6317 = vld [vmem:[#allocation21 + $0x3b4] sm:$0xff]
        %v6318 = vld [vmem:[#allocation21 + $0x3bc] sm:$0xf]
        %v6319 = vld [vmem:[#allocation21 + $0x3c0] sm:$0xff]
        %v6320 = vld [vmem:[#allocation21 + $0x3c8] sm:$0xf]
        %v6321 = vld [vmem:[#allocation21 + $0x3cc] sm:$0xff]
        %v6322 = vld [vmem:[#allocation21 + $0x3d4] sm:$0xf]
        %v6323 = vld [vmem:[#allocation21 + $0x3d8] sm:$0xff]
        %v6324 = vld [vmem:[#allocation21 + $0x3e0] sm:$0xf]
        %v6325 = vld [vmem:[#allocation21 + $0x3e4] sm:$0xff]
        %v6326 = vld [vmem:[#allocation21 + $0x3ec] sm:$0xf]
        %v6327 = vld [vmem:[#allocation21 + $0x3f0] sm:$0xff]
        %v6328 = vld [vmem:[#allocation21 + $0x3f8] sm:$0xf]
        %v6329 = vld [vmem:[#allocation21 + $0x3fc] sm:$0xff]
        %v6330 = vld [vmem:[#allocation21 + $0x404] sm:$0xf]
        %v6331 = vld [vmem:[#allocation21 + $0x408] sm:$0xff]
        %v6332 = vld [vmem:[#allocation21 + $0x410] sm:$0xf]
        %v6333 = vld [vmem:[#allocation21 + $0x414] sm:$0xff]
        %v6334 = vld [vmem:[#allocation21 + $0x41c] sm:$0xf]
        %v6335 = vld [vmem:[#allocation21 + $0x420] sm:$0xff]
        %v6336 = vld [vmem:[#allocation21 + $0x428] sm:$0xf]
        %v6337 = vld [vmem:[#allocation21 + $0x42c] sm:$0xff]
        %v6338 = vld [vmem:[#allocation21 + $0x434] sm:$0xf]
        %v6339 = vld [vmem:[#allocation21 + $0x438] sm:$0xff]
        %v6340 = vld [vmem:[#allocation21 + $0x440] sm:$0xf]
        %v6341 = vld [vmem:[#allocation21 + $0x444] sm:$0xff]
        %v6342 = vld [vmem:[#allocation21 + $0x44c] sm:$0xf]
        %v6343 = vld [vmem:[#allocation21 + $0x450] sm:$0xff]
        %v6344 = vld [vmem:[#allocation21 + $0x458] sm:$0xf]
        %v6345 = vld [vmem:[#allocation21 + $0x45c] sm:$0xff]
        %v6346 = vld [vmem:[#allocation21 + $0x464] sm:$0xf]
        %v6347 = vld [vmem:[#allocation21 + $0x468] sm:$0xff]
        %v6348 = vld [vmem:[#allocation21 + $0x470] sm:$0xf]
        %v6349 = vld [vmem:[#allocation21 + $0x474] sm:$0xff]
        %v6350 = vld [vmem:[#allocation21 + $0x47c] sm:$0xf]
        %v6351 = vld [vmem:[#allocation21 + $0x480] sm:$0xff]
        %v6352 = vld [vmem:[#allocation21 + $0x488] sm:$0xf]
        %v6353 = vld [vmem:[#allocation21 + $0x48c] sm:$0xff]
        %v6354 = vld [vmem:[#allocation21 + $0x494] sm:$0xf]
        %v6355 = vld [vmem:[#allocation21 + $0x498] sm:$0xff]
        %v6356 = vld [vmem:[#allocation21 + $0x4a0] sm:$0xf]
        %v6357 = vld [vmem:[#allocation21 + $0x4a4] sm:$0xff]
        %v6358 = vld [vmem:[#allocation21 + $0x4ac] sm:$0xf]
        %v6359 = vld [vmem:[#allocation21 + $0x4b0] sm:$0xff]
        %v6360 = vld [vmem:[#allocation21 + $0x4b8] sm:$0xf]
        %v6361 = vld [vmem:[#allocation21 + $0x4bc] sm:$0xff]
        %v6362 = vld [vmem:[#allocation21 + $0x4c4] sm:$0xf]
        %v6363 = vld [vmem:[#allocation21 + $0x4c8] sm:$0xff]
        %v6364 = vld [vmem:[#allocation21 + $0x4d0] sm:$0xf]
        %v6365 = vld [vmem:[#allocation21 + $0x4d4] sm:$0xff]
        %v6366 = vld [vmem:[#allocation21 + $0x4dc] sm:$0xf]
        %v6367 = vld [vmem:[#allocation21 + $0x4e0] sm:$0xff]
        %v6368 = vld [vmem:[#allocation21 + $0x4e8] sm:$0xf]
        %v6369 = vld [vmem:[#allocation21 + $0x4ec] sm:$0xff]
        %v6370 = vld [vmem:[#allocation21 + $0x4f4] sm:$0xf]
        %v6371 = vld [vmem:[#allocation21 + $0x4f8] sm:$0xff]
        %v6372 = vld [vmem:[#allocation21 + $0x500] sm:$0xf]
        %v6373 = vld [vmem:[#allocation21 + $0x504] sm:$0xff]
        %v6374 = vld [vmem:[#allocation21 + $0x50c] sm:$0xf]
        %v6375 = vld [vmem:[#allocation21 + $0x510] sm:$0xff]
        %v6376 = vld [vmem:[#allocation21 + $0x518] sm:$0xf]
        %v6377 = vld [vmem:[#allocation21 + $0x51c] sm:$0xff]
        %v6378 = vld [vmem:[#allocation21 + $0x524] sm:$0xf]
        %v6379 = vld [vmem:[#allocation21 + $0x528] sm:$0xff]
        %v6380 = vld [vmem:[#allocation21 + $0x530] sm:$0xf]
        %v6381 = vld [vmem:[#allocation21 + $0x534] sm:$0xff]
        %v6382 = vld [vmem:[#allocation21 + $0x53c] sm:$0xf]
        %v6383 = vld [vmem:[#allocation21 + $0x540] sm:$0xff]
        %v6384 = vld [vmem:[#allocation21 + $0x548] sm:$0xf]
        %v6385 = vld [vmem:[#allocation21 + $0x54c] sm:$0xff]
        %v6386 = vld [vmem:[#allocation21 + $0x554] sm:$0xf]
        %v6387 = vld [vmem:[#allocation21 + $0x558] sm:$0xff]
        %v6388 = vld [vmem:[#allocation21 + $0x560] sm:$0xf]
        %v6389 = vld [vmem:[#allocation21 + $0x564] sm:$0xff]
        %v6390 = vld [vmem:[#allocation21 + $0x56c] sm:$0xf]
        %v6391 = vld [vmem:[#allocation21 + $0x570] sm:$0xff]
        %v6392 = vld [vmem:[#allocation21 + $0x578] sm:$0xf]
        %v6393 = vld [vmem:[#allocation21 + $0x57c] sm:$0xff]
        %v6394 = vld [vmem:[#allocation21 + $0x584] sm:$0xf]
        %v6395 = vld [vmem:[#allocation21 + $0x588] sm:$0xff]
        %v6396 = vld [vmem:[#allocation21 + $0x590] sm:$0xf]
        %v6397 = vld [vmem:[#allocation21 + $0x594] sm:$0xff]
        %v6398 = vld [vmem:[#allocation21 + $0x59c] sm:$0xf]
        %v6399 = vld [vmem:[#allocation21 + $0x5a0] sm:$0xff]
        %v6400 = vld [vmem:[#allocation21 + $0x5a8] sm:$0xf]
        %v6401 = vld [vmem:[#allocation21 + $0x5ac] sm:$0xff]
        %v6402 = vld [vmem:[#allocation21 + $0x5b4] sm:$0xf]
        %v6403 = vld [vmem:[#allocation21 + $0x5b8] sm:$0xff]
        %v6404 = vld [vmem:[#allocation21 + $0x5c0] sm:$0xf]
        %v6405 = vld [vmem:[#allocation21 + $0x5c4] sm:$0xff]
        %v6406 = vld [vmem:[#allocation21 + $0x5cc] sm:$0xf]
        %v6407 = vld [vmem:[#allocation21 + $0x5d0] sm:$0xff]
        %v6408 = vld [vmem:[#allocation21 + $0x5d8] sm:$0xf]
        %v6409 = vld [vmem:[#allocation21 + $0x5dc] sm:$0xff]
        %v6410 = vld [vmem:[#allocation21 + $0x5e4] sm:$0xf]
        %v6411 = vld [vmem:[#allocation21 + $0x5e8] sm:$0xff]
        %v6412 = vld [vmem:[#allocation21 + $0x5f0] sm:$0xf]
        %v6413 = vld [vmem:[#allocation21 + $0x5f4] sm:$0xff]
        %v6414 = vld [vmem:[#allocation21 + $0x5fc] sm:$0xf]
        %v6415 = vld [vmem:[#allocation21 + $0x600] sm:$0xff]
        %v6416 = vld [vmem:[#allocation21 + $0x608] sm:$0xf]
        %v6417 = vld [vmem:[#allocation21 + $0x60c] sm:$0xff]
        %v6418 = vld [vmem:[#allocation21 + $0x614] sm:$0xf]
        %v6419 = vld [vmem:[#allocation21 + $0x618] sm:$0xff]
        %v6420 = vld [vmem:[#allocation21 + $0x620] sm:$0xf]
        %v6421 = vld [vmem:[#allocation21 + $0x624] sm:$0xff]
        %v6422 = vld [vmem:[#allocation21 + $0x62c] sm:$0xf]
        %v6423 = vld [vmem:[#allocation21 + $0x630] sm:$0xff]
        %v6424 = vld [vmem:[#allocation21 + $0x638] sm:$0xf]
        %v6425 = vld [vmem:[#allocation21 + $0x63c] sm:$0xff]
        %v6426 = vld [vmem:[#allocation21 + $0x644] sm:$0xf]
        %v6427 = vld [vmem:[#allocation21 + $0x648] sm:$0xff]
        %v6428 = vld [vmem:[#allocation21 + $0x650] sm:$0xf]
        %v6429 = vld [vmem:[#allocation21 + $0x654] sm:$0xff]
        %v6430 = vld [vmem:[#allocation21 + $0x65c] sm:$0xf]
        %v6431 = vld [vmem:[#allocation21 + $0x660] sm:$0xff]
        %v6432 = vld [vmem:[#allocation21 + $0x668] sm:$0xf]
        %v6433 = vld [vmem:[#allocation21 + $0x66c] sm:$0xff]
        %v6434 = vld [vmem:[#allocation21 + $0x674] sm:$0xf]
        %v6435 = vld [vmem:[#allocation21 + $0x678] sm:$0xff]
        %v6436 = vld [vmem:[#allocation21 + $0x680] sm:$0xf]
        %v6437 = vld [vmem:[#allocation21 + $0x684] sm:$0xff]
        %v6438 = vld [vmem:[#allocation21 + $0x68c] sm:$0xf]
        %v6439 = vld [vmem:[#allocation21 + $0x690] sm:$0xff]
        %v6440 = vld [vmem:[#allocation21 + $0x698] sm:$0xf]
        %v6441 = vld [vmem:[#allocation21 + $0x69c] sm:$0xff]
        %v6442 = vld [vmem:[#allocation21 + $0x6a4] sm:$0xf]
        %v6443 = vld [vmem:[#allocation21 + $0x6a8] sm:$0xff]
        %v6444 = vld [vmem:[#allocation21 + $0x6b0] sm:$0xf]
        %v6445 = vld [vmem:[#allocation21 + $0x6b4] sm:$0xff]
        %v6446 = vld [vmem:[#allocation21 + $0x6bc] sm:$0xf]
        %v6447 = vld [vmem:[#allocation21 + $0x6c0] sm:$0xff]
        %v6448 = vld [vmem:[#allocation21 + $0x6c8] sm:$0xf]
        %v6449 = vld [vmem:[#allocation21 + $0x6cc] sm:$0xff]
        %v6450 = vld [vmem:[#allocation21 + $0x6d4] sm:$0xf]
        %v6451 = vld [vmem:[#allocation21 + $0x6d8] sm:$0xff]
        %v6452 = vld [vmem:[#allocation21 + $0x6e0] sm:$0xf]
        %v6453 = vld [vmem:[#allocation21 + $0x6e4] sm:$0xff]
        %v6454 = vld [vmem:[#allocation21 + $0x6ec] sm:$0xf]
        %v6455 = vld [vmem:[#allocation21 + $0x6f0] sm:$0xff]
        %v6456 = vld [vmem:[#allocation21 + $0x6f8] sm:$0xf]
        %v6457 = vld [vmem:[#allocation21 + $0x6fc] sm:$0xff]
        %v6458 = vld [vmem:[#allocation21 + $0x704] sm:$0xf]
        %v6459 = vld [vmem:[#allocation21 + $0x708] sm:$0xff]
        %v6460 = vld [vmem:[#allocation21 + $0x710] sm:$0xf]
        %v6461 = vld [vmem:[#allocation21 + $0x714] sm:$0xff]
        %v6462 = vld [vmem:[#allocation21 + $0x71c] sm:$0xf]
        %v6463 = vld [vmem:[#allocation21 + $0x720] sm:$0xff]
        %v6464 = vld [vmem:[#allocation21 + $0x728] sm:$0xf]
        %v6465 = vld [vmem:[#allocation21 + $0x72c] sm:$0xff]
        %v6466 = vld [vmem:[#allocation21 + $0x734] sm:$0xf]
        %v6467 = vld [vmem:[#allocation21 + $0x738] sm:$0xff]
        %v6468 = vld [vmem:[#allocation21 + $0x740] sm:$0xf]
        %v6469 = vld [vmem:[#allocation21 + $0x744] sm:$0xff]
        %v6470 = vld [vmem:[#allocation21 + $0x74c] sm:$0xf]
        %v6471 = vld [vmem:[#allocation21 + $0x750] sm:$0xff]
        %v6472 = vld [vmem:[#allocation21 + $0x758] sm:$0xf]
        %v6473 = vld [vmem:[#allocation21 + $0x75c] sm:$0xff]
        %v6474 = vld [vmem:[#allocation21 + $0x764] sm:$0xf]
        %v6475 = vld [vmem:[#allocation21 + $0x768] sm:$0xff]
        %v6476 = vld [vmem:[#allocation21 + $0x770] sm:$0xf]
        %v6477 = vld [vmem:[#allocation21 + $0x774] sm:$0xff]
        %v6478 = vld [vmem:[#allocation21 + $0x77c] sm:$0xf]
        %v6479 = vld [vmem:[#allocation21 + $0x780] sm:$0xff]
        %v6480 = vld [vmem:[#allocation21 + $0x788] sm:$0xf]
        %v6481 = vld [vmem:[#allocation21 + $0x78c] sm:$0xff]
        %v6482 = vld [vmem:[#allocation21 + $0x794] sm:$0xf]
        %v6483 = vld [vmem:[#allocation21 + $0x798] sm:$0xff]
        %v6484 = vld [vmem:[#allocation21 + $0x7a0] sm:$0xf]
        %v6485 = vld [vmem:[#allocation21 + $0x7a4] sm:$0xff]
        %v6486 = vld [vmem:[#allocation21 + $0x7ac] sm:$0xf]
        %v6487 = vld [vmem:[#allocation21 + $0x7b0] sm:$0xff]
        %v6488 = vld [vmem:[#allocation21 + $0x7b8] sm:$0xf]
        %v6489 = vld [vmem:[#allocation21 + $0x7bc] sm:$0xff]
        %v6490 = vld [vmem:[#allocation21 + $0x7c4] sm:$0xf]
        %v6491 = vld [vmem:[#allocation21 + $0x7c8] sm:$0xff]
        %v6492 = vld [vmem:[#allocation21 + $0x7d0] sm:$0xf]
        %v6493 = vld [vmem:[#allocation21 + $0x7d4] sm:$0xff]
        %v6494 = vld [vmem:[#allocation21 + $0x7dc] sm:$0xf]
        %v6495 = vld [vmem:[#allocation21 + $0x7e0] sm:$0xff]
        %v6496 = vld [vmem:[#allocation21 + $0x7e8] sm:$0xf]
        %v6497 = vld [vmem:[#allocation21 + $0x7ec] sm:$0xff]
        %v6498 = vld [vmem:[#allocation21 + $0x7f4] sm:$0xf]
        %v6499 = vld [vmem:[#allocation21 + $0x7f8] sm:$0xff]
        %v6500 = vld [vmem:[#allocation21 + $0x800] sm:$0xf]
        %v6501 = vld [vmem:[#allocation21 + $0x804] sm:$0xff]
        %v6502 = vld [vmem:[#allocation21 + $0x80c] sm:$0xf]
        %v6503 = vld [vmem:[#allocation21 + $0x810] sm:$0xff]
        %v6504 = vld [vmem:[#allocation21 + $0x818] sm:$0xf]
        %v6505 = vld [vmem:[#allocation21 + $0x81c] sm:$0xff]
        %v6506 = vld [vmem:[#allocation21 + $0x824] sm:$0xf]
        %v6507 = vld [vmem:[#allocation21 + $0x828] sm:$0xff]
        %v6508 = vld [vmem:[#allocation21 + $0x830] sm:$0xf]
        %v6509 = vld [vmem:[#allocation21 + $0x834] sm:$0xff]
        %v6510 = vld [vmem:[#allocation21 + $0x83c] sm:$0xf]
        %v6511 = vld [vmem:[#allocation21 + $0x840] sm:$0xff]
        %v6512 = vld [vmem:[#allocation21 + $0x848] sm:$0xf]
        %v6513 = vld [vmem:[#allocation21 + $0x84c] sm:$0xff]
        %v6514 = vld [vmem:[#allocation21 + $0x854] sm:$0xf]
        %v6515 = vld [vmem:[#allocation21 + $0x858] sm:$0xff]
        %v6516 = vld [vmem:[#allocation21 + $0x860] sm:$0xf]
        %v6517 = vld [vmem:[#allocation21 + $0x864] sm:$0xff]
        %v6518 = vld [vmem:[#allocation21 + $0x86c] sm:$0xf]
        %v6519 = vld [vmem:[#allocation21 + $0x870] sm:$0xff]
        %v6520 = vld [vmem:[#allocation21 + $0x878] sm:$0xf]
        %v6521 = vld [vmem:[#allocation21 + $0x87c] sm:$0xff]
        %v6522 = vld [vmem:[#allocation21 + $0x884] sm:$0xf]
        %v6523 = vld [vmem:[#allocation21 + $0x888] sm:$0xff]
        %v6524 = vld [vmem:[#allocation21 + $0x890] sm:$0xf]
        %v6525 = vld [vmem:[#allocation21 + $0x894] sm:$0xff]
        %v6526 = vld [vmem:[#allocation21 + $0x89c] sm:$0xf]
        %v6527 = vld [vmem:[#allocation21 + $0x8a0] sm:$0xff]
        %v6528 = vld [vmem:[#allocation21 + $0x8a8] sm:$0xf]
        %v6529 = vld [vmem:[#allocation21 + $0x8ac] sm:$0xff]
        %v6530 = vld [vmem:[#allocation21 + $0x8b4] sm:$0xf]
        %v6531 = vld [vmem:[#allocation21 + $0x8b8] sm:$0xff]
        %v6532 = vld [vmem:[#allocation21 + $0x8c0] sm:$0xf]
        %v6533 = vld [vmem:[#allocation21 + $0x8c4] sm:$0xff]
        %v6534 = vld [vmem:[#allocation21 + $0x8cc] sm:$0xf]
        %v6535 = vld [vmem:[#allocation21 + $0x8d0] sm:$0xff]
        %v6536 = vld [vmem:[#allocation21 + $0x8d8] sm:$0xf]
        %v6537 = vld [vmem:[#allocation21 + $0x8dc] sm:$0xff]
        %v6538 = vld [vmem:[#allocation21 + $0x8e4] sm:$0xf]
        %v6539 = vld [vmem:[#allocation21 + $0x8e8] sm:$0xff]
        %v6540 = vld [vmem:[#allocation21 + $0x8f0] sm:$0xf]
        %v6541 = vld [vmem:[#allocation21 + $0x8f4] sm:$0xff]
        %v6542 = vld [vmem:[#allocation21 + $0x8fc] sm:$0xf]
        %v6543 = vld [vmem:[#allocation22] sm:$0x7]
        %v6545 = vlaneseq
        %v6546 = vshrl.u32 %v6545, 7
        %v6547 = vsub.s32 0, %v6546
        %v6548 = vrot.slane %v6543, %v6547
        %v6549 = vlaneseq
        %v6550 = vshrl.u32 %v6549, 7
        %v6551 = vsub.s32 1, %v6550
        %v6552 = vrot.slane %v6543, %v6551
        %v6553 = vlaneseq
        %v6554 = vshrl.u32 %v6553, 7
        %v6555 = vsub.s32 2, %v6554
        %v6556 = vrot.slane %v6543, %v6555
        %v6944 = vunpack.c.l.b16 %v6159
        %v6945 = vunpack.c.h.b16 %v6159
        %v6946 = vunpack.c.l.b16 %v6160
        %v6947 = vunpack.c.l.b16 %v6161
        %v6948 = vunpack.c.h.b16 %v6161
        %v6949 = vunpack.c.l.b16 %v6162
        %v6950 = vunpack.c.l.b16 %v6163
        %v6951 = vunpack.c.h.b16 %v6163
        %v6952 = vunpack.c.l.b16 %v6164
        %v6953 = vunpack.c.l.b16 %v6165
        %v6954 = vunpack.c.h.b16 %v6165
        %v6955 = vunpack.c.l.b16 %v6166
        %v6956 = vunpack.c.l.b16 %v6167
        %v6957 = vunpack.c.h.b16 %v6167
        %v6958 = vunpack.c.l.b16 %v6168
        %v6959 = vunpack.c.l.b16 %v6169
        %v6960 = vunpack.c.h.b16 %v6169
        %v6961 = vunpack.c.l.b16 %v6170
        %v6962 = vunpack.c.l.b16 %v6171
        %v6963 = vunpack.c.h.b16 %v6171
        %v6964 = vunpack.c.l.b16 %v6172
        %v6965 = vunpack.c.l.b16 %v6173
        %v6966 = vunpack.c.h.b16 %v6173
        %v6967 = vunpack.c.l.b16 %v6174
        %v6968 = vunpack.c.l.b16 %v6175
        %v6969 = vunpack.c.h.b16 %v6175
        %v6970 = vunpack.c.l.b16 %v6176
        %v6971 = vunpack.c.l.b16 %v6177
        %v6972 = vunpack.c.h.b16 %v6177
        %v6973 = vunpack.c.l.b16 %v6178
        %v6974 = vunpack.c.l.b16 %v6179
        %v6975 = vunpack.c.h.b16 %v6179
        %v6976 = vunpack.c.l.b16 %v6180
        %v6977 = vunpack.c.l.b16 %v6181
        %v6978 = vunpack.c.h.b16 %v6181
        %v6979 = vunpack.c.l.b16 %v6182
        %v6980 = vunpack.c.l.b16 %v6183
        %v6981 = vunpack.c.h.b16 %v6183
        %v6982 = vunpack.c.l.b16 %v6184
        %v6983 = vunpack.c.l.b16 %v6185
        %v6984 = vunpack.c.h.b16 %v6185
        %v6985 = vunpack.c.l.b16 %v6186
        %v6986 = vunpack.c.l.b16 %v6187
        %v6987 = vunpack.c.h.b16 %v6187
        %v6988 = vunpack.c.l.b16 %v6188
        %v6989 = vunpack.c.l.b16 %v6189
        %v6990 = vunpack.c.h.b16 %v6189
        %v6991 = vunpack.c.l.b16 %v6190
        %v6992 = vunpack.c.l.b16 %v6191
        %v6993 = vunpack.c.h.b16 %v6191
        %v6994 = vunpack.c.l.b16 %v6192
        %v6995 = vunpack.c.l.b16 %v6193
        %v6996 = vunpack.c.h.b16 %v6193
        %v6997 = vunpack.c.l.b16 %v6194
        %v6998 = vunpack.c.l.b16 %v6195
        %v6999 = vunpack.c.h.b16 %v6195
        %v7000 = vunpack.c.l.b16 %v6196
        %v7001 = vunpack.c.l.b16 %v6197
        %v7002 = vunpack.c.h.b16 %v6197
        %v7003 = vunpack.c.l.b16 %v6198
        %v7004 = vunpack.c.l.b16 %v6199
        %v7005 = vunpack.c.h.b16 %v6199
        %v7006 = vunpack.c.l.b16 %v6200
        %v7007 = vunpack.c.l.b16 %v6201
        %v7008 = vunpack.c.h.b16 %v6201
        %v7009 = vunpack.c.l.b16 %v6202
        %v7010 = vunpack.c.l.b16 %v6203
        %v7011 = vunpack.c.h.b16 %v6203
        %v7012 = vunpack.c.l.b16 %v6204
        %v7013 = vunpack.c.l.b16 %v6205
        %v7014 = vunpack.c.h.b16 %v6205
        %v7015 = vunpack.c.l.b16 %v6206
        %v7016 = vunpack.c.l.b16 %v6207
        %v7017 = vunpack.c.h.b16 %v6207
        %v7018 = vunpack.c.l.b16 %v6208
        %v7019 = vunpack.c.l.b16 %v6209
        %v7020 = vunpack.c.h.b16 %v6209
        %v7021 = vunpack.c.l.b16 %v6210
        %v7022 = vunpack.c.l.b16 %v6211
        %v7023 = vunpack.c.h.b16 %v6211
        %v7024 = vunpack.c.l.b16 %v6212
        %v7025 = vunpack.c.l.b16 %v6213
        %v7026 = vunpack.c.h.b16 %v6213
        %v7027 = vunpack.c.l.b16 %v6214
        %v7028 = vunpack.c.l.b16 %v6215
        %v7029 = vunpack.c.h.b16 %v6215
        %v7030 = vunpack.c.l.b16 %v6216
        %v7031 = vunpack.c.l.b16 %v6217
        %v7032 = vunpack.c.h.b16 %v6217
        %v7033 = vunpack.c.l.b16 %v6218
        %v7034 = vunpack.c.l.b16 %v6219
        %v7035 = vunpack.c.h.b16 %v6219
        %v7036 = vunpack.c.l.b16 %v6220
        %v7037 = vunpack.c.l.b16 %v6221
        %v7038 = vunpack.c.h.b16 %v6221
        %v7039 = vunpack.c.l.b16 %v6222
        %v7040 = vunpack.c.l.b16 %v6223
        %v7041 = vunpack.c.h.b16 %v6223
        %v7042 = vunpack.c.l.b16 %v6224
        %v7043 = vunpack.c.l.b16 %v6225
        %v7044 = vunpack.c.h.b16 %v6225
        %v7045 = vunpack.c.l.b16 %v6226
        %v7046 = vunpack.c.l.b16 %v6227
        %v7047 = vunpack.c.h.b16 %v6227
        %v7048 = vunpack.c.l.b16 %v6228
        %v7049 = vunpack.c.l.b16 %v6229
        %v7050 = vunpack.c.h.b16 %v6229
        %v7051 = vunpack.c.l.b16 %v6230
        %v7052 = vunpack.c.l.b16 %v6231
        %v7053 = vunpack.c.h.b16 %v6231
        %v7054 = vunpack.c.l.b16 %v6232
        %v7055 = vunpack.c.l.b16 %v6233
        %v7056 = vunpack.c.h.b16 %v6233
        %v7057 = vunpack.c.l.b16 %v6234
        %v7058 = vunpack.c.l.b16 %v6235
        %v7059 = vunpack.c.h.b16 %v6235
        %v7060 = vunpack.c.l.b16 %v6236
        %v7061 = vunpack.c.l.b16 %v6237
        %v7062 = vunpack.c.h.b16 %v6237
        %v7063 = vunpack.c.l.b16 %v6238
        %v7064 = vunpack.c.l.b16 %v6239
        %v7065 = vunpack.c.h.b16 %v6239
        %v7066 = vunpack.c.l.b16 %v6240
        %v7067 = vunpack.c.l.b16 %v6241
        %v7068 = vunpack.c.h.b16 %v6241
        %v7069 = vunpack.c.l.b16 %v6242
        %v7070 = vunpack.c.l.b16 %v6243
        %v7071 = vunpack.c.h.b16 %v6243
        %v7072 = vunpack.c.l.b16 %v6244
        %v7073 = vunpack.c.l.b16 %v6245
        %v7074 = vunpack.c.h.b16 %v6245
        %v7075 = vunpack.c.l.b16 %v6246
        %v7076 = vunpack.c.l.b16 %v6247
        %v7077 = vunpack.c.h.b16 %v6247
        %v7078 = vunpack.c.l.b16 %v6248
        %v7079 = vunpack.c.l.b16 %v6249
        %v7080 = vunpack.c.h.b16 %v6249
        %v7081 = vunpack.c.l.b16 %v6250
        %v7082 = vunpack.c.l.b16 %v6251
        %v7083 = vunpack.c.h.b16 %v6251
        %v7084 = vunpack.c.l.b16 %v6252
        %v7085 = vunpack.c.l.b16 %v6253
        %v7086 = vunpack.c.h.b16 %v6253
        %v7087 = vunpack.c.l.b16 %v6254
        %v7088 = vunpack.c.l.b16 %v6255
        %v7089 = vunpack.c.h.b16 %v6255
        %v7090 = vunpack.c.l.b16 %v6256
        %v7091 = vunpack.c.l.b16 %v6257
        %v7092 = vunpack.c.h.b16 %v6257
        %v7093 = vunpack.c.l.b16 %v6258
        %v7094 = vunpack.c.l.b16 %v6259
        %v7095 = vunpack.c.h.b16 %v6259
        %v7096 = vunpack.c.l.b16 %v6260
        %v7097 = vunpack.c.l.b16 %v6261
        %v7098 = vunpack.c.h.b16 %v6261
        %v7099 = vunpack.c.l.b16 %v6262
        %v7100 = vunpack.c.l.b16 %v6263
        %v7101 = vunpack.c.h.b16 %v6263
        %v7102 = vunpack.c.l.b16 %v6264
        %v7103 = vunpack.c.l.b16 %v6265
        %v7104 = vunpack.c.h.b16 %v6265
        %v7105 = vunpack.c.l.b16 %v6266
        %v7106 = vunpack.c.l.b16 %v6267
        %v7107 = vunpack.c.h.b16 %v6267
        %v7108 = vunpack.c.l.b16 %v6268
        %v7109 = vunpack.c.l.b16 %v6269
        %v7110 = vunpack.c.h.b16 %v6269
        %v7111 = vunpack.c.l.b16 %v6270
        %v7112 = vunpack.c.l.b16 %v6271
        %v7113 = vunpack.c.h.b16 %v6271
        %v7114 = vunpack.c.l.b16 %v6272
        %v7115 = vunpack.c.l.b16 %v6273
        %v7116 = vunpack.c.h.b16 %v6273
        %v7117 = vunpack.c.l.b16 %v6274
        %v7118 = vunpack.c.l.b16 %v6275
        %v7119 = vunpack.c.h.b16 %v6275
        %v7120 = vunpack.c.l.b16 %v6276
        %v7121 = vunpack.c.l.b16 %v6277
        %v7122 = vunpack.c.h.b16 %v6277
        %v7123 = vunpack.c.l.b16 %v6278
        %v7124 = vunpack.c.l.b16 %v6279
        %v7125 = vunpack.c.h.b16 %v6279
        %v7126 = vunpack.c.l.b16 %v6280
        %v7127 = vunpack.c.l.b16 %v6281
        %v7128 = vunpack.c.h.b16 %v6281
        %v7129 = vunpack.c.l.b16 %v6282
        %v7130 = vunpack.c.l.b16 %v6283
        %v7131 = vunpack.c.h.b16 %v6283
        %v7132 = vunpack.c.l.b16 %v6284
        %v7133 = vunpack.c.l.b16 %v6285
        %v7134 = vunpack.c.h.b16 %v6285
        %v7135 = vunpack.c.l.b16 %v6286
        %v7136 = vunpack.c.l.b16 %v6287
        %v7137 = vunpack.c.h.b16 %v6287
        %v7138 = vunpack.c.l.b16 %v6288
        %v7139 = vunpack.c.l.b16 %v6289
        %v7140 = vunpack.c.h.b16 %v6289
        %v7141 = vunpack.c.l.b16 %v6290
        %v7142 = vunpack.c.l.b16 %v6291
        %v7143 = vunpack.c.h.b16 %v6291
        %v7144 = vunpack.c.l.b16 %v6292
        %v7145 = vunpack.c.l.b16 %v6293
        %v7146 = vunpack.c.h.b16 %v6293
        %v7147 = vunpack.c.l.b16 %v6294
        %v7148 = vunpack.c.l.b16 %v6295
        %v7149 = vunpack.c.h.b16 %v6295
        %v7150 = vunpack.c.l.b16 %v6296
        %v7151 = vunpack.c.l.b16 %v6297
        %v7152 = vunpack.c.h.b16 %v6297
        %v7153 = vunpack.c.l.b16 %v6298
        %v7154 = vunpack.c.l.b16 %v6299
        %v7155 = vunpack.c.h.b16 %v6299
        %v7156 = vunpack.c.l.b16 %v6300
        %v7157 = vunpack.c.l.b16 %v6301
        %v7158 = vunpack.c.h.b16 %v6301
        %v7159 = vunpack.c.l.b16 %v6302
        %v7160 = vunpack.c.l.b16 %v6303
        %v7161 = vunpack.c.h.b16 %v6303
        %v7162 = vunpack.c.l.b16 %v6304
        %v7163 = vunpack.c.l.b16 %v6305
        %v7164 = vunpack.c.h.b16 %v6305
        %v7165 = vunpack.c.l.b16 %v6306
        %v7166 = vunpack.c.l.b16 %v6307
        %v7167 = vunpack.c.h.b16 %v6307
        %v7168 = vunpack.c.l.b16 %v6308
        %v7169 = vunpack.c.l.b16 %v6309
        %v7170 = vunpack.c.h.b16 %v6309
        %v7171 = vunpack.c.l.b16 %v6310
        %v7172 = vunpack.c.l.b16 %v6311
        %v7173 = vunpack.c.h.b16 %v6311
        %v7174 = vunpack.c.l.b16 %v6312
        %v7175 = vunpack.c.l.b16 %v6313
        %v7176 = vunpack.c.h.b16 %v6313
        %v7177 = vunpack.c.l.b16 %v6314
        %v7178 = vunpack.c.l.b16 %v6315
        %v7179 = vunpack.c.h.b16 %v6315
        %v7180 = vunpack.c.l.b16 %v6316
        %v7181 = vunpack.c.l.b16 %v6317
        %v7182 = vunpack.c.h.b16 %v6317
        %v7183 = vunpack.c.l.b16 %v6318
        %v7184 = vunpack.c.l.b16 %v6319
        %v7185 = vunpack.c.h.b16 %v6319
        %v7186 = vunpack.c.l.b16 %v6320
        %v7187 = vunpack.c.l.b16 %v6321
        %v7188 = vunpack.c.h.b16 %v6321
        %v7189 = vunpack.c.l.b16 %v6322
        %v7190 = vunpack.c.l.b16 %v6323
        %v7191 = vunpack.c.h.b16 %v6323
        %v7192 = vunpack.c.l.b16 %v6324
        %v7193 = vunpack.c.l.b16 %v6325
        %v7194 = vunpack.c.h.b16 %v6325
        %v7195 = vunpack.c.l.b16 %v6326
        %v7196 = vunpack.c.l.b16 %v6327
        %v7197 = vunpack.c.h.b16 %v6327
        %v7198 = vunpack.c.l.b16 %v6328
        %v7199 = vunpack.c.l.b16 %v6329
        %v7200 = vunpack.c.h.b16 %v6329
        %v7201 = vunpack.c.l.b16 %v6330
        %v7202 = vunpack.c.l.b16 %v6331
        %v7203 = vunpack.c.h.b16 %v6331
        %v7204 = vunpack.c.l.b16 %v6332
        %v7205 = vunpack.c.l.b16 %v6333
        %v7206 = vunpack.c.h.b16 %v6333
        %v7207 = vunpack.c.l.b16 %v6334
        %v7208 = vunpack.c.l.b16 %v6335
        %v7209 = vunpack.c.h.b16 %v6335
        %v7210 = vunpack.c.l.b16 %v6336
        %v7211 = vunpack.c.l.b16 %v6337
        %v7212 = vunpack.c.h.b16 %v6337
        %v7213 = vunpack.c.l.b16 %v6338
        %v7214 = vunpack.c.l.b16 %v6339
        %v7215 = vunpack.c.h.b16 %v6339
        %v7216 = vunpack.c.l.b16 %v6340
        %v7217 = vunpack.c.l.b16 %v6341
        %v7218 = vunpack.c.h.b16 %v6341
        %v7219 = vunpack.c.l.b16 %v6342
        %v7220 = vunpack.c.l.b16 %v6343
        %v7221 = vunpack.c.h.b16 %v6343
        %v7222 = vunpack.c.l.b16 %v6344
        %v7223 = vunpack.c.l.b16 %v6345
        %v7224 = vunpack.c.h.b16 %v6345
        %v7225 = vunpack.c.l.b16 %v6346
        %v7226 = vunpack.c.l.b16 %v6347
        %v7227 = vunpack.c.h.b16 %v6347
        %v7228 = vunpack.c.l.b16 %v6348
        %v7229 = vunpack.c.l.b16 %v6349
        %v7230 = vunpack.c.h.b16 %v6349
        %v7231 = vunpack.c.l.b16 %v6350
        %v7232 = vunpack.c.l.b16 %v6351
        %v7233 = vunpack.c.h.b16 %v6351
        %v7234 = vunpack.c.l.b16 %v6352
        %v7235 = vunpack.c.l.b16 %v6353
        %v7236 = vunpack.c.h.b16 %v6353
        %v7237 = vunpack.c.l.b16 %v6354
        %v7238 = vunpack.c.l.b16 %v6355
        %v7239 = vunpack.c.h.b16 %v6355
        %v7240 = vunpack.c.l.b16 %v6356
        %v7241 = vunpack.c.l.b16 %v6357
        %v7242 = vunpack.c.h.b16 %v6357
        %v7243 = vunpack.c.l.b16 %v6358
        %v7244 = vunpack.c.l.b16 %v6359
        %v7245 = vunpack.c.h.b16 %v6359
        %v7246 = vunpack.c.l.b16 %v6360
        %v7247 = vunpack.c.l.b16 %v6361
        %v7248 = vunpack.c.h.b16 %v6361
        %v7249 = vunpack.c.l.b16 %v6362
        %v7250 = vunpack.c.l.b16 %v6363
        %v7251 = vunpack.c.h.b16 %v6363
        %v7252 = vunpack.c.l.b16 %v6364
        %v7253 = vunpack.c.l.b16 %v6365
        %v7254 = vunpack.c.h.b16 %v6365
        %v7255 = vunpack.c.l.b16 %v6366
        %v7256 = vunpack.c.l.b16 %v6367
        %v7257 = vunpack.c.h.b16 %v6367
        %v7258 = vunpack.c.l.b16 %v6368
        %v7259 = vunpack.c.l.b16 %v6369
        %v7260 = vunpack.c.h.b16 %v6369
        %v7261 = vunpack.c.l.b16 %v6370
        %v7262 = vunpack.c.l.b16 %v6371
        %v7263 = vunpack.c.h.b16 %v6371
        %v7264 = vunpack.c.l.b16 %v6372
        %v7265 = vunpack.c.l.b16 %v6373
        %v7266 = vunpack.c.h.b16 %v6373
        %v7267 = vunpack.c.l.b16 %v6374
        %v7268 = vunpack.c.l.b16 %v6375
        %v7269 = vunpack.c.h.b16 %v6375
        %v7270 = vunpack.c.l.b16 %v6376
        %v7271 = vunpack.c.l.b16 %v6377
        %v7272 = vunpack.c.h.b16 %v6377
        %v7273 = vunpack.c.l.b16 %v6378
        %v7274 = vunpack.c.l.b16 %v6379
        %v7275 = vunpack.c.h.b16 %v6379
        %v7276 = vunpack.c.l.b16 %v6380
        %v7277 = vunpack.c.l.b16 %v6381
        %v7278 = vunpack.c.h.b16 %v6381
        %v7279 = vunpack.c.l.b16 %v6382
        %v7280 = vunpack.c.l.b16 %v6383
        %v7281 = vunpack.c.h.b16 %v6383
        %v7282 = vunpack.c.l.b16 %v6384
        %v7283 = vunpack.c.l.b16 %v6385
        %v7284 = vunpack.c.h.b16 %v6385
        %v7285 = vunpack.c.l.b16 %v6386
        %v7286 = vunpack.c.l.b16 %v6387
        %v7287 = vunpack.c.h.b16 %v6387
        %v7288 = vunpack.c.l.b16 %v6388
        %v7289 = vunpack.c.l.b16 %v6389
        %v7290 = vunpack.c.h.b16 %v6389
        %v7291 = vunpack.c.l.b16 %v6390
        %v7292 = vunpack.c.l.b16 %v6391
        %v7293 = vunpack.c.h.b16 %v6391
        %v7294 = vunpack.c.l.b16 %v6392
        %v7295 = vunpack.c.l.b16 %v6393
        %v7296 = vunpack.c.h.b16 %v6393
        %v7297 = vunpack.c.l.b16 %v6394
        %v7298 = vunpack.c.l.b16 %v6395
        %v7299 = vunpack.c.h.b16 %v6395
        %v7300 = vunpack.c.l.b16 %v6396
        %v7301 = vunpack.c.l.b16 %v6397
        %v7302 = vunpack.c.h.b16 %v6397
        %v7303 = vunpack.c.l.b16 %v6398
        %v7304 = vunpack.c.l.b16 %v6399
        %v7305 = vunpack.c.h.b16 %v6399
        %v7306 = vunpack.c.l.b16 %v6400
        %v7307 = vunpack.c.l.b16 %v6401
        %v7308 = vunpack.c.h.b16 %v6401
        %v7309 = vunpack.c.l.b16 %v6402
        %v7310 = vunpack.c.l.b16 %v6403
        %v7311 = vunpack.c.h.b16 %v6403
        %v7312 = vunpack.c.l.b16 %v6404
        %v7313 = vunpack.c.l.b16 %v6405
        %v7314 = vunpack.c.h.b16 %v6405
        %v7315 = vunpack.c.l.b16 %v6406
        %v7316 = vunpack.c.l.b16 %v6407
        %v7317 = vunpack.c.h.b16 %v6407
        %v7318 = vunpack.c.l.b16 %v6408
        %v7319 = vunpack.c.l.b16 %v6409
        %v7320 = vunpack.c.h.b16 %v6409
        %v7321 = vunpack.c.l.b16 %v6410
        %v7322 = vunpack.c.l.b16 %v6411
        %v7323 = vunpack.c.h.b16 %v6411
        %v7324 = vunpack.c.l.b16 %v6412
        %v7325 = vunpack.c.l.b16 %v6413
        %v7326 = vunpack.c.h.b16 %v6413
        %v7327 = vunpack.c.l.b16 %v6414
        %v7328 = vunpack.c.l.b16 %v6415
        %v7329 = vunpack.c.h.b16 %v6415
        %v7330 = vunpack.c.l.b16 %v6416
        %v7331 = vunpack.c.l.b16 %v6417
        %v7332 = vunpack.c.h.b16 %v6417
        %v7333 = vunpack.c.l.b16 %v6418
        %v7334 = vunpack.c.l.b16 %v6419
        %v7335 = vunpack.c.h.b16 %v6419
        %v7336 = vunpack.c.l.b16 %v6420
        %v7337 = vunpack.c.l.b16 %v6421
        %v7338 = vunpack.c.h.b16 %v6421
        %v7339 = vunpack.c.l.b16 %v6422
        %v7340 = vunpack.c.l.b16 %v6423
        %v7341 = vunpack.c.h.b16 %v6423
        %v7342 = vunpack.c.l.b16 %v6424
        %v7343 = vunpack.c.l.b16 %v6425
        %v7344 = vunpack.c.h.b16 %v6425
        %v7345 = vunpack.c.l.b16 %v6426
        %v7346 = vunpack.c.l.b16 %v6427
        %v7347 = vunpack.c.h.b16 %v6427
        %v7348 = vunpack.c.l.b16 %v6428
        %v7349 = vunpack.c.l.b16 %v6429
        %v7350 = vunpack.c.h.b16 %v6429
        %v7351 = vunpack.c.l.b16 %v6430
        %v7352 = vunpack.c.l.b16 %v6431
        %v7353 = vunpack.c.h.b16 %v6431
        %v7354 = vunpack.c.l.b16 %v6432
        %v7355 = vunpack.c.l.b16 %v6433
        %v7356 = vunpack.c.h.b16 %v6433
        %v7357 = vunpack.c.l.b16 %v6434
        %v7358 = vunpack.c.l.b16 %v6435
        %v7359 = vunpack.c.h.b16 %v6435
        %v7360 = vunpack.c.l.b16 %v6436
        %v7361 = vunpack.c.l.b16 %v6437
        %v7362 = vunpack.c.h.b16 %v6437
        %v7363 = vunpack.c.l.b16 %v6438
        %v7364 = vunpack.c.l.b16 %v6439
        %v7365 = vunpack.c.h.b16 %v6439
        %v7366 = vunpack.c.l.b16 %v6440
        %v7367 = vunpack.c.l.b16 %v6441
        %v7368 = vunpack.c.h.b16 %v6441
        %v7369 = vunpack.c.l.b16 %v6442
        %v7370 = vunpack.c.l.b16 %v6443
        %v7371 = vunpack.c.h.b16 %v6443
        %v7372 = vunpack.c.l.b16 %v6444
        %v7373 = vunpack.c.l.b16 %v6445
        %v7374 = vunpack.c.h.b16 %v6445
        %v7375 = vunpack.c.l.b16 %v6446
        %v7376 = vunpack.c.l.b16 %v6447
        %v7377 = vunpack.c.h.b16 %v6447
        %v7378 = vunpack.c.l.b16 %v6448
        %v7379 = vunpack.c.l.b16 %v6449
        %v7380 = vunpack.c.h.b16 %v6449
        %v7381 = vunpack.c.l.b16 %v6450
        %v7382 = vunpack.c.l.b16 %v6451
        %v7383 = vunpack.c.h.b16 %v6451
        %v7384 = vunpack.c.l.b16 %v6452
        %v7385 = vunpack.c.l.b16 %v6453
        %v7386 = vunpack.c.h.b16 %v6453
        %v7387 = vunpack.c.l.b16 %v6454
        %v7388 = vunpack.c.l.b16 %v6455
        %v7389 = vunpack.c.h.b16 %v6455
        %v7390 = vunpack.c.l.b16 %v6456
        %v7391 = vunpack.c.l.b16 %v6457
        %v7392 = vunpack.c.h.b16 %v6457
        %v7393 = vunpack.c.l.b16 %v6458
        %v7394 = vunpack.c.l.b16 %v6459
        %v7395 = vunpack.c.h.b16 %v6459
        %v7396 = vunpack.c.l.b16 %v6460
        %v7397 = vunpack.c.l.b16 %v6461
        %v7398 = vunpack.c.h.b16 %v6461
        %v7399 = vunpack.c.l.b16 %v6462
        %v7400 = vunpack.c.l.b16 %v6463
        %v7401 = vunpack.c.h.b16 %v6463
        %v7402 = vunpack.c.l.b16 %v6464
        %v7403 = vunpack.c.l.b16 %v6465
        %v7404 = vunpack.c.h.b16 %v6465
        %v7405 = vunpack.c.l.b16 %v6466
        %v7406 = vunpack.c.l.b16 %v6467
        %v7407 = vunpack.c.h.b16 %v6467
        %v7408 = vunpack.c.l.b16 %v6468
        %v7409 = vunpack.c.l.b16 %v6469
        %v7410 = vunpack.c.h.b16 %v6469
        %v7411 = vunpack.c.l.b16 %v6470
        %v7412 = vunpack.c.l.b16 %v6471
        %v7413 = vunpack.c.h.b16 %v6471
        %v7414 = vunpack.c.l.b16 %v6472
        %v7415 = vunpack.c.l.b16 %v6473
        %v7416 = vunpack.c.h.b16 %v6473
        %v7417 = vunpack.c.l.b16 %v6474
        %v7418 = vunpack.c.l.b16 %v6475
        %v7419 = vunpack.c.h.b16 %v6475
        %v7420 = vunpack.c.l.b16 %v6476
        %v7421 = vunpack.c.l.b16 %v6477
        %v7422 = vunpack.c.h.b16 %v6477
        %v7423 = vunpack.c.l.b16 %v6478
        %v7424 = vunpack.c.l.b16 %v6479
        %v7425 = vunpack.c.h.b16 %v6479
        %v7426 = vunpack.c.l.b16 %v6480
        %v7427 = vunpack.c.l.b16 %v6481
        %v7428 = vunpack.c.h.b16 %v6481
        %v7429 = vunpack.c.l.b16 %v6482
        %v7430 = vunpack.c.l.b16 %v6483
        %v7431 = vunpack.c.h.b16 %v6483
        %v7432 = vunpack.c.l.b16 %v6484
        %v7433 = vunpack.c.l.b16 %v6485
        %v7434 = vunpack.c.h.b16 %v6485
        %v7435 = vunpack.c.l.b16 %v6486
        %v7436 = vunpack.c.l.b16 %v6487
        %v7437 = vunpack.c.h.b16 %v6487
        %v7438 = vunpack.c.l.b16 %v6488
        %v7439 = vunpack.c.l.b16 %v6489
        %v7440 = vunpack.c.h.b16 %v6489
        %v7441 = vunpack.c.l.b16 %v6490
        %v7442 = vunpack.c.l.b16 %v6491
        %v7443 = vunpack.c.h.b16 %v6491
        %v7444 = vunpack.c.l.b16 %v6492
        %v7445 = vunpack.c.l.b16 %v6493
        %v7446 = vunpack.c.h.b16 %v6493
        %v7447 = vunpack.c.l.b16 %v6494
        %v7448 = vunpack.c.l.b16 %v6495
        %v7449 = vunpack.c.h.b16 %v6495
        %v7450 = vunpack.c.l.b16 %v6496
        %v7451 = vunpack.c.l.b16 %v6497
        %v7452 = vunpack.c.h.b16 %v6497
        %v7453 = vunpack.c.l.b16 %v6498
        %v7454 = vunpack.c.l.b16 %v6499
        %v7455 = vunpack.c.h.b16 %v6499
        %v7456 = vunpack.c.l.b16 %v6500
        %v7457 = vunpack.c.l.b16 %v6501
        %v7458 = vunpack.c.h.b16 %v6501
        %v7459 = vunpack.c.l.b16 %v6502
        %v7460 = vunpack.c.l.b16 %v6503
        %v7461 = vunpack.c.h.b16 %v6503
        %v7462 = vunpack.c.l.b16 %v6504
        %v7463 = vunpack.c.l.b16 %v6505
        %v7464 = vunpack.c.h.b16 %v6505
        %v7465 = vunpack.c.l.b16 %v6506
        %v7466 = vunpack.c.l.b16 %v6507
        %v7467 = vunpack.c.h.b16 %v6507
        %v7468 = vunpack.c.l.b16 %v6508
        %v7469 = vunpack.c.l.b16 %v6509
        %v7470 = vunpack.c.h.b16 %v6509
        %v7471 = vunpack.c.l.b16 %v6510
        %v7472 = vunpack.c.l.b16 %v6511
        %v7473 = vunpack.c.h.b16 %v6511
        %v7474 = vunpack.c.l.b16 %v6512
        %v7475 = vunpack.c.l.b16 %v6513
        %v7476 = vunpack.c.h.b16 %v6513
        %v7477 = vunpack.c.l.b16 %v6514
        %v7478 = vunpack.c.l.b16 %v6515
        %v7479 = vunpack.c.h.b16 %v6515
        %v7480 = vunpack.c.l.b16 %v6516
        %v7481 = vunpack.c.l.b16 %v6517
        %v7482 = vunpack.c.h.b16 %v6517
        %v7483 = vunpack.c.l.b16 %v6518
        %v7484 = vunpack.c.l.b16 %v6519
        %v7485 = vunpack.c.h.b16 %v6519
        %v7486 = vunpack.c.l.b16 %v6520
        %v7487 = vunpack.c.l.b16 %v6521
        %v7488 = vunpack.c.h.b16 %v6521
        %v7489 = vunpack.c.l.b16 %v6522
        %v7490 = vunpack.c.l.b16 %v6523
        %v7491 = vunpack.c.h.b16 %v6523
        %v7492 = vunpack.c.l.b16 %v6524
        %v7493 = vunpack.c.l.b16 %v6525
        %v7494 = vunpack.c.h.b16 %v6525
        %v7495 = vunpack.c.l.b16 %v6526
        %v7496 = vunpack.c.l.b16 %v6527
        %v7497 = vunpack.c.h.b16 %v6527
        %v7498 = vunpack.c.l.b16 %v6528
        %v7499 = vunpack.c.l.b16 %v6529
        %v7500 = vunpack.c.h.b16 %v6529
        %v7501 = vunpack.c.l.b16 %v6530
        %v7502 = vunpack.c.l.b16 %v6531
        %v7503 = vunpack.c.h.b16 %v6531
        %v7504 = vunpack.c.l.b16 %v6532
        %v7505 = vunpack.c.l.b16 %v6533
        %v7506 = vunpack.c.h.b16 %v6533
        %v7507 = vunpack.c.l.b16 %v6534
        %v7508 = vunpack.c.l.b16 %v6535
        %v7509 = vunpack.c.h.b16 %v6535
        %v7510 = vunpack.c.l.b16 %v6536
        %v7511 = vunpack.c.l.b16 %v6537
        %v7512 = vunpack.c.h.b16 %v6537
        %v7513 = vunpack.c.l.b16 %v6538
        %v7514 = vunpack.c.l.b16 %v6539
        %v7515 = vunpack.c.h.b16 %v6539
        %v7516 = vunpack.c.l.b16 %v6540
        %v7517 = vunpack.c.l.b16 %v6541
        %v7518 = vunpack.c.h.b16 %v6541
        %v7519 = vunpack.c.l.b16 %v6542
        %v7520 = vpack.c.b16 %v6947, %v6944
        %v7521 = vpack.c.b16 %v6948, %v6945
        %v7522 = vpack.c.b16 %v6949, %v6946
        %v7523 = vpack.c.b16 %v6953, %v6950
        %v7524 = vpack.c.b16 %v6954, %v6951
        %v7525 = vpack.c.b16 %v6955, %v6952
        %v7526 = vpack.c.b16 %v6959, %v6956
        %v7527 = vpack.c.b16 %v6960, %v6957
        %v7528 = vpack.c.b16 %v6961, %v6958
        %v7529 = vpack.c.b16 %v6965, %v6962
        %v7530 = vpack.c.b16 %v6966, %v6963
        %v7531 = vpack.c.b16 %v6967, %v6964
        %v7532 = vpack.c.b16 %v6971, %v6968
        %v7533 = vpack.c.b16 %v6972, %v6969
        %v7534 = vpack.c.b16 %v6973, %v6970
        %v7535 = vpack.c.b16 %v6977, %v6974
        %v7536 = vpack.c.b16 %v6978, %v6975
        %v7537 = vpack.c.b16 %v6979, %v6976
        %v7538 = vpack.c.b16 %v6983, %v6980
        %v7539 = vpack.c.b16 %v6984, %v6981
        %v7540 = vpack.c.b16 %v6985, %v6982
        %v7541 = vpack.c.b16 %v6989, %v6986
        %v7542 = vpack.c.b16 %v6990, %v6987
        %v7543 = vpack.c.b16 %v6991, %v6988
        %v7544 = vpack.c.b16 %v6995, %v6992
        %v7545 = vpack.c.b16 %v6996, %v6993
        %v7546 = vpack.c.b16 %v6997, %v6994
        %v7547 = vpack.c.b16 %v7001, %v6998
        %v7548 = vpack.c.b16 %v7002, %v6999
        %v7549 = vpack.c.b16 %v7003, %v7000
        %v7550 = vpack.c.b16 %v7007, %v7004
        %v7551 = vpack.c.b16 %v7008, %v7005
        %v7552 = vpack.c.b16 %v7009, %v7006
        %v7553 = vpack.c.b16 %v7013, %v7010
        %v7554 = vpack.c.b16 %v7014, %v7011
        %v7555 = vpack.c.b16 %v7015, %v7012
        %v7556 = vpack.c.b16 %v7019, %v7016
        %v7557 = vpack.c.b16 %v7020, %v7017
        %v7558 = vpack.c.b16 %v7021, %v7018
        %v7559 = vpack.c.b16 %v7025, %v7022
        %v7560 = vpack.c.b16 %v7026, %v7023
        %v7561 = vpack.c.b16 %v7027, %v7024
        %v7562 = vpack.c.b16 %v7031, %v7028
        %v7563 = vpack.c.b16 %v7032, %v7029
        %v7564 = vpack.c.b16 %v7033, %v7030
        %v7565 = vpack.c.b16 %v7037, %v7034
        %v7566 = vpack.c.b16 %v7038, %v7035
        %v7567 = vpack.c.b16 %v7039, %v7036
        %v7568 = vpack.c.b16 %v7043, %v7040
        %v7569 = vpack.c.b16 %v7044, %v7041
        %v7570 = vpack.c.b16 %v7045, %v7042
        %v7571 = vpack.c.b16 %v7049, %v7046
        %v7572 = vpack.c.b16 %v7050, %v7047
        %v7573 = vpack.c.b16 %v7051, %v7048
        %v7574 = vpack.c.b16 %v7055, %v7052
        %v7575 = vpack.c.b16 %v7056, %v7053
        %v7576 = vpack.c.b16 %v7057, %v7054
        %v7577 = vpack.c.b16 %v7061, %v7058
        %v7578 = vpack.c.b16 %v7062, %v7059
        %v7579 = vpack.c.b16 %v7063, %v7060
        %v7580 = vpack.c.b16 %v7067, %v7064
        %v7581 = vpack.c.b16 %v7068, %v7065
        %v7582 = vpack.c.b16 %v7069, %v7066
        %v7583 = vpack.c.b16 %v7073, %v7070
        %v7584 = vpack.c.b16 %v7074, %v7071
        %v7585 = vpack.c.b16 %v7075, %v7072
        %v7586 = vpack.c.b16 %v7079, %v7076
        %v7587 = vpack.c.b16 %v7080, %v7077
        %v7588 = vpack.c.b16 %v7081, %v7078
        %v7589 = vpack.c.b16 %v7085, %v7082
        %v7590 = vpack.c.b16 %v7086, %v7083
        %v7591 = vpack.c.b16 %v7087, %v7084
        %v7592 = vpack.c.b16 %v7091, %v7088
        %v7593 = vpack.c.b16 %v7092, %v7089
        %v7594 = vpack.c.b16 %v7093, %v7090
        %v7595 = vpack.c.b16 %v7097, %v7094
        %v7596 = vpack.c.b16 %v7098, %v7095
        %v7597 = vpack.c.b16 %v7099, %v7096
        %v7598 = vpack.c.b16 %v7103, %v7100
        %v7599 = vpack.c.b16 %v7104, %v7101
        %v7600 = vpack.c.b16 %v7105, %v7102
        %v7601 = vpack.c.b16 %v7109, %v7106
        %v7602 = vpack.c.b16 %v7110, %v7107
        %v7603 = vpack.c.b16 %v7111, %v7108
        %v7604 = vpack.c.b16 %v7115, %v7112
        %v7605 = vpack.c.b16 %v7116, %v7113
        %v7606 = vpack.c.b16 %v7117, %v7114
        %v7607 = vpack.c.b16 %v7121, %v7118
        %v7608 = vpack.c.b16 %v7122, %v7119
        %v7609 = vpack.c.b16 %v7123, %v7120
        %v7610 = vpack.c.b16 %v7127, %v7124
        %v7611 = vpack.c.b16 %v7128, %v7125
        %v7612 = vpack.c.b16 %v7129, %v7126
        %v7613 = vpack.c.b16 %v7133, %v7130
        %v7614 = vpack.c.b16 %v7134, %v7131
        %v7615 = vpack.c.b16 %v7135, %v7132
        %v7616 = vpack.c.b16 %v7139, %v7136
        %v7617 = vpack.c.b16 %v7140, %v7137
        %v7618 = vpack.c.b16 %v7141, %v7138
        %v7619 = vpack.c.b16 %v7145, %v7142
        %v7620 = vpack.c.b16 %v7146, %v7143
        %v7621 = vpack.c.b16 %v7147, %v7144
        %v7622 = vpack.c.b16 %v7151, %v7148
        %v7623 = vpack.c.b16 %v7152, %v7149
        %v7624 = vpack.c.b16 %v7153, %v7150
        %v7625 = vpack.c.b16 %v7157, %v7154
        %v7626 = vpack.c.b16 %v7158, %v7155
        %v7627 = vpack.c.b16 %v7159, %v7156
        %v7628 = vpack.c.b16 %v7163, %v7160
        %v7629 = vpack.c.b16 %v7164, %v7161
        %v7630 = vpack.c.b16 %v7165, %v7162
        %v7631 = vpack.c.b16 %v7169, %v7166
        %v7632 = vpack.c.b16 %v7170, %v7167
        %v7633 = vpack.c.b16 %v7171, %v7168
        %v7634 = vpack.c.b16 %v7175, %v7172
        %v7635 = vpack.c.b16 %v7176, %v7173
        %v7636 = vpack.c.b16 %v7177, %v7174
        %v7637 = vpack.c.b16 %v7181, %v7178
        %v7638 = vpack.c.b16 %v7182, %v7179
        %v7639 = vpack.c.b16 %v7183, %v7180
        %v7640 = vpack.c.b16 %v7187, %v7184
        %v7641 = vpack.c.b16 %v7188, %v7185
        %v7642 = vpack.c.b16 %v7189, %v7186
        %v7643 = vpack.c.b16 %v7193, %v7190
        %v7644 = vpack.c.b16 %v7194, %v7191
        %v7645 = vpack.c.b16 %v7195, %v7192
        %v7646 = vpack.c.b16 %v7199, %v7196
        %v7647 = vpack.c.b16 %v7200, %v7197
        %v7648 = vpack.c.b16 %v7201, %v7198
        %v7649 = vpack.c.b16 %v7205, %v7202
        %v7650 = vpack.c.b16 %v7206, %v7203
        %v7651 = vpack.c.b16 %v7207, %v7204
        %v7652 = vpack.c.b16 %v7211, %v7208
        %v7653 = vpack.c.b16 %v7212, %v7209
        %v7654 = vpack.c.b16 %v7213, %v7210
        %v7655 = vpack.c.b16 %v7217, %v7214
        %v7656 = vpack.c.b16 %v7218, %v7215
        %v7657 = vpack.c.b16 %v7219, %v7216
        %v7658 = vpack.c.b16 %v7223, %v7220
        %v7659 = vpack.c.b16 %v7224, %v7221
        %v7660 = vpack.c.b16 %v7225, %v7222
        %v7661 = vpack.c.b16 %v7229, %v7226
        %v7662 = vpack.c.b16 %v7230, %v7227
        %v7663 = vpack.c.b16 %v7231, %v7228
        %v7664 = vpack.c.b16 %v7235, %v7232
        %v7665 = vpack.c.b16 %v7236, %v7233
        %v7666 = vpack.c.b16 %v7237, %v7234
        %v7667 = vpack.c.b16 %v7241, %v7238
        %v7668 = vpack.c.b16 %v7242, %v7239
        %v7669 = vpack.c.b16 %v7243, %v7240
        %v7670 = vpack.c.b16 %v7247, %v7244
        %v7671 = vpack.c.b16 %v7248, %v7245
        %v7672 = vpack.c.b16 %v7249, %v7246
        %v7673 = vpack.c.b16 %v7253, %v7250
        %v7674 = vpack.c.b16 %v7254, %v7251
        %v7675 = vpack.c.b16 %v7255, %v7252
        %v7676 = vpack.c.b16 %v7259, %v7256
        %v7677 = vpack.c.b16 %v7260, %v7257
        %v7678 = vpack.c.b16 %v7261, %v7258
        %v7679 = vpack.c.b16 %v7265, %v7262
        %v7680 = vpack.c.b16 %v7266, %v7263
        %v7681 = vpack.c.b16 %v7267, %v7264
        %v7682 = vpack.c.b16 %v7271, %v7268
        %v7683 = vpack.c.b16 %v7272, %v7269
        %v7684 = vpack.c.b16 %v7273, %v7270
        %v7685 = vpack.c.b16 %v7277, %v7274
        %v7686 = vpack.c.b16 %v7278, %v7275
        %v7687 = vpack.c.b16 %v7279, %v7276
        %v7688 = vpack.c.b16 %v7283, %v7280
        %v7689 = vpack.c.b16 %v7284, %v7281
        %v7690 = vpack.c.b16 %v7285, %v7282
        %v7691 = vpack.c.b16 %v7289, %v7286
        %v7692 = vpack.c.b16 %v7290, %v7287
        %v7693 = vpack.c.b16 %v7291, %v7288
        %v7694 = vpack.c.b16 %v7295, %v7292
        %v7695 = vpack.c.b16 %v7296, %v7293
        %v7696 = vpack.c.b16 %v7297, %v7294
        %v7697 = vpack.c.b16 %v7301, %v7298
        %v7698 = vpack.c.b16 %v7302, %v7299
        %v7699 = vpack.c.b16 %v7303, %v7300
        %v7700 = vpack.c.b16 %v7307, %v7304
        %v7701 = vpack.c.b16 %v7308, %v7305
        %v7702 = vpack.c.b16 %v7309, %v7306
        %v7703 = vpack.c.b16 %v7313, %v7310
        %v7704 = vpack.c.b16 %v7314, %v7311
        %v7705 = vpack.c.b16 %v7315, %v7312
        %v7706 = vpack.c.b16 %v7319, %v7316
        %v7707 = vpack.c.b16 %v7320, %v7317
        %v7708 = vpack.c.b16 %v7321, %v7318
        %v7709 = vpack.c.b16 %v7325, %v7322
        %v7710 = vpack.c.b16 %v7326, %v7323
        %v7711 = vpack.c.b16 %v7327, %v7324
        %v7712 = vpack.c.b16 %v7331, %v7328
        %v7713 = vpack.c.b16 %v7332, %v7329
        %v7714 = vpack.c.b16 %v7333, %v7330
        %v7715 = vpack.c.b16 %v7337, %v7334
        %v7716 = vpack.c.b16 %v7338, %v7335
        %v7717 = vpack.c.b16 %v7339, %v7336
        %v7718 = vpack.c.b16 %v7343, %v7340
        %v7719 = vpack.c.b16 %v7344, %v7341
        %v7720 = vpack.c.b16 %v7345, %v7342
        %v7721 = vpack.c.b16 %v7349, %v7346
        %v7722 = vpack.c.b16 %v7350, %v7347
        %v7723 = vpack.c.b16 %v7351, %v7348
        %v7724 = vpack.c.b16 %v7355, %v7352
        %v7725 = vpack.c.b16 %v7356, %v7353
        %v7726 = vpack.c.b16 %v7357, %v7354
        %v7727 = vpack.c.b16 %v7361, %v7358
        %v7728 = vpack.c.b16 %v7362, %v7359
        %v7729 = vpack.c.b16 %v7363, %v7360
        %v7730 = vpack.c.b16 %v7367, %v7364
        %v7731 = vpack.c.b16 %v7368, %v7365
        %v7732 = vpack.c.b16 %v7369, %v7366
        %v7733 = vpack.c.b16 %v7373, %v7370
        %v7734 = vpack.c.b16 %v7374, %v7371
        %v7735 = vpack.c.b16 %v7375, %v7372
        %v7736 = vpack.c.b16 %v7379, %v7376
        %v7737 = vpack.c.b16 %v7380, %v7377
        %v7738 = vpack.c.b16 %v7381, %v7378
        %v7739 = vpack.c.b16 %v7385, %v7382
        %v7740 = vpack.c.b16 %v7386, %v7383
        %v7741 = vpack.c.b16 %v7387, %v7384
        %v7742 = vpack.c.b16 %v7391, %v7388
        %v7743 = vpack.c.b16 %v7392, %v7389
        %v7744 = vpack.c.b16 %v7393, %v7390
        %v7745 = vpack.c.b16 %v7397, %v7394
        %v7746 = vpack.c.b16 %v7398, %v7395
        %v7747 = vpack.c.b16 %v7399, %v7396
        %v7748 = vpack.c.b16 %v7403, %v7400
        %v7749 = vpack.c.b16 %v7404, %v7401
        %v7750 = vpack.c.b16 %v7405, %v7402
        %v7751 = vpack.c.b16 %v7409, %v7406
        %v7752 = vpack.c.b16 %v7410, %v7407
        %v7753 = vpack.c.b16 %v7411, %v7408
        %v7754 = vpack.c.b16 %v7415, %v7412
        %v7755 = vpack.c.b16 %v7416, %v7413
        %v7756 = vpack.c.b16 %v7417, %v7414
        %v7757 = vpack.c.b16 %v7421, %v7418
        %v7758 = vpack.c.b16 %v7422, %v7419
        %v7759 = vpack.c.b16 %v7423, %v7420
        %v7760 = vpack.c.b16 %v7427, %v7424
        %v7761 = vpack.c.b16 %v7428, %v7425
        %v7762 = vpack.c.b16 %v7429, %v7426
        %v7763 = vpack.c.b16 %v7433, %v7430
        %v7764 = vpack.c.b16 %v7434, %v7431
        %v7765 = vpack.c.b16 %v7435, %v7432
        %v7766 = vpack.c.b16 %v7439, %v7436
        %v7767 = vpack.c.b16 %v7440, %v7437
        %v7768 = vpack.c.b16 %v7441, %v7438
        %v7769 = vpack.c.b16 %v7445, %v7442
        %v7770 = vpack.c.b16 %v7446, %v7443
        %v7771 = vpack.c.b16 %v7447, %v7444
        %v7772 = vpack.c.b16 %v7451, %v7448
        %v7773 = vpack.c.b16 %v7452, %v7449
        %v7774 = vpack.c.b16 %v7453, %v7450
        %v7775 = vpack.c.b16 %v7457, %v7454
        %v7776 = vpack.c.b16 %v7458, %v7455
        %v7777 = vpack.c.b16 %v7459, %v7456
        %v7778 = vpack.c.b16 %v7463, %v7460
        %v7779 = vpack.c.b16 %v7464, %v7461
        %v7780 = vpack.c.b16 %v7465, %v7462
        %v7781 = vpack.c.b16 %v7469, %v7466
        %v7782 = vpack.c.b16 %v7470, %v7467
        %v7783 = vpack.c.b16 %v7471, %v7468
        %v7784 = vpack.c.b16 %v7475, %v7472
        %v7785 = vpack.c.b16 %v7476, %v7473
        %v7786 = vpack.c.b16 %v7477, %v7474
        %v7787 = vpack.c.b16 %v7481, %v7478
        %v7788 = vpack.c.b16 %v7482, %v7479
        %v7789 = vpack.c.b16 %v7483, %v7480
        %v7790 = vpack.c.b16 %v7487, %v7484
        %v7791 = vpack.c.b16 %v7488, %v7485
        %v7792 = vpack.c.b16 %v7489, %v7486
        %v7793 = vpack.c.b16 %v7493, %v7490
        %v7794 = vpack.c.b16 %v7494, %v7491
        %v7795 = vpack.c.b16 %v7495, %v7492
        %v7796 = vpack.c.b16 %v7499, %v7496
        %v7797 = vpack.c.b16 %v7500, %v7497
        %v7798 = vpack.c.b16 %v7501, %v7498
        %v7799 = vpack.c.b16 %v7505, %v7502
        %v7800 = vpack.c.b16 %v7506, %v7503
        %v7801 = vpack.c.b16 %v7507, %v7504
        %v7802 = vpack.c.b16 %v7511, %v7508
        %v7803 = vpack.c.b16 %v7512, %v7509
        %v7804 = vpack.c.b16 %v7513, %v7510
        %v7805 = vpack.c.b16 %v7517, %v7514
        %v7806 = vpack.c.b16 %v7518, %v7515
        %v7807 = vpack.c.b16 %v7519, %v7516
        %8096 = vmatprep.subr.bf16.mxu0 %v7542
        %8097 = vmatpush1.bf16.msra.mxu0 %v7541
        %8098 = vmatprep.subr.bf16.mxu0 %v7539
        %8099 = vmatpush1.bf16.msra.mxu0 %v7538
        %8100 = vmatprep.subr.bf16.mxu0 %v7536
        %8101 = vmatpush1.bf16.msra.mxu0 %v7535
        %8102 = vmatprep.subr.bf16.mxu0 %v7533
        %8103 = vmatpush1.bf16.msra.mxu0 %v7532
        %8104 = vmatprep.subr.bf16.mxu0 %v7530
        %8105 = vmatpush1.bf16.msra.mxu0 %v7529
        %8106 = vmatprep.subr.bf16.mxu0 %v7527
        %8107 = vmatpush1.bf16.msra.mxu0 %v7526
        %8108 = vmatprep.subr.bf16.mxu0 %v7524
        %8109 = vmatpush1.bf16.msra.mxu0 %v7523
        %8110 = vmatprep.subr.bf16.mxu0 %v7521
        %8111 = vmatpush1.bf16.msra.mxu0 %v7520
        %8112 = vmatprep.subr.bf16.mxu0 %v7566
        %8113 = vmatpush2.bf16.msra.mxu0 %v7565
        %8114 = vmatprep.subr.bf16.mxu0 %v7563
        %8115 = vmatpush2.bf16.msra.mxu0 %v7562
        %8116 = vmatprep.subr.bf16.mxu0 %v7560
        %8117 = vmatpush2.bf16.msra.mxu0 %v7559
        %8118 = vmatprep.subr.bf16.mxu0 %v7557
        %8119 = vmatpush2.bf16.msra.mxu0 %v7556
        %8120 = vmatprep.subr.bf16.mxu0 %v7554
        %8121 = vmatpush2.bf16.msra.mxu0 %v7553
        %8122 = vmatprep.subr.bf16.mxu0 %v7551
        %8123 = vmatpush2.bf16.msra.mxu0 %v7550
        %8124 = vmatprep.subr.bf16.mxu0 %v7548
        %8125 = vmatpush2.bf16.msra.mxu0 %v7547
        %8126 = vmatprep.subr.bf16.mxu0 %v7545
        %8127 = vmatpush2.bf16.msra.mxu0 %v7544
        %8128 = vmatprep.mubr.bf16.mxu0 %v6148
        %8129 = vmatmul.mubr.bf16.gmra.mxu0 %v6147
        %v8130 = vpop.f32.mrf.mxu0
        %v8131 = vadd.f32 %v6548, %v8130
        %v8132 = vpop.f32.mrf.mxu0
        %v8133 = vadd.f32 %v6552, %v8132
        %v8134 = vpop.f32.mrf.mxu0
        %v8135 = vpop.f32.mrf.mxu0
        %8136 = vdwg.mxu0
        %8137 = vmatprep.subr.bf16.mxu0 %v7590
        %8138 = vmatpush1.bf16.msra.mxu0 %v7589
        %8139 = vmatprep.subr.bf16.mxu0 %v7587
        %8140 = vmatpush1.bf16.msra.mxu0 %v7586
        %8141 = vmatprep.subr.bf16.mxu0 %v7584
        %8142 = vmatpush1.bf16.msra.mxu0 %v7583
        %8143 = vmatprep.subr.bf16.mxu0 %v7581
        %8144 = vmatpush1.bf16.msra.mxu0 %v7580
        %8145 = vmatprep.subr.bf16.mxu0 %v7578
        %8146 = vmatpush1.bf16.msra.mxu0 %v7577
        %8147 = vmatprep.subr.bf16.mxu0 %v7575
        %8148 = vmatpush1.bf16.msra.mxu0 %v7574
        %8149 = vmatprep.subr.bf16.mxu0 %v7572
        %8150 = vmatpush1.bf16.msra.mxu0 %v7571
        %8151 = vmatprep.subr.bf16.mxu0 %v7569
        %8152 = vmatpush1.bf16.msra.mxu0 %v7568
        %8153 = vmatprep.subr.bf16.mxu0 %v7614
        %8154 = vmatpush2.bf16.msra.mxu0 %v7613
        %8155 = vmatprep.subr.bf16.mxu0 %v7611
        %8156 = vmatpush2.bf16.msra.mxu0 %v7610
        %8157 = vmatprep.subr.bf16.mxu0 %v7608
        %8158 = vmatpush2.bf16.msra.mxu0 %v7607
        %8159 = vmatprep.subr.bf16.mxu0 %v7605
        %8160 = vmatpush2.bf16.msra.mxu0 %v7604
        %8161 = vmatprep.subr.bf16.mxu0 %v7602
        %8162 = vmatpush2.bf16.msra.mxu0 %v7601
        %8163 = vmatprep.subr.bf16.mxu0 %v7599
        %8164 = vmatpush2.bf16.msra.mxu0 %v7598
        %8165 = vmatprep.subr.bf16.mxu0 %v7596
        %8166 = vmatpush2.bf16.msra.mxu0 %v7595
        %8167 = vmatprep.subr.bf16.mxu0 %v7593
        %8168 = vmatpush2.bf16.msra.mxu0 %v7592
        %8169 = vmatprep.mubr.bf16.mxu0 %v6150
        %8170 = vmatmul.mubr.bf16.gmra.mxu0 %v6149
        %v8171 = vpop.f32.mrf.mxu0
        %v8172 = vadd.f32 %v8131, %v8171
        %v8173 = vpop.f32.mrf.mxu0
        %v8174 = vadd.f32 %v8133, %v8173
        %v8175 = vpop.f32.mrf.mxu0
        %v8176 = vpop.f32.mrf.mxu0
        %8177 = vdwg.mxu0
        %8178 = vmatprep.subr.bf16.mxu0 %v7638
        %8179 = vmatpush1.bf16.msra.mxu0 %v7637
        %8180 = vmatprep.subr.bf16.mxu0 %v7635
        %8181 = vmatpush1.bf16.msra.mxu0 %v7634
        %8182 = vmatprep.subr.bf16.mxu0 %v7632
        %8183 = vmatpush1.bf16.msra.mxu0 %v7631
        %8184 = vmatprep.subr.bf16.mxu0 %v7629
        %8185 = vmatpush1.bf16.msra.mxu0 %v7628
        %8186 = vmatprep.subr.bf16.mxu0 %v7626
        %8187 = vmatpush1.bf16.msra.mxu0 %v7625
        %8188 = vmatprep.subr.bf16.mxu0 %v7623
        %8189 = vmatpush1.bf16.msra.mxu0 %v7622
        %8190 = vmatprep.subr.bf16.mxu0 %v7620
        %8191 = vmatpush1.bf16.msra.mxu0 %v7619
        %8192 = vmatprep.subr.bf16.mxu0 %v7617
        %8193 = vmatpush1.bf16.msra.mxu0 %v7616
        %8194 = vmatprep.subr.bf16.mxu0 %v7662
        %8195 = vmatpush2.bf16.msra.mxu0 %v7661
        %8196 = vmatprep.subr.bf16.mxu0 %v7659
        %8197 = vmatpush2.bf16.msra.mxu0 %v7658
        %8198 = vmatprep.subr.bf16.mxu0 %v7656
        %8199 = vmatpush2.bf16.msra.mxu0 %v7655
        %8200 = vmatprep.subr.bf16.mxu0 %v7653
        %8201 = vmatpush2.bf16.msra.mxu0 %v7652
        %8202 = vmatprep.subr.bf16.mxu0 %v7650
        %8203 = vmatpush2.bf16.msra.mxu0 %v7649
        %8204 = vmatprep.subr.bf16.mxu0 %v7647
        %8205 = vmatpush2.bf16.msra.mxu0 %v7646
        %8206 = vmatprep.subr.bf16.mxu0 %v7644
        %8207 = vmatpush2.bf16.msra.mxu0 %v7643
        %8208 = vmatprep.subr.bf16.mxu0 %v7641
        %8209 = vmatpush2.bf16.msra.mxu0 %v7640
        %8210 = vmatprep.mubr.bf16.mxu0 %v6152
        %8211 = vmatmul.mubr.bf16.gmra.mxu0 %v6151
        %v8212 = vpop.f32.mrf.mxu0
        %v8213 = vadd.f32 %v8172, %v8212
        %v8214 = vpop.f32.mrf.mxu0
        %v8215 = vadd.f32 %v8174, %v8214
        %v8216 = vpop.f32.mrf.mxu0
        %v8217 = vpop.f32.mrf.mxu0
        %8218 = vdwg.mxu0
        %8219 = vmatprep.subr.bf16.mxu0 %v7686
        %8220 = vmatpush1.bf16.msra.mxu0 %v7685
        %8221 = vmatprep.subr.bf16.mxu0 %v7683
        %8222 = vmatpush1.bf16.msra.mxu0 %v7682
        %8223 = vmatprep.subr.bf16.mxu0 %v7680
        %8224 = vmatpush1.bf16.msra.mxu0 %v7679
        %8225 = vmatprep.subr.bf16.mxu0 %v7677
        %8226 = vmatpush1.bf16.msra.mxu0 %v7676
        %8227 = vmatprep.subr.bf16.mxu0 %v7674
        %8228 = vmatpush1.bf16.msra.mxu0 %v7673
        %8229 = vmatprep.subr.bf16.mxu0 %v7671
        %8230 = vmatpush1.bf16.msra.mxu0 %v7670
        %8231 = vmatprep.subr.bf16.mxu0 %v7668
        %8232 = vmatpush1.bf16.msra.mxu0 %v7667
        %8233 = vmatprep.subr.bf16.mxu0 %v7665
        %8234 = vmatpush1.bf16.msra.mxu0 %v7664
        %8235 = vmatprep.subr.bf16.mxu0 %v7710
        %8236 = vmatpush2.bf16.msra.mxu0 %v7709
        %8237 = vmatprep.subr.bf16.mxu0 %v7707
        %8238 = vmatpush2.bf16.msra.mxu0 %v7706
        %8239 = vmatprep.subr.bf16.mxu0 %v7704
        %8240 = vmatpush2.bf16.msra.mxu0 %v7703
        %8241 = vmatprep.subr.bf16.mxu0 %v7701
        %8242 = vmatpush2.bf16.msra.mxu0 %v7700
        %8243 = vmatprep.subr.bf16.mxu0 %v7698
        %8244 = vmatpush2.bf16.msra.mxu0 %v7697
        %8245 = vmatprep.subr.bf16.mxu0 %v7695
        %8246 = vmatpush2.bf16.msra.mxu0 %v7694
        %8247 = vmatprep.subr.bf16.mxu0 %v7692
        %8248 = vmatpush2.bf16.msra.mxu0 %v7691
        %8249 = vmatprep.subr.bf16.mxu0 %v7689
        %8250 = vmatpush2.bf16.msra.mxu0 %v7688
        %8251 = vmatprep.mubr.bf16.mxu0 %v6154
        %8252 = vmatmul.mubr.bf16.gmra.mxu0 %v6153
        %v8253 = vpop.f32.mrf.mxu0
        %v8254 = vadd.f32 %v8213, %v8253
        %v8255 = vpop.f32.mrf.mxu0
        %v8256 = vadd.f32 %v8215, %v8255
        %v8257 = vpop.f32.mrf.mxu0
        %v8258 = vpop.f32.mrf.mxu0
        %8259 = vdwg.mxu0
        %8260 = vmatprep.subr.bf16.mxu0 %v7734
        %8261 = vmatpush1.bf16.msra.mxu0 %v7733
        %8262 = vmatprep.subr.bf16.mxu0 %v7731
        %8263 = vmatpush1.bf16.msra.mxu0 %v7730
        %8264 = vmatprep.subr.bf16.mxu0 %v7728
        %8265 = vmatpush1.bf16.msra.mxu0 %v7727
        %8266 = vmatprep.subr.bf16.mxu0 %v7725
        %8267 = vmatpush1.bf16.msra.mxu0 %v7724
        %8268 = vmatprep.subr.bf16.mxu0 %v7722
        %8269 = vmatpush1.bf16.msra.mxu0 %v7721
        %8270 = vmatprep.subr.bf16.mxu0 %v7719
        %8271 = vmatpush1.bf16.msra.mxu0 %v7718
        %8272 = vmatprep.subr.bf16.mxu0 %v7716
        %8273 = vmatpush1.bf16.msra.mxu0 %v7715
        %8274 = vmatprep.subr.bf16.mxu0 %v7713
        %8275 = vmatpush1.bf16.msra.mxu0 %v7712
        %8276 = vmatprep.subr.bf16.mxu0 %v7758
        %8277 = vmatpush2.bf16.msra.mxu0 %v7757
        %8278 = vmatprep.subr.bf16.mxu0 %v7755
        %8279 = vmatpush2.bf16.msra.mxu0 %v7754
        %8280 = vmatprep.subr.bf16.mxu0 %v7752
        %8281 = vmatpush2.bf16.msra.mxu0 %v7751
        %8282 = vmatprep.subr.bf16.mxu0 %v7749
        %8283 = vmatpush2.bf16.msra.mxu0 %v7748
        %8284 = vmatprep.subr.bf16.mxu0 %v7746
        %8285 = vmatpush2.bf16.msra.mxu0 %v7745
        %8286 = vmatprep.subr.bf16.mxu0 %v7743
        %8287 = vmatpush2.bf16.msra.mxu0 %v7742
        %8288 = vmatprep.subr.bf16.mxu0 %v7740
        %8289 = vmatpush2.bf16.msra.mxu0 %v7739
        %8290 = vmatprep.subr.bf16.mxu0 %v7737
        %8291 = vmatpush2.bf16.msra.mxu0 %v7736
        %8292 = vmatprep.mubr.bf16.mxu0 %v6156
        %8293 = vmatmul.mubr.bf16.gmra.mxu0 %v6155
        %v8294 = vpop.f32.mrf.mxu0
        %v8295 = vadd.f32 %v8254, %v8294
        %v8296 = vpop.f32.mrf.mxu0
        %v8297 = vadd.f32 %v8256, %v8296
        %v8298 = vpop.f32.mrf.mxu0
        %v8299 = vpop.f32.mrf.mxu0
        %8300 = vdwg.mxu0
        %8301 = vmatprep.subr.bf16.mxu0 %v7782
        %8302 = vmatpush1.bf16.msra.mxu0 %v7781
        %8303 = vmatprep.subr.bf16.mxu0 %v7779
        %8304 = vmatpush1.bf16.msra.mxu0 %v7778
        %8305 = vmatprep.subr.bf16.mxu0 %v7776
        %8306 = vmatpush1.bf16.msra.mxu0 %v7775
        %8307 = vmatprep.subr.bf16.mxu0 %v7773
        %8308 = vmatpush1.bf16.msra.mxu0 %v7772
        %8309 = vmatprep.subr.bf16.mxu0 %v7770
        %8310 = vmatpush1.bf16.msra.mxu0 %v7769
        %8311 = vmatprep.subr.bf16.mxu0 %v7767
        %8312 = vmatpush1.bf16.msra.mxu0 %v7766
        %8313 = vmatprep.subr.bf16.mxu0 %v7764
        %8314 = vmatpush1.bf16.msra.mxu0 %v7763
        %8315 = vmatprep.subr.bf16.mxu0 %v7761
        %8316 = vmatpush1.bf16.msra.mxu0 %v7760
        %8317 = vmatprep.subr.bf16.mxu0 %v7806
        %8318 = vmatpush2.bf16.msra.mxu0 %v7805
        %8319 = vmatprep.subr.bf16.mxu0 %v7803
        %8320 = vmatpush2.bf16.msra.mxu0 %v7802
        %8321 = vmatprep.subr.bf16.mxu0 %v7800
        %8322 = vmatpush2.bf16.msra.mxu0 %v7799
        %8323 = vmatprep.subr.bf16.mxu0 %v7797
        %8324 = vmatpush2.bf16.msra.mxu0 %v7796
        %8325 = vmatprep.subr.bf16.mxu0 %v7794
        %8326 = vmatpush2.bf16.msra.mxu0 %v7793
        %8327 = vmatprep.subr.bf16.mxu0 %v7791
        %8328 = vmatpush2.bf16.msra.mxu0 %v7790
        %8329 = vmatprep.subr.bf16.mxu0 %v7788
        %8330 = vmatpush2.bf16.msra.mxu0 %v7787
        %8331 = vmatprep.subr.bf16.mxu0 %v7785
        %8332 = vmatpush2.bf16.msra.mxu0 %v7784
        %8333 = vmatprep.mubr.bf16.mxu0 %v6158
        %8334 = vmatmul.mubr.bf16.gmra.mxu0 %v6157
        %v8335 = vpop.f32.mrf.mxu0
        %v8336 = vadd.f32 %v8295, %v8335
        %v8337 = vpop.f32.mrf.mxu0
        %v8338 = vadd.f32 %v8297, %v8337
        %v8339 = vpop.f32.mrf.mxu0
        %v8340 = vpop.f32.mrf.mxu0
        %8341 = vdwg.mxu0
        %8342 = vmatprep.subr.bf16.mxu0 0
        %8343 = vmatpush1.bf16.msra.mxu0 %v7543
        %8344 = vmatprep.subr.bf16.mxu0 0
        %8345 = vmatpush1.bf16.msra.mxu0 %v7540
        %8346 = vmatprep.subr.bf16.mxu0 0
        %8347 = vmatpush1.bf16.msra.mxu0 %v7537
        %8348 = vmatprep.subr.bf16.mxu0 0
        %8349 = vmatpush1.bf16.msra.mxu0 %v7534
        %8350 = vmatprep.subr.bf16.mxu0 0
        %8351 = vmatpush1.bf16.msra.mxu0 %v7531
        %8352 = vmatprep.subr.bf16.mxu0 0
        %8353 = vmatpush1.bf16.msra.mxu0 %v7528
        %8354 = vmatprep.subr.bf16.mxu0 0
        %8355 = vmatpush1.bf16.msra.mxu0 %v7525
        %8356 = vmatprep.subr.bf16.mxu0 0
        %8357 = vmatpush1.bf16.msra.mxu0 %v7522
        %8358 = vmatprep.subr.bf16.mxu0 0
        %8359 = vmatpush2.bf16.msra.mxu0 %v7567
        %8360 = vmatprep.subr.bf16.mxu0 0
        %8361 = vmatpush2.bf16.msra.mxu0 %v7564
        %8362 = vmatprep.subr.bf16.mxu0 0
        %8363 = vmatpush2.bf16.msra.mxu0 %v7561
        %8364 = vmatprep.subr.bf16.mxu0 0
        %8365 = vmatpush2.bf16.msra.mxu0 %v7558
        %8366 = vmatprep.subr.bf16.mxu0 0
        %8367 = vmatpush2.bf16.msra.mxu0 %v7555
        %8368 = vmatprep.subr.bf16.mxu0 0
        %8369 = vmatpush2.bf16.msra.mxu0 %v7552
        %8370 = vmatprep.subr.bf16.mxu0 0
        %8371 = vmatpush2.bf16.msra.mxu0 %v7549
        %8372 = vmatprep.subr.bf16.mxu0 0
        %8373 = vmatpush2.bf16.msra.mxu0 %v7546
        %8374 = vmatprep.mubr.bf16.mxu0 %v6148
        %8375 = vmatmul.mubr.bf16.gmra.mxu0 %v6147
        %v8376 = vpop.f32.mrf.mxu0
        %v8377 = vadd.f32 %v6556, %v8376
        %v8378 = vpop.f32.mrf.mxu0
        %v8379 = vpop.f32.mrf.mxu0
        %v8380 = vpop.f32.mrf.mxu0
        %8381 = vdwg.mxu0
        %8382 = vmatprep.subr.bf16.mxu0 0
        %8383 = vmatpush1.bf16.msra.mxu0 %v7591
        %8384 = vmatprep.subr.bf16.mxu0 0
        %8385 = vmatpush1.bf16.msra.mxu0 %v7588
        %8386 = vmatprep.subr.bf16.mxu0 0
        %8387 = vmatpush1.bf16.msra.mxu0 %v7585
        %8388 = vmatprep.subr.bf16.mxu0 0
        %8389 = vmatpush1.bf16.msra.mxu0 %v7582
        %8390 = vmatprep.subr.bf16.mxu0 0
        %8391 = vmatpush1.bf16.msra.mxu0 %v7579
        %8392 = vmatprep.subr.bf16.mxu0 0
        %8393 = vmatpush1.bf16.msra.mxu0 %v7576
        %8394 = vmatprep.subr.bf16.mxu0 0
        %8395 = vmatpush1.bf16.msra.mxu0 %v7573
        %8396 = vmatprep.subr.bf16.mxu0 0
        %8397 = vmatpush1.bf16.msra.mxu0 %v7570
        %8398 = vmatprep.subr.bf16.mxu0 0
        %8399 = vmatpush2.bf16.msra.mxu0 %v7615
        %8400 = vmatprep.subr.bf16.mxu0 0
        %8401 = vmatpush2.bf16.msra.mxu0 %v7612
        %8402 = vmatprep.subr.bf16.mxu0 0
        %8403 = vmatpush2.bf16.msra.mxu0 %v7609
        %8404 = vmatprep.subr.bf16.mxu0 0
        %8405 = vmatpush2.bf16.msra.mxu0 %v7606
        %8406 = vmatprep.subr.bf16.mxu0 0
        %8407 = vmatpush2.bf16.msra.mxu0 %v7603
        %8408 = vmatprep.subr.bf16.mxu0 0
        %8409 = vmatpush2.bf16.msra.mxu0 %v7600
        %8410 = vmatprep.subr.bf16.mxu0 0
        %8411 = vmatpush2.bf16.msra.mxu0 %v7597
        %8412 = vmatprep.subr.bf16.mxu0 0
        %8413 = vmatpush2.bf16.msra.mxu0 %v7594
        %8414 = vmatprep.mubr.bf16.mxu0 %v6150
        %8415 = vmatmul.mubr.bf16.gmra.mxu0 %v6149
        %v8416 = vpop.f32.mrf.mxu0
        %v8417 = vadd.f32 %v8377, %v8416
        %v8418 = vpop.f32.mrf.mxu0
        %v8419 = vpop.f32.mrf.mxu0
        %v8420 = vpop.f32.mrf.mxu0
        %8421 = vdwg.mxu0
        %8422 = vmatprep.subr.bf16.mxu0 0
        %8423 = vmatpush1.bf16.msra.mxu0 %v7639
        %8424 = vmatprep.subr.bf16.mxu0 0
        %8425 = vmatpush1.bf16.msra.mxu0 %v7636
        %8426 = vmatprep.subr.bf16.mxu0 0
        %8427 = vmatpush1.bf16.msra.mxu0 %v7633
        %8428 = vmatprep.subr.bf16.mxu0 0
        %8429 = vmatpush1.bf16.msra.mxu0 %v7630
        %8430 = vmatprep.subr.bf16.mxu0 0
        %8431 = vmatpush1.bf16.msra.mxu0 %v7627
        %8432 = vmatprep.subr.bf16.mxu0 0
        %8433 = vmatpush1.bf16.msra.mxu0 %v7624
        %8434 = vmatprep.subr.bf16.mxu0 0
        %8435 = vmatpush1.bf16.msra.mxu0 %v7621
        %8436 = vmatprep.subr.bf16.mxu0 0
        %8437 = vmatpush1.bf16.msra.mxu0 %v7618
        %8438 = vmatprep.subr.bf16.mxu0 0
        %8439 = vmatpush2.bf16.msra.mxu0 %v7663
        %8440 = vmatprep.subr.bf16.mxu0 0
        %8441 = vmatpush2.bf16.msra.mxu0 %v7660
        %8442 = vmatprep.subr.bf16.mxu0 0
        %8443 = vmatpush2.bf16.msra.mxu0 %v7657
        %8444 = vmatprep.subr.bf16.mxu0 0
        %8445 = vmatpush2.bf16.msra.mxu0 %v7654
        %8446 = vmatprep.subr.bf16.mxu0 0
        %8447 = vmatpush2.bf16.msra.mxu0 %v7651
        %8448 = vmatprep.subr.bf16.mxu0 0
        %8449 = vmatpush2.bf16.msra.mxu0 %v7648
        %8450 = vmatprep.subr.bf16.mxu0 0
        %8451 = vmatpush2.bf16.msra.mxu0 %v7645
        %8452 = vmatprep.subr.bf16.mxu0 0
        %8453 = vmatpush2.bf16.msra.mxu0 %v7642
        %8454 = vmatprep.mubr.bf16.mxu0 %v6152
        %8455 = vmatmul.mubr.bf16.gmra.mxu0 %v6151
        %v8456 = vpop.f32.mrf.mxu0
        %v8457 = vadd.f32 %v8417, %v8456
        %v8458 = vpop.f32.mrf.mxu0
        %v8459 = vpop.f32.mrf.mxu0
        %v8460 = vpop.f32.mrf.mxu0
        %8461 = vdwg.mxu0
        %8462 = vmatprep.subr.bf16.mxu0 0
        %8463 = vmatpush1.bf16.msra.mxu0 %v7687
        %8464 = vmatprep.subr.bf16.mxu0 0
        %8465 = vmatpush1.bf16.msra.mxu0 %v7684
        %8466 = vmatprep.subr.bf16.mxu0 0
        %8467 = vmatpush1.bf16.msra.mxu0 %v7681
        %8468 = vmatprep.subr.bf16.mxu0 0
        %8469 = vmatpush1.bf16.msra.mxu0 %v7678
        %8470 = vmatprep.subr.bf16.mxu0 0
        %8471 = vmatpush1.bf16.msra.mxu0 %v7675
        %8472 = vmatprep.subr.bf16.mxu0 0
        %8473 = vmatpush1.bf16.msra.mxu0 %v7672
        %8474 = vmatprep.subr.bf16.mxu0 0
        %8475 = vmatpush1.bf16.msra.mxu0 %v7669
        %8476 = vmatprep.subr.bf16.mxu0 0
        %8477 = vmatpush1.bf16.msra.mxu0 %v7666
        %8478 = vmatprep.subr.bf16.mxu0 0
        %8479 = vmatpush2.bf16.msra.mxu0 %v7711
        %8480 = vmatprep.subr.bf16.mxu0 0
        %8481 = vmatpush2.bf16.msra.mxu0 %v7708
        %8482 = vmatprep.subr.bf16.mxu0 0
        %8483 = vmatpush2.bf16.msra.mxu0 %v7705
        %8484 = vmatprep.subr.bf16.mxu0 0
        %8485 = vmatpush2.bf16.msra.mxu0 %v7702
        %8486 = vmatprep.subr.bf16.mxu0 0
        %8487 = vmatpush2.bf16.msra.mxu0 %v7699
        %8488 = vmatprep.subr.bf16.mxu0 0
        %8489 = vmatpush2.bf16.msra.mxu0 %v7696
        %8490 = vmatprep.subr.bf16.mxu0 0
        %8491 = vmatpush2.bf16.msra.mxu0 %v7693
        %8492 = vmatprep.subr.bf16.mxu0 0
        %8493 = vmatpush2.bf16.msra.mxu0 %v7690
        %8494 = vmatprep.mubr.bf16.mxu0 %v6154
        %8495 = vmatmul.mubr.bf16.gmra.mxu0 %v6153
        %v8496 = vpop.f32.mrf.mxu0
        %v8497 = vadd.f32 %v8457, %v8496
        %v8498 = vpop.f32.mrf.mxu0
        %v8499 = vpop.f32.mrf.mxu0
        %v8500 = vpop.f32.mrf.mxu0
        %8501 = vdwg.mxu0
        %8502 = vmatprep.subr.bf16.mxu0 0
        %8503 = vmatpush1.bf16.msra.mxu0 %v7735
        %8504 = vmatprep.subr.bf16.mxu0 0
        %8505 = vmatpush1.bf16.msra.mxu0 %v7732
        %8506 = vmatprep.subr.bf16.mxu0 0
        %8507 = vmatpush1.bf16.msra.mxu0 %v7729
        %8508 = vmatprep.subr.bf16.mxu0 0
        %8509 = vmatpush1.bf16.msra.mxu0 %v7726
        %8510 = vmatprep.subr.bf16.mxu0 0
        %8511 = vmatpush1.bf16.msra.mxu0 %v7723
        %8512 = vmatprep.subr.bf16.mxu0 0
        %8513 = vmatpush1.bf16.msra.mxu0 %v7720
        %8514 = vmatprep.subr.bf16.mxu0 0
        %8515 = vmatpush1.bf16.msra.mxu0 %v7717
        %8516 = vmatprep.subr.bf16.mxu0 0
        %8517 = vmatpush1.bf16.msra.mxu0 %v7714
        %8518 = vmatprep.subr.bf16.mxu0 0
        %8519 = vmatpush2.bf16.msra.mxu0 %v7759
        %8520 = vmatprep.subr.bf16.mxu0 0
        %8521 = vmatpush2.bf16.msra.mxu0 %v7756
        %8522 = vmatprep.subr.bf16.mxu0 0
        %8523 = vmatpush2.bf16.msra.mxu0 %v7753
        %8524 = vmatprep.subr.bf16.mxu0 0
        %8525 = vmatpush2.bf16.msra.mxu0 %v7750
        %8526 = vmatprep.subr.bf16.mxu0 0
        %8527 = vmatpush2.bf16.msra.mxu0 %v7747
        %8528 = vmatprep.subr.bf16.mxu0 0
        %8529 = vmatpush2.bf16.msra.mxu0 %v7744
        %8530 = vmatprep.subr.bf16.mxu0 0
        %8531 = vmatpush2.bf16.msra.mxu0 %v7741
        %8532 = vmatprep.subr.bf16.mxu0 0
        %8533 = vmatpush2.bf16.msra.mxu0 %v7738
        %8534 = vmatprep.mubr.bf16.mxu0 %v6156
        %8535 = vmatmul.mubr.bf16.gmra.mxu0 %v6155
        %v8536 = vpop.f32.mrf.mxu0
        %v8537 = vadd.f32 %v8497, %v8536
        %v8538 = vpop.f32.mrf.mxu0
        %v8539 = vpop.f32.mrf.mxu0
        %v8540 = vpop.f32.mrf.mxu0
        %8541 = vdwg.mxu0
        %8542 = vmatprep.subr.bf16.mxu0 0
        %8543 = vmatpush1.bf16.msra.mxu0 %v7783
        %8544 = vmatprep.subr.bf16.mxu0 0
        %8545 = vmatpush1.bf16.msra.mxu0 %v7780
        %8546 = vmatprep.subr.bf16.mxu0 0
        %8547 = vmatpush1.bf16.msra.mxu0 %v7777
        %8548 = vmatprep.subr.bf16.mxu0 0
        %8549 = vmatpush1.bf16.msra.mxu0 %v7774
        %8550 = vmatprep.subr.bf16.mxu0 0
        %8551 = vmatpush1.bf16.msra.mxu0 %v7771
        %8552 = vmatprep.subr.bf16.mxu0 0
        %8553 = vmatpush1.bf16.msra.mxu0 %v7768
        %8554 = vmatprep.subr.bf16.mxu0 0
        %8555 = vmatpush1.bf16.msra.mxu0 %v7765
        %8556 = vmatprep.subr.bf16.mxu0 0
        %8557 = vmatpush1.bf16.msra.mxu0 %v7762
        %8558 = vmatprep.subr.bf16.mxu0 0
        %8559 = vmatpush2.bf16.msra.mxu0 %v7807
        %8560 = vmatprep.subr.bf16.mxu0 0
        %8561 = vmatpush2.bf16.msra.mxu0 %v7804
        %8562 = vmatprep.subr.bf16.mxu0 0
        %8563 = vmatpush2.bf16.msra.mxu0 %v7801
        %8564 = vmatprep.subr.bf16.mxu0 0
        %8565 = vmatpush2.bf16.msra.mxu0 %v7798
        %8566 = vmatprep.subr.bf16.mxu0 0
        %8567 = vmatpush2.bf16.msra.mxu0 %v7795
        %8568 = vmatprep.subr.bf16.mxu0 0
        %8569 = vmatpush2.bf16.msra.mxu0 %v7792
        %8570 = vmatprep.subr.bf16.mxu0 0
        %8571 = vmatpush2.bf16.msra.mxu0 %v7789
        %8572 = vmatprep.subr.bf16.mxu0 0
        %8573 = vmatpush2.bf16.msra.mxu0 %v7786
        %8574 = vmatprep.mubr.bf16.mxu0 %v6158
        %8575 = vmatmul.mubr.bf16.gmra.mxu0 %v6157
        %v8576 = vpop.f32.mrf.mxu0
        %v8577 = vadd.f32 %v8537, %v8576
        %v8578 = vpop.f32.mrf.mxu0
        %v8579 = vpop.f32.mrf.mxu0
        %v8580 = vpop.f32.mrf.mxu0
        %8581 = vdwg.mxu0
        %v8582 = vadd.f32 %v3784, %v8336
        %v8583 = vadd.f32 %v3785, %v8338
        %v8584 = vadd.f32 %v3786, %v8577
        %8585 = vst [vmem:[%s575] sm:$0xff] %v8582
        %8586 = vst [vmem:[%s575 + $0x8] sm:$0xff] %v8583
        %8587 = vst [vmem:[%s575 + $0x10] sm:$0xff] %v8584
        %s8588 = sand.u32 %s300, 1
        %s8589 = scalar_lea.sflag [#allocation6], %s8588
        %s8590 = sand.u32 %s300, 1
        %s8591 = smul.addr %s8590, 24
        %s8592 = scalar_lea.vmem [#allocation24], %s8591
        // Predicated region
        $region117: #{transformer_block.1} parent=67 // pred_check
          %p8593 = pneg %p310
        $region118: #{transformer_block.1} parent=67 // pred_check_branch
          %8595 = sbr.rel (%p8593) target = $region120
        $region119: #{transformer_block.1} parent=67 // pred_region
          %s8597 = ssub.s32 384, 384
          %8598 = vsyncadd %s8589, %s8597
          %s8599 = smul.addr %s35, 3
          %s8600 = smul.addr %s8599, 128
          %s8601 = scalar_lea.hbm %s12, %s8600
          %s8603 = sshll.u32 %s8592, 4
          %s8604 = int_to_ptr.vmem [resolvable:$true] %s8603
          %8606 = dma.vmem_to_hbm [thread:$0]  %s8604, 384, %s8601, %s8589
        $region120: #{transformer_block.1} parent=67 // pred_fallthru
          _
      $region68: #{transformer_block.1} parent=5 // pred_fallthru
        _
      %p8607 = scmp.le.s32.totalorder 2, %s30
      // Predicated region
      $region121: #{transformer_block.1} parent=5 // pred_check
        %p8608 = pneg %p8607
      $region122: #{transformer_block.1} parent=5 // pred_check_branch
        %8610 = sbr.rel (%p8608) target = $region124
      $region123: #{transformer_block.1} parent=5 // pred_region
        %s8611 = ssub.s32 %s30, 2
        // Predicated region
        $region125: #{transformer_block.1} parent=123 // pred_check
          %p8612 = pneg %p316
        $region126: #{transformer_block.1} parent=123 // pred_check_branch
          %8614 = sbr.rel (%p8612) target = $region128
        $region127: #{transformer_block.1} parent=123 // pred_region
          %s8615 = sand.u32 %s301, 1
          %s8616 = scalar_lea.sflag [#allocation6], %s8615
          %s8617 = sand.u32 %s301, 1
          %s8618 = smul.addr %s8617, 24
          %s8619 = scalar_lea.vmem [#allocation24], %s8618
          %8620 = dma.done %s8616, 384
        $region128: #{transformer_block.1} parent=123 // pred_fallthru
          _
      $region124: #{transformer_block.1} parent=5 // pred_fallthru
        _
    $region6: #{transformer_block.1} parent=1 // loop_footer
      %s34 = sadd.s32 1, %s30
    $region7: #{transformer_block.1} parent=1 // loop_footer_branch
      %29 = sbr.rel target = $region3
    $region8: #{transformer_block.1} parent=1 // loop_exit
      _
    %8621 = vsyncpa [#allocation5], 1
    %s8622 = scalar_lea.sflag [#allocation5], 1
    %8623 = vsyncpa %s8622, 1
    %8624 = vsyncpa [#allocation8], 1
    %8625 = vsyncpa [#allocation11], 1
    %8626 = vsyncpa [#allocation14], 1
    %8627 = vsyncpa [#allocation17], 1
    %8628 = vsyncpa [#allocation20], 1
    %8629 = vsyncpa [#allocation23], 1
    %8630 = vsyncpa [#allocation6], 1
    %s8631 = scalar_lea.sflag [#allocation6], 1
    %8632 = vsyncpa %s8631, 1

</llo_original>
